<compile_context>
chip_gen: v7x
topology: tpu7x:2x2x1
jax: 0.10.0
libtpu: 0.0.40
codegen_flags: <defaults>
</compile_context>

<pallas_src>
import jax
import jax.numpy as jnp
from jax.experimental import pallas as pl
from jax.experimental.pallas import tpu as pltpu

# Layer sizes from the PyTorch module.
D_IN = 28 * 28            # 784
Z_DIM = 32                # bottleneck
D_PAD = 896               # 784 padded to 7 * 128 (lane-dense)
Z_PAD = 128               # 32 padded to 128 (lane-dense)

ENC_DIMS = [D_IN, 512, 256, Z_DIM]
DEC_DIMS = [Z_DIM, 256, 512, D_IN]


def ae_kernel(x_ref,
              w1_ref, b1_ref, w2_ref, b2_ref, w3_ref, b3_ref,   # encoder
              w4_ref, b4_ref, w5_ref, b5_ref, w6_ref, b6_ref,   # decoder
              enc_ref, dec_ref):
    """Fused AE forward for one batch tile.

    x_ref:   (TM, 896) bf16 (zero-padded 784->896)
    wK_ref:  (in_k, out_k) bf16 (padded where needed), bK_ref: (1, out_k) f32
    enc_ref: (TM, 128) f32 (cols 32: are exact zeros)
    dec_ref: (TM, 896) f32 (cols 784: are exact zeros)
    """
    x = x_ref[...]

    def linear(h_bf16, w_ref, b_ref):
        # bf16 x bf16 -> f32 accumulation on the MXU, bias add in f32.
        return jnp.dot(h_bf16, w_ref[...],
                       preferred_element_type=jnp.float32) + b_ref[...]

    def relu_bf16(y_f32):
        return jnp.maximum(y_f32, 0.0).astype(jnp.bfloat16)

    # Encoder: Linear -> ReLU -> Linear -> ReLU -> Linear
    h = relu_bf16(linear(x, w1_ref, b1_ref))
    h = relu_bf16(linear(h, w2_ref, b2_ref))
    enc = linear(h, w3_ref, b3_ref)                       # (TM, 128) f32

    # Decoder: Linear -> ReLU -> Linear -> ReLU -> Linear
    h = relu_bf16(linear(enc.astype(jnp.bfloat16), w4_ref, b4_ref))
    h = relu_bf16(linear(h, w5_ref, b5_ref))
    dec = linear(h, w6_ref, b6_ref)                       # (TM, 896) f32

    enc_ref[...] = enc.astype(enc_ref.dtype)
    dec_ref[...] = dec.astype(dec_ref.dtype)


def init_params(key):
    """Deterministic init mimicking PyTorch nn.Linear default:
    U(-1/sqrt(fan_in), 1/sqrt(fan_in)).  Weights stored as (in, out), f32."""
    params = []
    dims = list(zip(ENC_DIMS[:-1], ENC_DIMS[1:])) + \
           list(zip(DEC_DIMS[:-1], DEC_DIMS[1:]))
    for (din, dout) in dims:
        key, kw, kb = jax.random.split(key, 3)
        bound = 1.0 / jnp.sqrt(jnp.float32(din))
        w = jax.random.uniform(kw, (din, dout), jnp.float32, -bound, bound)
        b = jax.random.uniform(kb, (1, dout), jnp.float32, -bound, bound)
        params += [w, b]
    return params


def _prepare_params(params):
    """Pad (exactly, with zeros) to lane-dense shapes and cast weights to bf16.
    Padding is mathematically a no-op: zero rows/cols contribute nothing and
    the padded enc/dec columns come out as exact zeros."""
    w1, b1, w2, b2, w3, b3, w4, b4, w5, b5, w6, b6 = params

    w1p = jnp.zeros((D_PAD, 512), jnp.float32).at[:D_IN, :].set(w1)
    w3p = jnp.zeros((256, Z_PAD), jnp.float32).at[:, :Z_DIM].set(w3)
    b3p = jnp.zeros((1, Z_PAD), jnp.float32).at[:, :Z_DIM].set(b3)
    w4p = jnp.zeros((Z_PAD, 256), jnp.float32).at[:Z_DIM, :].set(w4)
    w6p = jnp.zeros((512, D_PAD), jnp.float32).at[:, :D_IN].set(w6)
    b6p = jnp.zeros((1, D_PAD), jnp.float32).at[:, :D_IN].set(b6)

    ws = [w1p, w2, w3p, w4p, w5, w6p]
    bs = [b1, b2, b3p, b4, b5, b6p]

    packed = []
    for w, b in zip(ws, bs):
        packed += [w.astype(jnp.bfloat16), b.astype(jnp.float32)]
    return packed


def ae_forward(x, params, *, tm=256):
    """x: (B, 784) float32.  Returns (encoded (B,32), decoded (B,784)) f32."""
    B, D = x.shape
    assert D == D_IN

    # Pad batch to a multiple of tm and features 784 -> 896; cast to bf16.
    B_pad = ((B + tm - 1) // tm) * tm
    xp = jnp.zeros((B_pad, D_PAD), jnp.bfloat16)
    xp = xp.at[:B, :D_IN].set(x.astype(jnp.bfloat16))

    packed = _prepare_params(params)

    # Weights/biases: full-array (un-tiled) blocks, resident in VMEM.
    def full_spec(arr):
        return pl.BlockSpec(arr.shape, lambda i: (0, 0))

    in_specs = [pl.BlockSpec((tm, D_PAD), lambda i: (i, 0))] + \
               [full_spec(p) for p in packed]

    out_specs = (
        pl.BlockSpec((tm, Z_PAD), lambda i: (i, 0)),   # encoded (padded)
        pl.BlockSpec((tm, D_PAD), lambda i: (i, 0)),   # decoded (padded)
    )

    out_shape = (
        jax.ShapeDtypeStruct((B_pad, Z_PAD), jnp.float32),
        jax.ShapeDtypeStruct((B_pad, D_PAD), jnp.float32),
    )

    enc_p, dec_p = pl.pallas_call(
        ae_kernel,
        out_shape=out_shape,
        grid_spec=pltpu.PrefetchScalarGridSpec(
            num_scalar_prefetch=0,
            grid=(B_pad // tm,),
            in_specs=in_specs,
            out_specs=out_specs,
        ),
        compiler_params=pltpu.CompilerParams(
            dimension_semantics=("parallel",),
        ),
    )(xp, *packed)

    return enc_p[:B, :Z_DIM], dec_p[:B, :D_IN]


def ae_reference(x, params):
    """Pure-JAX reference with the SAME numerics as the kernel
    (bf16 operands, f32 accumulation, f32 bias/ReLU)."""
    w1, b1, w2, b2, w3, b3, w4, b4, w5, b5, w6, b6 = params

    def lin(h, w, b):
        return jnp.dot(h.astype(jnp.bfloat16), w.astype(jnp.bfloat16),
                       preferred_element_type=jnp.float32) + b

    h = jnp.maximum(lin(x, w1, b1), 0.0)
    h = jnp.maximum(lin(h, w2, b2), 0.0)
    enc = lin(h, w3, b3)
    h = jnp.maximum(lin(enc, w4, b4), 0.0)
    h = jnp.maximum(lin(h, w5, b5), 0.0)
    dec = lin(h, w6, b6)
    return enc, dec


if __name__ == "__main__":
    key = jax.random.PRNGKey(0)
    k_params, k_x = jax.random.split(key)

    params = init_params(k_params)

    # Small test: B=256 with tm=128 -> 2 grid steps (exercises the pipeline and
    # lets v7x shard the batch axis across both TensorCores).
    B, TM = 256, 128
    x = jax.random.normal(k_x, (B, D_IN), jnp.float32)

    enc, dec = ae_forward(x, params, tm=TM)
    jax.block_until_ready((enc, dec))

    enc_ref, dec_ref = ae_reference(x, params)
    assert enc.shape == (B, Z_DIM) and dec.shape == (B, D_IN)
    assert jnp.allclose(enc, enc_ref, atol=1e-2, rtol=1e-2), \
        float(jnp.max(jnp.abs(enc - enc_ref)))
    assert jnp.allclose(dec, dec_ref, atol=1e-2, rtol=1e-2), \
        float(jnp.max(jnp.abs(dec - dec_ref)))

    print("KERNEL_OK")
</pallas_src>

<mosaic_0001>
module attributes {stable_mosaic.version = 11 : i64} {
  func.func @ae_kernel(%arg0: i32, %arg1: memref<128x896xbf16, #tpu.memory_space<vmem>>, %arg2: memref<896x512xbf16, #tpu.memory_space<vmem>>, %arg3: memref<1x512xf32, #tpu.memory_space<vmem>>, %arg4: memref<512x256xbf16, #tpu.memory_space<vmem>>, %arg5: memref<1x256xf32, #tpu.memory_space<vmem>>, %arg6: memref<256x128xbf16, #tpu.memory_space<vmem>>, %arg7: memref<1x128xf32, #tpu.memory_space<vmem>>, %arg8: memref<128x256xbf16, #tpu.memory_space<vmem>>, %arg9: memref<1x256xf32, #tpu.memory_space<vmem>>, %arg10: memref<256x512xbf16, #tpu.memory_space<vmem>>, %arg11: memref<1x512xf32, #tpu.memory_space<vmem>>, %arg12: memref<512x896xbf16, #tpu.memory_space<vmem>>, %arg13: memref<1x896xf32, #tpu.memory_space<vmem>>, %arg14: memref<128x128xf32, #tpu.memory_space<vmem>>, %arg15: memref<128x896xf32, #tpu.memory_space<vmem>>) attributes {dimension_semantics = [#tpu.dimension_semantics<parallel>], iteration_bounds = array<i64: 2>, scalar_prefetch = 0 : i64, scratch_operands = 0 : i64, tpu.core_type = #tpu.core_type<tc>, window_params = [{transform_indices = @transform_0, window_bounds = array<i64: 128, 896>}, {pipeline_mode = #tpu.pipeline_mode<synchronous>, transform_indices = @transform_1, window_bounds = array<i64: 896, 512>}, {pipeline_mode = #tpu.pipeline_mode<synchronous>, transform_indices = @transform_2, window_bounds = array<i64: 1, 512>}, {pipeline_mode = #tpu.pipeline_mode<synchronous>, transform_indices = @transform_3, window_bounds = array<i64: 512, 256>}, {pipeline_mode = #tpu.pipeline_mode<synchronous>, transform_indices = @transform_4, window_bounds = array<i64: 1, 256>}, {pipeline_mode = #tpu.pipeline_mode<synchronous>, transform_indices = @transform_5, window_bounds = array<i64: 256, 128>}, {pipeline_mode = #tpu.pipeline_mode<synchronous>, transform_indices = @transform_6, window_bounds = array<i64: 1, 128>}, {pipeline_mode = #tpu.pipeline_mode<synchronous>, transform_indices = @transform_7, window_bounds = array<i64: 128, 256>}, {pipeline_mode = #tpu.pipeline_mode<synchronous>, transform_indices = @transform_8, window_bounds = array<i64: 1, 256>}, {pipeline_mode = #tpu.pipeline_mode<synchronous>, transform_indices = @transform_9, window_bounds = array<i64: 256, 512>}, {pipeline_mode = #tpu.pipeline_mode<synchronous>, transform_indices = @transform_10, window_bounds = array<i64: 1, 512>}, {pipeline_mode = #tpu.pipeline_mode<synchronous>, transform_indices = @transform_11, window_bounds = array<i64: 512, 896>}, {pipeline_mode = #tpu.pipeline_mode<synchronous>, transform_indices = @transform_12, window_bounds = array<i64: 1, 896>}, {transform_indices = @transform_13, window_bounds = array<i64: 128, 128>}, {transform_indices = @transform_14, window_bounds = array<i64: 128, 896>}]} {
    %c0 = arith.constant 0 : index
    %c0_0 = arith.constant 0 : index
    %0 = vector.load %arg1[%c0, %c0_0] : memref<128x896xbf16, #tpu.memory_space<vmem>>, vector<128x896xbf16>
    %c0_1 = arith.constant 0 : index
    %c0_2 = arith.constant 0 : index
    %1 = vector.load %arg2[%c0_1, %c0_2] : memref<896x512xbf16, #tpu.memory_space<vmem>>, vector<896x512xbf16>
    %cst = arith.constant dense<0.000000e+00> : vector<128x512xf32>
    %2 = tpu.matmul %0, %1, %cst {dimension_numbers = #tpu.dot_dimension_numbers<[1], [0], [0], [1], [0, 0, 1, 1], [], []>} : vector<128x896xbf16>, vector<896x512xbf16>, vector<128x512xf32> -> vector<128x512xf32>
    %c0_3 = arith.constant 0 : index
    %c0_4 = arith.constant 0 : index
    %3 = vector.load %arg3[%c0_3, %c0_4] : memref<1x512xf32, #tpu.memory_space<vmem>>, vector<1x512xf32>
    %4 = vector.broadcast %3 : vector<1x512xf32> to vector<128x512xf32>
    %5 = arith.addf %2, %4 : vector<128x512xf32>
    %cst_5 = arith.constant 0.000000e+00 : f32
    %6 = vector.broadcast %cst_5 : f32 to vector<128x512xf32>
    %7 = arith.maximumf %5, %6 : vector<128x512xf32>
    %8 = arith.truncf %7 : vector<128x512xf32> to vector<128x512xbf16>
    %c0_6 = arith.constant 0 : index
    %c0_7 = arith.constant 0 : index
    %9 = vector.load %arg4[%c0_6, %c0_7] : memref<512x256xbf16, #tpu.memory_space<vmem>>, vector<512x256xbf16>
    %cst_8 = arith.constant dense<0.000000e+00> : vector<128x256xf32>
    %10 = tpu.matmul %8, %9, %cst_8 {dimension_numbers = #tpu.dot_dimension_numbers<[1], [0], [0], [1], [0, 0, 1, 1], [], []>} : vector<128x512xbf16>, vector<512x256xbf16>, vector<128x256xf32> -> vector<128x256xf32>
    %c0_9 = arith.constant 0 : index
    %c0_10 = arith.constant 0 : index
    %11 = vector.load %arg5[%c0_9, %c0_10] : memref<1x256xf32, #tpu.memory_space<vmem>>, vector<1x256xf32>
    %12 = vector.broadcast %11 : vector<1x256xf32> to vector<128x256xf32>
    %13 = arith.addf %10, %12 : vector<128x256xf32>
    %cst_11 = arith.constant 0.000000e+00 : f32
    %14 = vector.broadcast %cst_11 : f32 to vector<128x256xf32>
    %15 = arith.maximumf %13, %14 : vector<128x256xf32>
    %16 = arith.truncf %15 : vector<128x256xf32> to vector<128x256xbf16>
    %c0_12 = arith.constant 0 : index
    %c0_13 = arith.constant 0 : index
    %17 = vector.load %arg6[%c0_12, %c0_13] : memref<256x128xbf16, #tpu.memory_space<vmem>>, vector<256x128xbf16>
    %cst_14 = arith.constant dense<0.000000e+00> : vector<128x128xf32>
    %18 = tpu.matmul %16, %17, %cst_14 {dimension_numbers = #tpu.dot_dimension_numbers<[1], [0], [0], [1], [0, 0, 1, 1], [], []>} : vector<128x256xbf16>, vector<256x128xbf16>, vector<128x128xf32> -> vector<128x128xf32>
    %c0_15 = arith.constant 0 : index
    %c0_16 = arith.constant 0 : index
    %19 = vector.load %arg7[%c0_15, %c0_16] : memref<1x128xf32, #tpu.memory_space<vmem>>, vector<1x128xf32>
    %20 = vector.broadcast %19 : vector<1x128xf32> to vector<128x128xf32>
    %21 = arith.addf %18, %20 : vector<128x128xf32>
    %22 = arith.truncf %21 : vector<128x128xf32> to vector<128x128xbf16>
    %c0_17 = arith.constant 0 : index
    %c0_18 = arith.constant 0 : index
    %23 = vector.load %arg8[%c0_17, %c0_18] : memref<128x256xbf16, #tpu.memory_space<vmem>>, vector<128x256xbf16>
    %cst_19 = arith.constant dense<0.000000e+00> : vector<128x256xf32>
    %24 = tpu.matmul %22, %23, %cst_19 {dimension_numbers = #tpu.dot_dimension_numbers<[1], [0], [0], [1], [0, 0, 1, 1], [], []>} : vector<128x128xbf16>, vector<128x256xbf16>, vector<128x256xf32> -> vector<128x256xf32>
    %c0_20 = arith.constant 0 : index
    %c0_21 = arith.constant 0 : index
    %25 = vector.load %arg9[%c0_20, %c0_21] : memref<1x256xf32, #tpu.memory_space<vmem>>, vector<1x256xf32>
    %26 = vector.broadcast %25 : vector<1x256xf32> to vector<128x256xf32>
    %27 = arith.addf %24, %26 : vector<128x256xf32>
    %cst_22 = arith.constant 0.000000e+00 : f32
    %28 = vector.broadcast %cst_22 : f32 to vector<128x256xf32>
    %29 = arith.maximumf %27, %28 : vector<128x256xf32>
    %30 = arith.truncf %29 : vector<128x256xf32> to vector<128x256xbf16>
    %c0_23 = arith.constant 0 : index
    %c0_24 = arith.constant 0 : index
    %31 = vector.load %arg10[%c0_23, %c0_24] : memref<256x512xbf16, #tpu.memory_space<vmem>>, vector<256x512xbf16>
    %cst_25 = arith.constant dense<0.000000e+00> : vector<128x512xf32>
    %32 = tpu.matmul %30, %31, %cst_25 {dimension_numbers = #tpu.dot_dimension_numbers<[1], [0], [0], [1], [0, 0, 1, 1], [], []>} : vector<128x256xbf16>, vector<256x512xbf16>, vector<128x512xf32> -> vector<128x512xf32>
    %c0_26 = arith.constant 0 : index
    %c0_27 = arith.constant 0 : index
    %33 = vector.load %arg11[%c0_26, %c0_27] : memref<1x512xf32, #tpu.memory_space<vmem>>, vector<1x512xf32>
    %34 = vector.broadcast %33 : vector<1x512xf32> to vector<128x512xf32>
    %35 = arith.addf %32, %34 : vector<128x512xf32>
    %cst_28 = arith.constant 0.000000e+00 : f32
    %36 = vector.broadcast %cst_28 : f32 to vector<128x512xf32>
    %37 = arith.maximumf %35, %36 : vector<128x512xf32>
    %38 = arith.truncf %37 : vector<128x512xf32> to vector<128x512xbf16>
    %c0_29 = arith.constant 0 : index
    %c0_30 = arith.constant 0 : index
    %39 = vector.load %arg12[%c0_29, %c0_30] : memref<512x896xbf16, #tpu.memory_space<vmem>>, vector<512x896xbf16>
    %cst_31 = arith.constant dense<0.000000e+00> : vector<128x896xf32>
    %40 = tpu.matmul %38, %39, %cst_31 {dimension_numbers = #tpu.dot_dimension_numbers<[1], [0], [0], [1], [0, 0, 1, 1], [], []>} : vector<128x512xbf16>, vector<512x896xbf16>, vector<128x896xf32> -> vector<128x896xf32>
    %c0_32 = arith.constant 0 : index
    %c0_33 = arith.constant 0 : index
    %41 = vector.load %arg13[%c0_32, %c0_33] : memref<1x896xf32, #tpu.memory_space<vmem>>, vector<1x896xf32>
    %42 = vector.broadcast %41 : vector<1x896xf32> to vector<128x896xf32>
    %43 = arith.addf %40, %42 : vector<128x896xf32>
    %c0_34 = arith.constant 0 : index
    %c0_35 = arith.constant 0 : index
    %44 = vector.load %arg14[%c0_34, %c0_35] : memref<128x128xf32, #tpu.memory_space<vmem>>, vector<128x128xf32>
    tpu.vector_store %arg14[%c0_34, %c0_35], %21 {strides = array<i32>} : memref<128x128xf32, #tpu.memory_space<vmem>>, vector<128x128xf32>,
    %c0_36 = arith.constant 0 : index
    %c0_37 = arith.constant 0 : index
    %45 = vector.load %arg15[%c0_36, %c0_37] : memref<128x896xf32, #tpu.memory_space<vmem>>, vector<128x896xf32>
    tpu.vector_store %arg15[%c0_36, %c0_37], %43 {strides = array<i32>} : memref<128x896xf32, #tpu.memory_space<vmem>>, vector<128x896xf32>,
    return
  }
  func.func @transform_0(%arg0: i32) -> (i32, i32) {
    %c0_i32 = arith.constant 0 : i32
    %c0_i32_0 = arith.constant 0 : i32
    return %arg0, %c0_i32 : i32, i32
  }
  func.func @transform_1(%arg0: i32) -> (i32, i32) {
    %c0_i32 = arith.constant 0 : i32
    %c0_i32_0 = arith.constant 0 : i32
    %c0_i32_1 = arith.constant 0 : i32
    return %c0_i32, %c0_i32_0 : i32, i32
  }
  func.func @transform_2(%arg0: i32) -> (i32, i32) {
    %c0_i32 = arith.constant 0 : i32
    %c0_i32_0 = arith.constant 0 : i32
    %c0_i32_1 = arith.constant 0 : i32
    return %c0_i32, %c0_i32_0 : i32, i32
  }
  func.func @transform_3(%arg0: i32) -> (i32, i32) {
    %c0_i32 = arith.constant 0 : i32
    %c0_i32_0 = arith.constant 0 : i32
    %c0_i32_1 = arith.constant 0 : i32
    return %c0_i32, %c0_i32_0 : i32, i32
  }
  func.func @transform_4(%arg0: i32) -> (i32, i32) {
    %c0_i32 = arith.constant 0 : i32
    %c0_i32_0 = arith.constant 0 : i32
    %c0_i32_1 = arith.constant 0 : i32
    return %c0_i32, %c0_i32_0 : i32, i32
  }
  func.func @transform_5(%arg0: i32) -> (i32, i32) {
    %c0_i32 = arith.constant 0 : i32
    %c0_i32_0 = arith.constant 0 : i32
    %c0_i32_1 = arith.constant 0 : i32
    return %c0_i32, %c0_i32_0 : i32, i32
  }
  func.func @transform_6(%arg0: i32) -> (i32, i32) {
    %c0_i32 = arith.constant 0 : i32
    %c0_i32_0 = arith.constant 0 : i32
    %c0_i32_1 = arith.constant 0 : i32
    return %c0_i32, %c0_i32_0 : i32, i32
  }
  func.func @transform_7(%arg0: i32) -> (i32, i32) {
    %c0_i32 = arith.constant 0 : i32
    %c0_i32_0 = arith.constant 0 : i32
    %c0_i32_1 = arith.constant 0 : i32
    return %c0_i32, %c0_i32_0 : i32, i32
  }
  func.func @transform_8(%arg0: i32) -> (i32, i32) {
    %c0_i32 = arith.constant 0 : i32
    %c0_i32_0 = arith.constant 0 : i32
    %c0_i32_1 = arith.constant 0 : i32
    return %c0_i32, %c0_i32_0 : i32, i32
  }
  func.func @transform_9(%arg0: i32) -> (i32, i32) {
    %c0_i32 = arith.constant 0 : i32
    %c0_i32_0 = arith.constant 0 : i32
    %c0_i32_1 = arith.constant 0 : i32
    return %c0_i32, %c0_i32_0 : i32, i32
  }
  func.func @transform_10(%arg0: i32) -> (i32, i32) {
    %c0_i32 = arith.constant 0 : i32
    %c0_i32_0 = arith.constant 0 : i32
    %c0_i32_1 = arith.constant 0 : i32
    return %c0_i32, %c0_i32_0 : i32, i32
  }
  func.func @transform_11(%arg0: i32) -> (i32, i32) {
    %c0_i32 = arith.constant 0 : i32
    %c0_i32_0 = arith.constant 0 : i32
    %c0_i32_1 = arith.constant 0 : i32
    return %c0_i32, %c0_i32_0 : i32, i32
  }
  func.func @transform_12(%arg0: i32) -> (i32, i32) {
    %c0_i32 = arith.constant 0 : i32
    %c0_i32_0 = arith.constant 0 : i32
    %c0_i32_1 = arith.constant 0 : i32
    return %c0_i32, %c0_i32_0 : i32, i32
  }
  func.func @transform_13(%arg0: i32) -> (i32, i32) {
    %c0_i32 = arith.constant 0 : i32
    %c0_i32_0 = arith.constant 0 : i32
    return %arg0, %c0_i32 : i32, i32
  }
  func.func @transform_14(%arg0: i32) -> (i32, i32) {
    %c0_i32 = arith.constant 0 : i32
    %c0_i32_0 = arith.constant 0 : i32
    return %arg0, %c0_i32 : i32, i32
  }
}

</mosaic_0001>

<llo_original>
// kernel: tpu_custom_call.1
$region0: #{tpu_custom_call.1}
  #allocation0 [shape = 'u32[]', space=smem, size = 0x4, offset = 0x4, fixed_abs, tag = 'smem constant byte address 0x4 - core index']
  #allocation1 [shape = 'u32[144,128]{1,0:T(1,128)}', space=vmem, size = 0x12000, scoped, tag = 'internal scratch']
  %s0 = inlined_call_operand.hbm [shape: bf16[256,896], index: 0, kind: input, shape index: {}]
  %s1 = inlined_call_operand.hbm [shape: bf16[896,512], index: 1, kind: input, shape index: {}]
  %s2 = inlined_call_operand.vmem [shape: f32[1,512], index: 2, kind: input, shape index: {}]
  %s3 = inlined_call_operand.hbm [shape: bf16[512,256], index: 3, kind: input, shape index: {}]
  %s4 = inlined_call_operand.hbm [shape: f32[1,256], index: 4, kind: input, shape index: {}]
  %s5 = inlined_call_operand.hbm [shape: bf16[256,128], index: 5, kind: input, shape index: {}]
  %s6 = inlined_call_operand.vmem [shape: f32[1,128], index: 6, kind: input, shape index: {}]
  %s7 = inlined_call_operand.hbm [shape: bf16[128,256], index: 7, kind: input, shape index: {}]
  %s8 = inlined_call_operand.vmem [shape: f32[1,256], index: 8, kind: input, shape index: {}]
  %s9 = inlined_call_operand.hbm [shape: bf16[256,512], index: 9, kind: input, shape index: {}]
  %s10 = inlined_call_operand.vmem [shape: f32[1,512], index: 10, kind: input, shape index: {}]
  %s11 = inlined_call_operand.hbm [shape: bf16[512,896], index: 11, kind: input, shape index: {}]
  %s12 = inlined_call_operand.vmem [shape: f32[1,896], index: 12, kind: input, shape index: {}]
  %s13 = inlined_call_operand.hbm [shape: f32[256,128], index: 13, kind: output, shape index: {0}]
  %s14 = inlined_call_operand.hbm [shape: f32[256,896], index: 14, kind: output, shape index: {1}]
  %15 = xla_tuple %s13, %s14
  %s16 = sld [smem:[#allocation0]]
  $region125: #{tpu_custom_call.1} parent=0
    _
  %s18 = ssub.s32 1, %s16
  %s19 = scalar_select 0, %s18, %s16
  $region1: #{tpu_custom_call.1} parent=0
    #allocation2 [shape = 'u8[458752]{0}', space=vmem, size = 0x70000, scoped, tag = 'input window, operand 0']
    #allocation3 [shape = 's32[2]{0}', space=sflag, size = 0x8, scoped, tag = 'scoped memory for tpu_custom_call.1']
    #allocation4 [shape = 's32[2]{0}', space=sflag, size = 0x8, scoped, tag = 'scoped memory for tpu_custom_call.1']
    #allocation5 [shape = 'u8[917504]{0}', space=vmem, size = 0xe0000, scoped, tag = 'input window, operand 1, single buffered']
    #allocation6 [shape = 's32[1]{0}', space=sflag, size = 0x4, scoped, tag = 'scoped memory for tpu_custom_call.1']
    #allocation7 [shape = 'u8[262144]{0}', space=vmem, size = 0x40000, scoped, tag = 'input window, operand 3, single buffered']
    #allocation8 [shape = 'u8[1024]{0}', space=vmem, size = 0x400, scoped, tag = 'input window, operand 4, single buffered']
    #allocation9 [shape = 's32[1]{0}', space=sflag, size = 0x4, scoped, tag = 'scoped memory for tpu_custom_call.1']
    #allocation10 [shape = 'u8[65536]{0}', space=vmem, size = 0x10000, scoped, tag = 'input window, operand 5, single buffered']
    #allocation11 [shape = 'u8[65536]{0}', space=vmem, size = 0x10000, scoped, tag = 'input window, operand 7, single buffered']
    #allocation12 [shape = 's32[1]{0}', space=sflag, size = 0x4, scoped, tag = 'scoped memory for tpu_custom_call.1']
    #allocation13 [shape = 'u8[262144]{0}', space=vmem, size = 0x40000, scoped, tag = 'input window, operand 9, single buffered']
    #allocation14 [shape = 'u8[917504]{0}', space=vmem, size = 0xe0000, scoped, tag = 'input window, operand 11, single buffered']
    #allocation15 [shape = 's32[1]{0}', space=sflag, size = 0x4, scoped, tag = 'scoped memory for tpu_custom_call.1']
    #allocation16 [shape = 'u8[131072]{0}', space=vmem, size = 0x20000, scoped, tag = 'output window, operand 0']
    #allocation17 [shape = 'u8[917504]{0}', space=vmem, size = 0xe0000, scoped, tag = 'output window, operand 1']
    #allocation18 [shape = 's32[2]{0}', space=sflag, size = 0x8, scoped, tag = 'scoped memory for tpu_custom_call.1']
    %20 = vsyncpa [#allocation3], 0
    %s21 = scalar_lea.sflag [#allocation3], 1
    %22 = vsyncpa %s21, 0
    %23 = vsyncpa [#allocation6], 0
    %24 = vsyncpa [#allocation9], 0
    %25 = vsyncpa [#allocation12], 0
    %26 = vsyncpa [#allocation15], 0
    %27 = vsyncpa [#allocation4], 0
    %s28 = scalar_lea.sflag [#allocation4], 1
    %29 = vsyncpa %s28, 0
    %30 = vsyncpa [#allocation18], 0
    %s31 = scalar_lea.sflag [#allocation18], 1
    %32 = vsyncpa %s31, 0
    loop: start=0, step=1, limit=4
    $region2: #{tpu_custom_call.1} parent=1 // loop_pre_header
      _
    $region3: #{tpu_custom_call.1} parent=1 // loop_header
      %s34 = sphi 0, %s38
      %p35 = scmp.ge.s32.totalorder %s34, 4
      %s44 = sphi 0, %s46
      %s47 = sphi 0, %s44
      %s48 = sphi 0, %s47
      %s64 = sphi 0, %s48
      %s68 = sphi 0, %s68
      %s70 = sphi 0, %s68
      %s71 = sphi 0, %s70
      %s85 = sphi 0, %s71
      %s89 = sphi 0, %s89
      %s91 = sphi 0, %s89
      %s92 = sphi 0, %s91
      %s106 = sphi 0, %s92
      %s110 = sphi 0, %s110
      %s112 = sphi 0, %s110
      %s113 = sphi 0, %s112
      %s127 = sphi 0, %s113
      %s131 = sphi 0, %s131
      %s133 = sphi 0, %s131
      %s134 = sphi 0, %s133
      %s148 = sphi 0, %s134
      %s152 = sphi 0, %s152
      %s154 = sphi 0, %s152
      %s155 = sphi 0, %s154
      %s169 = sphi 0, %s155
      %s173 = sphi 0, %s173
      %s175 = sphi 0, %s173
      %s176 = sphi 0, %s175
      %s190 = sphi 0, %s176
      %s194 = sphi 0, %s194
      %s196 = sphi 0, %s194
      %s197 = sphi 0, %s196
      %s211 = sphi 0, %s197
      %s215 = sphi 0, %s215
      %s217 = sphi 0, %s215
      %s218 = sphi 0, %s217
      %s232 = sphi 0, %s218
      %s236 = sphi 0, %s236
      %s238 = sphi 0, %s236
      %s239 = sphi 0, %s238
      %s253 = sphi 0, %s239
      %s257 = sphi 0, %s257
      %s259 = sphi 0, %s257
      %s260 = sphi 0, %s259
      %s274 = sphi 0, %s260
      %s278 = sphi 0, %s278
      %s280 = sphi 0, %s278
      %s281 = sphi 0, %s280
      %s295 = sphi 0, %s281
      %s299 = sphi 0, %s299
      %s301 = sphi 0, %s299
      %s302 = sphi 0, %s301
      %s316 = sphi 0, %s302
      %s322 = sphi 0, %s324
      %s325 = sphi 0, %s322
      %s326 = sphi 0, %s325
      %s342 = sphi 0, %s326
      %s348 = sphi 0, %s350
      %s351 = sphi 0, %s348
      %s352 = sphi 0, %s351
      %s368 = sphi 0, %s352
    $region4: #{tpu_custom_call.1} parent=1 // loop_header_branch
      %37 = sbr.rel (%p35) target = $region8
    $region5: #{tpu_custom_call.1} parent=1 // loop_body
      %s39 = ssub.s32 %s34, 1
      %s40 = ssub.s32 %s34, 2
      %s41 = sadd.s32 %s34, 1
      %s42 = ssub.s32 %s34, %s41
      %p43 = scmp.eq.s32.totalorder %s42, 0
      %s45 = sadd.s32 %s44, 1
      %s46 = scalar_select %p43, %s44, %s45
      %p49 = pneg %p43
      %p50 = scmp.eq.s32.totalorder %s34, 1
      %p51 = por %p49, %p50
      %p52 = scmp.ne.s32.totalorder %s44, %s47
      %p53 = scmp.eq.s32.totalorder %s34, 0
      %p54 = por %p52, %p53
      %p55 = scmp.ne.s32.totalorder %s44, %s47
      %p56 = scmp.eq.s32.totalorder %s39, 1
      %p57 = por %p55, %p56
      %p58 = scmp.ne.s32.totalorder %s47, %s48
      %p59 = scmp.eq.s32.totalorder %s39, 0
      %p60 = por %p58, %p59
      %p61 = scmp.ne.s32.totalorder %s47, %s48
      %p62 = scmp.eq.s32.totalorder %s40, 1
      %p63 = por %p61, %p62
      %p65 = scmp.ne.s32.totalorder %s48, %s64
      %p66 = scmp.eq.s32.totalorder %s40, 0
      %p67 = por %p65, %p66
      %s69 = sadd.s32 %s68, 1
      %p72 = scmp.eq.s32.totalorder %s34, 1
      %p73 = scmp.ne.s32.totalorder %s68, %s70
      %p74 = scmp.eq.s32.totalorder %s34, 0
      %p75 = por %p73, %p74
      %p76 = scmp.ne.s32.totalorder %s68, %s70
      %p77 = scmp.eq.s32.totalorder %s39, 1
      %p78 = por %p76, %p77
      %p79 = scmp.ne.s32.totalorder %s70, %s71
      %p80 = scmp.eq.s32.totalorder %s39, 0
      %p81 = por %p79, %p80
      %p82 = scmp.ne.s32.totalorder %s70, %s71
      %p83 = scmp.eq.s32.totalorder %s40, 1
      %p84 = por %p82, %p83
      %p86 = scmp.ne.s32.totalorder %s71, %s85
      %p87 = scmp.eq.s32.totalorder %s40, 0
      %p88 = por %p86, %p87
      %s90 = sadd.s32 %s89, 1
      %p93 = scmp.eq.s32.totalorder %s34, 1
      %p94 = scmp.ne.s32.totalorder %s89, %s91
      %p95 = scmp.eq.s32.totalorder %s34, 0
      %p96 = por %p94, %p95
      %p97 = scmp.ne.s32.totalorder %s89, %s91
      %p98 = scmp.eq.s32.totalorder %s39, 1
      %p99 = por %p97, %p98
      %p100 = scmp.ne.s32.totalorder %s91, %s92
      %p101 = scmp.eq.s32.totalorder %s39, 0
      %p102 = por %p100, %p101
      %p103 = scmp.ne.s32.totalorder %s91, %s92
      %p104 = scmp.eq.s32.totalorder %s40, 1
      %p105 = por %p103, %p104
      %p107 = scmp.ne.s32.totalorder %s92, %s106
      %p108 = scmp.eq.s32.totalorder %s40, 0
      %p109 = por %p107, %p108
      %s111 = sadd.s32 %s110, 1
      %p114 = scmp.eq.s32.totalorder %s34, 1
      %p115 = scmp.ne.s32.totalorder %s110, %s112
      %p116 = scmp.eq.s32.totalorder %s34, 0
      %p117 = por %p115, %p116
      %p118 = scmp.ne.s32.totalorder %s110, %s112
      %p119 = scmp.eq.s32.totalorder %s39, 1
      %p120 = por %p118, %p119
      %p121 = scmp.ne.s32.totalorder %s112, %s113
      %p122 = scmp.eq.s32.totalorder %s39, 0
      %p123 = por %p121, %p122
      %p124 = scmp.ne.s32.totalorder %s112, %s113
      %p125 = scmp.eq.s32.totalorder %s40, 1
      %p126 = por %p124, %p125
      %p128 = scmp.ne.s32.totalorder %s113, %s127
      %p129 = scmp.eq.s32.totalorder %s40, 0
      %p130 = por %p128, %p129
      %s132 = sadd.s32 %s131, 1
      %p135 = scmp.eq.s32.totalorder %s34, 1
      %p136 = scmp.ne.s32.totalorder %s131, %s133
      %p137 = scmp.eq.s32.totalorder %s34, 0
      %p138 = por %p136, %p137
      %p139 = scmp.ne.s32.totalorder %s131, %s133
      %p140 = scmp.eq.s32.totalorder %s39, 1
      %p141 = por %p139, %p140
      %p142 = scmp.ne.s32.totalorder %s133, %s134
      %p143 = scmp.eq.s32.totalorder %s39, 0
      %p144 = por %p142, %p143
      %p145 = scmp.ne.s32.totalorder %s133, %s134
      %p146 = scmp.eq.s32.totalorder %s40, 1
      %p147 = por %p145, %p146
      %p149 = scmp.ne.s32.totalorder %s134, %s148
      %p150 = scmp.eq.s32.totalorder %s40, 0
      %p151 = por %p149, %p150
      %s153 = sadd.s32 %s152, 1
      %p156 = scmp.eq.s32.totalorder %s34, 1
      %p157 = scmp.ne.s32.totalorder %s152, %s154
      %p158 = scmp.eq.s32.totalorder %s34, 0
      %p159 = por %p157, %p158
      %p160 = scmp.ne.s32.totalorder %s152, %s154
      %p161 = scmp.eq.s32.totalorder %s39, 1
      %p162 = por %p160, %p161
      %p163 = scmp.ne.s32.totalorder %s154, %s155
      %p164 = scmp.eq.s32.totalorder %s39, 0
      %p165 = por %p163, %p164
      %p166 = scmp.ne.s32.totalorder %s154, %s155
      %p167 = scmp.eq.s32.totalorder %s40, 1
      %p168 = por %p166, %p167
      %p170 = scmp.ne.s32.totalorder %s155, %s169
      %p171 = scmp.eq.s32.totalorder %s40, 0
      %p172 = por %p170, %p171
      %s174 = sadd.s32 %s173, 1
      %p177 = scmp.eq.s32.totalorder %s34, 1
      %p178 = scmp.ne.s32.totalorder %s173, %s175
      %p179 = scmp.eq.s32.totalorder %s34, 0
      %p180 = por %p178, %p179
      %p181 = scmp.ne.s32.totalorder %s173, %s175
      %p182 = scmp.eq.s32.totalorder %s39, 1
      %p183 = por %p181, %p182
      %p184 = scmp.ne.s32.totalorder %s175, %s176
      %p185 = scmp.eq.s32.totalorder %s39, 0
      %p186 = por %p184, %p185
      %p187 = scmp.ne.s32.totalorder %s175, %s176
      %p188 = scmp.eq.s32.totalorder %s40, 1
      %p189 = por %p187, %p188
      %p191 = scmp.ne.s32.totalorder %s176, %s190
      %p192 = scmp.eq.s32.totalorder %s40, 0
      %p193 = por %p191, %p192
      %s195 = sadd.s32 %s194, 1
      %p198 = scmp.eq.s32.totalorder %s34, 1
      %p199 = scmp.ne.s32.totalorder %s194, %s196
      %p200 = scmp.eq.s32.totalorder %s34, 0
      %p201 = por %p199, %p200
      %p202 = scmp.ne.s32.totalorder %s194, %s196
      %p203 = scmp.eq.s32.totalorder %s39, 1
      %p204 = por %p202, %p203
      %p205 = scmp.ne.s32.totalorder %s196, %s197
      %p206 = scmp.eq.s32.totalorder %s39, 0
      %p207 = por %p205, %p206
      %p208 = scmp.ne.s32.totalorder %s196, %s197
      %p209 = scmp.eq.s32.totalorder %s40, 1
      %p210 = por %p208, %p209
      %p212 = scmp.ne.s32.totalorder %s197, %s211
      %p213 = scmp.eq.s32.totalorder %s40, 0
      %p214 = por %p212, %p213
      %s216 = sadd.s32 %s215, 1
      %p219 = scmp.eq.s32.totalorder %s34, 1
      %p220 = scmp.ne.s32.totalorder %s215, %s217
      %p221 = scmp.eq.s32.totalorder %s34, 0
      %p222 = por %p220, %p221
      %p223 = scmp.ne.s32.totalorder %s215, %s217
      %p224 = scmp.eq.s32.totalorder %s39, 1
      %p225 = por %p223, %p224
      %p226 = scmp.ne.s32.totalorder %s217, %s218
      %p227 = scmp.eq.s32.totalorder %s39, 0
      %p228 = por %p226, %p227
      %p229 = scmp.ne.s32.totalorder %s217, %s218
      %p230 = scmp.eq.s32.totalorder %s40, 1
      %p231 = por %p229, %p230
      %p233 = scmp.ne.s32.totalorder %s218, %s232
      %p234 = scmp.eq.s32.totalorder %s40, 0
      %p235 = por %p233, %p234
      %s237 = sadd.s32 %s236, 1
      %p240 = scmp.eq.s32.totalorder %s34, 1
      %p241 = scmp.ne.s32.totalorder %s236, %s238
      %p242 = scmp.eq.s32.totalorder %s34, 0
      %p243 = por %p241, %p242
      %p244 = scmp.ne.s32.totalorder %s236, %s238
      %p245 = scmp.eq.s32.totalorder %s39, 1
      %p246 = por %p244, %p245
      %p247 = scmp.ne.s32.totalorder %s238, %s239
      %p248 = scmp.eq.s32.totalorder %s39, 0
      %p249 = por %p247, %p248
      %p250 = scmp.ne.s32.totalorder %s238, %s239
      %p251 = scmp.eq.s32.totalorder %s40, 1
      %p252 = por %p250, %p251
      %p254 = scmp.ne.s32.totalorder %s239, %s253
      %p255 = scmp.eq.s32.totalorder %s40, 0
      %p256 = por %p254, %p255
      %s258 = sadd.s32 %s257, 1
      %p261 = scmp.eq.s32.totalorder %s34, 1
      %p262 = scmp.ne.s32.totalorder %s257, %s259
      %p263 = scmp.eq.s32.totalorder %s34, 0
      %p264 = por %p262, %p263
      %p265 = scmp.ne.s32.totalorder %s257, %s259
      %p266 = scmp.eq.s32.totalorder %s39, 1
      %p267 = por %p265, %p266
      %p268 = scmp.ne.s32.totalorder %s259, %s260
      %p269 = scmp.eq.s32.totalorder %s39, 0
      %p270 = por %p268, %p269
      %p271 = scmp.ne.s32.totalorder %s259, %s260
      %p272 = scmp.eq.s32.totalorder %s40, 1
      %p273 = por %p271, %p272
      %p275 = scmp.ne.s32.totalorder %s260, %s274
      %p276 = scmp.eq.s32.totalorder %s40, 0
      %p277 = por %p275, %p276
      %s279 = sadd.s32 %s278, 1
      %p282 = scmp.eq.s32.totalorder %s34, 1
      %p283 = scmp.ne.s32.totalorder %s278, %s280
      %p284 = scmp.eq.s32.totalorder %s34, 0
      %p285 = por %p283, %p284
      %p286 = scmp.ne.s32.totalorder %s278, %s280
      %p287 = scmp.eq.s32.totalorder %s39, 1
      %p288 = por %p286, %p287
      %p289 = scmp.ne.s32.totalorder %s280, %s281
      %p290 = scmp.eq.s32.totalorder %s39, 0
      %p291 = por %p289, %p290
      %p292 = scmp.ne.s32.totalorder %s280, %s281
      %p293 = scmp.eq.s32.totalorder %s40, 1
      %p294 = por %p292, %p293
      %p296 = scmp.ne.s32.totalorder %s281, %s295
      %p297 = scmp.eq.s32.totalorder %s40, 0
      %p298 = por %p296, %p297
      %s300 = sadd.s32 %s299, 1
      %p303 = scmp.eq.s32.totalorder %s34, 1
      %p304 = scmp.ne.s32.totalorder %s299, %s301
      %p305 = scmp.eq.s32.totalorder %s34, 0
      %p306 = por %p304, %p305
      %p307 = scmp.ne.s32.totalorder %s299, %s301
      %p308 = scmp.eq.s32.totalorder %s39, 1
      %p309 = por %p307, %p308
      %p310 = scmp.ne.s32.totalorder %s301, %s302
      %p311 = scmp.eq.s32.totalorder %s39, 0
      %p312 = por %p310, %p311
      %p313 = scmp.ne.s32.totalorder %s301, %s302
      %p314 = scmp.eq.s32.totalorder %s40, 1
      %p315 = por %p313, %p314
      %p317 = scmp.ne.s32.totalorder %s302, %s316
      %p318 = scmp.eq.s32.totalorder %s40, 0
      %p319 = por %p317, %p318
      %s320 = ssub.s32 %s34, %s41
      %p321 = scmp.eq.s32.totalorder %s320, 0
      %s323 = sadd.s32 %s322, 1
      %s324 = scalar_select %p321, %s322, %s323
      %p327 = pneg %p321
      %p328 = scmp.eq.s32.totalorder %s34, 1
      %p329 = por %p327, %p328
      %p330 = scmp.ne.s32.totalorder %s322, %s325
      %p331 = scmp.eq.s32.totalorder %s34, 0
      %p332 = por %p330, %p331
      %p333 = scmp.ne.s32.totalorder %s322, %s325
      %p334 = scmp.eq.s32.totalorder %s39, 1
      %p335 = por %p333, %p334
      %p336 = scmp.ne.s32.totalorder %s325, %s326
      %p337 = scmp.eq.s32.totalorder %s39, 0
      %p338 = por %p336, %p337
      %p339 = scmp.ne.s32.totalorder %s325, %s326
      %p340 = scmp.eq.s32.totalorder %s40, 1
      %p341 = por %p339, %p340
      %p343 = scmp.ne.s32.totalorder %s326, %s342
      %p344 = scmp.eq.s32.totalorder %s40, 0
      %p345 = por %p343, %p344
      %s346 = ssub.s32 %s34, %s41
      %p347 = scmp.eq.s32.totalorder %s346, 0
      %s349 = sadd.s32 %s348, 1
      %s350 = scalar_select %p347, %s348, %s349
      %p353 = pneg %p347
      %p354 = scmp.eq.s32.totalorder %s34, 1
      %p355 = por %p353, %p354
      %p356 = scmp.ne.s32.totalorder %s348, %s351
      %p357 = scmp.eq.s32.totalorder %s34, 0
      %p358 = por %p356, %p357
      %p359 = scmp.ne.s32.totalorder %s348, %s351
      %p360 = scmp.eq.s32.totalorder %s39, 1
      %p361 = por %p359, %p360
      %p362 = scmp.ne.s32.totalorder %s351, %s352
      %p363 = scmp.eq.s32.totalorder %s39, 0
      %p364 = por %p362, %p363
      %p365 = scmp.ne.s32.totalorder %s351, %s352
      %p366 = scmp.eq.s32.totalorder %s40, 1
      %p367 = por %p365, %p366
      %p369 = scmp.ne.s32.totalorder %s352, %s368
      %p370 = scmp.eq.s32.totalorder %s40, 0
      %p371 = por %p369, %p370
      %p372 = scmp.le.s32.totalorder 1, %s34
      %p373 = scmp.lt.s32.totalorder %s34, 3
      %p374 = pnand %p372, %p373
      %p375 = pneg %p374
      // Predicated region
      $region9: #{tpu_custom_call.1} parent=5 // pred_check
        _
      $region10: #{tpu_custom_call.1} parent=5 // pred_check_branch
        %377 = sbr.rel (%p374) target = $region12
      $region11: #{tpu_custom_call.1} parent=5 // pred_region
        %s378 = ssub.s32 %s34, 1
        // Predicated region
        $region13: #{tpu_custom_call.1} parent=11 // pred_check
          %p379 = pneg %p81
        $region14: #{tpu_custom_call.1} parent=11 // pred_check_branch
          %381 = sbr.rel (%p379) target = $region16
        $region15: #{tpu_custom_call.1} parent=11 // pred_region
          %s383 = ssub.s32 28672, 28672
          %384 = vsyncadd [#allocation6], %s383
          %s385 = sshll.u32 [#allocation5], 4
          %s386 = int_to_ptr.vmem [resolvable:$true] %s385
          %391 = dma.hbm_to_vmem [thread:$0]  %s1, 28672, %s386, [#allocation6], 256, 256, 16
        $region16: #{tpu_custom_call.1} parent=11 // pred_fallthru
          _
        // Predicated region
        $region17: #{tpu_custom_call.1} parent=11 // pred_check
          %p392 = pneg %p102
        $region18: #{tpu_custom_call.1} parent=11 // pred_check_branch
          %394 = sbr.rel (%p392) target = $region20
        $region19: #{tpu_custom_call.1} parent=11 // pred_region
          _
        $region20: #{tpu_custom_call.1} parent=11 // pred_fallthru
          _
        // Predicated region
        $region21: #{tpu_custom_call.1} parent=11 // pred_check
          %p395 = pneg %p123
        $region22: #{tpu_custom_call.1} parent=11 // pred_check_branch
          %397 = sbr.rel (%p395) target = $region24
        $region23: #{tpu_custom_call.1} parent=11 // pred_region
          %s399 = ssub.s32 8192, 8192
          %400 = vsyncadd [#allocation6], %s399
          %s401 = sshll.u32 [#allocation7], 4
          %s402 = int_to_ptr.vmem [resolvable:$true] %s401
          %407 = dma.hbm_to_vmem [thread:$0]  %s3, 8192, %s402, [#allocation6], 128, 128, 8
        $region24: #{tpu_custom_call.1} parent=11 // pred_fallthru
          _
        // Predicated region
        $region25: #{tpu_custom_call.1} parent=11 // pred_check
          %p408 = pneg %p144
        $region26: #{tpu_custom_call.1} parent=11 // pred_check_branch
          %410 = sbr.rel (%p408) target = $region28
        $region27: #{tpu_custom_call.1} parent=11 // pred_region
          %s412 = ssub.s32 32, 32
          %413 = vsyncadd [#allocation9], %s412
          %s415 = sshll.u32 [#allocation8], 4
          %s416 = int_to_ptr.vmem [resolvable:$true] %s415
          %418 = dma.hbm_to_vmem [thread:$0]  %s4, 32, %s416, [#allocation9]
        $region28: #{tpu_custom_call.1} parent=11 // pred_fallthru
          _
        // Predicated region
        $region29: #{tpu_custom_call.1} parent=11 // pred_check
          %p419 = pneg %p165
        $region30: #{tpu_custom_call.1} parent=11 // pred_check_branch
          %421 = sbr.rel (%p419) target = $region32
        $region31: #{tpu_custom_call.1} parent=11 // pred_region
          %s423 = ssub.s32 2048, 2048
          %424 = vsyncadd [#allocation9], %s423
          %s425 = sshll.u32 [#allocation10], 4
          %s426 = int_to_ptr.vmem [resolvable:$true] %s425
          %431 = dma.hbm_to_vmem [thread:$0]  %s5, 2048, %s426, [#allocation9], 64, 64, 4
        $region32: #{tpu_custom_call.1} parent=11 // pred_fallthru
          _
        // Predicated region
        $region33: #{tpu_custom_call.1} parent=11 // pred_check
          %p432 = pneg %p186
        $region34: #{tpu_custom_call.1} parent=11 // pred_check_branch
          %434 = sbr.rel (%p432) target = $region36
        $region35: #{tpu_custom_call.1} parent=11 // pred_region
          _
        $region36: #{tpu_custom_call.1} parent=11 // pred_fallthru
          _
        // Predicated region
        $region37: #{tpu_custom_call.1} parent=11 // pred_check
          %p435 = pneg %p207
        $region38: #{tpu_custom_call.1} parent=11 // pred_check_branch
          %437 = sbr.rel (%p435) target = $region40
        $region39: #{tpu_custom_call.1} parent=11 // pred_region
          %s439 = ssub.s32 2048, 2048
          %440 = vsyncadd [#allocation12], %s439
          %s441 = sshll.u32 [#allocation11], 4
          %s442 = int_to_ptr.vmem [resolvable:$true] %s441
          %447 = dma.hbm_to_vmem [thread:$0]  %s7, 2048, %s442, [#allocation12], 128, 128, 8
        $region40: #{tpu_custom_call.1} parent=11 // pred_fallthru
          _
        // Predicated region
        $region41: #{tpu_custom_call.1} parent=11 // pred_check
          %p448 = pneg %p228
        $region42: #{tpu_custom_call.1} parent=11 // pred_check_branch
          %450 = sbr.rel (%p448) target = $region44
        $region43: #{tpu_custom_call.1} parent=11 // pred_region
          _
        $region44: #{tpu_custom_call.1} parent=11 // pred_fallthru
          _
        // Predicated region
        $region45: #{tpu_custom_call.1} parent=11 // pred_check
          %p451 = pneg %p249
        $region46: #{tpu_custom_call.1} parent=11 // pred_check_branch
          %453 = sbr.rel (%p451) target = $region48
        $region47: #{tpu_custom_call.1} parent=11 // pred_region
          %s455 = ssub.s32 8192, 8192
          %456 = vsyncadd [#allocation12], %s455
          %s457 = sshll.u32 [#allocation13], 4
          %s458 = int_to_ptr.vmem [resolvable:$true] %s457
          %463 = dma.hbm_to_vmem [thread:$0]  %s9, 8192, %s458, [#allocation12], 256, 256, 16
        $region48: #{tpu_custom_call.1} parent=11 // pred_fallthru
          _
        // Predicated region
        $region49: #{tpu_custom_call.1} parent=11 // pred_check
          %p464 = pneg %p270
        $region50: #{tpu_custom_call.1} parent=11 // pred_check_branch
          %466 = sbr.rel (%p464) target = $region52
        $region51: #{tpu_custom_call.1} parent=11 // pred_region
          _
        $region52: #{tpu_custom_call.1} parent=11 // pred_fallthru
          _
        // Predicated region
        $region53: #{tpu_custom_call.1} parent=11 // pred_check
          %p467 = pneg %p291
        $region54: #{tpu_custom_call.1} parent=11 // pred_check_branch
          %469 = sbr.rel (%p467) target = $region56
        $region55: #{tpu_custom_call.1} parent=11 // pred_region
          %s471 = ssub.s32 28672, 28672
          %472 = vsyncadd [#allocation15], %s471
          %s473 = sshll.u32 [#allocation14], 4
          %s474 = int_to_ptr.vmem [resolvable:$true] %s473
          %479 = dma.hbm_to_vmem [thread:$0]  %s11, 28672, %s474, [#allocation15], 448, 448, 28
        $region56: #{tpu_custom_call.1} parent=11 // pred_fallthru
          _
        // Predicated region
        $region57: #{tpu_custom_call.1} parent=11 // pred_check
          %p480 = pneg %p312
        $region58: #{tpu_custom_call.1} parent=11 // pred_check_branch
          %482 = sbr.rel (%p480) target = $region60
        $region59: #{tpu_custom_call.1} parent=11 // pred_region
          _
        $region60: #{tpu_custom_call.1} parent=11 // pred_fallthru
          _
      $region12: #{tpu_custom_call.1} parent=5 // pred_fallthru
        _
      %p483 = scmp.lt.s32.totalorder %s34, 2
      // Predicated region
      $region61: #{tpu_custom_call.1} parent=5 // pred_check
        %p484 = pneg %p483
      $region62: #{tpu_custom_call.1} parent=5 // pred_check_branch
        %486 = sbr.rel (%p484) target = $region64
      $region63: #{tpu_custom_call.1} parent=5 // pred_region
        // Predicated region
        $region65: #{tpu_custom_call.1} parent=63 // pred_check
          %p487 = pneg %p54
        $region66: #{tpu_custom_call.1} parent=63 // pred_check_branch
          %489 = sbr.rel (%p487) target = $region68
        $region67: #{tpu_custom_call.1} parent=63 // pred_region
          %s490 = sand.u32 %s44, 1
          %s491 = scalar_lea.sflag [#allocation3], %s490
          %s492 = sand.u32 %s44, 1
          %s493 = smul.addr %s492, 448
          %s494 = scalar_lea.vmem [#allocation2], %s493
          %s495 = smul.u32 16, %s34
          %s497 = ssub.s32 7168, 7168
          %498 = vsyncadd %s491, %s497
          %s499 = smul.addr %s495, 7
          %s500 = smul.addr %s499, 64
          %s501 = scalar_lea.hbm %s0, %s500
          %s502 = sshll.u32 %s494, 4
          %s503 = int_to_ptr.vmem [resolvable:$true] %s502
          %508 = dma.hbm_to_vmem [thread:$0]  %s501, 7168, %s503, %s491, 448, 448, 28
        $region68: #{tpu_custom_call.1} parent=63 // pred_fallthru
          _
      $region64: #{tpu_custom_call.1} parent=5 // pred_fallthru
        _
      %p509 = scmp.le.s32.totalorder 1, %s34
      %p510 = scmp.lt.s32.totalorder %s34, 3
      %p511 = pnand %p509, %p510
      %p512 = pneg %p511
      // Predicated region
      $region69: #{tpu_custom_call.1} parent=5 // pred_check
        _
      $region70: #{tpu_custom_call.1} parent=5 // pred_check_branch
        %514 = sbr.rel (%p511) target = $region72
      $region71: #{tpu_custom_call.1} parent=5 // pred_region
        %s515 = ssub.s32 %s34, 1
        %s516 = sand.u32 %s47, 1
        %s517 = scalar_lea.sflag [#allocation3], %s516
        %s518 = sand.u32 %s47, 1
        %s519 = smul.addr %s518, 448
        %s520 = scalar_lea.vmem [#allocation2], %s519
        // Predicated region
        $region73: #{tpu_custom_call.1} parent=71 // pred_check
          %p521 = pneg %p60
        $region74: #{tpu_custom_call.1} parent=71 // pred_check_branch
          %523 = sbr.rel (%p521) target = $region76
        $region75: #{tpu_custom_call.1} parent=71 // pred_region
          %524 = dma.done %s517, 7168
        $region76: #{tpu_custom_call.1} parent=71 // pred_fallthru
          _
        // Predicated region
        $region77: #{tpu_custom_call.1} parent=71 // pred_check
          %p525 = pneg %p81
        $region78: #{tpu_custom_call.1} parent=71 // pred_check_branch
          %527 = sbr.rel (%p525) target = $region80
        $region79: #{tpu_custom_call.1} parent=71 // pred_region
          %528 = dma.done [#allocation6], 28672
        $region80: #{tpu_custom_call.1} parent=71 // pred_fallthru
          _
        // Predicated region
        $region81: #{tpu_custom_call.1} parent=71 // pred_check
          %p529 = pneg %p123
        $region82: #{tpu_custom_call.1} parent=71 // pred_check_branch
          %531 = sbr.rel (%p529) target = $region84
        $region83: #{tpu_custom_call.1} parent=71 // pred_region
          %532 = dma.done [#allocation6], 8192
        $region84: #{tpu_custom_call.1} parent=71 // pred_fallthru
          _
        // Predicated region
        $region85: #{tpu_custom_call.1} parent=71 // pred_check
          %p533 = pneg %p144
        $region86: #{tpu_custom_call.1} parent=71 // pred_check_branch
          %535 = sbr.rel (%p533) target = $region88
        $region87: #{tpu_custom_call.1} parent=71 // pred_region
          %536 = dma.done [#allocation9], 32
        $region88: #{tpu_custom_call.1} parent=71 // pred_fallthru
          _
        // Predicated region
        $region89: #{tpu_custom_call.1} parent=71 // pred_check
          %p537 = pneg %p165
        $region90: #{tpu_custom_call.1} parent=71 // pred_check_branch
          %539 = sbr.rel (%p537) target = $region92
        $region91: #{tpu_custom_call.1} parent=71 // pred_region
          %540 = dma.done [#allocation9], 2048
        $region92: #{tpu_custom_call.1} parent=71 // pred_fallthru
          _
        // Predicated region
        $region93: #{tpu_custom_call.1} parent=71 // pred_check
          %p541 = pneg %p207
        $region94: #{tpu_custom_call.1} parent=71 // pred_check_branch
          %543 = sbr.rel (%p541) target = $region96
        $region95: #{tpu_custom_call.1} parent=71 // pred_region
          %544 = dma.done [#allocation12], 2048
        $region96: #{tpu_custom_call.1} parent=71 // pred_fallthru
          _
        // Predicated region
        $region97: #{tpu_custom_call.1} parent=71 // pred_check
          %p545 = pneg %p249
        $region98: #{tpu_custom_call.1} parent=71 // pred_check_branch
          %547 = sbr.rel (%p545) target = $region100
        $region99: #{tpu_custom_call.1} parent=71 // pred_region
          %548 = dma.done [#allocation12], 8192
        $region100: #{tpu_custom_call.1} parent=71 // pred_fallthru
          _
        // Predicated region
        $region101: #{tpu_custom_call.1} parent=71 // pred_check
          %p549 = pneg %p291
        $region102: #{tpu_custom_call.1} parent=71 // pred_check_branch
          %551 = sbr.rel (%p549) target = $region104
        $region103: #{tpu_custom_call.1} parent=71 // pred_region
          %552 = dma.done [#allocation15], 28672
        $region104: #{tpu_custom_call.1} parent=71 // pred_fallthru
          _
        %s553 = sand.u32 %s47, 1
        %s554 = scalar_lea.sflag [#allocation3], %s553
        %s555 = sand.u32 %s47, 1
        %s556 = smul.addr %s555, 448
        %s557 = scalar_lea.vmem [#allocation2], %s556
        %p558 = pneg %p60
        %p559 = pneg %p57
        %p560 = pneg %p81
        %p561 = pneg %p78
        %p562 = pneg %p102
        %p563 = pneg %p99
        %p564 = pneg %p123
        %p565 = pneg %p120
        %p566 = pneg %p144
        %p567 = pneg %p141
        %p568 = pneg %p165
        %p569 = pneg %p162
        %p570 = pneg %p186
        %p571 = pneg %p183
        %p572 = pneg %p207
        %p573 = pneg %p204
        %p574 = pneg %p228
        %p575 = pneg %p225
        %p576 = pneg %p249
        %p577 = pneg %p246
        %p578 = pneg %p270
        %p579 = pneg %p267
        %p580 = pneg %p291
        %p581 = pneg %p288
        %p582 = pneg %p312
        %p583 = pneg %p309
        %p584 = pneg %p338
        %p585 = pneg %p335
        %s586 = sand.u32 %s325, 1
        %s587 = scalar_lea.sflag [#allocation4], %s586
        %s588 = sand.u32 %s325, 1
        %s589 = smul.addr %s588, 128
        %s590 = scalar_lea.vmem [#allocation16], %s589
        %p591 = pneg %p364
        %p592 = pneg %p361
        %s593 = sand.u32 %s351, 1
        %s594 = scalar_lea.sflag [#allocation18], %s593
        %s595 = sand.u32 %s351, 1
        %s596 = smul.addr %s595, 896
        %s597 = scalar_lea.vmem [#allocation17], %s596
        %s598 = smul.u32 16, %s39
        %s599 = smul.u32 16, %s39
        %s600 = smul.u32 16, %s39
        %v602 = vld [vmem:[%s520] sm:$0xff]
        %v603 = vld [vmem:[%s520 + $0x8] sm:$0xff]
        %v604 = vld [vmem:[%s520 + $0x10] sm:$0xff]
        %v605 = vld [vmem:[%s520 + $0x18] sm:$0xf]
        %v606 = vld [vmem:[%s520 + $0x1c] sm:$0xff]
        %v607 = vld [vmem:[%s520 + $0x24] sm:$0xff]
        %v608 = vld [vmem:[%s520 + $0x2c] sm:$0xff]
        %v609 = vld [vmem:[%s520 + $0x34] sm:$0xf]
        %v610 = vld [vmem:[%s520 + $0x38] sm:$0xff]
        %v611 = vld [vmem:[%s520 + $0x40] sm:$0xff]
        %v612 = vld [vmem:[%s520 + $0x48] sm:$0xff]
        %v613 = vld [vmem:[%s520 + $0x50] sm:$0xf]
        %v614 = vld [vmem:[%s520 + $0x54] sm:$0xff]
        %v615 = vld [vmem:[%s520 + $0x5c] sm:$0xff]
        %v616 = vld [vmem:[%s520 + $0x64] sm:$0xff]
        %v617 = vld [vmem:[%s520 + $0x6c] sm:$0xf]
        %v618 = vld [vmem:[%s520 + $0x70] sm:$0xff]
        %v619 = vld [vmem:[%s520 + $0x78] sm:$0xff]
        %v620 = vld [vmem:[%s520 + $0x80] sm:$0xff]
        %v621 = vld [vmem:[%s520 + $0x88] sm:$0xf]
        %v622 = vld [vmem:[%s520 + $0x8c] sm:$0xff]
        %v623 = vld [vmem:[%s520 + $0x94] sm:$0xff]
        %v624 = vld [vmem:[%s520 + $0x9c] sm:$0xff]
        %v625 = vld [vmem:[%s520 + $0xa4] sm:$0xf]
        %v626 = vld [vmem:[%s520 + $0xa8] sm:$0xff]
        %v627 = vld [vmem:[%s520 + $0xb0] sm:$0xff]
        %v628 = vld [vmem:[%s520 + $0xb8] sm:$0xff]
        %v629 = vld [vmem:[%s520 + $0xc0] sm:$0xf]
        %v630 = vld [vmem:[%s520 + $0xc4] sm:$0xff]
        %v631 = vld [vmem:[%s520 + $0xcc] sm:$0xff]
        %v632 = vld [vmem:[%s520 + $0xd4] sm:$0xff]
        %v633 = vld [vmem:[%s520 + $0xdc] sm:$0xf]
        %v634 = vld [vmem:[%s520 + $0xe0] sm:$0xff]
        %v635 = vld [vmem:[%s520 + $0xe8] sm:$0xff]
        %v636 = vld [vmem:[%s520 + $0xf0] sm:$0xff]
        %v637 = vld [vmem:[%s520 + $0xf8] sm:$0xf]
        %v638 = vld [vmem:[%s520 + $0xfc] sm:$0xff]
        %v639 = vld [vmem:[%s520 + $0x104] sm:$0xff]
        %v640 = vld [vmem:[%s520 + $0x10c] sm:$0xff]
        %v641 = vld [vmem:[%s520 + $0x114] sm:$0xf]
        %v642 = vld [vmem:[%s520 + $0x118] sm:$0xff]
        %v643 = vld [vmem:[%s520 + $0x120] sm:$0xff]
        %v644 = vld [vmem:[%s520 + $0x128] sm:$0xff]
        %v645 = vld [vmem:[%s520 + $0x130] sm:$0xf]
        %v646 = vld [vmem:[%s520 + $0x134] sm:$0xff]
        %v647 = vld [vmem:[%s520 + $0x13c] sm:$0xff]
        %v648 = vld [vmem:[%s520 + $0x144] sm:$0xff]
        %v649 = vld [vmem:[%s520 + $0x14c] sm:$0xf]
        %v650 = vld [vmem:[%s520 + $0x150] sm:$0xff]
        %v651 = vld [vmem:[%s520 + $0x158] sm:$0xff]
        %v652 = vld [vmem:[%s520 + $0x160] sm:$0xff]
        %v653 = vld [vmem:[%s520 + $0x168] sm:$0xf]
        %v654 = vld [vmem:[%s520 + $0x16c] sm:$0xff]
        %v655 = vld [vmem:[%s520 + $0x174] sm:$0xff]
        %v656 = vld [vmem:[%s520 + $0x17c] sm:$0xff]
        %v657 = vld [vmem:[%s520 + $0x184] sm:$0xf]
        %v658 = vld [vmem:[%s520 + $0x188] sm:$0xff]
        %v659 = vld [vmem:[%s520 + $0x190] sm:$0xff]
        %v660 = vld [vmem:[%s520 + $0x198] sm:$0xff]
        %v661 = vld [vmem:[%s520 + $0x1a0] sm:$0xf]
        %v662 = vld [vmem:[%s520 + $0x1a4] sm:$0xff]
        %v663 = vld [vmem:[%s520 + $0x1ac] sm:$0xff]
        %v664 = vld [vmem:[%s520 + $0x1b4] sm:$0xff]
        %v665 = vld [vmem:[%s520 + $0x1bc] sm:$0xf]
        %v666 = vld [vmem:[#allocation5] sm:$0xff]
        %v667 = vld [vmem:[#allocation5 + $0x8] sm:$0xff]
        %v668 = vld [vmem:[#allocation5 + $0x10] sm:$0xff]
        %v669 = vld [vmem:[#allocation5 + $0x18] sm:$0xff]
        %v670 = vld [vmem:[#allocation5 + $0x20] sm:$0xff]
        %v671 = vld [vmem:[#allocation5 + $0x28] sm:$0xff]
        %v672 = vld [vmem:[#allocation5 + $0x30] sm:$0xff]
        %v673 = vld [vmem:[#allocation5 + $0x38] sm:$0xff]
        %v674 = vld [vmem:[#allocation5 + $0x40] sm:$0xff]
        %v675 = vld [vmem:[#allocation5 + $0x48] sm:$0xff]
        %v676 = vld [vmem:[#allocation5 + $0x50] sm:$0xff]
        %v677 = vld [vmem:[#allocation5 + $0x58] sm:$0xff]
        %v678 = vld [vmem:[#allocation5 + $0x60] sm:$0xff]
        %v679 = vld [vmem:[#allocation5 + $0x68] sm:$0xff]
        %v680 = vld [vmem:[#allocation5 + $0x70] sm:$0xff]
        %v681 = vld [vmem:[#allocation5 + $0x78] sm:$0xff]
        %v682 = vld [vmem:[#allocation5 + $0x80] sm:$0xff]
        %v683 = vld [vmem:[#allocation5 + $0x88] sm:$0xff]
        %v684 = vld [vmem:[#allocation5 + $0x90] sm:$0xff]
        %v685 = vld [vmem:[#allocation5 + $0x98] sm:$0xff]
        %v686 = vld [vmem:[#allocation5 + $0xa0] sm:$0xff]
        %v687 = vld [vmem:[#allocation5 + $0xa8] sm:$0xff]
        %v688 = vld [vmem:[#allocation5 + $0xb0] sm:$0xff]
        %v689 = vld [vmem:[#allocation5 + $0xb8] sm:$0xff]
        %v690 = vld [vmem:[#allocation5 + $0xc0] sm:$0xff]
        %v691 = vld [vmem:[#allocation5 + $0xc8] sm:$0xff]
        %v692 = vld [vmem:[#allocation5 + $0xd0] sm:$0xff]
        %v693 = vld [vmem:[#allocation5 + $0xd8] sm:$0xff]
        %v694 = vld [vmem:[#allocation5 + $0xe0] sm:$0xff]
        %v695 = vld [vmem:[#allocation5 + $0xe8] sm:$0xff]
        %v696 = vld [vmem:[#allocation5 + $0xf0] sm:$0xff]
        %v697 = vld [vmem:[#allocation5 + $0xf8] sm:$0xff]
        %v698 = vld [vmem:[#allocation5 + $0x100] sm:$0xff]
        %v699 = vld [vmem:[#allocation5 + $0x108] sm:$0xff]
        %v700 = vld [vmem:[#allocation5 + $0x110] sm:$0xff]
        %v701 = vld [vmem:[#allocation5 + $0x118] sm:$0xff]
        %v702 = vld [vmem:[#allocation5 + $0x120] sm:$0xff]
        %v703 = vld [vmem:[#allocation5 + $0x128] sm:$0xff]
        %v704 = vld [vmem:[#allocation5 + $0x130] sm:$0xff]
        %v705 = vld [vmem:[#allocation5 + $0x138] sm:$0xff]
        %v706 = vld [vmem:[#allocation5 + $0x140] sm:$0xff]
        %v707 = vld [vmem:[#allocation5 + $0x148] sm:$0xff]
        %v708 = vld [vmem:[#allocation5 + $0x150] sm:$0xff]
        %v709 = vld [vmem:[#allocation5 + $0x158] sm:$0xff]
        %v710 = vld [vmem:[#allocation5 + $0x160] sm:$0xff]
        %v711 = vld [vmem:[#allocation5 + $0x168] sm:$0xff]
        %v712 = vld [vmem:[#allocation5 + $0x170] sm:$0xff]
        %v713 = vld [vmem:[#allocation5 + $0x178] sm:$0xff]
        %v714 = vld [vmem:[#allocation5 + $0x180] sm:$0xff]
        %v715 = vld [vmem:[#allocation5 + $0x188] sm:$0xff]
        %v716 = vld [vmem:[#allocation5 + $0x190] sm:$0xff]
        %v717 = vld [vmem:[#allocation5 + $0x198] sm:$0xff]
        %v718 = vld [vmem:[#allocation5 + $0x1a0] sm:$0xff]
        %v719 = vld [vmem:[#allocation5 + $0x1a8] sm:$0xff]
        %v720 = vld [vmem:[#allocation5 + $0x1b0] sm:$0xff]
        %v721 = vld [vmem:[#allocation5 + $0x1b8] sm:$0xff]
        %v722 = vld [vmem:[#allocation5 + $0x1c0] sm:$0xff]
        %v723 = vld [vmem:[#allocation5 + $0x1c8] sm:$0xff]
        %v724 = vld [vmem:[#allocation5 + $0x1d0] sm:$0xff]
        %v725 = vld [vmem:[#allocation5 + $0x1d8] sm:$0xff]
        %v726 = vld [vmem:[#allocation5 + $0x1e0] sm:$0xff]
        %v727 = vld [vmem:[#allocation5 + $0x1e8] sm:$0xff]
        %v728 = vld [vmem:[#allocation5 + $0x1f0] sm:$0xff]
        %v729 = vld [vmem:[#allocation5 + $0x1f8] sm:$0xff]
        %v730 = vld [vmem:[#allocation5 + $0x200] sm:$0xff]
        %v731 = vld [vmem:[#allocation5 + $0x208] sm:$0xff]
        %v732 = vld [vmem:[#allocation5 + $0x210] sm:$0xff]
        %v733 = vld [vmem:[#allocation5 + $0x218] sm:$0xff]
        %v734 = vld [vmem:[#allocation5 + $0x220] sm:$0xff]
        %v735 = vld [vmem:[#allocation5 + $0x228] sm:$0xff]
        %v736 = vld [vmem:[#allocation5 + $0x230] sm:$0xff]
        %v737 = vld [vmem:[#allocation5 + $0x238] sm:$0xff]
        %v738 = vld [vmem:[#allocation5 + $0x240] sm:$0xff]
        %v739 = vld [vmem:[#allocation5 + $0x248] sm:$0xff]
        %v740 = vld [vmem:[#allocation5 + $0x250] sm:$0xff]
        %v741 = vld [vmem:[#allocation5 + $0x258] sm:$0xff]
        %v742 = vld [vmem:[#allocation5 + $0x260] sm:$0xff]
        %v743 = vld [vmem:[#allocation5 + $0x268] sm:$0xff]
        %v744 = vld [vmem:[#allocation5 + $0x270] sm:$0xff]
        %v745 = vld [vmem:[#allocation5 + $0x278] sm:$0xff]
        %v746 = vld [vmem:[#allocation5 + $0x280] sm:$0xff]
        %v747 = vld [vmem:[#allocation5 + $0x288] sm:$0xff]
        %v748 = vld [vmem:[#allocation5 + $0x290] sm:$0xff]
        %v749 = vld [vmem:[#allocation5 + $0x298] sm:$0xff]
        %v750 = vld [vmem:[#allocation5 + $0x2a0] sm:$0xff]
        %v751 = vld [vmem:[#allocation5 + $0x2a8] sm:$0xff]
        %v752 = vld [vmem:[#allocation5 + $0x2b0] sm:$0xff]
        %v753 = vld [vmem:[#allocation5 + $0x2b8] sm:$0xff]
        %v754 = vld [vmem:[#allocation5 + $0x2c0] sm:$0xff]
        %v755 = vld [vmem:[#allocation5 + $0x2c8] sm:$0xff]
        %v756 = vld [vmem:[#allocation5 + $0x2d0] sm:$0xff]
        %v757 = vld [vmem:[#allocation5 + $0x2d8] sm:$0xff]
        %v758 = vld [vmem:[#allocation5 + $0x2e0] sm:$0xff]
        %v759 = vld [vmem:[#allocation5 + $0x2e8] sm:$0xff]
        %v760 = vld [vmem:[#allocation5 + $0x2f0] sm:$0xff]
        %v761 = vld [vmem:[#allocation5 + $0x2f8] sm:$0xff]
        %v762 = vld [vmem:[#allocation5 + $0x300] sm:$0xff]
        %v763 = vld [vmem:[#allocation5 + $0x308] sm:$0xff]
        %v764 = vld [vmem:[#allocation5 + $0x310] sm:$0xff]
        %v765 = vld [vmem:[#allocation5 + $0x318] sm:$0xff]
        %v766 = vld [vmem:[#allocation5 + $0x320] sm:$0xff]
        %v767 = vld [vmem:[#allocation5 + $0x328] sm:$0xff]
        %v768 = vld [vmem:[#allocation5 + $0x330] sm:$0xff]
        %v769 = vld [vmem:[#allocation5 + $0x338] sm:$0xff]
        %v770 = vld [vmem:[#allocation5 + $0x340] sm:$0xff]
        %v771 = vld [vmem:[#allocation5 + $0x348] sm:$0xff]
        %v772 = vld [vmem:[#allocation5 + $0x350] sm:$0xff]
        %v773 = vld [vmem:[#allocation5 + $0x358] sm:$0xff]
        %v774 = vld [vmem:[#allocation5 + $0x360] sm:$0xff]
        %v775 = vld [vmem:[#allocation5 + $0x368] sm:$0xff]
        %v776 = vld [vmem:[#allocation5 + $0x370] sm:$0xff]
        %v777 = vld [vmem:[#allocation5 + $0x378] sm:$0xff]
        %v778 = vld [vmem:[#allocation5 + $0x380] sm:$0xff]
        %v779 = vld [vmem:[#allocation5 + $0x388] sm:$0xff]
        %v780 = vld [vmem:[#allocation5 + $0x390] sm:$0xff]
        %v781 = vld [vmem:[#allocation5 + $0x398] sm:$0xff]
        %v782 = vld [vmem:[#allocation5 + $0x3a0] sm:$0xff]
        %v783 = vld [vmem:[#allocation5 + $0x3a8] sm:$0xff]
        %v784 = vld [vmem:[#allocation5 + $0x3b0] sm:$0xff]
        %v785 = vld [vmem:[#allocation5 + $0x3b8] sm:$0xff]
        %v786 = vld [vmem:[#allocation5 + $0x3c0] sm:$0xff]
        %v787 = vld [vmem:[#allocation5 + $0x3c8] sm:$0xff]
        %v788 = vld [vmem:[#allocation5 + $0x3d0] sm:$0xff]
        %v789 = vld [vmem:[#allocation5 + $0x3d8] sm:$0xff]
        %v790 = vld [vmem:[#allocation5 + $0x3e0] sm:$0xff]
        %v791 = vld [vmem:[#allocation5 + $0x3e8] sm:$0xff]
        %v792 = vld [vmem:[#allocation5 + $0x3f0] sm:$0xff]
        %v793 = vld [vmem:[#allocation5 + $0x3f8] sm:$0xff]
        %v794 = vld [vmem:[#allocation5 + $0x400] sm:$0xff]
        %v795 = vld [vmem:[#allocation5 + $0x408] sm:$0xff]
        %v796 = vld [vmem:[#allocation5 + $0x410] sm:$0xff]
        %v797 = vld [vmem:[#allocation5 + $0x418] sm:$0xff]
        %v798 = vld [vmem:[#allocation5 + $0x420] sm:$0xff]
        %v799 = vld [vmem:[#allocation5 + $0x428] sm:$0xff]
        %v800 = vld [vmem:[#allocation5 + $0x430] sm:$0xff]
        %v801 = vld [vmem:[#allocation5 + $0x438] sm:$0xff]
        %v802 = vld [vmem:[#allocation5 + $0x440] sm:$0xff]
        %v803 = vld [vmem:[#allocation5 + $0x448] sm:$0xff]
        %v804 = vld [vmem:[#allocation5 + $0x450] sm:$0xff]
        %v805 = vld [vmem:[#allocation5 + $0x458] sm:$0xff]
        %v806 = vld [vmem:[#allocation5 + $0x460] sm:$0xff]
        %v807 = vld [vmem:[#allocation5 + $0x468] sm:$0xff]
        %v808 = vld [vmem:[#allocation5 + $0x470] sm:$0xff]
        %v809 = vld [vmem:[#allocation5 + $0x478] sm:$0xff]
        %v810 = vld [vmem:[#allocation5 + $0x480] sm:$0xff]
        %v811 = vld [vmem:[#allocation5 + $0x488] sm:$0xff]
        %v812 = vld [vmem:[#allocation5 + $0x490] sm:$0xff]
        %v813 = vld [vmem:[#allocation5 + $0x498] sm:$0xff]
        %v814 = vld [vmem:[#allocation5 + $0x4a0] sm:$0xff]
        %v815 = vld [vmem:[#allocation5 + $0x4a8] sm:$0xff]
        %v816 = vld [vmem:[#allocation5 + $0x4b0] sm:$0xff]
        %v817 = vld [vmem:[#allocation5 + $0x4b8] sm:$0xff]
        %v818 = vld [vmem:[#allocation5 + $0x4c0] sm:$0xff]
        %v819 = vld [vmem:[#allocation5 + $0x4c8] sm:$0xff]
        %v820 = vld [vmem:[#allocation5 + $0x4d0] sm:$0xff]
        %v821 = vld [vmem:[#allocation5 + $0x4d8] sm:$0xff]
        %v822 = vld [vmem:[#allocation5 + $0x4e0] sm:$0xff]
        %v823 = vld [vmem:[#allocation5 + $0x4e8] sm:$0xff]
        %v824 = vld [vmem:[#allocation5 + $0x4f0] sm:$0xff]
        %v825 = vld [vmem:[#allocation5 + $0x4f8] sm:$0xff]
        %v826 = vld [vmem:[#allocation5 + $0x500] sm:$0xff]
        %v827 = vld [vmem:[#allocation5 + $0x508] sm:$0xff]
        %v828 = vld [vmem:[#allocation5 + $0x510] sm:$0xff]
        %v829 = vld [vmem:[#allocation5 + $0x518] sm:$0xff]
        %v830 = vld [vmem:[#allocation5 + $0x520] sm:$0xff]
        %v831 = vld [vmem:[#allocation5 + $0x528] sm:$0xff]
        %v832 = vld [vmem:[#allocation5 + $0x530] sm:$0xff]
        %v833 = vld [vmem:[#allocation5 + $0x538] sm:$0xff]
        %v834 = vld [vmem:[#allocation5 + $0x540] sm:$0xff]
        %v835 = vld [vmem:[#allocation5 + $0x548] sm:$0xff]
        %v836 = vld [vmem:[#allocation5 + $0x550] sm:$0xff]
        %v837 = vld [vmem:[#allocation5 + $0x558] sm:$0xff]
        %v838 = vld [vmem:[#allocation5 + $0x560] sm:$0xff]
        %v839 = vld [vmem:[#allocation5 + $0x568] sm:$0xff]
        %v840 = vld [vmem:[#allocation5 + $0x570] sm:$0xff]
        %v841 = vld [vmem:[#allocation5 + $0x578] sm:$0xff]
        %v842 = vld [vmem:[#allocation5 + $0x580] sm:$0xff]
        %v843 = vld [vmem:[#allocation5 + $0x588] sm:$0xff]
        %v844 = vld [vmem:[#allocation5 + $0x590] sm:$0xff]
        %v845 = vld [vmem:[#allocation5 + $0x598] sm:$0xff]
        %v846 = vld [vmem:[#allocation5 + $0x5a0] sm:$0xff]
        %v847 = vld [vmem:[#allocation5 + $0x5a8] sm:$0xff]
        %v848 = vld [vmem:[#allocation5 + $0x5b0] sm:$0xff]
        %v849 = vld [vmem:[#allocation5 + $0x5b8] sm:$0xff]
        %v850 = vld [vmem:[#allocation5 + $0x5c0] sm:$0xff]
        %v851 = vld [vmem:[#allocation5 + $0x5c8] sm:$0xff]
        %v852 = vld [vmem:[#allocation5 + $0x5d0] sm:$0xff]
        %v853 = vld [vmem:[#allocation5 + $0x5d8] sm:$0xff]
        %v854 = vld [vmem:[#allocation5 + $0x5e0] sm:$0xff]
        %v855 = vld [vmem:[#allocation5 + $0x5e8] sm:$0xff]
        %v856 = vld [vmem:[#allocation5 + $0x5f0] sm:$0xff]
        %v857 = vld [vmem:[#allocation5 + $0x5f8] sm:$0xff]
        %v858 = vld [vmem:[#allocation5 + $0x600] sm:$0xff]
        %v859 = vld [vmem:[#allocation5 + $0x608] sm:$0xff]
        %v860 = vld [vmem:[#allocation5 + $0x610] sm:$0xff]
        %v861 = vld [vmem:[#allocation5 + $0x618] sm:$0xff]
        %v862 = vld [vmem:[#allocation5 + $0x620] sm:$0xff]
        %v863 = vld [vmem:[#allocation5 + $0x628] sm:$0xff]
        %v864 = vld [vmem:[#allocation5 + $0x630] sm:$0xff]
        %v865 = vld [vmem:[#allocation5 + $0x638] sm:$0xff]
        %v866 = vld [vmem:[#allocation5 + $0x640] sm:$0xff]
        %v867 = vld [vmem:[#allocation5 + $0x648] sm:$0xff]
        %v868 = vld [vmem:[#allocation5 + $0x650] sm:$0xff]
        %v869 = vld [vmem:[#allocation5 + $0x658] sm:$0xff]
        %v870 = vld [vmem:[#allocation5 + $0x660] sm:$0xff]
        %v871 = vld [vmem:[#allocation5 + $0x668] sm:$0xff]
        %v872 = vld [vmem:[#allocation5 + $0x670] sm:$0xff]
        %v873 = vld [vmem:[#allocation5 + $0x678] sm:$0xff]
        %v874 = vld [vmem:[#allocation5 + $0x680] sm:$0xff]
        %v875 = vld [vmem:[#allocation5 + $0x688] sm:$0xff]
        %v876 = vld [vmem:[#allocation5 + $0x690] sm:$0xff]
        %v877 = vld [vmem:[#allocation5 + $0x698] sm:$0xff]
        %v878 = vld [vmem:[#allocation5 + $0x6a0] sm:$0xff]
        %v879 = vld [vmem:[#allocation5 + $0x6a8] sm:$0xff]
        %v880 = vld [vmem:[#allocation5 + $0x6b0] sm:$0xff]
        %v881 = vld [vmem:[#allocation5 + $0x6b8] sm:$0xff]
        %v882 = vld [vmem:[#allocation5 + $0x6c0] sm:$0xff]
        %v883 = vld [vmem:[#allocation5 + $0x6c8] sm:$0xff]
        %v884 = vld [vmem:[#allocation5 + $0x6d0] sm:$0xff]
        %v885 = vld [vmem:[#allocation5 + $0x6d8] sm:$0xff]
        %v886 = vld [vmem:[#allocation5 + $0x6e0] sm:$0xff]
        %v887 = vld [vmem:[#allocation5 + $0x6e8] sm:$0xff]
        %v888 = vld [vmem:[#allocation5 + $0x6f0] sm:$0xff]
        %v889 = vld [vmem:[#allocation5 + $0x6f8] sm:$0xff]
        %v890 = vld [vmem:[%s2] sm:$0xf]
        %v892 = vlaneseq
        %v893 = vshrl.u32 %v892, 7
        %v894 = vsub.s32 0, %v893
        %v895 = vrot.slane %v890, %v894
        %v896 = vlaneseq
        %v897 = vshrl.u32 %v896, 7
        %v898 = vsub.s32 1, %v897
        %v899 = vrot.slane %v890, %v898
        %v900 = vlaneseq
        %v901 = vshrl.u32 %v900, 7
        %v902 = vsub.s32 2, %v901
        %v903 = vrot.slane %v890, %v902
        %v904 = vlaneseq
        %v905 = vshrl.u32 %v904, 7
        %v906 = vsub.s32 3, %v905
        %v907 = vrot.slane %v890, %v906
        %v976 = vunpack.c.l.b16 %v602
        %v977 = vunpack.c.h.b16 %v602
        %v978 = vunpack.c.l.b16 %v603
        %v979 = vunpack.c.h.b16 %v603
        %v980 = vunpack.c.l.b16 %v604
        %v981 = vunpack.c.h.b16 %v604
        %v982 = vunpack.c.l.b16 %v605
        %v983 = vunpack.c.l.b16 %v606
        %v984 = vunpack.c.h.b16 %v606
        %v985 = vunpack.c.l.b16 %v607
        %v986 = vunpack.c.h.b16 %v607
        %v987 = vunpack.c.l.b16 %v608
        %v988 = vunpack.c.h.b16 %v608
        %v989 = vunpack.c.l.b16 %v609
        %v990 = vunpack.c.l.b16 %v610
        %v991 = vunpack.c.h.b16 %v610
        %v992 = vunpack.c.l.b16 %v611
        %v993 = vunpack.c.h.b16 %v611
        %v994 = vunpack.c.l.b16 %v612
        %v995 = vunpack.c.h.b16 %v612
        %v996 = vunpack.c.l.b16 %v613
        %v997 = vunpack.c.l.b16 %v614
        %v998 = vunpack.c.h.b16 %v614
        %v999 = vunpack.c.l.b16 %v615
        %v1000 = vunpack.c.h.b16 %v615
        %v1001 = vunpack.c.l.b16 %v616
        %v1002 = vunpack.c.h.b16 %v616
        %v1003 = vunpack.c.l.b16 %v617
        %v1004 = vunpack.c.l.b16 %v618
        %v1005 = vunpack.c.h.b16 %v618
        %v1006 = vunpack.c.l.b16 %v619
        %v1007 = vunpack.c.h.b16 %v619
        %v1008 = vunpack.c.l.b16 %v620
        %v1009 = vunpack.c.h.b16 %v620
        %v1010 = vunpack.c.l.b16 %v621
        %v1011 = vunpack.c.l.b16 %v622
        %v1012 = vunpack.c.h.b16 %v622
        %v1013 = vunpack.c.l.b16 %v623
        %v1014 = vunpack.c.h.b16 %v623
        %v1015 = vunpack.c.l.b16 %v624
        %v1016 = vunpack.c.h.b16 %v624
        %v1017 = vunpack.c.l.b16 %v625
        %v1018 = vunpack.c.l.b16 %v626
        %v1019 = vunpack.c.h.b16 %v626
        %v1020 = vunpack.c.l.b16 %v627
        %v1021 = vunpack.c.h.b16 %v627
        %v1022 = vunpack.c.l.b16 %v628
        %v1023 = vunpack.c.h.b16 %v628
        %v1024 = vunpack.c.l.b16 %v629
        %v1025 = vunpack.c.l.b16 %v630
        %v1026 = vunpack.c.h.b16 %v630
        %v1027 = vunpack.c.l.b16 %v631
        %v1028 = vunpack.c.h.b16 %v631
        %v1029 = vunpack.c.l.b16 %v632
        %v1030 = vunpack.c.h.b16 %v632
        %v1031 = vunpack.c.l.b16 %v633
        %v1032 = vunpack.c.l.b16 %v634
        %v1033 = vunpack.c.h.b16 %v634
        %v1034 = vunpack.c.l.b16 %v635
        %v1035 = vunpack.c.h.b16 %v635
        %v1036 = vunpack.c.l.b16 %v636
        %v1037 = vunpack.c.h.b16 %v636
        %v1038 = vunpack.c.l.b16 %v637
        %v1039 = vunpack.c.l.b16 %v638
        %v1040 = vunpack.c.h.b16 %v638
        %v1041 = vunpack.c.l.b16 %v639
        %v1042 = vunpack.c.h.b16 %v639
        %v1043 = vunpack.c.l.b16 %v640
        %v1044 = vunpack.c.h.b16 %v640
        %v1045 = vunpack.c.l.b16 %v641
        %v1046 = vunpack.c.l.b16 %v642
        %v1047 = vunpack.c.h.b16 %v642
        %v1048 = vunpack.c.l.b16 %v643
        %v1049 = vunpack.c.h.b16 %v643
        %v1050 = vunpack.c.l.b16 %v644
        %v1051 = vunpack.c.h.b16 %v644
        %v1052 = vunpack.c.l.b16 %v645
        %v1053 = vunpack.c.l.b16 %v646
        %v1054 = vunpack.c.h.b16 %v646
        %v1055 = vunpack.c.l.b16 %v647
        %v1056 = vunpack.c.h.b16 %v647
        %v1057 = vunpack.c.l.b16 %v648
        %v1058 = vunpack.c.h.b16 %v648
        %v1059 = vunpack.c.l.b16 %v649
        %v1060 = vunpack.c.l.b16 %v650
        %v1061 = vunpack.c.h.b16 %v650
        %v1062 = vunpack.c.l.b16 %v651
        %v1063 = vunpack.c.h.b16 %v651
        %v1064 = vunpack.c.l.b16 %v652
        %v1065 = vunpack.c.h.b16 %v652
        %v1066 = vunpack.c.l.b16 %v653
        %v1067 = vunpack.c.l.b16 %v654
        %v1068 = vunpack.c.h.b16 %v654
        %v1069 = vunpack.c.l.b16 %v655
        %v1070 = vunpack.c.h.b16 %v655
        %v1071 = vunpack.c.l.b16 %v656
        %v1072 = vunpack.c.h.b16 %v656
        %v1073 = vunpack.c.l.b16 %v657
        %v1074 = vunpack.c.l.b16 %v658
        %v1075 = vunpack.c.h.b16 %v658
        %v1076 = vunpack.c.l.b16 %v659
        %v1077 = vunpack.c.h.b16 %v659
        %v1078 = vunpack.c.l.b16 %v660
        %v1079 = vunpack.c.h.b16 %v660
        %v1080 = vunpack.c.l.b16 %v661
        %v1081 = vunpack.c.l.b16 %v662
        %v1082 = vunpack.c.h.b16 %v662
        %v1083 = vunpack.c.l.b16 %v663
        %v1084 = vunpack.c.h.b16 %v663
        %v1085 = vunpack.c.l.b16 %v664
        %v1086 = vunpack.c.h.b16 %v664
        %v1087 = vunpack.c.l.b16 %v665
        %v1088 = vpack.c.b16 %v983, %v976
        %v1089 = vpack.c.b16 %v984, %v977
        %v1090 = vpack.c.b16 %v985, %v978
        %v1091 = vpack.c.b16 %v986, %v979
        %v1092 = vpack.c.b16 %v987, %v980
        %v1093 = vpack.c.b16 %v988, %v981
        %v1094 = vpack.c.b16 %v989, %v982
        %v1095 = vpack.c.b16 %v997, %v990
        %v1096 = vpack.c.b16 %v998, %v991
        %v1097 = vpack.c.b16 %v999, %v992
        %v1098 = vpack.c.b16 %v1000, %v993
        %v1099 = vpack.c.b16 %v1001, %v994
        %v1100 = vpack.c.b16 %v1002, %v995
        %v1101 = vpack.c.b16 %v1003, %v996
        %v1102 = vpack.c.b16 %v1011, %v1004
        %v1103 = vpack.c.b16 %v1012, %v1005
        %v1104 = vpack.c.b16 %v1013, %v1006
        %v1105 = vpack.c.b16 %v1014, %v1007
        %v1106 = vpack.c.b16 %v1015, %v1008
        %v1107 = vpack.c.b16 %v1016, %v1009
        %v1108 = vpack.c.b16 %v1017, %v1010
        %v1109 = vpack.c.b16 %v1025, %v1018
        %v1110 = vpack.c.b16 %v1026, %v1019
        %v1111 = vpack.c.b16 %v1027, %v1020
        %v1112 = vpack.c.b16 %v1028, %v1021
        %v1113 = vpack.c.b16 %v1029, %v1022
        %v1114 = vpack.c.b16 %v1030, %v1023
        %v1115 = vpack.c.b16 %v1031, %v1024
        %v1116 = vpack.c.b16 %v1039, %v1032
        %v1117 = vpack.c.b16 %v1040, %v1033
        %v1118 = vpack.c.b16 %v1041, %v1034
        %v1119 = vpack.c.b16 %v1042, %v1035
        %v1120 = vpack.c.b16 %v1043, %v1036
        %v1121 = vpack.c.b16 %v1044, %v1037
        %v1122 = vpack.c.b16 %v1045, %v1038
        %v1123 = vpack.c.b16 %v1053, %v1046
        %v1124 = vpack.c.b16 %v1054, %v1047
        %v1125 = vpack.c.b16 %v1055, %v1048
        %v1126 = vpack.c.b16 %v1056, %v1049
        %v1127 = vpack.c.b16 %v1057, %v1050
        %v1128 = vpack.c.b16 %v1058, %v1051
        %v1129 = vpack.c.b16 %v1059, %v1052
        %v1130 = vpack.c.b16 %v1067, %v1060
        %v1131 = vpack.c.b16 %v1068, %v1061
        %v1132 = vpack.c.b16 %v1069, %v1062
        %v1133 = vpack.c.b16 %v1070, %v1063
        %v1134 = vpack.c.b16 %v1071, %v1064
        %v1135 = vpack.c.b16 %v1072, %v1065
        %v1136 = vpack.c.b16 %v1073, %v1066
        %v1137 = vpack.c.b16 %v1081, %v1074
        %v1138 = vpack.c.b16 %v1082, %v1075
        %v1139 = vpack.c.b16 %v1083, %v1076
        %v1140 = vpack.c.b16 %v1084, %v1077
        %v1141 = vpack.c.b16 %v1085, %v1078
        %v1142 = vpack.c.b16 %v1086, %v1079
        %v1143 = vpack.c.b16 %v1087, %v1080
        %v1424 = vunpack.c.l.b16 %v666
        %v1425 = vunpack.c.h.b16 %v666
        %v1426 = vunpack.c.l.b16 %v667
        %v1427 = vunpack.c.h.b16 %v667
        %v1428 = vunpack.c.l.b16 %v668
        %v1429 = vunpack.c.h.b16 %v668
        %v1430 = vunpack.c.l.b16 %v669
        %v1431 = vunpack.c.h.b16 %v669
        %v1432 = vunpack.c.l.b16 %v670
        %v1433 = vunpack.c.h.b16 %v670
        %v1434 = vunpack.c.l.b16 %v671
        %v1435 = vunpack.c.h.b16 %v671
        %v1436 = vunpack.c.l.b16 %v672
        %v1437 = vunpack.c.h.b16 %v672
        %v1438 = vunpack.c.l.b16 %v673
        %v1439 = vunpack.c.h.b16 %v673
        %v1440 = vunpack.c.l.b16 %v674
        %v1441 = vunpack.c.h.b16 %v674
        %v1442 = vunpack.c.l.b16 %v675
        %v1443 = vunpack.c.h.b16 %v675
        %v1444 = vunpack.c.l.b16 %v676
        %v1445 = vunpack.c.h.b16 %v676
        %v1446 = vunpack.c.l.b16 %v677
        %v1447 = vunpack.c.h.b16 %v677
        %v1448 = vunpack.c.l.b16 %v678
        %v1449 = vunpack.c.h.b16 %v678
        %v1450 = vunpack.c.l.b16 %v679
        %v1451 = vunpack.c.h.b16 %v679
        %v1452 = vunpack.c.l.b16 %v680
        %v1453 = vunpack.c.h.b16 %v680
        %v1454 = vunpack.c.l.b16 %v681
        %v1455 = vunpack.c.h.b16 %v681
        %v1456 = vunpack.c.l.b16 %v682
        %v1457 = vunpack.c.h.b16 %v682
        %v1458 = vunpack.c.l.b16 %v683
        %v1459 = vunpack.c.h.b16 %v683
        %v1460 = vunpack.c.l.b16 %v684
        %v1461 = vunpack.c.h.b16 %v684
        %v1462 = vunpack.c.l.b16 %v685
        %v1463 = vunpack.c.h.b16 %v685
        %v1464 = vunpack.c.l.b16 %v686
        %v1465 = vunpack.c.h.b16 %v686
        %v1466 = vunpack.c.l.b16 %v687
        %v1467 = vunpack.c.h.b16 %v687
        %v1468 = vunpack.c.l.b16 %v688
        %v1469 = vunpack.c.h.b16 %v688
        %v1470 = vunpack.c.l.b16 %v689
        %v1471 = vunpack.c.h.b16 %v689
        %v1472 = vunpack.c.l.b16 %v690
        %v1473 = vunpack.c.h.b16 %v690
        %v1474 = vunpack.c.l.b16 %v691
        %v1475 = vunpack.c.h.b16 %v691
        %v1476 = vunpack.c.l.b16 %v692
        %v1477 = vunpack.c.h.b16 %v692
        %v1478 = vunpack.c.l.b16 %v693
        %v1479 = vunpack.c.h.b16 %v693
        %v1480 = vunpack.c.l.b16 %v694
        %v1481 = vunpack.c.h.b16 %v694
        %v1482 = vunpack.c.l.b16 %v695
        %v1483 = vunpack.c.h.b16 %v695
        %v1484 = vunpack.c.l.b16 %v696
        %v1485 = vunpack.c.h.b16 %v696
        %v1486 = vunpack.c.l.b16 %v697
        %v1487 = vunpack.c.h.b16 %v697
        %v1488 = vunpack.c.l.b16 %v698
        %v1489 = vunpack.c.h.b16 %v698
        %v1490 = vunpack.c.l.b16 %v699
        %v1491 = vunpack.c.h.b16 %v699
        %v1492 = vunpack.c.l.b16 %v700
        %v1493 = vunpack.c.h.b16 %v700
        %v1494 = vunpack.c.l.b16 %v701
        %v1495 = vunpack.c.h.b16 %v701
        %v1496 = vunpack.c.l.b16 %v702
        %v1497 = vunpack.c.h.b16 %v702
        %v1498 = vunpack.c.l.b16 %v703
        %v1499 = vunpack.c.h.b16 %v703
        %v1500 = vunpack.c.l.b16 %v704
        %v1501 = vunpack.c.h.b16 %v704
        %v1502 = vunpack.c.l.b16 %v705
        %v1503 = vunpack.c.h.b16 %v705
        %v1504 = vunpack.c.l.b16 %v706
        %v1505 = vunpack.c.h.b16 %v706
        %v1506 = vunpack.c.l.b16 %v707
        %v1507 = vunpack.c.h.b16 %v707
        %v1508 = vunpack.c.l.b16 %v708
        %v1509 = vunpack.c.h.b16 %v708
        %v1510 = vunpack.c.l.b16 %v709
        %v1511 = vunpack.c.h.b16 %v709
        %v1512 = vunpack.c.l.b16 %v710
        %v1513 = vunpack.c.h.b16 %v710
        %v1514 = vunpack.c.l.b16 %v711
        %v1515 = vunpack.c.h.b16 %v711
        %v1516 = vunpack.c.l.b16 %v712
        %v1517 = vunpack.c.h.b16 %v712
        %v1518 = vunpack.c.l.b16 %v713
        %v1519 = vunpack.c.h.b16 %v713
        %v1520 = vunpack.c.l.b16 %v714
        %v1521 = vunpack.c.h.b16 %v714
        %v1522 = vunpack.c.l.b16 %v715
        %v1523 = vunpack.c.h.b16 %v715
        %v1524 = vunpack.c.l.b16 %v716
        %v1525 = vunpack.c.h.b16 %v716
        %v1526 = vunpack.c.l.b16 %v717
        %v1527 = vunpack.c.h.b16 %v717
        %v1528 = vunpack.c.l.b16 %v718
        %v1529 = vunpack.c.h.b16 %v718
        %v1530 = vunpack.c.l.b16 %v719
        %v1531 = vunpack.c.h.b16 %v719
        %v1532 = vunpack.c.l.b16 %v720
        %v1533 = vunpack.c.h.b16 %v720
        %v1534 = vunpack.c.l.b16 %v721
        %v1535 = vunpack.c.h.b16 %v721
        %v1536 = vunpack.c.l.b16 %v722
        %v1537 = vunpack.c.h.b16 %v722
        %v1538 = vunpack.c.l.b16 %v723
        %v1539 = vunpack.c.h.b16 %v723
        %v1540 = vunpack.c.l.b16 %v724
        %v1541 = vunpack.c.h.b16 %v724
        %v1542 = vunpack.c.l.b16 %v725
        %v1543 = vunpack.c.h.b16 %v725
        %v1544 = vunpack.c.l.b16 %v726
        %v1545 = vunpack.c.h.b16 %v726
        %v1546 = vunpack.c.l.b16 %v727
        %v1547 = vunpack.c.h.b16 %v727
        %v1548 = vunpack.c.l.b16 %v728
        %v1549 = vunpack.c.h.b16 %v728
        %v1550 = vunpack.c.l.b16 %v729
        %v1551 = vunpack.c.h.b16 %v729
        %v1552 = vunpack.c.l.b16 %v730
        %v1553 = vunpack.c.h.b16 %v730
        %v1554 = vunpack.c.l.b16 %v731
        %v1555 = vunpack.c.h.b16 %v731
        %v1556 = vunpack.c.l.b16 %v732
        %v1557 = vunpack.c.h.b16 %v732
        %v1558 = vunpack.c.l.b16 %v733
        %v1559 = vunpack.c.h.b16 %v733
        %v1560 = vunpack.c.l.b16 %v734
        %v1561 = vunpack.c.h.b16 %v734
        %v1562 = vunpack.c.l.b16 %v735
        %v1563 = vunpack.c.h.b16 %v735
        %v1564 = vunpack.c.l.b16 %v736
        %v1565 = vunpack.c.h.b16 %v736
        %v1566 = vunpack.c.l.b16 %v737
        %v1567 = vunpack.c.h.b16 %v737
        %v1568 = vunpack.c.l.b16 %v738
        %v1569 = vunpack.c.h.b16 %v738
        %v1570 = vunpack.c.l.b16 %v739
        %v1571 = vunpack.c.h.b16 %v739
        %v1572 = vunpack.c.l.b16 %v740
        %v1573 = vunpack.c.h.b16 %v740
        %v1574 = vunpack.c.l.b16 %v741
        %v1575 = vunpack.c.h.b16 %v741
        %v1576 = vunpack.c.l.b16 %v742
        %v1577 = vunpack.c.h.b16 %v742
        %v1578 = vunpack.c.l.b16 %v743
        %v1579 = vunpack.c.h.b16 %v743
        %v1580 = vunpack.c.l.b16 %v744
        %v1581 = vunpack.c.h.b16 %v744
        %v1582 = vunpack.c.l.b16 %v745
        %v1583 = vunpack.c.h.b16 %v745
        %v1584 = vunpack.c.l.b16 %v746
        %v1585 = vunpack.c.h.b16 %v746
        %v1586 = vunpack.c.l.b16 %v747
        %v1587 = vunpack.c.h.b16 %v747
        %v1588 = vunpack.c.l.b16 %v748
        %v1589 = vunpack.c.h.b16 %v748
        %v1590 = vunpack.c.l.b16 %v749
        %v1591 = vunpack.c.h.b16 %v749
        %v1592 = vunpack.c.l.b16 %v750
        %v1593 = vunpack.c.h.b16 %v750
        %v1594 = vunpack.c.l.b16 %v751
        %v1595 = vunpack.c.h.b16 %v751
        %v1596 = vunpack.c.l.b16 %v752
        %v1597 = vunpack.c.h.b16 %v752
        %v1598 = vunpack.c.l.b16 %v753
        %v1599 = vunpack.c.h.b16 %v753
        %v1600 = vunpack.c.l.b16 %v754
        %v1601 = vunpack.c.h.b16 %v754
        %v1602 = vunpack.c.l.b16 %v755
        %v1603 = vunpack.c.h.b16 %v755
        %v1604 = vunpack.c.l.b16 %v756
        %v1605 = vunpack.c.h.b16 %v756
        %v1606 = vunpack.c.l.b16 %v757
        %v1607 = vunpack.c.h.b16 %v757
        %v1608 = vunpack.c.l.b16 %v758
        %v1609 = vunpack.c.h.b16 %v758
        %v1610 = vunpack.c.l.b16 %v759
        %v1611 = vunpack.c.h.b16 %v759
        %v1612 = vunpack.c.l.b16 %v760
        %v1613 = vunpack.c.h.b16 %v760
        %v1614 = vunpack.c.l.b16 %v761
        %v1615 = vunpack.c.h.b16 %v761
        %v1616 = vunpack.c.l.b16 %v762
        %v1617 = vunpack.c.h.b16 %v762
        %v1618 = vunpack.c.l.b16 %v763
        %v1619 = vunpack.c.h.b16 %v763
        %v1620 = vunpack.c.l.b16 %v764
        %v1621 = vunpack.c.h.b16 %v764
        %v1622 = vunpack.c.l.b16 %v765
        %v1623 = vunpack.c.h.b16 %v765
        %v1624 = vunpack.c.l.b16 %v766
        %v1625 = vunpack.c.h.b16 %v766
        %v1626 = vunpack.c.l.b16 %v767
        %v1627 = vunpack.c.h.b16 %v767
        %v1628 = vunpack.c.l.b16 %v768
        %v1629 = vunpack.c.h.b16 %v768
        %v1630 = vunpack.c.l.b16 %v769
        %v1631 = vunpack.c.h.b16 %v769
        %v1632 = vunpack.c.l.b16 %v770
        %v1633 = vunpack.c.h.b16 %v770
        %v1634 = vunpack.c.l.b16 %v771
        %v1635 = vunpack.c.h.b16 %v771
        %v1636 = vunpack.c.l.b16 %v772
        %v1637 = vunpack.c.h.b16 %v772
        %v1638 = vunpack.c.l.b16 %v773
        %v1639 = vunpack.c.h.b16 %v773
        %v1640 = vunpack.c.l.b16 %v774
        %v1641 = vunpack.c.h.b16 %v774
        %v1642 = vunpack.c.l.b16 %v775
        %v1643 = vunpack.c.h.b16 %v775
        %v1644 = vunpack.c.l.b16 %v776
        %v1645 = vunpack.c.h.b16 %v776
        %v1646 = vunpack.c.l.b16 %v777
        %v1647 = vunpack.c.h.b16 %v777
        %v1648 = vunpack.c.l.b16 %v778
        %v1649 = vunpack.c.h.b16 %v778
        %v1650 = vunpack.c.l.b16 %v779
        %v1651 = vunpack.c.h.b16 %v779
        %v1652 = vunpack.c.l.b16 %v780
        %v1653 = vunpack.c.h.b16 %v780
        %v1654 = vunpack.c.l.b16 %v781
        %v1655 = vunpack.c.h.b16 %v781
        %v1656 = vunpack.c.l.b16 %v782
        %v1657 = vunpack.c.h.b16 %v782
        %v1658 = vunpack.c.l.b16 %v783
        %v1659 = vunpack.c.h.b16 %v783
        %v1660 = vunpack.c.l.b16 %v784
        %v1661 = vunpack.c.h.b16 %v784
        %v1662 = vunpack.c.l.b16 %v785
        %v1663 = vunpack.c.h.b16 %v785
        %v1664 = vunpack.c.l.b16 %v786
        %v1665 = vunpack.c.h.b16 %v786
        %v1666 = vunpack.c.l.b16 %v787
        %v1667 = vunpack.c.h.b16 %v787
        %v1668 = vunpack.c.l.b16 %v788
        %v1669 = vunpack.c.h.b16 %v788
        %v1670 = vunpack.c.l.b16 %v789
        %v1671 = vunpack.c.h.b16 %v789
        %v1672 = vunpack.c.l.b16 %v790
        %v1673 = vunpack.c.h.b16 %v790
        %v1674 = vunpack.c.l.b16 %v791
        %v1675 = vunpack.c.h.b16 %v791
        %v1676 = vunpack.c.l.b16 %v792
        %v1677 = vunpack.c.h.b16 %v792
        %v1678 = vunpack.c.l.b16 %v793
        %v1679 = vunpack.c.h.b16 %v793
        %v1680 = vunpack.c.l.b16 %v794
        %v1681 = vunpack.c.h.b16 %v794
        %v1682 = vunpack.c.l.b16 %v795
        %v1683 = vunpack.c.h.b16 %v795
        %v1684 = vunpack.c.l.b16 %v796
        %v1685 = vunpack.c.h.b16 %v796
        %v1686 = vunpack.c.l.b16 %v797
        %v1687 = vunpack.c.h.b16 %v797
        %v1688 = vunpack.c.l.b16 %v798
        %v1689 = vunpack.c.h.b16 %v798
        %v1690 = vunpack.c.l.b16 %v799
        %v1691 = vunpack.c.h.b16 %v799
        %v1692 = vunpack.c.l.b16 %v800
        %v1693 = vunpack.c.h.b16 %v800
        %v1694 = vunpack.c.l.b16 %v801
        %v1695 = vunpack.c.h.b16 %v801
        %v1696 = vunpack.c.l.b16 %v802
        %v1697 = vunpack.c.h.b16 %v802
        %v1698 = vunpack.c.l.b16 %v803
        %v1699 = vunpack.c.h.b16 %v803
        %v1700 = vunpack.c.l.b16 %v804
        %v1701 = vunpack.c.h.b16 %v804
        %v1702 = vunpack.c.l.b16 %v805
        %v1703 = vunpack.c.h.b16 %v805
        %v1704 = vunpack.c.l.b16 %v806
        %v1705 = vunpack.c.h.b16 %v806
        %v1706 = vunpack.c.l.b16 %v807
        %v1707 = vunpack.c.h.b16 %v807
        %v1708 = vunpack.c.l.b16 %v808
        %v1709 = vunpack.c.h.b16 %v808
        %v1710 = vunpack.c.l.b16 %v809
        %v1711 = vunpack.c.h.b16 %v809
        %v1712 = vunpack.c.l.b16 %v810
        %v1713 = vunpack.c.h.b16 %v810
        %v1714 = vunpack.c.l.b16 %v811
        %v1715 = vunpack.c.h.b16 %v811
        %v1716 = vunpack.c.l.b16 %v812
        %v1717 = vunpack.c.h.b16 %v812
        %v1718 = vunpack.c.l.b16 %v813
        %v1719 = vunpack.c.h.b16 %v813
        %v1720 = vunpack.c.l.b16 %v814
        %v1721 = vunpack.c.h.b16 %v814
        %v1722 = vunpack.c.l.b16 %v815
        %v1723 = vunpack.c.h.b16 %v815
        %v1724 = vunpack.c.l.b16 %v816
        %v1725 = vunpack.c.h.b16 %v816
        %v1726 = vunpack.c.l.b16 %v817
        %v1727 = vunpack.c.h.b16 %v817
        %v1728 = vunpack.c.l.b16 %v818
        %v1729 = vunpack.c.h.b16 %v818
        %v1730 = vunpack.c.l.b16 %v819
        %v1731 = vunpack.c.h.b16 %v819
        %v1732 = vunpack.c.l.b16 %v820
        %v1733 = vunpack.c.h.b16 %v820
        %v1734 = vunpack.c.l.b16 %v821
        %v1735 = vunpack.c.h.b16 %v821
        %v1736 = vunpack.c.l.b16 %v822
        %v1737 = vunpack.c.h.b16 %v822
        %v1738 = vunpack.c.l.b16 %v823
        %v1739 = vunpack.c.h.b16 %v823
        %v1740 = vunpack.c.l.b16 %v824
        %v1741 = vunpack.c.h.b16 %v824
        %v1742 = vunpack.c.l.b16 %v825
        %v1743 = vunpack.c.h.b16 %v825
        %v1744 = vunpack.c.l.b16 %v826
        %v1745 = vunpack.c.h.b16 %v826
        %v1746 = vunpack.c.l.b16 %v827
        %v1747 = vunpack.c.h.b16 %v827
        %v1748 = vunpack.c.l.b16 %v828
        %v1749 = vunpack.c.h.b16 %v828
        %v1750 = vunpack.c.l.b16 %v829
        %v1751 = vunpack.c.h.b16 %v829
        %v1752 = vunpack.c.l.b16 %v830
        %v1753 = vunpack.c.h.b16 %v830
        %v1754 = vunpack.c.l.b16 %v831
        %v1755 = vunpack.c.h.b16 %v831
        %v1756 = vunpack.c.l.b16 %v832
        %v1757 = vunpack.c.h.b16 %v832
        %v1758 = vunpack.c.l.b16 %v833
        %v1759 = vunpack.c.h.b16 %v833
        %v1760 = vunpack.c.l.b16 %v834
        %v1761 = vunpack.c.h.b16 %v834
        %v1762 = vunpack.c.l.b16 %v835
        %v1763 = vunpack.c.h.b16 %v835
        %v1764 = vunpack.c.l.b16 %v836
        %v1765 = vunpack.c.h.b16 %v836
        %v1766 = vunpack.c.l.b16 %v837
        %v1767 = vunpack.c.h.b16 %v837
        %v1768 = vunpack.c.l.b16 %v838
        %v1769 = vunpack.c.h.b16 %v838
        %v1770 = vunpack.c.l.b16 %v839
        %v1771 = vunpack.c.h.b16 %v839
        %v1772 = vunpack.c.l.b16 %v840
        %v1773 = vunpack.c.h.b16 %v840
        %v1774 = vunpack.c.l.b16 %v841
        %v1775 = vunpack.c.h.b16 %v841
        %v1776 = vunpack.c.l.b16 %v842
        %v1777 = vunpack.c.h.b16 %v842
        %v1778 = vunpack.c.l.b16 %v843
        %v1779 = vunpack.c.h.b16 %v843
        %v1780 = vunpack.c.l.b16 %v844
        %v1781 = vunpack.c.h.b16 %v844
        %v1782 = vunpack.c.l.b16 %v845
        %v1783 = vunpack.c.h.b16 %v845
        %v1784 = vunpack.c.l.b16 %v846
        %v1785 = vunpack.c.h.b16 %v846
        %v1786 = vunpack.c.l.b16 %v847
        %v1787 = vunpack.c.h.b16 %v847
        %v1788 = vunpack.c.l.b16 %v848
        %v1789 = vunpack.c.h.b16 %v848
        %v1790 = vunpack.c.l.b16 %v849
        %v1791 = vunpack.c.h.b16 %v849
        %v1792 = vunpack.c.l.b16 %v850
        %v1793 = vunpack.c.h.b16 %v850
        %v1794 = vunpack.c.l.b16 %v851
        %v1795 = vunpack.c.h.b16 %v851
        %v1796 = vunpack.c.l.b16 %v852
        %v1797 = vunpack.c.h.b16 %v852
        %v1798 = vunpack.c.l.b16 %v853
        %v1799 = vunpack.c.h.b16 %v853
        %v1800 = vunpack.c.l.b16 %v854
        %v1801 = vunpack.c.h.b16 %v854
        %v1802 = vunpack.c.l.b16 %v855
        %v1803 = vunpack.c.h.b16 %v855
        %v1804 = vunpack.c.l.b16 %v856
        %v1805 = vunpack.c.h.b16 %v856
        %v1806 = vunpack.c.l.b16 %v857
        %v1807 = vunpack.c.h.b16 %v857
        %v1808 = vunpack.c.l.b16 %v858
        %v1809 = vunpack.c.h.b16 %v858
        %v1810 = vunpack.c.l.b16 %v859
        %v1811 = vunpack.c.h.b16 %v859
        %v1812 = vunpack.c.l.b16 %v860
        %v1813 = vunpack.c.h.b16 %v860
        %v1814 = vunpack.c.l.b16 %v861
        %v1815 = vunpack.c.h.b16 %v861
        %v1816 = vunpack.c.l.b16 %v862
        %v1817 = vunpack.c.h.b16 %v862
        %v1818 = vunpack.c.l.b16 %v863
        %v1819 = vunpack.c.h.b16 %v863
        %v1820 = vunpack.c.l.b16 %v864
        %v1821 = vunpack.c.h.b16 %v864
        %v1822 = vunpack.c.l.b16 %v865
        %v1823 = vunpack.c.h.b16 %v865
        %v1824 = vunpack.c.l.b16 %v866
        %v1825 = vunpack.c.h.b16 %v866
        %v1826 = vunpack.c.l.b16 %v867
        %v1827 = vunpack.c.h.b16 %v867
        %v1828 = vunpack.c.l.b16 %v868
        %v1829 = vunpack.c.h.b16 %v868
        %v1830 = vunpack.c.l.b16 %v869
        %v1831 = vunpack.c.h.b16 %v869
        %v1832 = vunpack.c.l.b16 %v870
        %v1833 = vunpack.c.h.b16 %v870
        %v1834 = vunpack.c.l.b16 %v871
        %v1835 = vunpack.c.h.b16 %v871
        %v1836 = vunpack.c.l.b16 %v872
        %v1837 = vunpack.c.h.b16 %v872
        %v1838 = vunpack.c.l.b16 %v873
        %v1839 = vunpack.c.h.b16 %v873
        %v1840 = vunpack.c.l.b16 %v874
        %v1841 = vunpack.c.h.b16 %v874
        %v1842 = vunpack.c.l.b16 %v875
        %v1843 = vunpack.c.h.b16 %v875
        %v1844 = vunpack.c.l.b16 %v876
        %v1845 = vunpack.c.h.b16 %v876
        %v1846 = vunpack.c.l.b16 %v877
        %v1847 = vunpack.c.h.b16 %v877
        %v1848 = vunpack.c.l.b16 %v878
        %v1849 = vunpack.c.h.b16 %v878
        %v1850 = vunpack.c.l.b16 %v879
        %v1851 = vunpack.c.h.b16 %v879
        %v1852 = vunpack.c.l.b16 %v880
        %v1853 = vunpack.c.h.b16 %v880
        %v1854 = vunpack.c.l.b16 %v881
        %v1855 = vunpack.c.h.b16 %v881
        %v1856 = vunpack.c.l.b16 %v882
        %v1857 = vunpack.c.h.b16 %v882
        %v1858 = vunpack.c.l.b16 %v883
        %v1859 = vunpack.c.h.b16 %v883
        %v1860 = vunpack.c.l.b16 %v884
        %v1861 = vunpack.c.h.b16 %v884
        %v1862 = vunpack.c.l.b16 %v885
        %v1863 = vunpack.c.h.b16 %v885
        %v1864 = vunpack.c.l.b16 %v886
        %v1865 = vunpack.c.h.b16 %v886
        %v1866 = vunpack.c.l.b16 %v887
        %v1867 = vunpack.c.h.b16 %v887
        %v1868 = vunpack.c.l.b16 %v888
        %v1869 = vunpack.c.h.b16 %v888
        %v1870 = vunpack.c.l.b16 %v889
        %v1871 = vunpack.c.h.b16 %v889
        %v1872 = vpack.c.b16 %v1428, %v1424
        %v1873 = vpack.c.b16 %v1429, %v1425
        %v1874 = vpack.c.b16 %v1430, %v1426
        %v1875 = vpack.c.b16 %v1431, %v1427
        %v1876 = vpack.c.b16 %v1436, %v1432
        %v1877 = vpack.c.b16 %v1437, %v1433
        %v1878 = vpack.c.b16 %v1438, %v1434
        %v1879 = vpack.c.b16 %v1439, %v1435
        %v1880 = vpack.c.b16 %v1444, %v1440
        %v1881 = vpack.c.b16 %v1445, %v1441
        %v1882 = vpack.c.b16 %v1446, %v1442
        %v1883 = vpack.c.b16 %v1447, %v1443
        %v1884 = vpack.c.b16 %v1452, %v1448
        %v1885 = vpack.c.b16 %v1453, %v1449
        %v1886 = vpack.c.b16 %v1454, %v1450
        %v1887 = vpack.c.b16 %v1455, %v1451
        %v1888 = vpack.c.b16 %v1460, %v1456
        %v1889 = vpack.c.b16 %v1461, %v1457
        %v1890 = vpack.c.b16 %v1462, %v1458
        %v1891 = vpack.c.b16 %v1463, %v1459
        %v1892 = vpack.c.b16 %v1468, %v1464
        %v1893 = vpack.c.b16 %v1469, %v1465
        %v1894 = vpack.c.b16 %v1470, %v1466
        %v1895 = vpack.c.b16 %v1471, %v1467
        %v1896 = vpack.c.b16 %v1476, %v1472
        %v1897 = vpack.c.b16 %v1477, %v1473
        %v1898 = vpack.c.b16 %v1478, %v1474
        %v1899 = vpack.c.b16 %v1479, %v1475
        %v1900 = vpack.c.b16 %v1484, %v1480
        %v1901 = vpack.c.b16 %v1485, %v1481
        %v1902 = vpack.c.b16 %v1486, %v1482
        %v1903 = vpack.c.b16 %v1487, %v1483
        %v1904 = vpack.c.b16 %v1492, %v1488
        %v1905 = vpack.c.b16 %v1493, %v1489
        %v1906 = vpack.c.b16 %v1494, %v1490
        %v1907 = vpack.c.b16 %v1495, %v1491
        %v1908 = vpack.c.b16 %v1500, %v1496
        %v1909 = vpack.c.b16 %v1501, %v1497
        %v1910 = vpack.c.b16 %v1502, %v1498
        %v1911 = vpack.c.b16 %v1503, %v1499
        %v1912 = vpack.c.b16 %v1508, %v1504
        %v1913 = vpack.c.b16 %v1509, %v1505
        %v1914 = vpack.c.b16 %v1510, %v1506
        %v1915 = vpack.c.b16 %v1511, %v1507
        %v1916 = vpack.c.b16 %v1516, %v1512
        %v1917 = vpack.c.b16 %v1517, %v1513
        %v1918 = vpack.c.b16 %v1518, %v1514
        %v1919 = vpack.c.b16 %v1519, %v1515
        %v1920 = vpack.c.b16 %v1524, %v1520
        %v1921 = vpack.c.b16 %v1525, %v1521
        %v1922 = vpack.c.b16 %v1526, %v1522
        %v1923 = vpack.c.b16 %v1527, %v1523
        %v1924 = vpack.c.b16 %v1532, %v1528
        %v1925 = vpack.c.b16 %v1533, %v1529
        %v1926 = vpack.c.b16 %v1534, %v1530
        %v1927 = vpack.c.b16 %v1535, %v1531
        %v1928 = vpack.c.b16 %v1540, %v1536
        %v1929 = vpack.c.b16 %v1541, %v1537
        %v1930 = vpack.c.b16 %v1542, %v1538
        %v1931 = vpack.c.b16 %v1543, %v1539
        %v1932 = vpack.c.b16 %v1548, %v1544
        %v1933 = vpack.c.b16 %v1549, %v1545
        %v1934 = vpack.c.b16 %v1550, %v1546
        %v1935 = vpack.c.b16 %v1551, %v1547
        %v1936 = vpack.c.b16 %v1556, %v1552
        %v1937 = vpack.c.b16 %v1557, %v1553
        %v1938 = vpack.c.b16 %v1558, %v1554
        %v1939 = vpack.c.b16 %v1559, %v1555
        %v1940 = vpack.c.b16 %v1564, %v1560
        %v1941 = vpack.c.b16 %v1565, %v1561
        %v1942 = vpack.c.b16 %v1566, %v1562
        %v1943 = vpack.c.b16 %v1567, %v1563
        %v1944 = vpack.c.b16 %v1572, %v1568
        %v1945 = vpack.c.b16 %v1573, %v1569
        %v1946 = vpack.c.b16 %v1574, %v1570
        %v1947 = vpack.c.b16 %v1575, %v1571
        %v1948 = vpack.c.b16 %v1580, %v1576
        %v1949 = vpack.c.b16 %v1581, %v1577
        %v1950 = vpack.c.b16 %v1582, %v1578
        %v1951 = vpack.c.b16 %v1583, %v1579
        %v1952 = vpack.c.b16 %v1588, %v1584
        %v1953 = vpack.c.b16 %v1589, %v1585
        %v1954 = vpack.c.b16 %v1590, %v1586
        %v1955 = vpack.c.b16 %v1591, %v1587
        %v1956 = vpack.c.b16 %v1596, %v1592
        %v1957 = vpack.c.b16 %v1597, %v1593
        %v1958 = vpack.c.b16 %v1598, %v1594
        %v1959 = vpack.c.b16 %v1599, %v1595
        %v1960 = vpack.c.b16 %v1604, %v1600
        %v1961 = vpack.c.b16 %v1605, %v1601
        %v1962 = vpack.c.b16 %v1606, %v1602
        %v1963 = vpack.c.b16 %v1607, %v1603
        %v1964 = vpack.c.b16 %v1612, %v1608
        %v1965 = vpack.c.b16 %v1613, %v1609
        %v1966 = vpack.c.b16 %v1614, %v1610
        %v1967 = vpack.c.b16 %v1615, %v1611
        %v1968 = vpack.c.b16 %v1620, %v1616
        %v1969 = vpack.c.b16 %v1621, %v1617
        %v1970 = vpack.c.b16 %v1622, %v1618
        %v1971 = vpack.c.b16 %v1623, %v1619
        %v1972 = vpack.c.b16 %v1628, %v1624
        %v1973 = vpack.c.b16 %v1629, %v1625
        %v1974 = vpack.c.b16 %v1630, %v1626
        %v1975 = vpack.c.b16 %v1631, %v1627
        %v1976 = vpack.c.b16 %v1636, %v1632
        %v1977 = vpack.c.b16 %v1637, %v1633
        %v1978 = vpack.c.b16 %v1638, %v1634
        %v1979 = vpack.c.b16 %v1639, %v1635
        %v1980 = vpack.c.b16 %v1644, %v1640
        %v1981 = vpack.c.b16 %v1645, %v1641
        %v1982 = vpack.c.b16 %v1646, %v1642
        %v1983 = vpack.c.b16 %v1647, %v1643
        %v1984 = vpack.c.b16 %v1652, %v1648
        %v1985 = vpack.c.b16 %v1653, %v1649
        %v1986 = vpack.c.b16 %v1654, %v1650
        %v1987 = vpack.c.b16 %v1655, %v1651
        %v1988 = vpack.c.b16 %v1660, %v1656
        %v1989 = vpack.c.b16 %v1661, %v1657
        %v1990 = vpack.c.b16 %v1662, %v1658
        %v1991 = vpack.c.b16 %v1663, %v1659
        %v1992 = vpack.c.b16 %v1668, %v1664
        %v1993 = vpack.c.b16 %v1669, %v1665
        %v1994 = vpack.c.b16 %v1670, %v1666
        %v1995 = vpack.c.b16 %v1671, %v1667
        %v1996 = vpack.c.b16 %v1676, %v1672
        %v1997 = vpack.c.b16 %v1677, %v1673
        %v1998 = vpack.c.b16 %v1678, %v1674
        %v1999 = vpack.c.b16 %v1679, %v1675
        %v2000 = vpack.c.b16 %v1684, %v1680
        %v2001 = vpack.c.b16 %v1685, %v1681
        %v2002 = vpack.c.b16 %v1686, %v1682
        %v2003 = vpack.c.b16 %v1687, %v1683
        %v2004 = vpack.c.b16 %v1692, %v1688
        %v2005 = vpack.c.b16 %v1693, %v1689
        %v2006 = vpack.c.b16 %v1694, %v1690
        %v2007 = vpack.c.b16 %v1695, %v1691
        %v2008 = vpack.c.b16 %v1700, %v1696
        %v2009 = vpack.c.b16 %v1701, %v1697
        %v2010 = vpack.c.b16 %v1702, %v1698
        %v2011 = vpack.c.b16 %v1703, %v1699
        %v2012 = vpack.c.b16 %v1708, %v1704
        %v2013 = vpack.c.b16 %v1709, %v1705
        %v2014 = vpack.c.b16 %v1710, %v1706
        %v2015 = vpack.c.b16 %v1711, %v1707
        %v2016 = vpack.c.b16 %v1716, %v1712
        %v2017 = vpack.c.b16 %v1717, %v1713
        %v2018 = vpack.c.b16 %v1718, %v1714
        %v2019 = vpack.c.b16 %v1719, %v1715
        %v2020 = vpack.c.b16 %v1724, %v1720
        %v2021 = vpack.c.b16 %v1725, %v1721
        %v2022 = vpack.c.b16 %v1726, %v1722
        %v2023 = vpack.c.b16 %v1727, %v1723
        %v2024 = vpack.c.b16 %v1732, %v1728
        %v2025 = vpack.c.b16 %v1733, %v1729
        %v2026 = vpack.c.b16 %v1734, %v1730
        %v2027 = vpack.c.b16 %v1735, %v1731
        %v2028 = vpack.c.b16 %v1740, %v1736
        %v2029 = vpack.c.b16 %v1741, %v1737
        %v2030 = vpack.c.b16 %v1742, %v1738
        %v2031 = vpack.c.b16 %v1743, %v1739
        %v2032 = vpack.c.b16 %v1748, %v1744
        %v2033 = vpack.c.b16 %v1749, %v1745
        %v2034 = vpack.c.b16 %v1750, %v1746
        %v2035 = vpack.c.b16 %v1751, %v1747
        %v2036 = vpack.c.b16 %v1756, %v1752
        %v2037 = vpack.c.b16 %v1757, %v1753
        %v2038 = vpack.c.b16 %v1758, %v1754
        %v2039 = vpack.c.b16 %v1759, %v1755
        %v2040 = vpack.c.b16 %v1764, %v1760
        %v2041 = vpack.c.b16 %v1765, %v1761
        %v2042 = vpack.c.b16 %v1766, %v1762
        %v2043 = vpack.c.b16 %v1767, %v1763
        %v2044 = vpack.c.b16 %v1772, %v1768
        %v2045 = vpack.c.b16 %v1773, %v1769
        %v2046 = vpack.c.b16 %v1774, %v1770
        %v2047 = vpack.c.b16 %v1775, %v1771
        %v2048 = vpack.c.b16 %v1780, %v1776
        %v2049 = vpack.c.b16 %v1781, %v1777
        %v2050 = vpack.c.b16 %v1782, %v1778
        %v2051 = vpack.c.b16 %v1783, %v1779
        %v2052 = vpack.c.b16 %v1788, %v1784
        %v2053 = vpack.c.b16 %v1789, %v1785
        %v2054 = vpack.c.b16 %v1790, %v1786
        %v2055 = vpack.c.b16 %v1791, %v1787
        %v2056 = vpack.c.b16 %v1796, %v1792
        %v2057 = vpack.c.b16 %v1797, %v1793
        %v2058 = vpack.c.b16 %v1798, %v1794
        %v2059 = vpack.c.b16 %v1799, %v1795
        %v2060 = vpack.c.b16 %v1804, %v1800
        %v2061 = vpack.c.b16 %v1805, %v1801
        %v2062 = vpack.c.b16 %v1806, %v1802
        %v2063 = vpack.c.b16 %v1807, %v1803
        %v2064 = vpack.c.b16 %v1812, %v1808
        %v2065 = vpack.c.b16 %v1813, %v1809
        %v2066 = vpack.c.b16 %v1814, %v1810
        %v2067 = vpack.c.b16 %v1815, %v1811
        %v2068 = vpack.c.b16 %v1820, %v1816
        %v2069 = vpack.c.b16 %v1821, %v1817
        %v2070 = vpack.c.b16 %v1822, %v1818
        %v2071 = vpack.c.b16 %v1823, %v1819
        %v2072 = vpack.c.b16 %v1828, %v1824
        %v2073 = vpack.c.b16 %v1829, %v1825
        %v2074 = vpack.c.b16 %v1830, %v1826
        %v2075 = vpack.c.b16 %v1831, %v1827
        %v2076 = vpack.c.b16 %v1836, %v1832
        %v2077 = vpack.c.b16 %v1837, %v1833
        %v2078 = vpack.c.b16 %v1838, %v1834
        %v2079 = vpack.c.b16 %v1839, %v1835
        %v2080 = vpack.c.b16 %v1844, %v1840
        %v2081 = vpack.c.b16 %v1845, %v1841
        %v2082 = vpack.c.b16 %v1846, %v1842
        %v2083 = vpack.c.b16 %v1847, %v1843
        %v2084 = vpack.c.b16 %v1852, %v1848
        %v2085 = vpack.c.b16 %v1853, %v1849
        %v2086 = vpack.c.b16 %v1854, %v1850
        %v2087 = vpack.c.b16 %v1855, %v1851
        %v2088 = vpack.c.b16 %v1860, %v1856
        %v2089 = vpack.c.b16 %v1861, %v1857
        %v2090 = vpack.c.b16 %v1862, %v1858
        %v2091 = vpack.c.b16 %v1863, %v1859
        %v2092 = vpack.c.b16 %v1868, %v1864
        %v2093 = vpack.c.b16 %v1869, %v1865
        %v2094 = vpack.c.b16 %v1870, %v1866
        %v2095 = vpack.c.b16 %v1871, %v1867
        %2320 = vmatprep.subr.bf16.mxu0 %v1873
        %2321 = vmatpush1.bf16.msra.mxu0 %v1872
        %2322 = vmatprep.subr.bf16.mxu0 %v1877
        %2323 = vmatpush1.bf16.msra.mxu0 %v1876
        %2324 = vmatprep.subr.bf16.mxu0 %v1881
        %2325 = vmatpush1.bf16.msra.mxu0 %v1880
        %2326 = vmatprep.subr.bf16.mxu0 %v1885
        %2327 = vmatpush1.bf16.msra.mxu0 %v1884
        %2328 = vmatprep.subr.bf16.mxu0 %v1889
        %2329 = vmatpush1.bf16.msra.mxu0 %v1888
        %2330 = vmatprep.subr.bf16.mxu0 %v1893
        %2331 = vmatpush1.bf16.msra.mxu0 %v1892
        %2332 = vmatprep.subr.bf16.mxu0 %v1897
        %2333 = vmatpush1.bf16.msra.mxu0 %v1896
        %2334 = vmatprep.subr.bf16.mxu0 %v1901
        %2335 = vmatpush1.bf16.msra.mxu0 %v1900
        %2336 = vmatprep.subr.bf16.mxu0 %v1905
        %2337 = vmatpush1.bf16.msra.mxu0 %v1904
        %2338 = vmatprep.subr.bf16.mxu0 %v1909
        %2339 = vmatpush1.bf16.msra.mxu0 %v1908
        %2340 = vmatprep.subr.bf16.mxu0 %v1913
        %2341 = vmatpush1.bf16.msra.mxu0 %v1912
        %2342 = vmatprep.subr.bf16.mxu0 %v1917
        %2343 = vmatpush1.bf16.msra.mxu0 %v1916
        %2344 = vmatprep.subr.bf16.mxu0 %v1921
        %2345 = vmatpush1.bf16.msra.mxu0 %v1920
        %2346 = vmatprep.subr.bf16.mxu0 %v1925
        %2347 = vmatpush1.bf16.msra.mxu0 %v1924
        %2348 = vmatprep.subr.bf16.mxu0 %v1929
        %2349 = vmatpush1.bf16.msra.mxu0 %v1928
        %2350 = vmatprep.subr.bf16.mxu0 %v1933
        %2351 = vmatpush1.bf16.msra.mxu0 %v1932
        %2352 = vmatprep.mubr.bf16.mxu0 %v1089
        %2353 = vmatmul.mubr.bf16.gmra.mrb[0].mxu0 %v1088
        %v2354 = vpop.f32.mrb[0].mxu0
        %v2355 = vadd.f32 %v895, %v2354
        %v2356 = vpop.f32.mrb[0].mxu0
        %v2357 = vadd.f32 %v899, %v2356
        %v2358 = vpop.f32.mrb[0].mxu0
        %v2359 = vadd.f32 %v895, %v2358
        %v2360 = vpop.f32.mrb[0].mxu0
        %v2361 = vadd.f32 %v899, %v2360
        %2362 = vmatprep.mubr.bf16.mxu0 %v1096
        %2363 = vmatmul.mubr.bf16.gmra.mrb[0].mxu0 %v1095
        %v2364 = vpop.f32.mrb[0].mxu0
        %v2365 = vadd.f32 %v895, %v2364
        %v2366 = vpop.f32.mrb[0].mxu0
        %v2367 = vadd.f32 %v899, %v2366
        %v2368 = vpop.f32.mrb[0].mxu0
        %v2369 = vadd.f32 %v895, %v2368
        %v2370 = vpop.f32.mrb[0].mxu0
        %v2371 = vadd.f32 %v899, %v2370
        %2372 = vmatprep.mubr.bf16.mxu0 %v1103
        %2373 = vmatmul.mubr.bf16.gmra.mrb[0].mxu0 %v1102
        %v2374 = vpop.f32.mrb[0].mxu0
        %v2375 = vadd.f32 %v895, %v2374
        %v2376 = vpop.f32.mrb[0].mxu0
        %v2377 = vadd.f32 %v899, %v2376
        %v2378 = vpop.f32.mrb[0].mxu0
        %v2379 = vadd.f32 %v895, %v2378
        %v2380 = vpop.f32.mrb[0].mxu0
        %v2381 = vadd.f32 %v899, %v2380
        %2382 = vmatprep.mubr.bf16.mxu0 %v1110
        %2383 = vmatmul.mubr.bf16.gmra.mrb[0].mxu0 %v1109
        %v2384 = vpop.f32.mrb[0].mxu0
        %v2385 = vadd.f32 %v895, %v2384
        %v2386 = vpop.f32.mrb[0].mxu0
        %v2387 = vadd.f32 %v899, %v2386
        %v2388 = vpop.f32.mrb[0].mxu0
        %v2389 = vadd.f32 %v895, %v2388
        %v2390 = vpop.f32.mrb[0].mxu0
        %v2391 = vadd.f32 %v899, %v2390
        %2392 = vmatprep.mubr.bf16.mxu0 %v1117
        %2393 = vmatmul.mubr.bf16.gmra.mrb[0].mxu0 %v1116
        %v2394 = vpop.f32.mrb[0].mxu0
        %v2395 = vadd.f32 %v895, %v2394
        %v2396 = vpop.f32.mrb[0].mxu0
        %v2397 = vadd.f32 %v899, %v2396
        %v2398 = vpop.f32.mrb[0].mxu0
        %v2399 = vadd.f32 %v895, %v2398
        %v2400 = vpop.f32.mrb[0].mxu0
        %v2401 = vadd.f32 %v899, %v2400
        %2402 = vmatprep.mubr.bf16.mxu0 %v1124
        %2403 = vmatmul.mubr.bf16.gmra.mrb[0].mxu0 %v1123
        %v2404 = vpop.f32.mrb[0].mxu0
        %v2405 = vadd.f32 %v895, %v2404
        %v2406 = vpop.f32.mrb[0].mxu0
        %v2407 = vadd.f32 %v899, %v2406
        %v2408 = vpop.f32.mrb[0].mxu0
        %v2409 = vadd.f32 %v895, %v2408
        %v2410 = vpop.f32.mrb[0].mxu0
        %v2411 = vadd.f32 %v899, %v2410
        %2412 = vmatprep.mubr.bf16.mxu0 %v1131
        %2413 = vmatmul.mubr.bf16.gmra.mrb[0].mxu0 %v1130
        %v2414 = vpop.f32.mrb[0].mxu0
        %v2415 = vadd.f32 %v895, %v2414
        %v2416 = vpop.f32.mrb[0].mxu0
        %v2417 = vadd.f32 %v899, %v2416
        %v2418 = vpop.f32.mrb[0].mxu0
        %v2419 = vadd.f32 %v895, %v2418
        %v2420 = vpop.f32.mrb[0].mxu0
        %v2421 = vadd.f32 %v899, %v2420
        %2422 = vmatprep.mubr.bf16.mxu0 %v1138
        %2423 = vmatmul.mubr.bf16.gmra.mrb[0].mxu0 %v1137
        %v2424 = vpop.f32.mrb[0].mxu0
        %v2425 = vadd.f32 %v895, %v2424
        %v2426 = vpop.f32.mrb[0].mxu0
        %v2427 = vadd.f32 %v899, %v2426
        %v2428 = vpop.f32.mrb[0].mxu0
        %v2429 = vadd.f32 %v895, %v2428
        %v2430 = vpop.f32.mrb[0].mxu0
        %v2431 = vadd.f32 %v899, %v2430
        %2432 = vdwg.mxu0
        %2433 = vmatprep.subr.bf16.mxu0 %v1937
        %2434 = vmatpush1.bf16.msra.mxu0 %v1936
        %2435 = vmatprep.subr.bf16.mxu0 %v1941
        %2436 = vmatpush1.bf16.msra.mxu0 %v1940
        %2437 = vmatprep.subr.bf16.mxu0 %v1945
        %2438 = vmatpush1.bf16.msra.mxu0 %v1944
        %2439 = vmatprep.subr.bf16.mxu0 %v1949
        %2440 = vmatpush1.bf16.msra.mxu0 %v1948
        %2441 = vmatprep.subr.bf16.mxu0 %v1953
        %2442 = vmatpush1.bf16.msra.mxu0 %v1952
        %2443 = vmatprep.subr.bf16.mxu0 %v1957
        %2444 = vmatpush1.bf16.msra.mxu0 %v1956
        %2445 = vmatprep.subr.bf16.mxu0 %v1961
        %2446 = vmatpush1.bf16.msra.mxu0 %v1960
        %2447 = vmatprep.subr.bf16.mxu0 %v1965
        %2448 = vmatpush1.bf16.msra.mxu0 %v1964
        %2449 = vmatprep.subr.bf16.mxu0 %v1969
        %2450 = vmatpush1.bf16.msra.mxu0 %v1968
        %2451 = vmatprep.subr.bf16.mxu0 %v1973
        %2452 = vmatpush1.bf16.msra.mxu0 %v1972
        %2453 = vmatprep.subr.bf16.mxu0 %v1977
        %2454 = vmatpush1.bf16.msra.mxu0 %v1976
        %2455 = vmatprep.subr.bf16.mxu0 %v1981
        %2456 = vmatpush1.bf16.msra.mxu0 %v1980
        %2457 = vmatprep.subr.bf16.mxu0 %v1985
        %2458 = vmatpush1.bf16.msra.mxu0 %v1984
        %2459 = vmatprep.subr.bf16.mxu0 %v1989
        %2460 = vmatpush1.bf16.msra.mxu0 %v1988
        %2461 = vmatprep.subr.bf16.mxu0 %v1993
        %2462 = vmatpush1.bf16.msra.mxu0 %v1992
        %2463 = vmatprep.subr.bf16.mxu0 %v1997
        %2464 = vmatpush1.bf16.msra.mxu0 %v1996
        %2465 = vmatprep.mubr.bf16.mxu0 %v1091
        %2466 = vmatmul.mubr.bf16.gmra.mrb[0].mxu0 %v1090
        %v2467 = vpop.f32.mrb[0].mxu0
        %v2468 = vadd.f32 %v2355, %v2467
        %v2469 = vpop.f32.mrb[0].mxu0
        %v2470 = vadd.f32 %v2357, %v2469
        %v2471 = vpop.f32.mrb[0].mxu0
        %v2472 = vadd.f32 %v2359, %v2471
        %v2473 = vpop.f32.mrb[0].mxu0
        %v2474 = vadd.f32 %v2361, %v2473
        %2475 = vmatprep.mubr.bf16.mxu0 %v1098
        %2476 = vmatmul.mubr.bf16.gmra.mrb[0].mxu0 %v1097
        %v2477 = vpop.f32.mrb[0].mxu0
        %v2478 = vadd.f32 %v2365, %v2477
        %v2479 = vpop.f32.mrb[0].mxu0
        %v2480 = vadd.f32 %v2367, %v2479
        %v2481 = vpop.f32.mrb[0].mxu0
        %v2482 = vadd.f32 %v2369, %v2481
        %v2483 = vpop.f32.mrb[0].mxu0
        %v2484 = vadd.f32 %v2371, %v2483
        %2485 = vmatprep.mubr.bf16.mxu0 %v1105
        %2486 = vmatmul.mubr.bf16.gmra.mrb[0].mxu0 %v1104
        %v2487 = vpop.f32.mrb[0].mxu0
        %v2488 = vadd.f32 %v2375, %v2487
        %v2489 = vpop.f32.mrb[0].mxu0
        %v2490 = vadd.f32 %v2377, %v2489
        %v2491 = vpop.f32.mrb[0].mxu0
        %v2492 = vadd.f32 %v2379, %v2491
        %v2493 = vpop.f32.mrb[0].mxu0
        %v2494 = vadd.f32 %v2381, %v2493
        %2495 = vmatprep.mubr.bf16.mxu0 %v1112
        %2496 = vmatmul.mubr.bf16.gmra.mrb[0].mxu0 %v1111
        %v2497 = vpop.f32.mrb[0].mxu0
        %v2498 = vadd.f32 %v2385, %v2497
        %v2499 = vpop.f32.mrb[0].mxu0
        %v2500 = vadd.f32 %v2387, %v2499
        %v2501 = vpop.f32.mrb[0].mxu0
        %v2502 = vadd.f32 %v2389, %v2501
        %v2503 = vpop.f32.mrb[0].mxu0
        %v2504 = vadd.f32 %v2391, %v2503
        %2505 = vmatprep.mubr.bf16.mxu0 %v1119
        %2506 = vmatmul.mubr.bf16.gmra.mrb[0].mxu0 %v1118
        %v2507 = vpop.f32.mrb[0].mxu0
        %v2508 = vadd.f32 %v2395, %v2507
        %v2509 = vpop.f32.mrb[0].mxu0
        %v2510 = vadd.f32 %v2397, %v2509
        %v2511 = vpop.f32.mrb[0].mxu0
        %v2512 = vadd.f32 %v2399, %v2511
        %v2513 = vpop.f32.mrb[0].mxu0
        %v2514 = vadd.f32 %v2401, %v2513
        %2515 = vmatprep.mubr.bf16.mxu0 %v1126
        %2516 = vmatmul.mubr.bf16.gmra.mrb[0].mxu0 %v1125
        %v2517 = vpop.f32.mrb[0].mxu0
        %v2518 = vadd.f32 %v2405, %v2517
        %v2519 = vpop.f32.mrb[0].mxu0
        %v2520 = vadd.f32 %v2407, %v2519
        %v2521 = vpop.f32.mrb[0].mxu0
        %v2522 = vadd.f32 %v2409, %v2521
        %v2523 = vpop.f32.mrb[0].mxu0
        %v2524 = vadd.f32 %v2411, %v2523
        %2525 = vmatprep.mubr.bf16.mxu0 %v1133
        %2526 = vmatmul.mubr.bf16.gmra.mrb[0].mxu0 %v1132
        %v2527 = vpop.f32.mrb[0].mxu0
        %v2528 = vadd.f32 %v2415, %v2527
        %v2529 = vpop.f32.mrb[0].mxu0
        %v2530 = vadd.f32 %v2417, %v2529
        %v2531 = vpop.f32.mrb[0].mxu0
        %v2532 = vadd.f32 %v2419, %v2531
        %v2533 = vpop.f32.mrb[0].mxu0
        %v2534 = vadd.f32 %v2421, %v2533
        %2535 = vmatprep.mubr.bf16.mxu0 %v1140
        %2536 = vmatmul.mubr.bf16.gmra.mrb[0].mxu0 %v1139
        %v2537 = vpop.f32.mrb[0].mxu0
        %v2538 = vadd.f32 %v2425, %v2537
        %v2539 = vpop.f32.mrb[0].mxu0
        %v2540 = vadd.f32 %v2427, %v2539
        %v2541 = vpop.f32.mrb[0].mxu0
        %v2542 = vadd.f32 %v2429, %v2541
        %v2543 = vpop.f32.mrb[0].mxu0
        %v2544 = vadd.f32 %v2431, %v2543
        %2545 = vdwg.mxu0
        %2546 = vmatprep.subr.bf16.mxu0 %v2001
        %2547 = vmatpush1.bf16.msra.mxu0 %v2000
        %2548 = vmatprep.subr.bf16.mxu0 %v2005
        %2549 = vmatpush1.bf16.msra.mxu0 %v2004
        %2550 = vmatprep.subr.bf16.mxu0 %v2009
        %2551 = vmatpush1.bf16.msra.mxu0 %v2008
        %2552 = vmatprep.subr.bf16.mxu0 %v2013
        %2553 = vmatpush1.bf16.msra.mxu0 %v2012
        %2554 = vmatprep.subr.bf16.mxu0 %v2017
        %2555 = vmatpush1.bf16.msra.mxu0 %v2016
        %2556 = vmatprep.subr.bf16.mxu0 %v2021
        %2557 = vmatpush1.bf16.msra.mxu0 %v2020
        %2558 = vmatprep.subr.bf16.mxu0 %v2025
        %2559 = vmatpush1.bf16.msra.mxu0 %v2024
        %2560 = vmatprep.subr.bf16.mxu0 %v2029
        %2561 = vmatpush1.bf16.msra.mxu0 %v2028
        %2562 = vmatprep.subr.bf16.mxu0 %v2033
        %2563 = vmatpush1.bf16.msra.mxu0 %v2032
        %2564 = vmatprep.subr.bf16.mxu0 %v2037
        %2565 = vmatpush1.bf16.msra.mxu0 %v2036
        %2566 = vmatprep.subr.bf16.mxu0 %v2041
        %2567 = vmatpush1.bf16.msra.mxu0 %v2040
        %2568 = vmatprep.subr.bf16.mxu0 %v2045
        %2569 = vmatpush1.bf16.msra.mxu0 %v2044
        %2570 = vmatprep.subr.bf16.mxu0 %v2049
        %2571 = vmatpush1.bf16.msra.mxu0 %v2048
        %2572 = vmatprep.subr.bf16.mxu0 %v2053
        %2573 = vmatpush1.bf16.msra.mxu0 %v2052
        %2574 = vmatprep.subr.bf16.mxu0 %v2057
        %2575 = vmatpush1.bf16.msra.mxu0 %v2056
        %2576 = vmatprep.subr.bf16.mxu0 %v2061
        %2577 = vmatpush1.bf16.msra.mxu0 %v2060
        %2578 = vmatprep.mubr.bf16.mxu0 %v1093
        %2579 = vmatmul.mubr.bf16.gmra.mrb[0].mxu0 %v1092
        %v2580 = vpop.f32.mrb[0].mxu0
        %v2581 = vadd.f32 %v2468, %v2580
        %v2582 = vpop.f32.mrb[0].mxu0
        %v2583 = vadd.f32 %v2470, %v2582
        %v2584 = vpop.f32.mrb[0].mxu0
        %v2585 = vadd.f32 %v2472, %v2584
        %v2586 = vpop.f32.mrb[0].mxu0
        %v2587 = vadd.f32 %v2474, %v2586
        %2588 = vmatprep.mubr.bf16.mxu0 %v1100
        %2589 = vmatmul.mubr.bf16.gmra.mrb[0].mxu0 %v1099
        %v2590 = vpop.f32.mrb[0].mxu0
        %v2591 = vadd.f32 %v2478, %v2590
        %v2592 = vpop.f32.mrb[0].mxu0
        %v2593 = vadd.f32 %v2480, %v2592
        %v2594 = vpop.f32.mrb[0].mxu0
        %v2595 = vadd.f32 %v2482, %v2594
        %v2596 = vpop.f32.mrb[0].mxu0
        %v2597 = vadd.f32 %v2484, %v2596
        %2598 = vmatprep.mubr.bf16.mxu0 %v1107
        %2599 = vmatmul.mubr.bf16.gmra.mrb[0].mxu0 %v1106
        %v2600 = vpop.f32.mrb[0].mxu0
        %v2601 = vadd.f32 %v2488, %v2600
        %v2602 = vpop.f32.mrb[0].mxu0
        %v2603 = vadd.f32 %v2490, %v2602
        %v2604 = vpop.f32.mrb[0].mxu0
        %v2605 = vadd.f32 %v2492, %v2604
        %v2606 = vpop.f32.mrb[0].mxu0
        %v2607 = vadd.f32 %v2494, %v2606
        %2608 = vmatprep.mubr.bf16.mxu0 %v1114
        %2609 = vmatmul.mubr.bf16.gmra.mrb[0].mxu0 %v1113
        %v2610 = vpop.f32.mrb[0].mxu0
        %v2611 = vadd.f32 %v2498, %v2610
        %v2612 = vpop.f32.mrb[0].mxu0
        %v2613 = vadd.f32 %v2500, %v2612
        %v2614 = vpop.f32.mrb[0].mxu0
        %v2615 = vadd.f32 %v2502, %v2614
        %v2616 = vpop.f32.mrb[0].mxu0
        %v2617 = vadd.f32 %v2504, %v2616
        %2618 = vmatprep.mubr.bf16.mxu0 %v1121
        %2619 = vmatmul.mubr.bf16.gmra.mrb[0].mxu0 %v1120
        %v2620 = vpop.f32.mrb[0].mxu0
        %v2621 = vadd.f32 %v2508, %v2620
        %v2622 = vpop.f32.mrb[0].mxu0
        %v2623 = vadd.f32 %v2510, %v2622
        %v2624 = vpop.f32.mrb[0].mxu0
        %v2625 = vadd.f32 %v2512, %v2624
        %v2626 = vpop.f32.mrb[0].mxu0
        %v2627 = vadd.f32 %v2514, %v2626
        %2628 = vmatprep.mubr.bf16.mxu0 %v1128
        %2629 = vmatmul.mubr.bf16.gmra.mrb[0].mxu0 %v1127
        %v2630 = vpop.f32.mrb[0].mxu0
        %v2631 = vadd.f32 %v2518, %v2630
        %v2632 = vpop.f32.mrb[0].mxu0
        %v2633 = vadd.f32 %v2520, %v2632
        %v2634 = vpop.f32.mrb[0].mxu0
        %v2635 = vadd.f32 %v2522, %v2634
        %v2636 = vpop.f32.mrb[0].mxu0
        %v2637 = vadd.f32 %v2524, %v2636
        %2638 = vmatprep.mubr.bf16.mxu0 %v1135
        %2639 = vmatmul.mubr.bf16.gmra.mrb[0].mxu0 %v1134
        %v2640 = vpop.f32.mrb[0].mxu0
        %v2641 = vadd.f32 %v2528, %v2640
        %v2642 = vpop.f32.mrb[0].mxu0
        %v2643 = vadd.f32 %v2530, %v2642
        %v2644 = vpop.f32.mrb[0].mxu0
        %v2645 = vadd.f32 %v2532, %v2644
        %v2646 = vpop.f32.mrb[0].mxu0
        %v2647 = vadd.f32 %v2534, %v2646
        %2648 = vmatprep.mubr.bf16.mxu0 %v1142
        %2649 = vmatmul.mubr.bf16.gmra.mrb[0].mxu0 %v1141
        %v2650 = vpop.f32.mrb[0].mxu0
        %v2651 = vadd.f32 %v2538, %v2650
        %v2652 = vpop.f32.mrb[0].mxu0
        %v2653 = vadd.f32 %v2540, %v2652
        %v2654 = vpop.f32.mrb[0].mxu0
        %v2655 = vadd.f32 %v2542, %v2654
        %v2656 = vpop.f32.mrb[0].mxu0
        %v2657 = vadd.f32 %v2544, %v2656
        %2658 = vdwg.mxu0
        %2659 = vmatprep.subr.bf16.mxu0 %v2065
        %2660 = vmatpush1.bf16.msra.mxu0 %v2064
        %2661 = vmatprep.subr.bf16.mxu0 %v2069
        %2662 = vmatpush1.bf16.msra.mxu0 %v2068
        %2663 = vmatprep.subr.bf16.mxu0 %v2073
        %2664 = vmatpush1.bf16.msra.mxu0 %v2072
        %2665 = vmatprep.subr.bf16.mxu0 %v2077
        %2666 = vmatpush1.bf16.msra.mxu0 %v2076
        %2667 = vmatprep.subr.bf16.mxu0 %v2081
        %2668 = vmatpush1.bf16.msra.mxu0 %v2080
        %2669 = vmatprep.subr.bf16.mxu0 %v2085
        %2670 = vmatpush1.bf16.msra.mxu0 %v2084
        %2671 = vmatprep.subr.bf16.mxu0 %v2089
        %2672 = vmatpush1.bf16.msra.mxu0 %v2088
        %2673 = vmatprep.subr.bf16.mxu0 %v2093
        %2674 = vmatpush1.bf16.msra.mxu0 %v2092
        %2675 = vmatprep.subr.bf16.mxu0 0
        %2676 = vmatpush1.bf16.msra.mxu0 0
        %2677 = vmatprep.subr.bf16.mxu0 0
        %2678 = vmatpush1.bf16.msra.mxu0 0
        %2679 = vmatprep.subr.bf16.mxu0 0
        %2680 = vmatpush1.bf16.msra.mxu0 0
        %2681 = vmatprep.subr.bf16.mxu0 0
        %2682 = vmatpush1.bf16.msra.mxu0 0
        %2683 = vmatprep.subr.bf16.mxu0 0
        %2684 = vmatpush1.bf16.msra.mxu0 0
        %2685 = vmatprep.subr.bf16.mxu0 0
        %2686 = vmatpush1.bf16.msra.mxu0 0
        %2687 = vmatprep.subr.bf16.mxu0 0
        %2688 = vmatpush1.bf16.msra.mxu0 0
        %2689 = vmatprep.subr.bf16.mxu0 0
        %2690 = vmatpush1.bf16.msra.mxu0 0
        %2691 = vmatprep.mubr.bf16.mxu0 0
        %2692 = vmatmul.mubr.bf16.gmra.mrb[0].mxu0 %v1094
        %v2693 = vpop.f32.mrb[0].mxu0
        %v2694 = vadd.f32 %v2581, %v2693
        %v2695 = vpop.f32.mrb[0].mxu0
        %v2696 = vadd.f32 %v2583, %v2695
        %v2697 = vpop.f32.mrb[0].mxu0
        %v2698 = vadd.f32 %v2585, %v2697
        %v2699 = vpop.f32.mrb[0].mxu0
        %v2700 = vadd.f32 %v2587, %v2699
        %2701 = vmatprep.mubr.bf16.mxu0 0
        %2702 = vmatmul.mubr.bf16.gmra.mrb[0].mxu0 %v1101
        %v2703 = vpop.f32.mrb[0].mxu0
        %v2704 = vadd.f32 %v2591, %v2703
        %v2705 = vpop.f32.mrb[0].mxu0
        %v2706 = vadd.f32 %v2593, %v2705
        %v2707 = vpop.f32.mrb[0].mxu0
        %v2708 = vadd.f32 %v2595, %v2707
        %v2709 = vpop.f32.mrb[0].mxu0
        %v2710 = vadd.f32 %v2597, %v2709
        %2711 = vmatprep.mubr.bf16.mxu0 0
        %2712 = vmatmul.mubr.bf16.gmra.mrb[0].mxu0 %v1108
        %v2713 = vpop.f32.mrb[0].mxu0
        %v2714 = vadd.f32 %v2601, %v2713
        %v2715 = vpop.f32.mrb[0].mxu0
        %v2716 = vadd.f32 %v2603, %v2715
        %v2717 = vpop.f32.mrb[0].mxu0
        %v2718 = vadd.f32 %v2605, %v2717
        %v2719 = vpop.f32.mrb[0].mxu0
        %v2720 = vadd.f32 %v2607, %v2719
        %2721 = vmatprep.mubr.bf16.mxu0 0
        %2722 = vmatmul.mubr.bf16.gmra.mrb[0].mxu0 %v1115
        %v2723 = vpop.f32.mrb[0].mxu0
        %v2724 = vadd.f32 %v2611, %v2723
        %v2725 = vpop.f32.mrb[0].mxu0
        %v2726 = vadd.f32 %v2613, %v2725
        %v2727 = vpop.f32.mrb[0].mxu0
        %v2728 = vadd.f32 %v2615, %v2727
        %v2729 = vpop.f32.mrb[0].mxu0
        %v2730 = vadd.f32 %v2617, %v2729
        %2731 = vmatprep.mubr.bf16.mxu0 0
        %2732 = vmatmul.mubr.bf16.gmra.mrb[0].mxu0 %v1122
        %v2733 = vpop.f32.mrb[0].mxu0
        %v2734 = vadd.f32 %v2621, %v2733
        %v2735 = vpop.f32.mrb[0].mxu0
        %v2736 = vadd.f32 %v2623, %v2735
        %v2737 = vpop.f32.mrb[0].mxu0
        %v2738 = vadd.f32 %v2625, %v2737
        %v2739 = vpop.f32.mrb[0].mxu0
        %v2740 = vadd.f32 %v2627, %v2739
        %2741 = vmatprep.mubr.bf16.mxu0 0
        %2742 = vmatmul.mubr.bf16.gmra.mrb[0].mxu0 %v1129
        %v2743 = vpop.f32.mrb[0].mxu0
        %v2744 = vadd.f32 %v2631, %v2743
        %v2745 = vpop.f32.mrb[0].mxu0
        %v2746 = vadd.f32 %v2633, %v2745
        %v2747 = vpop.f32.mrb[0].mxu0
        %v2748 = vadd.f32 %v2635, %v2747
        %v2749 = vpop.f32.mrb[0].mxu0
        %v2750 = vadd.f32 %v2637, %v2749
        %2751 = vmatprep.mubr.bf16.mxu0 0
        %2752 = vmatmul.mubr.bf16.gmra.mrb[0].mxu0 %v1136
        %v2753 = vpop.f32.mrb[0].mxu0
        %v2754 = vadd.f32 %v2641, %v2753
        %v2755 = vpop.f32.mrb[0].mxu0
        %v2756 = vadd.f32 %v2643, %v2755
        %v2757 = vpop.f32.mrb[0].mxu0
        %v2758 = vadd.f32 %v2645, %v2757
        %v2759 = vpop.f32.mrb[0].mxu0
        %v2760 = vadd.f32 %v2647, %v2759
        %2761 = vmatprep.mubr.bf16.mxu0 0
        %2762 = vmatmul.mubr.bf16.gmra.mrb[0].mxu0 %v1143
        %v2763 = vpop.f32.mrb[0].mxu0
        %v2764 = vadd.f32 %v2651, %v2763
        %v2765 = vpop.f32.mrb[0].mxu0
        %v2766 = vadd.f32 %v2653, %v2765
        %v2767 = vpop.f32.mrb[0].mxu0
        %v2768 = vadd.f32 %v2655, %v2767
        %v2769 = vpop.f32.mrb[0].mxu0
        %v2770 = vadd.f32 %v2657, %v2769
        %2771 = vdwg.mxu0
        %2772 = vmatprep.subr.bf16.mxu0 %v1875
        %2773 = vmatpush1.bf16.msra.mxu0 %v1874
        %2774 = vmatprep.subr.bf16.mxu0 %v1879
        %2775 = vmatpush1.bf16.msra.mxu0 %v1878
        %2776 = vmatprep.subr.bf16.mxu0 %v1883
        %2777 = vmatpush1.bf16.msra.mxu0 %v1882
        %2778 = vmatprep.subr.bf16.mxu0 %v1887
        %2779 = vmatpush1.bf16.msra.mxu0 %v1886
        %2780 = vmatprep.subr.bf16.mxu0 %v1891
        %2781 = vmatpush1.bf16.msra.mxu0 %v1890
        %2782 = vmatprep.subr.bf16.mxu0 %v1895
        %2783 = vmatpush1.bf16.msra.mxu0 %v1894
        %2784 = vmatprep.subr.bf16.mxu0 %v1899
        %2785 = vmatpush1.bf16.msra.mxu0 %v1898
        %2786 = vmatprep.subr.bf16.mxu0 %v1903
        %2787 = vmatpush1.bf16.msra.mxu0 %v1902
        %2788 = vmatprep.subr.bf16.mxu0 %v1907
        %2789 = vmatpush1.bf16.msra.mxu0 %v1906
        %2790 = vmatprep.subr.bf16.mxu0 %v1911
        %2791 = vmatpush1.bf16.msra.mxu0 %v1910
        %2792 = vmatprep.subr.bf16.mxu0 %v1915
        %2793 = vmatpush1.bf16.msra.mxu0 %v1914
        %2794 = vmatprep.subr.bf16.mxu0 %v1919
        %2795 = vmatpush1.bf16.msra.mxu0 %v1918
        %2796 = vmatprep.subr.bf16.mxu0 %v1923
        %2797 = vmatpush1.bf16.msra.mxu0 %v1922
        %2798 = vmatprep.subr.bf16.mxu0 %v1927
        %2799 = vmatpush1.bf16.msra.mxu0 %v1926
        %2800 = vmatprep.subr.bf16.mxu0 %v1931
        %2801 = vmatpush1.bf16.msra.mxu0 %v1930
        %2802 = vmatprep.subr.bf16.mxu0 %v1935
        %2803 = vmatpush1.bf16.msra.mxu0 %v1934
        %2804 = vmatprep.mubr.bf16.mxu0 %v1089
        %2805 = vmatmul.mubr.bf16.gmra.mrb[0].mxu0 %v1088
        %v2806 = vpop.f32.mrb[0].mxu0
        %v2807 = vadd.f32 %v903, %v2806
        %v2808 = vpop.f32.mrb[0].mxu0
        %v2809 = vadd.f32 %v907, %v2808
        %v2810 = vpop.f32.mrb[0].mxu0
        %v2811 = vadd.f32 %v903, %v2810
        %v2812 = vpop.f32.mrb[0].mxu0
        %v2813 = vadd.f32 %v907, %v2812
        %2814 = vmatprep.mubr.bf16.mxu0 %v1096
        %2815 = vmatmul.mubr.bf16.gmra.mrb[0].mxu0 %v1095
        %v2816 = vpop.f32.mrb[0].mxu0
        %v2817 = vadd.f32 %v903, %v2816
        %v2818 = vpop.f32.mrb[0].mxu0
        %v2819 = vadd.f32 %v907, %v2818
        %v2820 = vpop.f32.mrb[0].mxu0
        %v2821 = vadd.f32 %v903, %v2820
        %v2822 = vpop.f32.mrb[0].mxu0
        %v2823 = vadd.f32 %v907, %v2822
        %2824 = vmatprep.mubr.bf16.mxu0 %v1103
        %2825 = vmatmul.mubr.bf16.gmra.mrb[0].mxu0 %v1102
        %v2826 = vpop.f32.mrb[0].mxu0
        %v2827 = vadd.f32 %v903, %v2826
        %v2828 = vpop.f32.mrb[0].mxu0
        %v2829 = vadd.f32 %v907, %v2828
        %v2830 = vpop.f32.mrb[0].mxu0
        %v2831 = vadd.f32 %v903, %v2830
        %v2832 = vpop.f32.mrb[0].mxu0
        %v2833 = vadd.f32 %v907, %v2832
        %2834 = vmatprep.mubr.bf16.mxu0 %v1110
        %2835 = vmatmul.mubr.bf16.gmra.mrb[0].mxu0 %v1109
        %v2836 = vpop.f32.mrb[0].mxu0
        %v2837 = vadd.f32 %v903, %v2836
        %v2838 = vpop.f32.mrb[0].mxu0
        %v2839 = vadd.f32 %v907, %v2838
        %v2840 = vpop.f32.mrb[0].mxu0
        %v2841 = vadd.f32 %v903, %v2840
        %v2842 = vpop.f32.mrb[0].mxu0
        %v2843 = vadd.f32 %v907, %v2842
        %2844 = vmatprep.mubr.bf16.mxu0 %v1117
        %2845 = vmatmul.mubr.bf16.gmra.mrb[0].mxu0 %v1116
        %v2846 = vpop.f32.mrb[0].mxu0
        %v2847 = vadd.f32 %v903, %v2846
        %v2848 = vpop.f32.mrb[0].mxu0
        %v2849 = vadd.f32 %v907, %v2848
        %v2850 = vpop.f32.mrb[0].mxu0
        %v2851 = vadd.f32 %v903, %v2850
        %v2852 = vpop.f32.mrb[0].mxu0
        %v2853 = vadd.f32 %v907, %v2852
        %2854 = vmatprep.mubr.bf16.mxu0 %v1124
        %2855 = vmatmul.mubr.bf16.gmra.mrb[0].mxu0 %v1123
        %v2856 = vpop.f32.mrb[0].mxu0
        %v2857 = vadd.f32 %v903, %v2856
        %v2858 = vpop.f32.mrb[0].mxu0
        %v2859 = vadd.f32 %v907, %v2858
        %v2860 = vpop.f32.mrb[0].mxu0
        %v2861 = vadd.f32 %v903, %v2860
        %v2862 = vpop.f32.mrb[0].mxu0
        %v2863 = vadd.f32 %v907, %v2862
        %2864 = vmatprep.mubr.bf16.mxu0 %v1131
        %2865 = vmatmul.mubr.bf16.gmra.mrb[0].mxu0 %v1130
        %v2866 = vpop.f32.mrb[0].mxu0
        %v2867 = vadd.f32 %v903, %v2866
        %v2868 = vpop.f32.mrb[0].mxu0
        %v2869 = vadd.f32 %v907, %v2868
        %v2870 = vpop.f32.mrb[0].mxu0
        %v2871 = vadd.f32 %v903, %v2870
        %v2872 = vpop.f32.mrb[0].mxu0
        %v2873 = vadd.f32 %v907, %v2872
        %2874 = vmatprep.mubr.bf16.mxu0 %v1138
        %2875 = vmatmul.mubr.bf16.gmra.mrb[0].mxu0 %v1137
        %v2876 = vpop.f32.mrb[0].mxu0
        %v2877 = vadd.f32 %v903, %v2876
        %v2878 = vpop.f32.mrb[0].mxu0
        %v2879 = vadd.f32 %v907, %v2878
        %v2880 = vpop.f32.mrb[0].mxu0
        %v2881 = vadd.f32 %v903, %v2880
        %v2882 = vpop.f32.mrb[0].mxu0
        %v2883 = vadd.f32 %v907, %v2882
        %2884 = vdwg.mxu0
        %2885 = vmatprep.subr.bf16.mxu0 %v1939
        %2886 = vmatpush1.bf16.msra.mxu0 %v1938
        %2887 = vmatprep.subr.bf16.mxu0 %v1943
        %2888 = vmatpush1.bf16.msra.mxu0 %v1942
        %2889 = vmatprep.subr.bf16.mxu0 %v1947
        %2890 = vmatpush1.bf16.msra.mxu0 %v1946
        %2891 = vmatprep.subr.bf16.mxu0 %v1951
        %2892 = vmatpush1.bf16.msra.mxu0 %v1950
        %2893 = vmatprep.subr.bf16.mxu0 %v1955
        %2894 = vmatpush1.bf16.msra.mxu0 %v1954
        %2895 = vmatprep.subr.bf16.mxu0 %v1959
        %2896 = vmatpush1.bf16.msra.mxu0 %v1958
        %2897 = vmatprep.subr.bf16.mxu0 %v1963
        %2898 = vmatpush1.bf16.msra.mxu0 %v1962
        %2899 = vmatprep.subr.bf16.mxu0 %v1967
        %2900 = vmatpush1.bf16.msra.mxu0 %v1966
        %2901 = vmatprep.subr.bf16.mxu0 %v1971
        %2902 = vmatpush1.bf16.msra.mxu0 %v1970
        %2903 = vmatprep.subr.bf16.mxu0 %v1975
        %2904 = vmatpush1.bf16.msra.mxu0 %v1974
        %2905 = vmatprep.subr.bf16.mxu0 %v1979
        %2906 = vmatpush1.bf16.msra.mxu0 %v1978
        %2907 = vmatprep.subr.bf16.mxu0 %v1983
        %2908 = vmatpush1.bf16.msra.mxu0 %v1982
        %2909 = vmatprep.subr.bf16.mxu0 %v1987
        %2910 = vmatpush1.bf16.msra.mxu0 %v1986
        %2911 = vmatprep.subr.bf16.mxu0 %v1991
        %2912 = vmatpush1.bf16.msra.mxu0 %v1990
        %2913 = vmatprep.subr.bf16.mxu0 %v1995
        %2914 = vmatpush1.bf16.msra.mxu0 %v1994
        %2915 = vmatprep.subr.bf16.mxu0 %v1999
        %2916 = vmatpush1.bf16.msra.mxu0 %v1998
        %2917 = vmatprep.mubr.bf16.mxu0 %v1091
        %2918 = vmatmul.mubr.bf16.gmra.mrb[0].mxu0 %v1090
        %v2919 = vpop.f32.mrb[0].mxu0
        %v2920 = vadd.f32 %v2807, %v2919
        %v2921 = vpop.f32.mrb[0].mxu0
        %v2922 = vadd.f32 %v2809, %v2921
        %v2923 = vpop.f32.mrb[0].mxu0
        %v2924 = vadd.f32 %v2811, %v2923
        %v2925 = vpop.f32.mrb[0].mxu0
        %v2926 = vadd.f32 %v2813, %v2925
        %2927 = vmatprep.mubr.bf16.mxu0 %v1098
        %2928 = vmatmul.mubr.bf16.gmra.mrb[0].mxu0 %v1097
        %v2929 = vpop.f32.mrb[0].mxu0
        %v2930 = vadd.f32 %v2817, %v2929
        %v2931 = vpop.f32.mrb[0].mxu0
        %v2932 = vadd.f32 %v2819, %v2931
        %v2933 = vpop.f32.mrb[0].mxu0
        %v2934 = vadd.f32 %v2821, %v2933
        %v2935 = vpop.f32.mrb[0].mxu0
        %v2936 = vadd.f32 %v2823, %v2935
        %2937 = vmatprep.mubr.bf16.mxu0 %v1105
        %2938 = vmatmul.mubr.bf16.gmra.mrb[0].mxu0 %v1104
        %v2939 = vpop.f32.mrb[0].mxu0
        %v2940 = vadd.f32 %v2827, %v2939
        %v2941 = vpop.f32.mrb[0].mxu0
        %v2942 = vadd.f32 %v2829, %v2941
        %v2943 = vpop.f32.mrb[0].mxu0
        %v2944 = vadd.f32 %v2831, %v2943
        %v2945 = vpop.f32.mrb[0].mxu0
        %v2946 = vadd.f32 %v2833, %v2945
        %2947 = vmatprep.mubr.bf16.mxu0 %v1112
        %2948 = vmatmul.mubr.bf16.gmra.mrb[0].mxu0 %v1111
        %v2949 = vpop.f32.mrb[0].mxu0
        %v2950 = vadd.f32 %v2837, %v2949
        %v2951 = vpop.f32.mrb[0].mxu0
        %v2952 = vadd.f32 %v2839, %v2951
        %v2953 = vpop.f32.mrb[0].mxu0
        %v2954 = vadd.f32 %v2841, %v2953
        %v2955 = vpop.f32.mrb[0].mxu0
        %v2956 = vadd.f32 %v2843, %v2955
        %2957 = vmatprep.mubr.bf16.mxu0 %v1119
        %2958 = vmatmul.mubr.bf16.gmra.mrb[0].mxu0 %v1118
        %v2959 = vpop.f32.mrb[0].mxu0
        %v2960 = vadd.f32 %v2847, %v2959
        %v2961 = vpop.f32.mrb[0].mxu0
        %v2962 = vadd.f32 %v2849, %v2961
        %v2963 = vpop.f32.mrb[0].mxu0
        %v2964 = vadd.f32 %v2851, %v2963
        %v2965 = vpop.f32.mrb[0].mxu0
        %v2966 = vadd.f32 %v2853, %v2965
        %2967 = vmatprep.mubr.bf16.mxu0 %v1126
        %2968 = vmatmul.mubr.bf16.gmra.mrb[0].mxu0 %v1125
        %v2969 = vpop.f32.mrb[0].mxu0
        %v2970 = vadd.f32 %v2857, %v2969
        %v2971 = vpop.f32.mrb[0].mxu0
        %v2972 = vadd.f32 %v2859, %v2971
        %v2973 = vpop.f32.mrb[0].mxu0
        %v2974 = vadd.f32 %v2861, %v2973
        %v2975 = vpop.f32.mrb[0].mxu0
        %v2976 = vadd.f32 %v2863, %v2975
        %2977 = vmatprep.mubr.bf16.mxu0 %v1133
        %2978 = vmatmul.mubr.bf16.gmra.mrb[0].mxu0 %v1132
        %v2979 = vpop.f32.mrb[0].mxu0
        %v2980 = vadd.f32 %v2867, %v2979
        %v2981 = vpop.f32.mrb[0].mxu0
        %v2982 = vadd.f32 %v2869, %v2981
        %v2983 = vpop.f32.mrb[0].mxu0
        %v2984 = vadd.f32 %v2871, %v2983
        %v2985 = vpop.f32.mrb[0].mxu0
        %v2986 = vadd.f32 %v2873, %v2985
        %2987 = vmatprep.mubr.bf16.mxu0 %v1140
        %2988 = vmatmul.mubr.bf16.gmra.mrb[0].mxu0 %v1139
        %v2989 = vpop.f32.mrb[0].mxu0
        %v2990 = vadd.f32 %v2877, %v2989
        %v2991 = vpop.f32.mrb[0].mxu0
        %v2992 = vadd.f32 %v2879, %v2991
        %v2993 = vpop.f32.mrb[0].mxu0
        %v2994 = vadd.f32 %v2881, %v2993
        %v2995 = vpop.f32.mrb[0].mxu0
        %v2996 = vadd.f32 %v2883, %v2995
        %2997 = vdwg.mxu0
        %2998 = vmatprep.subr.bf16.mxu0 %v2003
        %2999 = vmatpush1.bf16.msra.mxu0 %v2002
        %3000 = vmatprep.subr.bf16.mxu0 %v2007
        %3001 = vmatpush1.bf16.msra.mxu0 %v2006
        %3002 = vmatprep.subr.bf16.mxu0 %v2011
        %3003 = vmatpush1.bf16.msra.mxu0 %v2010
        %3004 = vmatprep.subr.bf16.mxu0 %v2015
        %3005 = vmatpush1.bf16.msra.mxu0 %v2014
        %3006 = vmatprep.subr.bf16.mxu0 %v2019
        %3007 = vmatpush1.bf16.msra.mxu0 %v2018
        %3008 = vmatprep.subr.bf16.mxu0 %v2023
        %3009 = vmatpush1.bf16.msra.mxu0 %v2022
        %3010 = vmatprep.subr.bf16.mxu0 %v2027
        %3011 = vmatpush1.bf16.msra.mxu0 %v2026
        %3012 = vmatprep.subr.bf16.mxu0 %v2031
        %3013 = vmatpush1.bf16.msra.mxu0 %v2030
        %3014 = vmatprep.subr.bf16.mxu0 %v2035
        %3015 = vmatpush1.bf16.msra.mxu0 %v2034
        %3016 = vmatprep.subr.bf16.mxu0 %v2039
        %3017 = vmatpush1.bf16.msra.mxu0 %v2038
        %3018 = vmatprep.subr.bf16.mxu0 %v2043
        %3019 = vmatpush1.bf16.msra.mxu0 %v2042
        %3020 = vmatprep.subr.bf16.mxu0 %v2047
        %3021 = vmatpush1.bf16.msra.mxu0 %v2046
        %3022 = vmatprep.subr.bf16.mxu0 %v2051
        %3023 = vmatpush1.bf16.msra.mxu0 %v2050
        %3024 = vmatprep.subr.bf16.mxu0 %v2055
        %3025 = vmatpush1.bf16.msra.mxu0 %v2054
        %3026 = vmatprep.subr.bf16.mxu0 %v2059
        %3027 = vmatpush1.bf16.msra.mxu0 %v2058
        %3028 = vmatprep.subr.bf16.mxu0 %v2063
        %3029 = vmatpush1.bf16.msra.mxu0 %v2062
        %3030 = vmatprep.mubr.bf16.mxu0 %v1093
        %3031 = vmatmul.mubr.bf16.gmra.mrb[0].mxu0 %v1092
        %v3032 = vpop.f32.mrb[0].mxu0
        %v3033 = vadd.f32 %v2920, %v3032
        %v3034 = vpop.f32.mrb[0].mxu0
        %v3035 = vadd.f32 %v2922, %v3034
        %v3036 = vpop.f32.mrb[0].mxu0
        %v3037 = vadd.f32 %v2924, %v3036
        %v3038 = vpop.f32.mrb[0].mxu0
        %v3039 = vadd.f32 %v2926, %v3038
        %3040 = vmatprep.mubr.bf16.mxu0 %v1100
        %3041 = vmatmul.mubr.bf16.gmra.mrb[0].mxu0 %v1099
        %v3042 = vpop.f32.mrb[0].mxu0
        %v3043 = vadd.f32 %v2930, %v3042
        %v3044 = vpop.f32.mrb[0].mxu0
        %v3045 = vadd.f32 %v2932, %v3044
        %v3046 = vpop.f32.mrb[0].mxu0
        %v3047 = vadd.f32 %v2934, %v3046
        %v3048 = vpop.f32.mrb[0].mxu0
        %v3049 = vadd.f32 %v2936, %v3048
        %3050 = vmatprep.mubr.bf16.mxu0 %v1107
        %3051 = vmatmul.mubr.bf16.gmra.mrb[0].mxu0 %v1106
        %v3052 = vpop.f32.mrb[0].mxu0
        %v3053 = vadd.f32 %v2940, %v3052
        %v3054 = vpop.f32.mrb[0].mxu0
        %v3055 = vadd.f32 %v2942, %v3054
        %v3056 = vpop.f32.mrb[0].mxu0
        %v3057 = vadd.f32 %v2944, %v3056
        %v3058 = vpop.f32.mrb[0].mxu0
        %v3059 = vadd.f32 %v2946, %v3058
        %3060 = vmatprep.mubr.bf16.mxu0 %v1114
        %3061 = vmatmul.mubr.bf16.gmra.mrb[0].mxu0 %v1113
        %v3062 = vpop.f32.mrb[0].mxu0
        %v3063 = vadd.f32 %v2950, %v3062
        %v3064 = vpop.f32.mrb[0].mxu0
        %v3065 = vadd.f32 %v2952, %v3064
        %v3066 = vpop.f32.mrb[0].mxu0
        %v3067 = vadd.f32 %v2954, %v3066
        %v3068 = vpop.f32.mrb[0].mxu0
        %v3069 = vadd.f32 %v2956, %v3068
        %3070 = vmatprep.mubr.bf16.mxu0 %v1121
        %3071 = vmatmul.mubr.bf16.gmra.mrb[0].mxu0 %v1120
        %v3072 = vpop.f32.mrb[0].mxu0
        %v3073 = vadd.f32 %v2960, %v3072
        %v3074 = vpop.f32.mrb[0].mxu0
        %v3075 = vadd.f32 %v2962, %v3074
        %v3076 = vpop.f32.mrb[0].mxu0
        %v3077 = vadd.f32 %v2964, %v3076
        %v3078 = vpop.f32.mrb[0].mxu0
        %v3079 = vadd.f32 %v2966, %v3078
        %3080 = vmatprep.mubr.bf16.mxu0 %v1128
        %3081 = vmatmul.mubr.bf16.gmra.mrb[0].mxu0 %v1127
        %v3082 = vpop.f32.mrb[0].mxu0
        %v3083 = vadd.f32 %v2970, %v3082
        %v3084 = vpop.f32.mrb[0].mxu0
        %v3085 = vadd.f32 %v2972, %v3084
        %v3086 = vpop.f32.mrb[0].mxu0
        %v3087 = vadd.f32 %v2974, %v3086
        %v3088 = vpop.f32.mrb[0].mxu0
        %v3089 = vadd.f32 %v2976, %v3088
        %3090 = vmatprep.mubr.bf16.mxu0 %v1135
        %3091 = vmatmul.mubr.bf16.gmra.mrb[0].mxu0 %v1134
        %v3092 = vpop.f32.mrb[0].mxu0
        %v3093 = vadd.f32 %v2980, %v3092
        %v3094 = vpop.f32.mrb[0].mxu0
        %v3095 = vadd.f32 %v2982, %v3094
        %v3096 = vpop.f32.mrb[0].mxu0
        %v3097 = vadd.f32 %v2984, %v3096
        %v3098 = vpop.f32.mrb[0].mxu0
        %v3099 = vadd.f32 %v2986, %v3098
        %3100 = vmatprep.mubr.bf16.mxu0 %v1142
        %3101 = vmatmul.mubr.bf16.gmra.mrb[0].mxu0 %v1141
        %v3102 = vpop.f32.mrb[0].mxu0
        %v3103 = vadd.f32 %v2990, %v3102
        %v3104 = vpop.f32.mrb[0].mxu0
        %v3105 = vadd.f32 %v2992, %v3104
        %v3106 = vpop.f32.mrb[0].mxu0
        %v3107 = vadd.f32 %v2994, %v3106
        %v3108 = vpop.f32.mrb[0].mxu0
        %v3109 = vadd.f32 %v2996, %v3108
        %3110 = vdwg.mxu0
        %3111 = vmatprep.subr.bf16.mxu0 %v2067
        %3112 = vmatpush1.bf16.msra.mxu0 %v2066
        %3113 = vmatprep.subr.bf16.mxu0 %v2071
        %3114 = vmatpush1.bf16.msra.mxu0 %v2070
        %3115 = vmatprep.subr.bf16.mxu0 %v2075
        %3116 = vmatpush1.bf16.msra.mxu0 %v2074
        %3117 = vmatprep.subr.bf16.mxu0 %v2079
        %3118 = vmatpush1.bf16.msra.mxu0 %v2078
        %3119 = vmatprep.subr.bf16.mxu0 %v2083
        %3120 = vmatpush1.bf16.msra.mxu0 %v2082
        %3121 = vmatprep.subr.bf16.mxu0 %v2087
        %3122 = vmatpush1.bf16.msra.mxu0 %v2086
        %3123 = vmatprep.subr.bf16.mxu0 %v2091
        %3124 = vmatpush1.bf16.msra.mxu0 %v2090
        %3125 = vmatprep.subr.bf16.mxu0 %v2095
        %3126 = vmatpush1.bf16.msra.mxu0 %v2094
        %3127 = vmatprep.subr.bf16.mxu0 0
        %3128 = vmatpush1.bf16.msra.mxu0 0
        %3129 = vmatprep.subr.bf16.mxu0 0
        %3130 = vmatpush1.bf16.msra.mxu0 0
        %3131 = vmatprep.subr.bf16.mxu0 0
        %3132 = vmatpush1.bf16.msra.mxu0 0
        %3133 = vmatprep.subr.bf16.mxu0 0
        %3134 = vmatpush1.bf16.msra.mxu0 0
        %3135 = vmatprep.subr.bf16.mxu0 0
        %3136 = vmatpush1.bf16.msra.mxu0 0
        %3137 = vmatprep.subr.bf16.mxu0 0
        %3138 = vmatpush1.bf16.msra.mxu0 0
        %3139 = vmatprep.subr.bf16.mxu0 0
        %3140 = vmatpush1.bf16.msra.mxu0 0
        %3141 = vmatprep.subr.bf16.mxu0 0
        %3142 = vmatpush1.bf16.msra.mxu0 0
        %3143 = vmatprep.mubr.bf16.mxu0 0
        %3144 = vmatmul.mubr.bf16.gmra.mrb[0].mxu0 %v1094
        %v3145 = vpop.f32.mrb[0].mxu0
        %v3146 = vadd.f32 %v3033, %v3145
        %v3147 = vpop.f32.mrb[0].mxu0
        %v3148 = vadd.f32 %v3035, %v3147
        %v3149 = vpop.f32.mrb[0].mxu0
        %v3150 = vadd.f32 %v3037, %v3149
        %v3151 = vpop.f32.mrb[0].mxu0
        %v3152 = vadd.f32 %v3039, %v3151
        %3153 = vmatprep.mubr.bf16.mxu0 0
        %3154 = vmatmul.mubr.bf16.gmra.mrb[0].mxu0 %v1101
        %v3155 = vpop.f32.mrb[0].mxu0
        %v3156 = vadd.f32 %v3043, %v3155
        %v3157 = vpop.f32.mrb[0].mxu0
        %v3158 = vadd.f32 %v3045, %v3157
        %v3159 = vpop.f32.mrb[0].mxu0
        %v3160 = vadd.f32 %v3047, %v3159
        %v3161 = vpop.f32.mrb[0].mxu0
        %v3162 = vadd.f32 %v3049, %v3161
        %3163 = vmatprep.mubr.bf16.mxu0 0
        %3164 = vmatmul.mubr.bf16.gmra.mrb[0].mxu0 %v1108
        %v3165 = vpop.f32.mrb[0].mxu0
        %v3166 = vadd.f32 %v3053, %v3165
        %v3167 = vpop.f32.mrb[0].mxu0
        %v3168 = vadd.f32 %v3055, %v3167
        %v3169 = vpop.f32.mrb[0].mxu0
        %v3170 = vadd.f32 %v3057, %v3169
        %v3171 = vpop.f32.mrb[0].mxu0
        %v3172 = vadd.f32 %v3059, %v3171
        %3173 = vmatprep.mubr.bf16.mxu0 0
        %3174 = vmatmul.mubr.bf16.gmra.mrb[0].mxu0 %v1115
        %v3175 = vpop.f32.mrb[0].mxu0
        %v3176 = vadd.f32 %v3063, %v3175
        %v3177 = vpop.f32.mrb[0].mxu0
        %v3178 = vadd.f32 %v3065, %v3177
        %v3179 = vpop.f32.mrb[0].mxu0
        %v3180 = vadd.f32 %v3067, %v3179
        %v3181 = vpop.f32.mrb[0].mxu0
        %v3182 = vadd.f32 %v3069, %v3181
        %3183 = vmatprep.mubr.bf16.mxu0 0
        %3184 = vmatmul.mubr.bf16.gmra.mrb[0].mxu0 %v1122
        %v3185 = vpop.f32.mrb[0].mxu0
        %v3186 = vadd.f32 %v3073, %v3185
        %v3187 = vpop.f32.mrb[0].mxu0
        %v3188 = vadd.f32 %v3075, %v3187
        %v3189 = vpop.f32.mrb[0].mxu0
        %v3190 = vadd.f32 %v3077, %v3189
        %v3191 = vpop.f32.mrb[0].mxu0
        %v3192 = vadd.f32 %v3079, %v3191
        %3193 = vmatprep.mubr.bf16.mxu0 0
        %3194 = vmatmul.mubr.bf16.gmra.mrb[0].mxu0 %v1129
        %v3195 = vpop.f32.mrb[0].mxu0
        %v3196 = vadd.f32 %v3083, %v3195
        %v3197 = vpop.f32.mrb[0].mxu0
        %v3198 = vadd.f32 %v3085, %v3197
        %v3199 = vpop.f32.mrb[0].mxu0
        %v3200 = vadd.f32 %v3087, %v3199
        %v3201 = vpop.f32.mrb[0].mxu0
        %v3202 = vadd.f32 %v3089, %v3201
        %3203 = vmatprep.mubr.bf16.mxu0 0
        %3204 = vmatmul.mubr.bf16.gmra.mrb[0].mxu0 %v1136
        %v3205 = vpop.f32.mrb[0].mxu0
        %v3206 = vadd.f32 %v3093, %v3205
        %v3207 = vpop.f32.mrb[0].mxu0
        %v3208 = vadd.f32 %v3095, %v3207
        %v3209 = vpop.f32.mrb[0].mxu0
        %v3210 = vadd.f32 %v3097, %v3209
        %v3211 = vpop.f32.mrb[0].mxu0
        %v3212 = vadd.f32 %v3099, %v3211
        %3213 = vmatprep.mubr.bf16.mxu0 0
        %3214 = vmatmul.mubr.bf16.gmra.mrb[0].mxu0 %v1143
        %v3215 = vpop.f32.mrb[0].mxu0
        %v3216 = vadd.f32 %v3103, %v3215
        %v3217 = vpop.f32.mrb[0].mxu0
        %v3218 = vadd.f32 %v3105, %v3217
        %v3219 = vpop.f32.mrb[0].mxu0
        %v3220 = vadd.f32 %v3107, %v3219
        %v3221 = vpop.f32.mrb[0].mxu0
        %v3222 = vadd.f32 %v3109, %v3221
        %3223 = vdwg.mxu0
        %v3224 = vmax.f32 %v2694, 0.0
        %v3225 = vmax.f32 %v2696, 0.0
        %v3226 = vmax.f32 %v3146, 0.0
        %v3227 = vmax.f32 %v3148, 0.0
        %v3228 = vmax.f32 %v2698, 0.0
        %v3229 = vmax.f32 %v2700, 0.0
        %v3230 = vmax.f32 %v3150, 0.0
        %v3231 = vmax.f32 %v3152, 0.0
        %v3232 = vmax.f32 %v2704, 0.0
        %v3233 = vmax.f32 %v2706, 0.0
        %v3234 = vmax.f32 %v3156, 0.0
        %v3235 = vmax.f32 %v3158, 0.0
        %v3236 = vmax.f32 %v2708, 0.0
        %v3237 = vmax.f32 %v2710, 0.0
        %v3238 = vmax.f32 %v3160, 0.0
        %v3239 = vmax.f32 %v3162, 0.0
        %v3240 = vmax.f32 %v2714, 0.0
        %v3241 = vmax.f32 %v2716, 0.0
        %v3242 = vmax.f32 %v3166, 0.0
        %v3243 = vmax.f32 %v3168, 0.0
        %v3244 = vmax.f32 %v2718, 0.0
        %v3245 = vmax.f32 %v2720, 0.0
        %v3246 = vmax.f32 %v3170, 0.0
        %v3247 = vmax.f32 %v3172, 0.0
        %v3248 = vmax.f32 %v2724, 0.0
        %v3249 = vmax.f32 %v2726, 0.0
        %v3250 = vmax.f32 %v3176, 0.0
        %v3251 = vmax.f32 %v3178, 0.0
        %v3252 = vmax.f32 %v2728, 0.0
        %v3253 = vmax.f32 %v2730, 0.0
        %v3254 = vmax.f32 %v3180, 0.0
        %v3255 = vmax.f32 %v3182, 0.0
        %v3256 = vmax.f32 %v2734, 0.0
        %v3257 = vmax.f32 %v2736, 0.0
        %v3258 = vmax.f32 %v3186, 0.0
        %v3259 = vmax.f32 %v3188, 0.0
        %v3260 = vmax.f32 %v2738, 0.0
        %v3261 = vmax.f32 %v2740, 0.0
        %v3262 = vmax.f32 %v3190, 0.0
        %v3263 = vmax.f32 %v3192, 0.0
        %v3264 = vmax.f32 %v2744, 0.0
        %v3265 = vmax.f32 %v2746, 0.0
        %v3266 = vmax.f32 %v3196, 0.0
        %v3267 = vmax.f32 %v3198, 0.0
        %v3268 = vmax.f32 %v2748, 0.0
        %v3269 = vmax.f32 %v2750, 0.0
        %v3270 = vmax.f32 %v3200, 0.0
        %v3271 = vmax.f32 %v3202, 0.0
        %v3272 = vmax.f32 %v2754, 0.0
        %v3273 = vmax.f32 %v2756, 0.0
        %v3274 = vmax.f32 %v3206, 0.0
        %v3275 = vmax.f32 %v3208, 0.0
        %v3276 = vmax.f32 %v2758, 0.0
        %v3277 = vmax.f32 %v2760, 0.0
        %v3278 = vmax.f32 %v3210, 0.0
        %v3279 = vmax.f32 %v3212, 0.0
        %v3280 = vmax.f32 %v2764, 0.0
        %v3281 = vmax.f32 %v2766, 0.0
        %v3282 = vmax.f32 %v3216, 0.0
        %v3283 = vmax.f32 %v3218, 0.0
        %v3284 = vmax.f32 %v2768, 0.0
        %v3285 = vmax.f32 %v2770, 0.0
        %v3286 = vmax.f32 %v3220, 0.0
        %v3287 = vmax.f32 %v3222, 0.0
        %v3288 = vpack.c.bf16 %v3228, %v3224
        %v3289 = vpack.c.bf16 %v3229, %v3225
        %v3290 = vpack.c.bf16 %v3230, %v3226
        %v3291 = vpack.c.bf16 %v3231, %v3227
        %v3292 = vpack.c.bf16 %v3236, %v3232
        %v3293 = vpack.c.bf16 %v3237, %v3233
        %v3294 = vpack.c.bf16 %v3238, %v3234
        %v3295 = vpack.c.bf16 %v3239, %v3235
        %v3296 = vpack.c.bf16 %v3244, %v3240
        %v3297 = vpack.c.bf16 %v3245, %v3241
        %v3298 = vpack.c.bf16 %v3246, %v3242
        %v3299 = vpack.c.bf16 %v3247, %v3243
        %v3300 = vpack.c.bf16 %v3252, %v3248
        %v3301 = vpack.c.bf16 %v3253, %v3249
        %v3302 = vpack.c.bf16 %v3254, %v3250
        %v3303 = vpack.c.bf16 %v3255, %v3251
        %v3304 = vpack.c.bf16 %v3260, %v3256
        %v3305 = vpack.c.bf16 %v3261, %v3257
        %v3306 = vpack.c.bf16 %v3262, %v3258
        %v3307 = vpack.c.bf16 %v3263, %v3259
        %v3308 = vpack.c.bf16 %v3268, %v3264
        %v3309 = vpack.c.bf16 %v3269, %v3265
        %v3310 = vpack.c.bf16 %v3270, %v3266
        %v3311 = vpack.c.bf16 %v3271, %v3267
        %v3312 = vpack.c.bf16 %v3276, %v3272
        %v3313 = vpack.c.bf16 %v3277, %v3273
        %v3314 = vpack.c.bf16 %v3278, %v3274
        %v3315 = vpack.c.bf16 %v3279, %v3275
        %v3316 = vpack.c.bf16 %v3284, %v3280
        %v3317 = vpack.c.bf16 %v3285, %v3281
        %v3318 = vpack.c.bf16 %v3286, %v3282
        %v3319 = vpack.c.bf16 %v3287, %v3283
        %v3320 = vld [vmem:[#allocation7] sm:$0xff]
        %v3321 = vld [vmem:[#allocation7 + $0x8] sm:$0xff]
        %v3322 = vld [vmem:[#allocation7 + $0x10] sm:$0xff]
        %v3323 = vld [vmem:[#allocation7 + $0x18] sm:$0xff]
        %v3324 = vld [vmem:[#allocation7 + $0x20] sm:$0xff]
        %v3325 = vld [vmem:[#allocation7 + $0x28] sm:$0xff]
        %v3326 = vld [vmem:[#allocation7 + $0x30] sm:$0xff]
        %v3327 = vld [vmem:[#allocation7 + $0x38] sm:$0xff]
        %v3328 = vld [vmem:[#allocation7 + $0x40] sm:$0xff]
        %v3329 = vld [vmem:[#allocation7 + $0x48] sm:$0xff]
        %v3330 = vld [vmem:[#allocation7 + $0x50] sm:$0xff]
        %v3331 = vld [vmem:[#allocation7 + $0x58] sm:$0xff]
        %v3332 = vld [vmem:[#allocation7 + $0x60] sm:$0xff]
        %v3333 = vld [vmem:[#allocation7 + $0x68] sm:$0xff]
        %v3334 = vld [vmem:[#allocation7 + $0x70] sm:$0xff]
        %v3335 = vld [vmem:[#allocation7 + $0x78] sm:$0xff]
        %v3336 = vld [vmem:[#allocation7 + $0x80] sm:$0xff]
        %v3337 = vld [vmem:[#allocation7 + $0x88] sm:$0xff]
        %v3338 = vld [vmem:[#allocation7 + $0x90] sm:$0xff]
        %v3339 = vld [vmem:[#allocation7 + $0x98] sm:$0xff]
        %v3340 = vld [vmem:[#allocation7 + $0xa0] sm:$0xff]
        %v3341 = vld [vmem:[#allocation7 + $0xa8] sm:$0xff]
        %v3342 = vld [vmem:[#allocation7 + $0xb0] sm:$0xff]
        %v3343 = vld [vmem:[#allocation7 + $0xb8] sm:$0xff]
        %v3344 = vld [vmem:[#allocation7 + $0xc0] sm:$0xff]
        %v3345 = vld [vmem:[#allocation7 + $0xc8] sm:$0xff]
        %v3346 = vld [vmem:[#allocation7 + $0xd0] sm:$0xff]
        %v3347 = vld [vmem:[#allocation7 + $0xd8] sm:$0xff]
        %v3348 = vld [vmem:[#allocation7 + $0xe0] sm:$0xff]
        %v3349 = vld [vmem:[#allocation7 + $0xe8] sm:$0xff]
        %v3350 = vld [vmem:[#allocation7 + $0xf0] sm:$0xff]
        %v3351 = vld [vmem:[#allocation7 + $0xf8] sm:$0xff]
        %v3352 = vld [vmem:[#allocation7 + $0x100] sm:$0xff]
        %v3353 = vld [vmem:[#allocation7 + $0x108] sm:$0xff]
        %v3354 = vld [vmem:[#allocation7 + $0x110] sm:$0xff]
        %v3355 = vld [vmem:[#allocation7 + $0x118] sm:$0xff]
        %v3356 = vld [vmem:[#allocation7 + $0x120] sm:$0xff]
        %v3357 = vld [vmem:[#allocation7 + $0x128] sm:$0xff]
        %v3358 = vld [vmem:[#allocation7 + $0x130] sm:$0xff]
        %v3359 = vld [vmem:[#allocation7 + $0x138] sm:$0xff]
        %v3360 = vld [vmem:[#allocation7 + $0x140] sm:$0xff]
        %v3361 = vld [vmem:[#allocation7 + $0x148] sm:$0xff]
        %v3362 = vld [vmem:[#allocation7 + $0x150] sm:$0xff]
        %v3363 = vld [vmem:[#allocation7 + $0x158] sm:$0xff]
        %v3364 = vld [vmem:[#allocation7 + $0x160] sm:$0xff]
        %v3365 = vld [vmem:[#allocation7 + $0x168] sm:$0xff]
        %v3366 = vld [vmem:[#allocation7 + $0x170] sm:$0xff]
        %v3367 = vld [vmem:[#allocation7 + $0x178] sm:$0xff]
        %v3368 = vld [vmem:[#allocation7 + $0x180] sm:$0xff]
        %v3369 = vld [vmem:[#allocation7 + $0x188] sm:$0xff]
        %v3370 = vld [vmem:[#allocation7 + $0x190] sm:$0xff]
        %v3371 = vld [vmem:[#allocation7 + $0x198] sm:$0xff]
        %v3372 = vld [vmem:[#allocation7 + $0x1a0] sm:$0xff]
        %v3373 = vld [vmem:[#allocation7 + $0x1a8] sm:$0xff]
        %v3374 = vld [vmem:[#allocation7 + $0x1b0] sm:$0xff]
        %v3375 = vld [vmem:[#allocation7 + $0x1b8] sm:$0xff]
        %v3376 = vld [vmem:[#allocation7 + $0x1c0] sm:$0xff]
        %v3377 = vld [vmem:[#allocation7 + $0x1c8] sm:$0xff]
        %v3378 = vld [vmem:[#allocation7 + $0x1d0] sm:$0xff]
        %v3379 = vld [vmem:[#allocation7 + $0x1d8] sm:$0xff]
        %v3380 = vld [vmem:[#allocation7 + $0x1e0] sm:$0xff]
        %v3381 = vld [vmem:[#allocation7 + $0x1e8] sm:$0xff]
        %v3382 = vld [vmem:[#allocation7 + $0x1f0] sm:$0xff]
        %v3383 = vld [vmem:[#allocation7 + $0x1f8] sm:$0xff]
        %v3384 = vld [vmem:[#allocation8] sm:$0x3]
        %v3386 = vlaneseq
        %v3387 = vshrl.u32 %v3386, 7
        %v3388 = vsub.s32 0, %v3387
        %v3389 = vrot.slane %v3384, %v3388
        %v3390 = vlaneseq
        %v3391 = vshrl.u32 %v3390, 7
        %v3392 = vsub.s32 1, %v3391
        %v3393 = vrot.slane %v3384, %v3392
        %v3460 = vunpack.c.l.b16 %v3320
        %v3461 = vunpack.c.h.b16 %v3320
        %v3462 = vunpack.c.l.b16 %v3321
        %v3463 = vunpack.c.h.b16 %v3321
        %v3464 = vunpack.c.l.b16 %v3322
        %v3465 = vunpack.c.h.b16 %v3322
        %v3466 = vunpack.c.l.b16 %v3323
        %v3467 = vunpack.c.h.b16 %v3323
        %v3468 = vunpack.c.l.b16 %v3324
        %v3469 = vunpack.c.h.b16 %v3324
        %v3470 = vunpack.c.l.b16 %v3325
        %v3471 = vunpack.c.h.b16 %v3325
        %v3472 = vunpack.c.l.b16 %v3326
        %v3473 = vunpack.c.h.b16 %v3326
        %v3474 = vunpack.c.l.b16 %v3327
        %v3475 = vunpack.c.h.b16 %v3327
        %v3476 = vunpack.c.l.b16 %v3328
        %v3477 = vunpack.c.h.b16 %v3328
        %v3478 = vunpack.c.l.b16 %v3329
        %v3479 = vunpack.c.h.b16 %v3329
        %v3480 = vunpack.c.l.b16 %v3330
        %v3481 = vunpack.c.h.b16 %v3330
        %v3482 = vunpack.c.l.b16 %v3331
        %v3483 = vunpack.c.h.b16 %v3331
        %v3484 = vunpack.c.l.b16 %v3332
        %v3485 = vunpack.c.h.b16 %v3332
        %v3486 = vunpack.c.l.b16 %v3333
        %v3487 = vunpack.c.h.b16 %v3333
        %v3488 = vunpack.c.l.b16 %v3334
        %v3489 = vunpack.c.h.b16 %v3334
        %v3490 = vunpack.c.l.b16 %v3335
        %v3491 = vunpack.c.h.b16 %v3335
        %v3492 = vunpack.c.l.b16 %v3336
        %v3493 = vunpack.c.h.b16 %v3336
        %v3494 = vunpack.c.l.b16 %v3337
        %v3495 = vunpack.c.h.b16 %v3337
        %v3496 = vunpack.c.l.b16 %v3338
        %v3497 = vunpack.c.h.b16 %v3338
        %v3498 = vunpack.c.l.b16 %v3339
        %v3499 = vunpack.c.h.b16 %v3339
        %v3500 = vunpack.c.l.b16 %v3340
        %v3501 = vunpack.c.h.b16 %v3340
        %v3502 = vunpack.c.l.b16 %v3341
        %v3503 = vunpack.c.h.b16 %v3341
        %v3504 = vunpack.c.l.b16 %v3342
        %v3505 = vunpack.c.h.b16 %v3342
        %v3506 = vunpack.c.l.b16 %v3343
        %v3507 = vunpack.c.h.b16 %v3343
        %v3508 = vunpack.c.l.b16 %v3344
        %v3509 = vunpack.c.h.b16 %v3344
        %v3510 = vunpack.c.l.b16 %v3345
        %v3511 = vunpack.c.h.b16 %v3345
        %v3512 = vunpack.c.l.b16 %v3346
        %v3513 = vunpack.c.h.b16 %v3346
        %v3514 = vunpack.c.l.b16 %v3347
        %v3515 = vunpack.c.h.b16 %v3347
        %v3516 = vunpack.c.l.b16 %v3348
        %v3517 = vunpack.c.h.b16 %v3348
        %v3518 = vunpack.c.l.b16 %v3349
        %v3519 = vunpack.c.h.b16 %v3349
        %v3520 = vunpack.c.l.b16 %v3350
        %v3521 = vunpack.c.h.b16 %v3350
        %v3522 = vunpack.c.l.b16 %v3351
        %v3523 = vunpack.c.h.b16 %v3351
        %v3524 = vunpack.c.l.b16 %v3352
        %v3525 = vunpack.c.h.b16 %v3352
        %v3526 = vunpack.c.l.b16 %v3353
        %v3527 = vunpack.c.h.b16 %v3353
        %v3528 = vunpack.c.l.b16 %v3354
        %v3529 = vunpack.c.h.b16 %v3354
        %v3530 = vunpack.c.l.b16 %v3355
        %v3531 = vunpack.c.h.b16 %v3355
        %v3532 = vunpack.c.l.b16 %v3356
        %v3533 = vunpack.c.h.b16 %v3356
        %v3534 = vunpack.c.l.b16 %v3357
        %v3535 = vunpack.c.h.b16 %v3357
        %v3536 = vunpack.c.l.b16 %v3358
        %v3537 = vunpack.c.h.b16 %v3358
        %v3538 = vunpack.c.l.b16 %v3359
        %v3539 = vunpack.c.h.b16 %v3359
        %v3540 = vunpack.c.l.b16 %v3360
        %v3541 = vunpack.c.h.b16 %v3360
        %v3542 = vunpack.c.l.b16 %v3361
        %v3543 = vunpack.c.h.b16 %v3361
        %v3544 = vunpack.c.l.b16 %v3362
        %v3545 = vunpack.c.h.b16 %v3362
        %v3546 = vunpack.c.l.b16 %v3363
        %v3547 = vunpack.c.h.b16 %v3363
        %v3548 = vunpack.c.l.b16 %v3364
        %v3549 = vunpack.c.h.b16 %v3364
        %v3550 = vunpack.c.l.b16 %v3365
        %v3551 = vunpack.c.h.b16 %v3365
        %v3552 = vunpack.c.l.b16 %v3366
        %v3553 = vunpack.c.h.b16 %v3366
        %v3554 = vunpack.c.l.b16 %v3367
        %v3555 = vunpack.c.h.b16 %v3367
        %v3556 = vunpack.c.l.b16 %v3368
        %v3557 = vunpack.c.h.b16 %v3368
        %v3558 = vunpack.c.l.b16 %v3369
        %v3559 = vunpack.c.h.b16 %v3369
        %v3560 = vunpack.c.l.b16 %v3370
        %v3561 = vunpack.c.h.b16 %v3370
        %v3562 = vunpack.c.l.b16 %v3371
        %v3563 = vunpack.c.h.b16 %v3371
        %v3564 = vunpack.c.l.b16 %v3372
        %v3565 = vunpack.c.h.b16 %v3372
        %v3566 = vunpack.c.l.b16 %v3373
        %v3567 = vunpack.c.h.b16 %v3373
        %v3568 = vunpack.c.l.b16 %v3374
        %v3569 = vunpack.c.h.b16 %v3374
        %v3570 = vunpack.c.l.b16 %v3375
        %v3571 = vunpack.c.h.b16 %v3375
        %v3572 = vunpack.c.l.b16 %v3376
        %v3573 = vunpack.c.h.b16 %v3376
        %v3574 = vunpack.c.l.b16 %v3377
        %v3575 = vunpack.c.h.b16 %v3377
        %v3576 = vunpack.c.l.b16 %v3378
        %v3577 = vunpack.c.h.b16 %v3378
        %v3578 = vunpack.c.l.b16 %v3379
        %v3579 = vunpack.c.h.b16 %v3379
        %v3580 = vunpack.c.l.b16 %v3380
        %v3581 = vunpack.c.h.b16 %v3380
        %v3582 = vunpack.c.l.b16 %v3381
        %v3583 = vunpack.c.h.b16 %v3381
        %v3584 = vunpack.c.l.b16 %v3382
        %v3585 = vunpack.c.h.b16 %v3382
        %v3586 = vunpack.c.l.b16 %v3383
        %v3587 = vunpack.c.h.b16 %v3383
        %v3588 = vpack.c.b16 %v3462, %v3460
        %v3589 = vpack.c.b16 %v3463, %v3461
        %v3590 = vpack.c.b16 %v3466, %v3464
        %v3591 = vpack.c.b16 %v3467, %v3465
        %v3592 = vpack.c.b16 %v3470, %v3468
        %v3593 = vpack.c.b16 %v3471, %v3469
        %v3594 = vpack.c.b16 %v3474, %v3472
        %v3595 = vpack.c.b16 %v3475, %v3473
        %v3596 = vpack.c.b16 %v3478, %v3476
        %v3597 = vpack.c.b16 %v3479, %v3477
        %v3598 = vpack.c.b16 %v3482, %v3480
        %v3599 = vpack.c.b16 %v3483, %v3481
        %v3600 = vpack.c.b16 %v3486, %v3484
        %v3601 = vpack.c.b16 %v3487, %v3485
        %v3602 = vpack.c.b16 %v3490, %v3488
        %v3603 = vpack.c.b16 %v3491, %v3489
        %v3604 = vpack.c.b16 %v3494, %v3492
        %v3605 = vpack.c.b16 %v3495, %v3493
        %v3606 = vpack.c.b16 %v3498, %v3496
        %v3607 = vpack.c.b16 %v3499, %v3497
        %v3608 = vpack.c.b16 %v3502, %v3500
        %v3609 = vpack.c.b16 %v3503, %v3501
        %v3610 = vpack.c.b16 %v3506, %v3504
        %v3611 = vpack.c.b16 %v3507, %v3505
        %v3612 = vpack.c.b16 %v3510, %v3508
        %v3613 = vpack.c.b16 %v3511, %v3509
        %v3614 = vpack.c.b16 %v3514, %v3512
        %v3615 = vpack.c.b16 %v3515, %v3513
        %v3616 = vpack.c.b16 %v3518, %v3516
        %v3617 = vpack.c.b16 %v3519, %v3517
        %v3618 = vpack.c.b16 %v3522, %v3520
        %v3619 = vpack.c.b16 %v3523, %v3521
        %v3620 = vpack.c.b16 %v3526, %v3524
        %v3621 = vpack.c.b16 %v3527, %v3525
        %v3622 = vpack.c.b16 %v3530, %v3528
        %v3623 = vpack.c.b16 %v3531, %v3529
        %v3624 = vpack.c.b16 %v3534, %v3532
        %v3625 = vpack.c.b16 %v3535, %v3533
        %v3626 = vpack.c.b16 %v3538, %v3536
        %v3627 = vpack.c.b16 %v3539, %v3537
        %v3628 = vpack.c.b16 %v3542, %v3540
        %v3629 = vpack.c.b16 %v3543, %v3541
        %v3630 = vpack.c.b16 %v3546, %v3544
        %v3631 = vpack.c.b16 %v3547, %v3545
        %v3632 = vpack.c.b16 %v3550, %v3548
        %v3633 = vpack.c.b16 %v3551, %v3549
        %v3634 = vpack.c.b16 %v3554, %v3552
        %v3635 = vpack.c.b16 %v3555, %v3553
        %v3636 = vpack.c.b16 %v3558, %v3556
        %v3637 = vpack.c.b16 %v3559, %v3557
        %v3638 = vpack.c.b16 %v3562, %v3560
        %v3639 = vpack.c.b16 %v3563, %v3561
        %v3640 = vpack.c.b16 %v3566, %v3564
        %v3641 = vpack.c.b16 %v3567, %v3565
        %v3642 = vpack.c.b16 %v3570, %v3568
        %v3643 = vpack.c.b16 %v3571, %v3569
        %v3644 = vpack.c.b16 %v3574, %v3572
        %v3645 = vpack.c.b16 %v3575, %v3573
        %v3646 = vpack.c.b16 %v3578, %v3576
        %v3647 = vpack.c.b16 %v3579, %v3577
        %v3648 = vpack.c.b16 %v3582, %v3580
        %v3649 = vpack.c.b16 %v3583, %v3581
        %v3650 = vpack.c.b16 %v3586, %v3584
        %v3651 = vpack.c.b16 %v3587, %v3585
        %3716 = vmatprep.subr.bf16.mxu0 %v3589
        %3717 = vmatpush1.bf16.msra.mxu0 %v3588
        %3718 = vmatprep.subr.bf16.mxu0 %v3591
        %3719 = vmatpush1.bf16.msra.mxu0 %v3590
        %3720 = vmatprep.subr.bf16.mxu0 %v3593
        %3721 = vmatpush1.bf16.msra.mxu0 %v3592
        %3722 = vmatprep.subr.bf16.mxu0 %v3595
        %3723 = vmatpush1.bf16.msra.mxu0 %v3594
        %3724 = vmatprep.subr.bf16.mxu0 %v3597
        %3725 = vmatpush1.bf16.msra.mxu0 %v3596
        %3726 = vmatprep.subr.bf16.mxu0 %v3599
        %3727 = vmatpush1.bf16.msra.mxu0 %v3598
        %3728 = vmatprep.subr.bf16.mxu0 %v3601
        %3729 = vmatpush1.bf16.msra.mxu0 %v3600
        %3730 = vmatprep.subr.bf16.mxu0 %v3603
        %3731 = vmatpush1.bf16.msra.mxu0 %v3602
        %3732 = vmatprep.subr.bf16.mxu0 %v3605
        %3733 = vmatpush1.bf16.msra.mxu0 %v3604
        %3734 = vmatprep.subr.bf16.mxu0 %v3607
        %3735 = vmatpush1.bf16.msra.mxu0 %v3606
        %3736 = vmatprep.subr.bf16.mxu0 %v3609
        %3737 = vmatpush1.bf16.msra.mxu0 %v3608
        %3738 = vmatprep.subr.bf16.mxu0 %v3611
        %3739 = vmatpush1.bf16.msra.mxu0 %v3610
        %3740 = vmatprep.subr.bf16.mxu0 %v3613
        %3741 = vmatpush1.bf16.msra.mxu0 %v3612
        %3742 = vmatprep.subr.bf16.mxu0 %v3615
        %3743 = vmatpush1.bf16.msra.mxu0 %v3614
        %3744 = vmatprep.subr.bf16.mxu0 %v3617
        %3745 = vmatpush1.bf16.msra.mxu0 %v3616
        %3746 = vmatprep.subr.bf16.mxu0 %v3619
        %3747 = vmatpush1.bf16.msra.mxu0 %v3618
        %3748 = vmatprep.mubr.bf16.mxu0 %v3289
        %3749 = vmatmul.mubr.bf16.gmra.mrb[0].mxu0 %v3288
        %v3750 = vpop.f32.mrb[0].mxu0
        %v3751 = vadd.f32 %v3389, %v3750
        %v3752 = vpop.f32.mrb[0].mxu0
        %v3753 = vadd.f32 %v3393, %v3752
        %v3754 = vpop.f32.mrb[0].mxu0
        %v3755 = vadd.f32 %v3389, %v3754
        %v3756 = vpop.f32.mrb[0].mxu0
        %v3757 = vadd.f32 %v3393, %v3756
        %3758 = vmatprep.mubr.bf16.mxu0 %v3293
        %3759 = vmatmul.mubr.bf16.gmra.mrb[0].mxu0 %v3292
        %v3760 = vpop.f32.mrb[0].mxu0
        %v3761 = vadd.f32 %v3389, %v3760
        %v3762 = vpop.f32.mrb[0].mxu0
        %v3763 = vadd.f32 %v3393, %v3762
        %v3764 = vpop.f32.mrb[0].mxu0
        %v3765 = vadd.f32 %v3389, %v3764
        %v3766 = vpop.f32.mrb[0].mxu0
        %v3767 = vadd.f32 %v3393, %v3766
        %3768 = vmatprep.mubr.bf16.mxu0 %v3297
        %3769 = vmatmul.mubr.bf16.gmra.mrb[0].mxu0 %v3296
        %v3770 = vpop.f32.mrb[0].mxu0
        %v3771 = vadd.f32 %v3389, %v3770
        %v3772 = vpop.f32.mrb[0].mxu0
        %v3773 = vadd.f32 %v3393, %v3772
        %v3774 = vpop.f32.mrb[0].mxu0
        %v3775 = vadd.f32 %v3389, %v3774
        %v3776 = vpop.f32.mrb[0].mxu0
        %v3777 = vadd.f32 %v3393, %v3776
        %3778 = vmatprep.mubr.bf16.mxu0 %v3301
        %3779 = vmatmul.mubr.bf16.gmra.mrb[0].mxu0 %v3300
        %v3780 = vpop.f32.mrb[0].mxu0
        %v3781 = vadd.f32 %v3389, %v3780
        %v3782 = vpop.f32.mrb[0].mxu0
        %v3783 = vadd.f32 %v3393, %v3782
        %v3784 = vpop.f32.mrb[0].mxu0
        %v3785 = vadd.f32 %v3389, %v3784
        %v3786 = vpop.f32.mrb[0].mxu0
        %v3787 = vadd.f32 %v3393, %v3786
        %3788 = vmatprep.mubr.bf16.mxu0 %v3305
        %3789 = vmatmul.mubr.bf16.gmra.mrb[0].mxu0 %v3304
        %v3790 = vpop.f32.mrb[0].mxu0
        %v3791 = vadd.f32 %v3389, %v3790
        %v3792 = vpop.f32.mrb[0].mxu0
        %v3793 = vadd.f32 %v3393, %v3792
        %v3794 = vpop.f32.mrb[0].mxu0
        %v3795 = vadd.f32 %v3389, %v3794
        %v3796 = vpop.f32.mrb[0].mxu0
        %v3797 = vadd.f32 %v3393, %v3796
        %3798 = vmatprep.mubr.bf16.mxu0 %v3309
        %3799 = vmatmul.mubr.bf16.gmra.mrb[0].mxu0 %v3308
        %v3800 = vpop.f32.mrb[0].mxu0
        %v3801 = vadd.f32 %v3389, %v3800
        %v3802 = vpop.f32.mrb[0].mxu0
        %v3803 = vadd.f32 %v3393, %v3802
        %v3804 = vpop.f32.mrb[0].mxu0
        %v3805 = vadd.f32 %v3389, %v3804
        %v3806 = vpop.f32.mrb[0].mxu0
        %v3807 = vadd.f32 %v3393, %v3806
        %3808 = vmatprep.mubr.bf16.mxu0 %v3313
        %3809 = vmatmul.mubr.bf16.gmra.mrb[0].mxu0 %v3312
        %v3810 = vpop.f32.mrb[0].mxu0
        %v3811 = vadd.f32 %v3389, %v3810
        %v3812 = vpop.f32.mrb[0].mxu0
        %v3813 = vadd.f32 %v3393, %v3812
        %v3814 = vpop.f32.mrb[0].mxu0
        %v3815 = vadd.f32 %v3389, %v3814
        %v3816 = vpop.f32.mrb[0].mxu0
        %v3817 = vadd.f32 %v3393, %v3816
        %3818 = vmatprep.mubr.bf16.mxu0 %v3317
        %3819 = vmatmul.mubr.bf16.gmra.mrb[0].mxu0 %v3316
        %v3820 = vpop.f32.mrb[0].mxu0
        %v3821 = vadd.f32 %v3389, %v3820
        %v3822 = vpop.f32.mrb[0].mxu0
        %v3823 = vadd.f32 %v3393, %v3822
        %v3824 = vpop.f32.mrb[0].mxu0
        %v3825 = vadd.f32 %v3389, %v3824
        %v3826 = vpop.f32.mrb[0].mxu0
        %v3827 = vadd.f32 %v3393, %v3826
        %3828 = vdwg.mxu0
        %3829 = vmatprep.subr.bf16.mxu0 %v3621
        %3830 = vmatpush1.bf16.msra.mxu0 %v3620
        %3831 = vmatprep.subr.bf16.mxu0 %v3623
        %3832 = vmatpush1.bf16.msra.mxu0 %v3622
        %3833 = vmatprep.subr.bf16.mxu0 %v3625
        %3834 = vmatpush1.bf16.msra.mxu0 %v3624
        %3835 = vmatprep.subr.bf16.mxu0 %v3627
        %3836 = vmatpush1.bf16.msra.mxu0 %v3626
        %3837 = vmatprep.subr.bf16.mxu0 %v3629
        %3838 = vmatpush1.bf16.msra.mxu0 %v3628
        %3839 = vmatprep.subr.bf16.mxu0 %v3631
        %3840 = vmatpush1.bf16.msra.mxu0 %v3630
        %3841 = vmatprep.subr.bf16.mxu0 %v3633
        %3842 = vmatpush1.bf16.msra.mxu0 %v3632
        %3843 = vmatprep.subr.bf16.mxu0 %v3635
        %3844 = vmatpush1.bf16.msra.mxu0 %v3634
        %3845 = vmatprep.subr.bf16.mxu0 %v3637
        %3846 = vmatpush1.bf16.msra.mxu0 %v3636
        %3847 = vmatprep.subr.bf16.mxu0 %v3639
        %3848 = vmatpush1.bf16.msra.mxu0 %v3638
        %3849 = vmatprep.subr.bf16.mxu0 %v3641
        %3850 = vmatpush1.bf16.msra.mxu0 %v3640
        %3851 = vmatprep.subr.bf16.mxu0 %v3643
        %3852 = vmatpush1.bf16.msra.mxu0 %v3642
        %3853 = vmatprep.subr.bf16.mxu0 %v3645
        %3854 = vmatpush1.bf16.msra.mxu0 %v3644
        %3855 = vmatprep.subr.bf16.mxu0 %v3647
        %3856 = vmatpush1.bf16.msra.mxu0 %v3646
        %3857 = vmatprep.subr.bf16.mxu0 %v3649
        %3858 = vmatpush1.bf16.msra.mxu0 %v3648
        %3859 = vmatprep.subr.bf16.mxu0 %v3651
        %3860 = vmatpush1.bf16.msra.mxu0 %v3650
        %3861 = vmatprep.mubr.bf16.mxu0 %v3291
        %3862 = vmatmul.mubr.bf16.gmra.mrb[0].mxu0 %v3290
        %v3863 = vpop.f32.mrb[0].mxu0
        %v3864 = vadd.f32 %v3751, %v3863
        %v3865 = vpop.f32.mrb[0].mxu0
        %v3866 = vadd.f32 %v3753, %v3865
        %v3867 = vpop.f32.mrb[0].mxu0
        %v3868 = vadd.f32 %v3755, %v3867
        %v3869 = vpop.f32.mrb[0].mxu0
        %v3870 = vadd.f32 %v3757, %v3869
        %3871 = vmatprep.mubr.bf16.mxu0 %v3295
        %3872 = vmatmul.mubr.bf16.gmra.mrb[0].mxu0 %v3294
        %v3873 = vpop.f32.mrb[0].mxu0
        %v3874 = vadd.f32 %v3761, %v3873
        %v3875 = vpop.f32.mrb[0].mxu0
        %v3876 = vadd.f32 %v3763, %v3875
        %v3877 = vpop.f32.mrb[0].mxu0
        %v3878 = vadd.f32 %v3765, %v3877
        %v3879 = vpop.f32.mrb[0].mxu0
        %v3880 = vadd.f32 %v3767, %v3879
        %3881 = vmatprep.mubr.bf16.mxu0 %v3299
        %3882 = vmatmul.mubr.bf16.gmra.mrb[0].mxu0 %v3298
        %v3883 = vpop.f32.mrb[0].mxu0
        %v3884 = vadd.f32 %v3771, %v3883
        %v3885 = vpop.f32.mrb[0].mxu0
        %v3886 = vadd.f32 %v3773, %v3885
        %v3887 = vpop.f32.mrb[0].mxu0
        %v3888 = vadd.f32 %v3775, %v3887
        %v3889 = vpop.f32.mrb[0].mxu0
        %v3890 = vadd.f32 %v3777, %v3889
        %3891 = vmatprep.mubr.bf16.mxu0 %v3303
        %3892 = vmatmul.mubr.bf16.gmra.mrb[0].mxu0 %v3302
        %v3893 = vpop.f32.mrb[0].mxu0
        %v3894 = vadd.f32 %v3781, %v3893
        %v3895 = vpop.f32.mrb[0].mxu0
        %v3896 = vadd.f32 %v3783, %v3895
        %v3897 = vpop.f32.mrb[0].mxu0
        %v3898 = vadd.f32 %v3785, %v3897
        %v3899 = vpop.f32.mrb[0].mxu0
        %v3900 = vadd.f32 %v3787, %v3899
        %3901 = vmatprep.mubr.bf16.mxu0 %v3307
        %3902 = vmatmul.mubr.bf16.gmra.mrb[0].mxu0 %v3306
        %v3903 = vpop.f32.mrb[0].mxu0
        %v3904 = vadd.f32 %v3791, %v3903
        %v3905 = vpop.f32.mrb[0].mxu0
        %v3906 = vadd.f32 %v3793, %v3905
        %v3907 = vpop.f32.mrb[0].mxu0
        %v3908 = vadd.f32 %v3795, %v3907
        %v3909 = vpop.f32.mrb[0].mxu0
        %v3910 = vadd.f32 %v3797, %v3909
        %3911 = vmatprep.mubr.bf16.mxu0 %v3311
        %3912 = vmatmul.mubr.bf16.gmra.mrb[0].mxu0 %v3310
        %v3913 = vpop.f32.mrb[0].mxu0
        %v3914 = vadd.f32 %v3801, %v3913
        %v3915 = vpop.f32.mrb[0].mxu0
        %v3916 = vadd.f32 %v3803, %v3915
        %v3917 = vpop.f32.mrb[0].mxu0
        %v3918 = vadd.f32 %v3805, %v3917
        %v3919 = vpop.f32.mrb[0].mxu0
        %v3920 = vadd.f32 %v3807, %v3919
        %3921 = vmatprep.mubr.bf16.mxu0 %v3315
        %3922 = vmatmul.mubr.bf16.gmra.mrb[0].mxu0 %v3314
        %v3923 = vpop.f32.mrb[0].mxu0
        %v3924 = vadd.f32 %v3811, %v3923
        %v3925 = vpop.f32.mrb[0].mxu0
        %v3926 = vadd.f32 %v3813, %v3925
        %v3927 = vpop.f32.mrb[0].mxu0
        %v3928 = vadd.f32 %v3815, %v3927
        %v3929 = vpop.f32.mrb[0].mxu0
        %v3930 = vadd.f32 %v3817, %v3929
        %3931 = vmatprep.mubr.bf16.mxu0 %v3319
        %3932 = vmatmul.mubr.bf16.gmra.mrb[0].mxu0 %v3318
        %v3933 = vpop.f32.mrb[0].mxu0
        %v3934 = vadd.f32 %v3821, %v3933
        %v3935 = vpop.f32.mrb[0].mxu0
        %v3936 = vadd.f32 %v3823, %v3935
        %v3937 = vpop.f32.mrb[0].mxu0
        %v3938 = vadd.f32 %v3825, %v3937
        %v3939 = vpop.f32.mrb[0].mxu0
        %v3940 = vadd.f32 %v3827, %v3939
        %3941 = vdwg.mxu0
        %v3942 = vmax.f32 %v3864, 0.0
        %v3943 = vmax.f32 %v3866, 0.0
        %v3944 = vmax.f32 %v3868, 0.0
        %v3945 = vmax.f32 %v3870, 0.0
        %v3946 = vmax.f32 %v3874, 0.0
        %v3947 = vmax.f32 %v3876, 0.0
        %v3948 = vmax.f32 %v3878, 0.0
        %v3949 = vmax.f32 %v3880, 0.0
        %v3950 = vmax.f32 %v3884, 0.0
        %v3951 = vmax.f32 %v3886, 0.0
        %v3952 = vmax.f32 %v3888, 0.0
        %v3953 = vmax.f32 %v3890, 0.0
        %v3954 = vmax.f32 %v3894, 0.0
        %v3955 = vmax.f32 %v3896, 0.0
        %v3956 = vmax.f32 %v3898, 0.0
        %v3957 = vmax.f32 %v3900, 0.0
        %v3958 = vmax.f32 %v3904, 0.0
        %v3959 = vmax.f32 %v3906, 0.0
        %v3960 = vmax.f32 %v3908, 0.0
        %v3961 = vmax.f32 %v3910, 0.0
        %v3962 = vmax.f32 %v3914, 0.0
        %v3963 = vmax.f32 %v3916, 0.0
        %v3964 = vmax.f32 %v3918, 0.0
        %v3965 = vmax.f32 %v3920, 0.0
        %v3966 = vmax.f32 %v3924, 0.0
        %v3967 = vmax.f32 %v3926, 0.0
        %v3968 = vmax.f32 %v3928, 0.0
        %v3969 = vmax.f32 %v3930, 0.0
        %v3970 = vmax.f32 %v3934, 0.0
        %v3971 = vmax.f32 %v3936, 0.0
        %v3972 = vmax.f32 %v3938, 0.0
        %v3973 = vmax.f32 %v3940, 0.0
        %v3974 = vpack.c.bf16 %v3944, %v3942
        %v3975 = vpack.c.bf16 %v3945, %v3943
        %v3976 = vpack.c.bf16 %v3948, %v3946
        %v3977 = vpack.c.bf16 %v3949, %v3947
        %v3978 = vpack.c.bf16 %v3952, %v3950
        %v3979 = vpack.c.bf16 %v3953, %v3951
        %v3980 = vpack.c.bf16 %v3956, %v3954
        %v3981 = vpack.c.bf16 %v3957, %v3955
        %v3982 = vpack.c.bf16 %v3960, %v3958
        %v3983 = vpack.c.bf16 %v3961, %v3959
        %v3984 = vpack.c.bf16 %v3964, %v3962
        %v3985 = vpack.c.bf16 %v3965, %v3963
        %v3986 = vpack.c.bf16 %v3968, %v3966
        %v3987 = vpack.c.bf16 %v3969, %v3967
        %v3988 = vpack.c.bf16 %v3972, %v3970
        %v3989 = vpack.c.bf16 %v3973, %v3971
        %v3990 = vld [vmem:[#allocation10] sm:$0xf]
        %v3991 = vld [vmem:[#allocation10 + $0x4] sm:$0xf]
        %v3992 = vld [vmem:[#allocation10 + $0x8] sm:$0xf]
        %v3993 = vld [vmem:[#allocation10 + $0xc] sm:$0xf]
        %v3994 = vld [vmem:[#allocation10 + $0x10] sm:$0xf]
        %v3995 = vld [vmem:[#allocation10 + $0x14] sm:$0xf]
        %v3996 = vld [vmem:[#allocation10 + $0x18] sm:$0xf]
        %v3997 = vld [vmem:[#allocation10 + $0x1c] sm:$0xf]
        %v3998 = vld [vmem:[#allocation10 + $0x20] sm:$0xf]
        %v3999 = vld [vmem:[#allocation10 + $0x24] sm:$0xf]
        %v4000 = vld [vmem:[#allocation10 + $0x28] sm:$0xf]
        %v4001 = vld [vmem:[#allocation10 + $0x2c] sm:$0xf]
        %v4002 = vld [vmem:[#allocation10 + $0x30] sm:$0xf]
        %v4003 = vld [vmem:[#allocation10 + $0x34] sm:$0xf]
        %v4004 = vld [vmem:[#allocation10 + $0x38] sm:$0xf]
        %v4005 = vld [vmem:[#allocation10 + $0x3c] sm:$0xf]
        %v4006 = vld [vmem:[#allocation10 + $0x40] sm:$0xf]
        %v4007 = vld [vmem:[#allocation10 + $0x44] sm:$0xf]
        %v4008 = vld [vmem:[#allocation10 + $0x48] sm:$0xf]
        %v4009 = vld [vmem:[#allocation10 + $0x4c] sm:$0xf]
        %v4010 = vld [vmem:[#allocation10 + $0x50] sm:$0xf]
        %v4011 = vld [vmem:[#allocation10 + $0x54] sm:$0xf]
        %v4012 = vld [vmem:[#allocation10 + $0x58] sm:$0xf]
        %v4013 = vld [vmem:[#allocation10 + $0x5c] sm:$0xf]
        %v4014 = vld [vmem:[#allocation10 + $0x60] sm:$0xf]
        %v4015 = vld [vmem:[#allocation10 + $0x64] sm:$0xf]
        %v4016 = vld [vmem:[#allocation10 + $0x68] sm:$0xf]
        %v4017 = vld [vmem:[#allocation10 + $0x6c] sm:$0xf]
        %v4018 = vld [vmem:[#allocation10 + $0x70] sm:$0xf]
        %v4019 = vld [vmem:[#allocation10 + $0x74] sm:$0xf]
        %v4020 = vld [vmem:[#allocation10 + $0x78] sm:$0xf]
        %v4021 = vld [vmem:[#allocation10 + $0x7c] sm:$0xf]
        %v4022 = vld [vmem:[%s6] sm:$0x1]
        %v4024 = vlaneseq
        %v4025 = vshrl.u32 %v4024, 7
        %v4026 = vsub.s32 0, %v4025
        %v4027 = vrot.slane %v4022, %v4026
        %v4061 = vunpack.c.l.b16 %v3990
        %v4062 = vunpack.c.l.b16 %v3991
        %v4063 = vunpack.c.l.b16 %v3992
        %v4064 = vunpack.c.l.b16 %v3993
        %v4065 = vunpack.c.l.b16 %v3994
        %v4066 = vunpack.c.l.b16 %v3995
        %v4067 = vunpack.c.l.b16 %v3996
        %v4068 = vunpack.c.l.b16 %v3997
        %v4069 = vunpack.c.l.b16 %v3998
        %v4070 = vunpack.c.l.b16 %v3999
        %v4071 = vunpack.c.l.b16 %v4000
        %v4072 = vunpack.c.l.b16 %v4001
        %v4073 = vunpack.c.l.b16 %v4002
        %v4074 = vunpack.c.l.b16 %v4003
        %v4075 = vunpack.c.l.b16 %v4004
        %v4076 = vunpack.c.l.b16 %v4005
        %v4077 = vunpack.c.l.b16 %v4006
        %v4078 = vunpack.c.l.b16 %v4007
        %v4079 = vunpack.c.l.b16 %v4008
        %v4080 = vunpack.c.l.b16 %v4009
        %v4081 = vunpack.c.l.b16 %v4010
        %v4082 = vunpack.c.l.b16 %v4011
        %v4083 = vunpack.c.l.b16 %v4012
        %v4084 = vunpack.c.l.b16 %v4013
        %v4085 = vunpack.c.l.b16 %v4014
        %v4086 = vunpack.c.l.b16 %v4015
        %v4087 = vunpack.c.l.b16 %v4016
        %v4088 = vunpack.c.l.b16 %v4017
        %v4089 = vunpack.c.l.b16 %v4018
        %v4090 = vunpack.c.l.b16 %v4019
        %v4091 = vunpack.c.l.b16 %v4020
        %v4092 = vunpack.c.l.b16 %v4021
        %v4093 = vpack.c.b16 %v4062, %v4061
        %v4094 = vpack.c.b16 %v4064, %v4063
        %v4095 = vpack.c.b16 %v4066, %v4065
        %v4096 = vpack.c.b16 %v4068, %v4067
        %v4097 = vpack.c.b16 %v4070, %v4069
        %v4098 = vpack.c.b16 %v4072, %v4071
        %v4099 = vpack.c.b16 %v4074, %v4073
        %v4100 = vpack.c.b16 %v4076, %v4075
        %v4101 = vpack.c.b16 %v4078, %v4077
        %v4102 = vpack.c.b16 %v4080, %v4079
        %v4103 = vpack.c.b16 %v4082, %v4081
        %v4104 = vpack.c.b16 %v4084, %v4083
        %v4105 = vpack.c.b16 %v4086, %v4085
        %v4106 = vpack.c.b16 %v4088, %v4087
        %v4107 = vpack.c.b16 %v4090, %v4089
        %v4108 = vpack.c.b16 %v4092, %v4091
        %4125 = vmatprep.subr.bf16.mxu0 0
        %4126 = vmatpush1.bf16.msra.mxu0 %v4093
        %4127 = vmatprep.subr.bf16.mxu0 0
        %4128 = vmatpush1.bf16.msra.mxu0 %v4094
        %4129 = vmatprep.subr.bf16.mxu0 0
        %4130 = vmatpush1.bf16.msra.mxu0 %v4095
        %4131 = vmatprep.subr.bf16.mxu0 0
        %4132 = vmatpush1.bf16.msra.mxu0 %v4096
        %4133 = vmatprep.subr.bf16.mxu0 0
        %4134 = vmatpush1.bf16.msra.mxu0 %v4097
        %4135 = vmatprep.subr.bf16.mxu0 0
        %4136 = vmatpush1.bf16.msra.mxu0 %v4098
        %4137 = vmatprep.subr.bf16.mxu0 0
        %4138 = vmatpush1.bf16.msra.mxu0 %v4099
        %4139 = vmatprep.subr.bf16.mxu0 0
        %4140 = vmatpush1.bf16.msra.mxu0 %v4100
        %4141 = vmatprep.subr.bf16.mxu0 0
        %4142 = vmatpush1.bf16.msra.mxu0 %v4101
        %4143 = vmatprep.subr.bf16.mxu0 0
        %4144 = vmatpush1.bf16.msra.mxu0 %v4102
        %4145 = vmatprep.subr.bf16.mxu0 0
        %4146 = vmatpush1.bf16.msra.mxu0 %v4103
        %4147 = vmatprep.subr.bf16.mxu0 0
        %4148 = vmatpush1.bf16.msra.mxu0 %v4104
        %4149 = vmatprep.subr.bf16.mxu0 0
        %4150 = vmatpush1.bf16.msra.mxu0 %v4105
        %4151 = vmatprep.subr.bf16.mxu0 0
        %4152 = vmatpush1.bf16.msra.mxu0 %v4106
        %4153 = vmatprep.subr.bf16.mxu0 0
        %4154 = vmatpush1.bf16.msra.mxu0 %v4107
        %4155 = vmatprep.subr.bf16.mxu0 0
        %4156 = vmatpush1.bf16.msra.mxu0 %v4108
        %4157 = vmatprep.mubr.bf16.mxu0 %v3975
        %4158 = vmatmul.mubr.bf16.gmra.mrb[0].mxu0 %v3974
        %v4159 = vpop.f32.mrb[0].mxu0
        %v4160 = vadd.f32 %v4027, %v4159
        %v4161 = vpop.f32.mrb[0].mxu0
        %v4162 = vpop.f32.mrb[0].mxu0
        %v4163 = vadd.f32 %v4027, %v4162
        %v4164 = vpop.f32.mrb[0].mxu0
        %4165 = vmatprep.mubr.bf16.mxu0 %v3977
        %4166 = vmatmul.mubr.bf16.gmra.mrb[0].mxu0 %v3976
        %v4167 = vpop.f32.mrb[0].mxu0
        %v4168 = vadd.f32 %v4027, %v4167
        %v4169 = vpop.f32.mrb[0].mxu0
        %v4170 = vpop.f32.mrb[0].mxu0
        %v4171 = vadd.f32 %v4027, %v4170
        %v4172 = vpop.f32.mrb[0].mxu0
        %4173 = vmatprep.mubr.bf16.mxu0 %v3979
        %4174 = vmatmul.mubr.bf16.gmra.mrb[0].mxu0 %v3978
        %v4175 = vpop.f32.mrb[0].mxu0
        %v4176 = vadd.f32 %v4027, %v4175
        %v4177 = vpop.f32.mrb[0].mxu0
        %v4178 = vpop.f32.mrb[0].mxu0
        %v4179 = vadd.f32 %v4027, %v4178
        %v4180 = vpop.f32.mrb[0].mxu0
        %4181 = vmatprep.mubr.bf16.mxu0 %v3981
        %4182 = vmatmul.mubr.bf16.gmra.mrb[0].mxu0 %v3980
        %v4183 = vpop.f32.mrb[0].mxu0
        %v4184 = vadd.f32 %v4027, %v4183
        %v4185 = vpop.f32.mrb[0].mxu0
        %v4186 = vpop.f32.mrb[0].mxu0
        %v4187 = vadd.f32 %v4027, %v4186
        %v4188 = vpop.f32.mrb[0].mxu0
        %4189 = vmatprep.mubr.bf16.mxu0 %v3983
        %4190 = vmatmul.mubr.bf16.gmra.mrb[0].mxu0 %v3982
        %v4191 = vpop.f32.mrb[0].mxu0
        %v4192 = vadd.f32 %v4027, %v4191
        %v4193 = vpop.f32.mrb[0].mxu0
        %v4194 = vpop.f32.mrb[0].mxu0
        %v4195 = vadd.f32 %v4027, %v4194
        %v4196 = vpop.f32.mrb[0].mxu0
        %4197 = vmatprep.mubr.bf16.mxu0 %v3985
        %4198 = vmatmul.mubr.bf16.gmra.mrb[0].mxu0 %v3984
        %v4199 = vpop.f32.mrb[0].mxu0
        %v4200 = vadd.f32 %v4027, %v4199
        %v4201 = vpop.f32.mrb[0].mxu0
        %v4202 = vpop.f32.mrb[0].mxu0
        %v4203 = vadd.f32 %v4027, %v4202
        %v4204 = vpop.f32.mrb[0].mxu0
        %4205 = vmatprep.mubr.bf16.mxu0 %v3987
        %4206 = vmatmul.mubr.bf16.gmra.mrb[0].mxu0 %v3986
        %v4207 = vpop.f32.mrb[0].mxu0
        %v4208 = vadd.f32 %v4027, %v4207
        %v4209 = vpop.f32.mrb[0].mxu0
        %v4210 = vpop.f32.mrb[0].mxu0
        %v4211 = vadd.f32 %v4027, %v4210
        %v4212 = vpop.f32.mrb[0].mxu0
        %4213 = vmatprep.mubr.bf16.mxu0 %v3989
        %4214 = vmatmul.mubr.bf16.gmra.mrb[0].mxu0 %v3988
        %v4215 = vpop.f32.mrb[0].mxu0
        %v4216 = vadd.f32 %v4027, %v4215
        %v4217 = vpop.f32.mrb[0].mxu0
        %v4218 = vpop.f32.mrb[0].mxu0
        %v4219 = vadd.f32 %v4027, %v4218
        %v4220 = vpop.f32.mrb[0].mxu0
        %4221 = vdwg.mxu0
        %v4222 = vpack.c.bf16 %v4163, %v4160
        %v4223 = vpack.c.bf16 %v4171, %v4168
        %v4224 = vpack.c.bf16 %v4179, %v4176
        %v4225 = vpack.c.bf16 %v4187, %v4184
        %v4226 = vpack.c.bf16 %v4195, %v4192
        %v4227 = vpack.c.bf16 %v4203, %v4200
        %v4228 = vpack.c.bf16 %v4211, %v4208
        %v4229 = vpack.c.bf16 %v4219, %v4216
        %v4230 = vld [vmem:[#allocation11] sm:$0xff]
        %v4231 = vld [vmem:[#allocation11 + $0x8] sm:$0xff]
        %v4232 = vld [vmem:[#allocation11 + $0x10] sm:$0xff]
        %v4233 = vld [vmem:[#allocation11 + $0x18] sm:$0xff]
        %v4234 = vld [vmem:[#allocation11 + $0x20] sm:$0xff]
        %v4235 = vld [vmem:[#allocation11 + $0x28] sm:$0xff]
        %v4236 = vld [vmem:[#allocation11 + $0x30] sm:$0xff]
        %v4237 = vld [vmem:[#allocation11 + $0x38] sm:$0xff]
        %v4238 = vld [vmem:[#allocation11 + $0x40] sm:$0xff]
        %v4239 = vld [vmem:[#allocation11 + $0x48] sm:$0xff]
        %v4240 = vld [vmem:[#allocation11 + $0x50] sm:$0xff]
        %v4241 = vld [vmem:[#allocation11 + $0x58] sm:$0xff]
        %v4242 = vld [vmem:[#allocation11 + $0x60] sm:$0xff]
        %v4243 = vld [vmem:[#allocation11 + $0x68] sm:$0xff]
        %v4244 = vld [vmem:[#allocation11 + $0x70] sm:$0xff]
        %v4245 = vld [vmem:[#allocation11 + $0x78] sm:$0xff]
        %v4246 = vld [vmem:[%s8] sm:$0x3]
        %v4248 = vlaneseq
        %v4249 = vshrl.u32 %v4248, 7
        %v4250 = vsub.s32 0, %v4249
        %v4251 = vrot.slane %v4246, %v4250
        %v4252 = vlaneseq
        %v4253 = vshrl.u32 %v4252, 7
        %v4254 = vsub.s32 1, %v4253
        %v4255 = vrot.slane %v4246, %v4254
        %v4274 = vunpack.c.l.b16 %v4230
        %v4275 = vunpack.c.h.b16 %v4230
        %v4276 = vunpack.c.l.b16 %v4231
        %v4277 = vunpack.c.h.b16 %v4231
        %v4278 = vunpack.c.l.b16 %v4232
        %v4279 = vunpack.c.h.b16 %v4232
        %v4280 = vunpack.c.l.b16 %v4233
        %v4281 = vunpack.c.h.b16 %v4233
        %v4282 = vunpack.c.l.b16 %v4234
        %v4283 = vunpack.c.h.b16 %v4234
        %v4284 = vunpack.c.l.b16 %v4235
        %v4285 = vunpack.c.h.b16 %v4235
        %v4286 = vunpack.c.l.b16 %v4236
        %v4287 = vunpack.c.h.b16 %v4236
        %v4288 = vunpack.c.l.b16 %v4237
        %v4289 = vunpack.c.h.b16 %v4237
        %v4290 = vunpack.c.l.b16 %v4238
        %v4291 = vunpack.c.h.b16 %v4238
        %v4292 = vunpack.c.l.b16 %v4239
        %v4293 = vunpack.c.h.b16 %v4239
        %v4294 = vunpack.c.l.b16 %v4240
        %v4295 = vunpack.c.h.b16 %v4240
        %v4296 = vunpack.c.l.b16 %v4241
        %v4297 = vunpack.c.h.b16 %v4241
        %v4298 = vunpack.c.l.b16 %v4242
        %v4299 = vunpack.c.h.b16 %v4242
        %v4300 = vunpack.c.l.b16 %v4243
        %v4301 = vunpack.c.h.b16 %v4243
        %v4302 = vunpack.c.l.b16 %v4244
        %v4303 = vunpack.c.h.b16 %v4244
        %v4304 = vunpack.c.l.b16 %v4245
        %v4305 = vunpack.c.h.b16 %v4245
        %v4306 = vpack.c.b16 %v4276, %v4274
        %v4307 = vpack.c.b16 %v4277, %v4275
        %v4308 = vpack.c.b16 %v4280, %v4278
        %v4309 = vpack.c.b16 %v4281, %v4279
        %v4310 = vpack.c.b16 %v4284, %v4282
        %v4311 = vpack.c.b16 %v4285, %v4283
        %v4312 = vpack.c.b16 %v4288, %v4286
        %v4313 = vpack.c.b16 %v4289, %v4287
        %v4314 = vpack.c.b16 %v4292, %v4290
        %v4315 = vpack.c.b16 %v4293, %v4291
        %v4316 = vpack.c.b16 %v4296, %v4294
        %v4317 = vpack.c.b16 %v4297, %v4295
        %v4318 = vpack.c.b16 %v4300, %v4298
        %v4319 = vpack.c.b16 %v4301, %v4299
        %v4320 = vpack.c.b16 %v4304, %v4302
        %v4321 = vpack.c.b16 %v4305, %v4303
        %4338 = vmatprep.subr.bf16.mxu0 %v4307
        %4339 = vmatpush1.bf16.msra.mxu0 %v4306
        %4340 = vmatprep.subr.bf16.mxu0 %v4309
        %4341 = vmatpush1.bf16.msra.mxu0 %v4308
        %4342 = vmatprep.subr.bf16.mxu0 %v4311
        %4343 = vmatpush1.bf16.msra.mxu0 %v4310
        %4344 = vmatprep.subr.bf16.mxu0 %v4313
        %4345 = vmatpush1.bf16.msra.mxu0 %v4312
        %4346 = vmatprep.subr.bf16.mxu0 %v4315
        %4347 = vmatpush1.bf16.msra.mxu0 %v4314
        %4348 = vmatprep.subr.bf16.mxu0 %v4317
        %4349 = vmatpush1.bf16.msra.mxu0 %v4316
        %4350 = vmatprep.subr.bf16.mxu0 %v4319
        %4351 = vmatpush1.bf16.msra.mxu0 %v4318
        %4352 = vmatprep.subr.bf16.mxu0 %v4321
        %4353 = vmatpush1.bf16.msra.mxu0 %v4320
        %4354 = vmatprep.subr.bf16.mxu0 0
        %4355 = vmatpush1.bf16.msra.mxu0 0
        %4356 = vmatprep.subr.bf16.mxu0 0
        %4357 = vmatpush1.bf16.msra.mxu0 0
        %4358 = vmatprep.subr.bf16.mxu0 0
        %4359 = vmatpush1.bf16.msra.mxu0 0
        %4360 = vmatprep.subr.bf16.mxu0 0
        %4361 = vmatpush1.bf16.msra.mxu0 0
        %4362 = vmatprep.subr.bf16.mxu0 0
        %4363 = vmatpush1.bf16.msra.mxu0 0
        %4364 = vmatprep.subr.bf16.mxu0 0
        %4365 = vmatpush1.bf16.msra.mxu0 0
        %4366 = vmatprep.subr.bf16.mxu0 0
        %4367 = vmatpush1.bf16.msra.mxu0 0
        %4368 = vmatprep.subr.bf16.mxu0 0
        %4369 = vmatpush1.bf16.msra.mxu0 0
        %4370 = vmatprep.mubr.bf16.mxu0 0
        %4371 = vmatmul.mubr.bf16.gmra.mrb[0].mxu0 %v4222
        %v4372 = vpop.f32.mrb[0].mxu0
        %v4373 = vadd.f32 %v4251, %v4372
        %v4374 = vpop.f32.mrb[0].mxu0
        %v4375 = vadd.f32 %v4255, %v4374
        %v4376 = vpop.f32.mrb[0].mxu0
        %v4377 = vadd.f32 %v4251, %v4376
        %v4378 = vpop.f32.mrb[0].mxu0
        %v4379 = vadd.f32 %v4255, %v4378
        %4380 = vmatprep.mubr.bf16.mxu0 0
        %4381 = vmatmul.mubr.bf16.gmra.mrb[0].mxu0 %v4223
        %v4382 = vpop.f32.mrb[0].mxu0
        %v4383 = vadd.f32 %v4251, %v4382
        %v4384 = vpop.f32.mrb[0].mxu0
        %v4385 = vadd.f32 %v4255, %v4384
        %v4386 = vpop.f32.mrb[0].mxu0
        %v4387 = vadd.f32 %v4251, %v4386
        %v4388 = vpop.f32.mrb[0].mxu0
        %v4389 = vadd.f32 %v4255, %v4388
        %4390 = vmatprep.mubr.bf16.mxu0 0
        %4391 = vmatmul.mubr.bf16.gmra.mrb[0].mxu0 %v4224
        %v4392 = vpop.f32.mrb[0].mxu0
        %v4393 = vadd.f32 %v4251, %v4392
        %v4394 = vpop.f32.mrb[0].mxu0
        %v4395 = vadd.f32 %v4255, %v4394
        %v4396 = vpop.f32.mrb[0].mxu0
        %v4397 = vadd.f32 %v4251, %v4396
        %v4398 = vpop.f32.mrb[0].mxu0
        %v4399 = vadd.f32 %v4255, %v4398
        %4400 = vmatprep.mubr.bf16.mxu0 0
        %4401 = vmatmul.mubr.bf16.gmra.mrb[0].mxu0 %v4225
        %v4402 = vpop.f32.mrb[0].mxu0
        %v4403 = vadd.f32 %v4251, %v4402
        %v4404 = vpop.f32.mrb[0].mxu0
        %v4405 = vadd.f32 %v4255, %v4404
        %v4406 = vpop.f32.mrb[0].mxu0
        %v4407 = vadd.f32 %v4251, %v4406
        %v4408 = vpop.f32.mrb[0].mxu0
        %v4409 = vadd.f32 %v4255, %v4408
        %4410 = vmatprep.mubr.bf16.mxu0 0
        %4411 = vmatmul.mubr.bf16.gmra.mrb[0].mxu0 %v4226
        %v4412 = vpop.f32.mrb[0].mxu0
        %v4413 = vadd.f32 %v4251, %v4412
        %v4414 = vpop.f32.mrb[0].mxu0
        %v4415 = vadd.f32 %v4255, %v4414
        %v4416 = vpop.f32.mrb[0].mxu0
        %v4417 = vadd.f32 %v4251, %v4416
        %v4418 = vpop.f32.mrb[0].mxu0
        %v4419 = vadd.f32 %v4255, %v4418
        %4420 = vmatprep.mubr.bf16.mxu0 0
        %4421 = vmatmul.mubr.bf16.gmra.mrb[0].mxu0 %v4227
        %v4422 = vpop.f32.mrb[0].mxu0
        %v4423 = vadd.f32 %v4251, %v4422
        %v4424 = vpop.f32.mrb[0].mxu0
        %v4425 = vadd.f32 %v4255, %v4424
        %v4426 = vpop.f32.mrb[0].mxu0
        %v4427 = vadd.f32 %v4251, %v4426
        %v4428 = vpop.f32.mrb[0].mxu0
        %v4429 = vadd.f32 %v4255, %v4428
        %4430 = vmatprep.mubr.bf16.mxu0 0
        %4431 = vmatmul.mubr.bf16.gmra.mrb[0].mxu0 %v4228
        %v4432 = vpop.f32.mrb[0].mxu0
        %v4433 = vadd.f32 %v4251, %v4432
        %v4434 = vpop.f32.mrb[0].mxu0
        %v4435 = vadd.f32 %v4255, %v4434
        %v4436 = vpop.f32.mrb[0].mxu0
        %v4437 = vadd.f32 %v4251, %v4436
        %v4438 = vpop.f32.mrb[0].mxu0
        %v4439 = vadd.f32 %v4255, %v4438
        %4440 = vmatprep.mubr.bf16.mxu0 0
        %4441 = vmatmul.mubr.bf16.gmra.mrb[0].mxu0 %v4229
        %v4442 = vpop.f32.mrb[0].mxu0
        %v4443 = vadd.f32 %v4251, %v4442
        %v4444 = vpop.f32.mrb[0].mxu0
        %v4445 = vadd.f32 %v4255, %v4444
        %v4446 = vpop.f32.mrb[0].mxu0
        %v4447 = vadd.f32 %v4251, %v4446
        %v4448 = vpop.f32.mrb[0].mxu0
        %v4449 = vadd.f32 %v4255, %v4448
        %4450 = vdwg.mxu0
        %v4451 = vmax.f32 %v4373, 0.0
        %v4452 = vmax.f32 %v4375, 0.0
        %v4453 = vmax.f32 %v4377, 0.0
        %v4454 = vmax.f32 %v4379, 0.0
        %v4455 = vmax.f32 %v4383, 0.0
        %v4456 = vmax.f32 %v4385, 0.0
        %v4457 = vmax.f32 %v4387, 0.0
        %v4458 = vmax.f32 %v4389, 0.0
        %v4459 = vmax.f32 %v4393, 0.0
        %v4460 = vmax.f32 %v4395, 0.0
        %v4461 = vmax.f32 %v4397, 0.0
        %v4462 = vmax.f32 %v4399, 0.0
        %v4463 = vmax.f32 %v4403, 0.0
        %v4464 = vmax.f32 %v4405, 0.0
        %v4465 = vmax.f32 %v4407, 0.0
        %v4466 = vmax.f32 %v4409, 0.0
        %v4467 = vmax.f32 %v4413, 0.0
        %v4468 = vmax.f32 %v4415, 0.0
        %v4469 = vmax.f32 %v4417, 0.0
        %v4470 = vmax.f32 %v4419, 0.0
        %v4471 = vmax.f32 %v4423, 0.0
        %v4472 = vmax.f32 %v4425, 0.0
        %v4473 = vmax.f32 %v4427, 0.0
        %v4474 = vmax.f32 %v4429, 0.0
        %v4475 = vmax.f32 %v4433, 0.0
        %v4476 = vmax.f32 %v4435, 0.0
        %v4477 = vmax.f32 %v4437, 0.0
        %v4478 = vmax.f32 %v4439, 0.0
        %v4479 = vmax.f32 %v4443, 0.0
        %v4480 = vmax.f32 %v4445, 0.0
        %v4481 = vmax.f32 %v4447, 0.0
        %v4482 = vmax.f32 %v4449, 0.0
        %v4483 = vpack.c.bf16 %v4453, %v4451
        %v4484 = vpack.c.bf16 %v4454, %v4452
        %v4485 = vpack.c.bf16 %v4457, %v4455
        %v4486 = vpack.c.bf16 %v4458, %v4456
        %v4487 = vpack.c.bf16 %v4461, %v4459
        %v4488 = vpack.c.bf16 %v4462, %v4460
        %v4489 = vpack.c.bf16 %v4465, %v4463
        %v4490 = vpack.c.bf16 %v4466, %v4464
        %v4491 = vpack.c.bf16 %v4469, %v4467
        %v4492 = vpack.c.bf16 %v4470, %v4468
        %v4493 = vpack.c.bf16 %v4473, %v4471
        %v4494 = vpack.c.bf16 %v4474, %v4472
        %v4495 = vpack.c.bf16 %v4477, %v4475
        %v4496 = vpack.c.bf16 %v4478, %v4476
        %v4497 = vpack.c.bf16 %v4481, %v4479
        %v4498 = vpack.c.bf16 %v4482, %v4480
        %v4499 = vld [vmem:[#allocation13] sm:$0xff]
        %v4500 = vld [vmem:[#allocation13 + $0x8] sm:$0xff]
        %v4501 = vld [vmem:[#allocation13 + $0x10] sm:$0xff]
        %v4502 = vld [vmem:[#allocation13 + $0x18] sm:$0xff]
        %v4503 = vld [vmem:[#allocation13 + $0x20] sm:$0xff]
        %v4504 = vld [vmem:[#allocation13 + $0x28] sm:$0xff]
        %v4505 = vld [vmem:[#allocation13 + $0x30] sm:$0xff]
        %v4506 = vld [vmem:[#allocation13 + $0x38] sm:$0xff]
        %v4507 = vld [vmem:[#allocation13 + $0x40] sm:$0xff]
        %v4508 = vld [vmem:[#allocation13 + $0x48] sm:$0xff]
        %v4509 = vld [vmem:[#allocation13 + $0x50] sm:$0xff]
        %v4510 = vld [vmem:[#allocation13 + $0x58] sm:$0xff]
        %v4511 = vld [vmem:[#allocation13 + $0x60] sm:$0xff]
        %v4512 = vld [vmem:[#allocation13 + $0x68] sm:$0xff]
        %v4513 = vld [vmem:[#allocation13 + $0x70] sm:$0xff]
        %v4514 = vld [vmem:[#allocation13 + $0x78] sm:$0xff]
        %v4515 = vld [vmem:[#allocation13 + $0x80] sm:$0xff]
        %v4516 = vld [vmem:[#allocation13 + $0x88] sm:$0xff]
        %v4517 = vld [vmem:[#allocation13 + $0x90] sm:$0xff]
        %v4518 = vld [vmem:[#allocation13 + $0x98] sm:$0xff]
        %v4519 = vld [vmem:[#allocation13 + $0xa0] sm:$0xff]
        %v4520 = vld [vmem:[#allocation13 + $0xa8] sm:$0xff]
        %v4521 = vld [vmem:[#allocation13 + $0xb0] sm:$0xff]
        %v4522 = vld [vmem:[#allocation13 + $0xb8] sm:$0xff]
        %v4523 = vld [vmem:[#allocation13 + $0xc0] sm:$0xff]
        %v4524 = vld [vmem:[#allocation13 + $0xc8] sm:$0xff]
        %v4525 = vld [vmem:[#allocation13 + $0xd0] sm:$0xff]
        %v4526 = vld [vmem:[#allocation13 + $0xd8] sm:$0xff]
        %v4527 = vld [vmem:[#allocation13 + $0xe0] sm:$0xff]
        %v4528 = vld [vmem:[#allocation13 + $0xe8] sm:$0xff]
        %v4529 = vld [vmem:[#allocation13 + $0xf0] sm:$0xff]
        %v4530 = vld [vmem:[#allocation13 + $0xf8] sm:$0xff]
        %v4531 = vld [vmem:[#allocation13 + $0x100] sm:$0xff]
        %v4532 = vld [vmem:[#allocation13 + $0x108] sm:$0xff]
        %v4533 = vld [vmem:[#allocation13 + $0x110] sm:$0xff]
        %v4534 = vld [vmem:[#allocation13 + $0x118] sm:$0xff]
        %v4535 = vld [vmem:[#allocation13 + $0x120] sm:$0xff]
        %v4536 = vld [vmem:[#allocation13 + $0x128] sm:$0xff]
        %v4537 = vld [vmem:[#allocation13 + $0x130] sm:$0xff]
        %v4538 = vld [vmem:[#allocation13 + $0x138] sm:$0xff]
        %v4539 = vld [vmem:[#allocation13 + $0x140] sm:$0xff]
        %v4540 = vld [vmem:[#allocation13 + $0x148] sm:$0xff]
        %v4541 = vld [vmem:[#allocation13 + $0x150] sm:$0xff]
        %v4542 = vld [vmem:[#allocation13 + $0x158] sm:$0xff]
        %v4543 = vld [vmem:[#allocation13 + $0x160] sm:$0xff]
        %v4544 = vld [vmem:[#allocation13 + $0x168] sm:$0xff]
        %v4545 = vld [vmem:[#allocation13 + $0x170] sm:$0xff]
        %v4546 = vld [vmem:[#allocation13 + $0x178] sm:$0xff]
        %v4547 = vld [vmem:[#allocation13 + $0x180] sm:$0xff]
        %v4548 = vld [vmem:[#allocation13 + $0x188] sm:$0xff]
        %v4549 = vld [vmem:[#allocation13 + $0x190] sm:$0xff]
        %v4550 = vld [vmem:[#allocation13 + $0x198] sm:$0xff]
        %v4551 = vld [vmem:[#allocation13 + $0x1a0] sm:$0xff]
        %v4552 = vld [vmem:[#allocation13 + $0x1a8] sm:$0xff]
        %v4553 = vld [vmem:[#allocation13 + $0x1b0] sm:$0xff]
        %v4554 = vld [vmem:[#allocation13 + $0x1b8] sm:$0xff]
        %v4555 = vld [vmem:[#allocation13 + $0x1c0] sm:$0xff]
        %v4556 = vld [vmem:[#allocation13 + $0x1c8] sm:$0xff]
        %v4557 = vld [vmem:[#allocation13 + $0x1d0] sm:$0xff]
        %v4558 = vld [vmem:[#allocation13 + $0x1d8] sm:$0xff]
        %v4559 = vld [vmem:[#allocation13 + $0x1e0] sm:$0xff]
        %v4560 = vld [vmem:[#allocation13 + $0x1e8] sm:$0xff]
        %v4561 = vld [vmem:[#allocation13 + $0x1f0] sm:$0xff]
        %v4562 = vld [vmem:[#allocation13 + $0x1f8] sm:$0xff]
        %v4563 = vld [vmem:[%s10] sm:$0xf]
        %v4565 = vlaneseq
        %v4566 = vshrl.u32 %v4565, 7
        %v4567 = vsub.s32 0, %v4566
        %v4568 = vrot.slane %v4563, %v4567
        %v4569 = vlaneseq
        %v4570 = vshrl.u32 %v4569, 7
        %v4571 = vsub.s32 1, %v4570
        %v4572 = vrot.slane %v4563, %v4571
        %v4573 = vlaneseq
        %v4574 = vshrl.u32 %v4573, 7
        %v4575 = vsub.s32 2, %v4574
        %v4576 = vrot.slane %v4563, %v4575
        %v4577 = vlaneseq
        %v4578 = vshrl.u32 %v4577, 7
        %v4579 = vsub.s32 3, %v4578
        %v4580 = vrot.slane %v4563, %v4579
        %v4649 = vunpack.c.l.b16 %v4499
        %v4650 = vunpack.c.h.b16 %v4499
        %v4651 = vunpack.c.l.b16 %v4500
        %v4652 = vunpack.c.h.b16 %v4500
        %v4653 = vunpack.c.l.b16 %v4501
        %v4654 = vunpack.c.h.b16 %v4501
        %v4655 = vunpack.c.l.b16 %v4502
        %v4656 = vunpack.c.h.b16 %v4502
        %v4657 = vunpack.c.l.b16 %v4503
        %v4658 = vunpack.c.h.b16 %v4503
        %v4659 = vunpack.c.l.b16 %v4504
        %v4660 = vunpack.c.h.b16 %v4504
        %v4661 = vunpack.c.l.b16 %v4505
        %v4662 = vunpack.c.h.b16 %v4505
        %v4663 = vunpack.c.l.b16 %v4506
        %v4664 = vunpack.c.h.b16 %v4506
        %v4665 = vunpack.c.l.b16 %v4507
        %v4666 = vunpack.c.h.b16 %v4507
        %v4667 = vunpack.c.l.b16 %v4508
        %v4668 = vunpack.c.h.b16 %v4508
        %v4669 = vunpack.c.l.b16 %v4509
        %v4670 = vunpack.c.h.b16 %v4509
        %v4671 = vunpack.c.l.b16 %v4510
        %v4672 = vunpack.c.h.b16 %v4510
        %v4673 = vunpack.c.l.b16 %v4511
        %v4674 = vunpack.c.h.b16 %v4511
        %v4675 = vunpack.c.l.b16 %v4512
        %v4676 = vunpack.c.h.b16 %v4512
        %v4677 = vunpack.c.l.b16 %v4513
        %v4678 = vunpack.c.h.b16 %v4513
        %v4679 = vunpack.c.l.b16 %v4514
        %v4680 = vunpack.c.h.b16 %v4514
        %v4681 = vunpack.c.l.b16 %v4515
        %v4682 = vunpack.c.h.b16 %v4515
        %v4683 = vunpack.c.l.b16 %v4516
        %v4684 = vunpack.c.h.b16 %v4516
        %v4685 = vunpack.c.l.b16 %v4517
        %v4686 = vunpack.c.h.b16 %v4517
        %v4687 = vunpack.c.l.b16 %v4518
        %v4688 = vunpack.c.h.b16 %v4518
        %v4689 = vunpack.c.l.b16 %v4519
        %v4690 = vunpack.c.h.b16 %v4519
        %v4691 = vunpack.c.l.b16 %v4520
        %v4692 = vunpack.c.h.b16 %v4520
        %v4693 = vunpack.c.l.b16 %v4521
        %v4694 = vunpack.c.h.b16 %v4521
        %v4695 = vunpack.c.l.b16 %v4522
        %v4696 = vunpack.c.h.b16 %v4522
        %v4697 = vunpack.c.l.b16 %v4523
        %v4698 = vunpack.c.h.b16 %v4523
        %v4699 = vunpack.c.l.b16 %v4524
        %v4700 = vunpack.c.h.b16 %v4524
        %v4701 = vunpack.c.l.b16 %v4525
        %v4702 = vunpack.c.h.b16 %v4525
        %v4703 = vunpack.c.l.b16 %v4526
        %v4704 = vunpack.c.h.b16 %v4526
        %v4705 = vunpack.c.l.b16 %v4527
        %v4706 = vunpack.c.h.b16 %v4527
        %v4707 = vunpack.c.l.b16 %v4528
        %v4708 = vunpack.c.h.b16 %v4528
        %v4709 = vunpack.c.l.b16 %v4529
        %v4710 = vunpack.c.h.b16 %v4529
        %v4711 = vunpack.c.l.b16 %v4530
        %v4712 = vunpack.c.h.b16 %v4530
        %v4713 = vunpack.c.l.b16 %v4531
        %v4714 = vunpack.c.h.b16 %v4531
        %v4715 = vunpack.c.l.b16 %v4532
        %v4716 = vunpack.c.h.b16 %v4532
        %v4717 = vunpack.c.l.b16 %v4533
        %v4718 = vunpack.c.h.b16 %v4533
        %v4719 = vunpack.c.l.b16 %v4534
        %v4720 = vunpack.c.h.b16 %v4534
        %v4721 = vunpack.c.l.b16 %v4535
        %v4722 = vunpack.c.h.b16 %v4535
        %v4723 = vunpack.c.l.b16 %v4536
        %v4724 = vunpack.c.h.b16 %v4536
        %v4725 = vunpack.c.l.b16 %v4537
        %v4726 = vunpack.c.h.b16 %v4537
        %v4727 = vunpack.c.l.b16 %v4538
        %v4728 = vunpack.c.h.b16 %v4538
        %v4729 = vunpack.c.l.b16 %v4539
        %v4730 = vunpack.c.h.b16 %v4539
        %v4731 = vunpack.c.l.b16 %v4540
        %v4732 = vunpack.c.h.b16 %v4540
        %v4733 = vunpack.c.l.b16 %v4541
        %v4734 = vunpack.c.h.b16 %v4541
        %v4735 = vunpack.c.l.b16 %v4542
        %v4736 = vunpack.c.h.b16 %v4542
        %v4737 = vunpack.c.l.b16 %v4543
        %v4738 = vunpack.c.h.b16 %v4543
        %v4739 = vunpack.c.l.b16 %v4544
        %v4740 = vunpack.c.h.b16 %v4544
        %v4741 = vunpack.c.l.b16 %v4545
        %v4742 = vunpack.c.h.b16 %v4545
        %v4743 = vunpack.c.l.b16 %v4546
        %v4744 = vunpack.c.h.b16 %v4546
        %v4745 = vunpack.c.l.b16 %v4547
        %v4746 = vunpack.c.h.b16 %v4547
        %v4747 = vunpack.c.l.b16 %v4548
        %v4748 = vunpack.c.h.b16 %v4548
        %v4749 = vunpack.c.l.b16 %v4549
        %v4750 = vunpack.c.h.b16 %v4549
        %v4751 = vunpack.c.l.b16 %v4550
        %v4752 = vunpack.c.h.b16 %v4550
        %v4753 = vunpack.c.l.b16 %v4551
        %v4754 = vunpack.c.h.b16 %v4551
        %v4755 = vunpack.c.l.b16 %v4552
        %v4756 = vunpack.c.h.b16 %v4552
        %v4757 = vunpack.c.l.b16 %v4553
        %v4758 = vunpack.c.h.b16 %v4553
        %v4759 = vunpack.c.l.b16 %v4554
        %v4760 = vunpack.c.h.b16 %v4554
        %v4761 = vunpack.c.l.b16 %v4555
        %v4762 = vunpack.c.h.b16 %v4555
        %v4763 = vunpack.c.l.b16 %v4556
        %v4764 = vunpack.c.h.b16 %v4556
        %v4765 = vunpack.c.l.b16 %v4557
        %v4766 = vunpack.c.h.b16 %v4557
        %v4767 = vunpack.c.l.b16 %v4558
        %v4768 = vunpack.c.h.b16 %v4558
        %v4769 = vunpack.c.l.b16 %v4559
        %v4770 = vunpack.c.h.b16 %v4559
        %v4771 = vunpack.c.l.b16 %v4560
        %v4772 = vunpack.c.h.b16 %v4560
        %v4773 = vunpack.c.l.b16 %v4561
        %v4774 = vunpack.c.h.b16 %v4561
        %v4775 = vunpack.c.l.b16 %v4562
        %v4776 = vunpack.c.h.b16 %v4562
        %v4777 = vpack.c.b16 %v4653, %v4649
        %v4778 = vpack.c.b16 %v4654, %v4650
        %v4779 = vpack.c.b16 %v4655, %v4651
        %v4780 = vpack.c.b16 %v4656, %v4652
        %v4781 = vpack.c.b16 %v4661, %v4657
        %v4782 = vpack.c.b16 %v4662, %v4658
        %v4783 = vpack.c.b16 %v4663, %v4659
        %v4784 = vpack.c.b16 %v4664, %v4660
        %v4785 = vpack.c.b16 %v4669, %v4665
        %v4786 = vpack.c.b16 %v4670, %v4666
        %v4787 = vpack.c.b16 %v4671, %v4667
        %v4788 = vpack.c.b16 %v4672, %v4668
        %v4789 = vpack.c.b16 %v4677, %v4673
        %v4790 = vpack.c.b16 %v4678, %v4674
        %v4791 = vpack.c.b16 %v4679, %v4675
        %v4792 = vpack.c.b16 %v4680, %v4676
        %v4793 = vpack.c.b16 %v4685, %v4681
        %v4794 = vpack.c.b16 %v4686, %v4682
        %v4795 = vpack.c.b16 %v4687, %v4683
        %v4796 = vpack.c.b16 %v4688, %v4684
        %v4797 = vpack.c.b16 %v4693, %v4689
        %v4798 = vpack.c.b16 %v4694, %v4690
        %v4799 = vpack.c.b16 %v4695, %v4691
        %v4800 = vpack.c.b16 %v4696, %v4692
        %v4801 = vpack.c.b16 %v4701, %v4697
        %v4802 = vpack.c.b16 %v4702, %v4698
        %v4803 = vpack.c.b16 %v4703, %v4699
        %v4804 = vpack.c.b16 %v4704, %v4700
        %v4805 = vpack.c.b16 %v4709, %v4705
        %v4806 = vpack.c.b16 %v4710, %v4706
        %v4807 = vpack.c.b16 %v4711, %v4707
        %v4808 = vpack.c.b16 %v4712, %v4708
        %v4809 = vpack.c.b16 %v4717, %v4713
        %v4810 = vpack.c.b16 %v4718, %v4714
        %v4811 = vpack.c.b16 %v4719, %v4715
        %v4812 = vpack.c.b16 %v4720, %v4716
        %v4813 = vpack.c.b16 %v4725, %v4721
        %v4814 = vpack.c.b16 %v4726, %v4722
        %v4815 = vpack.c.b16 %v4727, %v4723
        %v4816 = vpack.c.b16 %v4728, %v4724
        %v4817 = vpack.c.b16 %v4733, %v4729
        %v4818 = vpack.c.b16 %v4734, %v4730
        %v4819 = vpack.c.b16 %v4735, %v4731
        %v4820 = vpack.c.b16 %v4736, %v4732
        %v4821 = vpack.c.b16 %v4741, %v4737
        %v4822 = vpack.c.b16 %v4742, %v4738
        %v4823 = vpack.c.b16 %v4743, %v4739
        %v4824 = vpack.c.b16 %v4744, %v4740
        %v4825 = vpack.c.b16 %v4749, %v4745
        %v4826 = vpack.c.b16 %v4750, %v4746
        %v4827 = vpack.c.b16 %v4751, %v4747
        %v4828 = vpack.c.b16 %v4752, %v4748
        %v4829 = vpack.c.b16 %v4757, %v4753
        %v4830 = vpack.c.b16 %v4758, %v4754
        %v4831 = vpack.c.b16 %v4759, %v4755
        %v4832 = vpack.c.b16 %v4760, %v4756
        %v4833 = vpack.c.b16 %v4765, %v4761
        %v4834 = vpack.c.b16 %v4766, %v4762
        %v4835 = vpack.c.b16 %v4767, %v4763
        %v4836 = vpack.c.b16 %v4768, %v4764
        %v4837 = vpack.c.b16 %v4773, %v4769
        %v4838 = vpack.c.b16 %v4774, %v4770
        %v4839 = vpack.c.b16 %v4775, %v4771
        %v4840 = vpack.c.b16 %v4776, %v4772
        %4905 = vmatprep.subr.bf16.mxu0 %v4778
        %4906 = vmatpush1.bf16.msra.mxu0 %v4777
        %4907 = vmatprep.subr.bf16.mxu0 %v4782
        %4908 = vmatpush1.bf16.msra.mxu0 %v4781
        %4909 = vmatprep.subr.bf16.mxu0 %v4786
        %4910 = vmatpush1.bf16.msra.mxu0 %v4785
        %4911 = vmatprep.subr.bf16.mxu0 %v4790
        %4912 = vmatpush1.bf16.msra.mxu0 %v4789
        %4913 = vmatprep.subr.bf16.mxu0 %v4794
        %4914 = vmatpush1.bf16.msra.mxu0 %v4793
        %4915 = vmatprep.subr.bf16.mxu0 %v4798
        %4916 = vmatpush1.bf16.msra.mxu0 %v4797
        %4917 = vmatprep.subr.bf16.mxu0 %v4802
        %4918 = vmatpush1.bf16.msra.mxu0 %v4801
        %4919 = vmatprep.subr.bf16.mxu0 %v4806
        %4920 = vmatpush1.bf16.msra.mxu0 %v4805
        %4921 = vmatprep.subr.bf16.mxu0 %v4810
        %4922 = vmatpush1.bf16.msra.mxu0 %v4809
        %4923 = vmatprep.subr.bf16.mxu0 %v4814
        %4924 = vmatpush1.bf16.msra.mxu0 %v4813
        %4925 = vmatprep.subr.bf16.mxu0 %v4818
        %4926 = vmatpush1.bf16.msra.mxu0 %v4817
        %4927 = vmatprep.subr.bf16.mxu0 %v4822
        %4928 = vmatpush1.bf16.msra.mxu0 %v4821
        %4929 = vmatprep.subr.bf16.mxu0 %v4826
        %4930 = vmatpush1.bf16.msra.mxu0 %v4825
        %4931 = vmatprep.subr.bf16.mxu0 %v4830
        %4932 = vmatpush1.bf16.msra.mxu0 %v4829
        %4933 = vmatprep.subr.bf16.mxu0 %v4834
        %4934 = vmatpush1.bf16.msra.mxu0 %v4833
        %4935 = vmatprep.subr.bf16.mxu0 %v4838
        %4936 = vmatpush1.bf16.msra.mxu0 %v4837
        %4937 = vmatprep.mubr.bf16.mxu0 %v4484
        %4938 = vmatmul.mubr.bf16.gmra.mrb[0].mxu0 %v4483
        %v4939 = vpop.f32.mrb[0].mxu0
        %v4940 = vadd.f32 %v4568, %v4939
        %v4941 = vpop.f32.mrb[0].mxu0
        %v4942 = vadd.f32 %v4572, %v4941
        %v4943 = vpop.f32.mrb[0].mxu0
        %v4944 = vadd.f32 %v4568, %v4943
        %v4945 = vpop.f32.mrb[0].mxu0
        %v4946 = vadd.f32 %v4572, %v4945
        %4947 = vmatprep.mubr.bf16.mxu0 %v4486
        %4948 = vmatmul.mubr.bf16.gmra.mrb[0].mxu0 %v4485
        %v4949 = vpop.f32.mrb[0].mxu0
        %v4950 = vadd.f32 %v4568, %v4949
        %v4951 = vpop.f32.mrb[0].mxu0
        %v4952 = vadd.f32 %v4572, %v4951
        %v4953 = vpop.f32.mrb[0].mxu0
        %v4954 = vadd.f32 %v4568, %v4953
        %v4955 = vpop.f32.mrb[0].mxu0
        %v4956 = vadd.f32 %v4572, %v4955
        %4957 = vmatprep.mubr.bf16.mxu0 %v4488
        %4958 = vmatmul.mubr.bf16.gmra.mrb[0].mxu0 %v4487
        %v4959 = vpop.f32.mrb[0].mxu0
        %v4960 = vadd.f32 %v4568, %v4959
        %v4961 = vpop.f32.mrb[0].mxu0
        %v4962 = vadd.f32 %v4572, %v4961
        %v4963 = vpop.f32.mrb[0].mxu0
        %v4964 = vadd.f32 %v4568, %v4963
        %v4965 = vpop.f32.mrb[0].mxu0
        %v4966 = vadd.f32 %v4572, %v4965
        %4967 = vmatprep.mubr.bf16.mxu0 %v4490
        %4968 = vmatmul.mubr.bf16.gmra.mrb[0].mxu0 %v4489
        %v4969 = vpop.f32.mrb[0].mxu0
        %v4970 = vadd.f32 %v4568, %v4969
        %v4971 = vpop.f32.mrb[0].mxu0
        %v4972 = vadd.f32 %v4572, %v4971
        %v4973 = vpop.f32.mrb[0].mxu0
        %v4974 = vadd.f32 %v4568, %v4973
        %v4975 = vpop.f32.mrb[0].mxu0
        %v4976 = vadd.f32 %v4572, %v4975
        %4977 = vmatprep.mubr.bf16.mxu0 %v4492
        %4978 = vmatmul.mubr.bf16.gmra.mrb[0].mxu0 %v4491
        %v4979 = vpop.f32.mrb[0].mxu0
        %v4980 = vadd.f32 %v4568, %v4979
        %v4981 = vpop.f32.mrb[0].mxu0
        %v4982 = vadd.f32 %v4572, %v4981
        %v4983 = vpop.f32.mrb[0].mxu0
        %v4984 = vadd.f32 %v4568, %v4983
        %v4985 = vpop.f32.mrb[0].mxu0
        %v4986 = vadd.f32 %v4572, %v4985
        %4987 = vmatprep.mubr.bf16.mxu0 %v4494
        %4988 = vmatmul.mubr.bf16.gmra.mrb[0].mxu0 %v4493
        %v4989 = vpop.f32.mrb[0].mxu0
        %v4990 = vadd.f32 %v4568, %v4989
        %v4991 = vpop.f32.mrb[0].mxu0
        %v4992 = vadd.f32 %v4572, %v4991
        %v4993 = vpop.f32.mrb[0].mxu0
        %v4994 = vadd.f32 %v4568, %v4993
        %v4995 = vpop.f32.mrb[0].mxu0
        %v4996 = vadd.f32 %v4572, %v4995
        %4997 = vmatprep.mubr.bf16.mxu0 %v4496
        %4998 = vmatmul.mubr.bf16.gmra.mrb[0].mxu0 %v4495
        %v4999 = vpop.f32.mrb[0].mxu0
        %v5000 = vadd.f32 %v4568, %v4999
        %v5001 = vpop.f32.mrb[0].mxu0
        %v5002 = vadd.f32 %v4572, %v5001
        %v5003 = vpop.f32.mrb[0].mxu0
        %v5004 = vadd.f32 %v4568, %v5003
        %v5005 = vpop.f32.mrb[0].mxu0
        %v5006 = vadd.f32 %v4572, %v5005
        %5007 = vmatprep.mubr.bf16.mxu0 %v4498
        %5008 = vmatmul.mubr.bf16.gmra.mrb[0].mxu0 %v4497
        %v5009 = vpop.f32.mrb[0].mxu0
        %v5010 = vadd.f32 %v4568, %v5009
        %v5011 = vpop.f32.mrb[0].mxu0
        %v5012 = vadd.f32 %v4572, %v5011
        %v5013 = vpop.f32.mrb[0].mxu0
        %v5014 = vadd.f32 %v4568, %v5013
        %v5015 = vpop.f32.mrb[0].mxu0
        %v5016 = vadd.f32 %v4572, %v5015
        %5017 = vdwg.mxu0
        %5018 = vmatprep.subr.bf16.mxu0 %v4780
        %5019 = vmatpush1.bf16.msra.mxu0 %v4779
        %5020 = vmatprep.subr.bf16.mxu0 %v4784
        %5021 = vmatpush1.bf16.msra.mxu0 %v4783
        %5022 = vmatprep.subr.bf16.mxu0 %v4788
        %5023 = vmatpush1.bf16.msra.mxu0 %v4787
        %5024 = vmatprep.subr.bf16.mxu0 %v4792
        %5025 = vmatpush1.bf16.msra.mxu0 %v4791
        %5026 = vmatprep.subr.bf16.mxu0 %v4796
        %5027 = vmatpush1.bf16.msra.mxu0 %v4795
        %5028 = vmatprep.subr.bf16.mxu0 %v4800
        %5029 = vmatpush1.bf16.msra.mxu0 %v4799
        %5030 = vmatprep.subr.bf16.mxu0 %v4804
        %5031 = vmatpush1.bf16.msra.mxu0 %v4803
        %5032 = vmatprep.subr.bf16.mxu0 %v4808
        %5033 = vmatpush1.bf16.msra.mxu0 %v4807
        %5034 = vmatprep.subr.bf16.mxu0 %v4812
        %5035 = vmatpush1.bf16.msra.mxu0 %v4811
        %5036 = vmatprep.subr.bf16.mxu0 %v4816
        %5037 = vmatpush1.bf16.msra.mxu0 %v4815
        %5038 = vmatprep.subr.bf16.mxu0 %v4820
        %5039 = vmatpush1.bf16.msra.mxu0 %v4819
        %5040 = vmatprep.subr.bf16.mxu0 %v4824
        %5041 = vmatpush1.bf16.msra.mxu0 %v4823
        %5042 = vmatprep.subr.bf16.mxu0 %v4828
        %5043 = vmatpush1.bf16.msra.mxu0 %v4827
        %5044 = vmatprep.subr.bf16.mxu0 %v4832
        %5045 = vmatpush1.bf16.msra.mxu0 %v4831
        %5046 = vmatprep.subr.bf16.mxu0 %v4836
        %5047 = vmatpush1.bf16.msra.mxu0 %v4835
        %5048 = vmatprep.subr.bf16.mxu0 %v4840
        %5049 = vmatpush1.bf16.msra.mxu0 %v4839
        %5050 = vmatprep.mubr.bf16.mxu0 %v4484
        %5051 = vmatmul.mubr.bf16.gmra.mrb[0].mxu0 %v4483
        %v5052 = vpop.f32.mrb[0].mxu0
        %v5053 = vadd.f32 %v4576, %v5052
        %v5054 = vpop.f32.mrb[0].mxu0
        %v5055 = vadd.f32 %v4580, %v5054
        %v5056 = vpop.f32.mrb[0].mxu0
        %v5057 = vadd.f32 %v4576, %v5056
        %v5058 = vpop.f32.mrb[0].mxu0
        %v5059 = vadd.f32 %v4580, %v5058
        %5060 = vmatprep.mubr.bf16.mxu0 %v4486
        %5061 = vmatmul.mubr.bf16.gmra.mrb[0].mxu0 %v4485
        %v5062 = vpop.f32.mrb[0].mxu0
        %v5063 = vadd.f32 %v4576, %v5062
        %v5064 = vpop.f32.mrb[0].mxu0
        %v5065 = vadd.f32 %v4580, %v5064
        %v5066 = vpop.f32.mrb[0].mxu0
        %v5067 = vadd.f32 %v4576, %v5066
        %v5068 = vpop.f32.mrb[0].mxu0
        %v5069 = vadd.f32 %v4580, %v5068
        %5070 = vmatprep.mubr.bf16.mxu0 %v4488
        %5071 = vmatmul.mubr.bf16.gmra.mrb[0].mxu0 %v4487
        %v5072 = vpop.f32.mrb[0].mxu0
        %v5073 = vadd.f32 %v4576, %v5072
        %v5074 = vpop.f32.mrb[0].mxu0
        %v5075 = vadd.f32 %v4580, %v5074
        %v5076 = vpop.f32.mrb[0].mxu0
        %v5077 = vadd.f32 %v4576, %v5076
        %v5078 = vpop.f32.mrb[0].mxu0
        %v5079 = vadd.f32 %v4580, %v5078
        %5080 = vmatprep.mubr.bf16.mxu0 %v4490
        %5081 = vmatmul.mubr.bf16.gmra.mrb[0].mxu0 %v4489
        %v5082 = vpop.f32.mrb[0].mxu0
        %v5083 = vadd.f32 %v4576, %v5082
        %v5084 = vpop.f32.mrb[0].mxu0
        %v5085 = vadd.f32 %v4580, %v5084
        %v5086 = vpop.f32.mrb[0].mxu0
        %v5087 = vadd.f32 %v4576, %v5086
        %v5088 = vpop.f32.mrb[0].mxu0
        %v5089 = vadd.f32 %v4580, %v5088
        %5090 = vmatprep.mubr.bf16.mxu0 %v4492
        %5091 = vmatmul.mubr.bf16.gmra.mrb[0].mxu0 %v4491
        %v5092 = vpop.f32.mrb[0].mxu0
        %v5093 = vadd.f32 %v4576, %v5092
        %v5094 = vpop.f32.mrb[0].mxu0
        %v5095 = vadd.f32 %v4580, %v5094
        %v5096 = vpop.f32.mrb[0].mxu0
        %v5097 = vadd.f32 %v4576, %v5096
        %v5098 = vpop.f32.mrb[0].mxu0
        %v5099 = vadd.f32 %v4580, %v5098
        %5100 = vmatprep.mubr.bf16.mxu0 %v4494
        %5101 = vmatmul.mubr.bf16.gmra.mrb[0].mxu0 %v4493
        %v5102 = vpop.f32.mrb[0].mxu0
        %v5103 = vadd.f32 %v4576, %v5102
        %v5104 = vpop.f32.mrb[0].mxu0
        %v5105 = vadd.f32 %v4580, %v5104
        %v5106 = vpop.f32.mrb[0].mxu0
        %v5107 = vadd.f32 %v4576, %v5106
        %v5108 = vpop.f32.mrb[0].mxu0
        %v5109 = vadd.f32 %v4580, %v5108
        %5110 = vmatprep.mubr.bf16.mxu0 %v4496
        %5111 = vmatmul.mubr.bf16.gmra.mrb[0].mxu0 %v4495
        %v5112 = vpop.f32.mrb[0].mxu0
        %v5113 = vadd.f32 %v4576, %v5112
        %v5114 = vpop.f32.mrb[0].mxu0
        %v5115 = vadd.f32 %v4580, %v5114
        %v5116 = vpop.f32.mrb[0].mxu0
        %v5117 = vadd.f32 %v4576, %v5116
        %v5118 = vpop.f32.mrb[0].mxu0
        %v5119 = vadd.f32 %v4580, %v5118
        %5120 = vmatprep.mubr.bf16.mxu0 %v4498
        %5121 = vmatmul.mubr.bf16.gmra.mrb[0].mxu0 %v4497
        %v5122 = vpop.f32.mrb[0].mxu0
        %v5123 = vadd.f32 %v4576, %v5122
        %v5124 = vpop.f32.mrb[0].mxu0
        %v5125 = vadd.f32 %v4580, %v5124
        %v5126 = vpop.f32.mrb[0].mxu0
        %v5127 = vadd.f32 %v4576, %v5126
        %v5128 = vpop.f32.mrb[0].mxu0
        %v5129 = vadd.f32 %v4580, %v5128
        %5130 = vdwg.mxu0
        %v5131 = vmax.f32 %v4940, 0.0
        %v5132 = vmax.f32 %v4942, 0.0
        %v5133 = vmax.f32 %v5053, 0.0
        %v5134 = vmax.f32 %v5055, 0.0
        %v5135 = vmax.f32 %v4944, 0.0
        %v5136 = vmax.f32 %v4946, 0.0
        %v5137 = vmax.f32 %v5057, 0.0
        %v5138 = vmax.f32 %v5059, 0.0
        %v5139 = vmax.f32 %v4950, 0.0
        %v5140 = vmax.f32 %v4952, 0.0
        %v5141 = vmax.f32 %v5063, 0.0
        %v5142 = vmax.f32 %v5065, 0.0
        %v5143 = vmax.f32 %v4954, 0.0
        %v5144 = vmax.f32 %v4956, 0.0
        %v5145 = vmax.f32 %v5067, 0.0
        %v5146 = vmax.f32 %v5069, 0.0
        %v5147 = vmax.f32 %v4960, 0.0
        %v5148 = vmax.f32 %v4962, 0.0
        %v5149 = vmax.f32 %v5073, 0.0
        %v5150 = vmax.f32 %v5075, 0.0
        %v5151 = vmax.f32 %v4964, 0.0
        %v5152 = vmax.f32 %v4966, 0.0
        %v5153 = vmax.f32 %v5077, 0.0
        %v5154 = vmax.f32 %v5079, 0.0
        %v5155 = vmax.f32 %v4970, 0.0
        %v5156 = vmax.f32 %v4972, 0.0
        %v5157 = vmax.f32 %v5083, 0.0
        %v5158 = vmax.f32 %v5085, 0.0
        %v5159 = vmax.f32 %v4974, 0.0
        %v5160 = vmax.f32 %v4976, 0.0
        %v5161 = vmax.f32 %v5087, 0.0
        %v5162 = vmax.f32 %v5089, 0.0
        %v5163 = vmax.f32 %v4980, 0.0
        %v5164 = vmax.f32 %v4982, 0.0
        %v5165 = vmax.f32 %v5093, 0.0
        %v5166 = vmax.f32 %v5095, 0.0
        %v5167 = vmax.f32 %v4984, 0.0
        %v5168 = vmax.f32 %v4986, 0.0
        %v5169 = vmax.f32 %v5097, 0.0
        %v5170 = vmax.f32 %v5099, 0.0
        %v5171 = vmax.f32 %v4990, 0.0
        %v5172 = vmax.f32 %v4992, 0.0
        %v5173 = vmax.f32 %v5103, 0.0
        %v5174 = vmax.f32 %v5105, 0.0
        %v5175 = vmax.f32 %v4994, 0.0
        %v5176 = vmax.f32 %v4996, 0.0
        %v5177 = vmax.f32 %v5107, 0.0
        %v5178 = vmax.f32 %v5109, 0.0
        %v5179 = vmax.f32 %v5000, 0.0
        %v5180 = vmax.f32 %v5002, 0.0
        %v5181 = vmax.f32 %v5113, 0.0
        %v5182 = vmax.f32 %v5115, 0.0
        %v5183 = vmax.f32 %v5004, 0.0
        %v5184 = vmax.f32 %v5006, 0.0
        %v5185 = vmax.f32 %v5117, 0.0
        %v5186 = vmax.f32 %v5119, 0.0
        %v5187 = vmax.f32 %v5010, 0.0
        %v5188 = vmax.f32 %v5012, 0.0
        %v5189 = vmax.f32 %v5123, 0.0
        %v5190 = vmax.f32 %v5125, 0.0
        %v5191 = vmax.f32 %v5014, 0.0
        %v5192 = vmax.f32 %v5016, 0.0
        %v5193 = vmax.f32 %v5127, 0.0
        %v5194 = vmax.f32 %v5129, 0.0
        %v5195 = vpack.c.bf16 %v5135, %v5131
        %v5196 = vpack.c.bf16 %v5136, %v5132
        %v5197 = vpack.c.bf16 %v5137, %v5133
        %v5198 = vpack.c.bf16 %v5138, %v5134
        %v5199 = vpack.c.bf16 %v5143, %v5139
        %v5200 = vpack.c.bf16 %v5144, %v5140
        %v5201 = vpack.c.bf16 %v5145, %v5141
        %v5202 = vpack.c.bf16 %v5146, %v5142
        %v5203 = vpack.c.bf16 %v5151, %v5147
        %v5204 = vpack.c.bf16 %v5152, %v5148
        %v5205 = vpack.c.bf16 %v5153, %v5149
        %v5206 = vpack.c.bf16 %v5154, %v5150
        %v5207 = vpack.c.bf16 %v5159, %v5155
        %v5208 = vpack.c.bf16 %v5160, %v5156
        %v5209 = vpack.c.bf16 %v5161, %v5157
        %v5210 = vpack.c.bf16 %v5162, %v5158
        %v5211 = vpack.c.bf16 %v5167, %v5163
        %v5212 = vpack.c.bf16 %v5168, %v5164
        %v5213 = vpack.c.bf16 %v5169, %v5165
        %v5214 = vpack.c.bf16 %v5170, %v5166
        %v5215 = vpack.c.bf16 %v5175, %v5171
        %v5216 = vpack.c.bf16 %v5176, %v5172
        %v5217 = vpack.c.bf16 %v5177, %v5173
        %v5218 = vpack.c.bf16 %v5178, %v5174
        %v5219 = vpack.c.bf16 %v5183, %v5179
        %v5220 = vpack.c.bf16 %v5184, %v5180
        %v5221 = vpack.c.bf16 %v5185, %v5181
        %v5222 = vpack.c.bf16 %v5186, %v5182
        %v5223 = vpack.c.bf16 %v5191, %v5187
        %v5224 = vpack.c.bf16 %v5192, %v5188
        %v5225 = vpack.c.bf16 %v5193, %v5189
        %v5226 = vpack.c.bf16 %v5194, %v5190
        %v5227 = vld [vmem:[#allocation14] sm:$0xff]
        %v5228 = vld [vmem:[#allocation14 + $0x8] sm:$0xff]
        %v5229 = vld [vmem:[#allocation14 + $0x10] sm:$0xff]
        %v5230 = vld [vmem:[#allocation14 + $0x18] sm:$0xf]
        %v5231 = vld [vmem:[#allocation14 + $0x1c] sm:$0xff]
        %v5232 = vld [vmem:[#allocation14 + $0x24] sm:$0xff]
        %v5233 = vld [vmem:[#allocation14 + $0x2c] sm:$0xff]
        %v5234 = vld [vmem:[#allocation14 + $0x34] sm:$0xf]
        %v5235 = vld [vmem:[#allocation14 + $0x38] sm:$0xff]
        %v5236 = vld [vmem:[#allocation14 + $0x40] sm:$0xff]
        %v5237 = vld [vmem:[#allocation14 + $0x48] sm:$0xff]
        %v5238 = vld [vmem:[#allocation14 + $0x50] sm:$0xf]
        %v5239 = vld [vmem:[#allocation14 + $0x54] sm:$0xff]
        %v5240 = vld [vmem:[#allocation14 + $0x5c] sm:$0xff]
        %v5241 = vld [vmem:[#allocation14 + $0x64] sm:$0xff]
        %v5242 = vld [vmem:[#allocation14 + $0x6c] sm:$0xf]
        %v5243 = vld [vmem:[#allocation14 + $0x70] sm:$0xff]
        %v5244 = vld [vmem:[#allocation14 + $0x78] sm:$0xff]
        %v5245 = vld [vmem:[#allocation14 + $0x80] sm:$0xff]
        %v5246 = vld [vmem:[#allocation14 + $0x88] sm:$0xf]
        %v5247 = vld [vmem:[#allocation14 + $0x8c] sm:$0xff]
        %v5248 = vld [vmem:[#allocation14 + $0x94] sm:$0xff]
        %v5249 = vld [vmem:[#allocation14 + $0x9c] sm:$0xff]
        %v5250 = vld [vmem:[#allocation14 + $0xa4] sm:$0xf]
        %v5251 = vld [vmem:[#allocation14 + $0xa8] sm:$0xff]
        %v5252 = vld [vmem:[#allocation14 + $0xb0] sm:$0xff]
        %v5253 = vld [vmem:[#allocation14 + $0xb8] sm:$0xff]
        %v5254 = vld [vmem:[#allocation14 + $0xc0] sm:$0xf]
        %v5255 = vld [vmem:[#allocation14 + $0xc4] sm:$0xff]
        %v5256 = vld [vmem:[#allocation14 + $0xcc] sm:$0xff]
        %v5257 = vld [vmem:[#allocation14 + $0xd4] sm:$0xff]
        %v5258 = vld [vmem:[#allocation14 + $0xdc] sm:$0xf]
        %v5259 = vld [vmem:[#allocation14 + $0xe0] sm:$0xff]
        %v5260 = vld [vmem:[#allocation14 + $0xe8] sm:$0xff]
        %v5261 = vld [vmem:[#allocation14 + $0xf0] sm:$0xff]
        %v5262 = vld [vmem:[#allocation14 + $0xf8] sm:$0xf]
        %v5263 = vld [vmem:[#allocation14 + $0xfc] sm:$0xff]
        %v5264 = vld [vmem:[#allocation14 + $0x104] sm:$0xff]
        %v5265 = vld [vmem:[#allocation14 + $0x10c] sm:$0xff]
        %v5266 = vld [vmem:[#allocation14 + $0x114] sm:$0xf]
        %v5267 = vld [vmem:[#allocation14 + $0x118] sm:$0xff]
        %v5268 = vld [vmem:[#allocation14 + $0x120] sm:$0xff]
        %v5269 = vld [vmem:[#allocation14 + $0x128] sm:$0xff]
        %v5270 = vld [vmem:[#allocation14 + $0x130] sm:$0xf]
        %v5271 = vld [vmem:[#allocation14 + $0x134] sm:$0xff]
        %v5272 = vld [vmem:[#allocation14 + $0x13c] sm:$0xff]
        %v5273 = vld [vmem:[#allocation14 + $0x144] sm:$0xff]
        %v5274 = vld [vmem:[#allocation14 + $0x14c] sm:$0xf]
        %v5275 = vld [vmem:[#allocation14 + $0x150] sm:$0xff]
        %v5276 = vld [vmem:[#allocation14 + $0x158] sm:$0xff]
        %v5277 = vld [vmem:[#allocation14 + $0x160] sm:$0xff]
        %v5278 = vld [vmem:[#allocation14 + $0x168] sm:$0xf]
        %v5279 = vld [vmem:[#allocation14 + $0x16c] sm:$0xff]
        %v5280 = vld [vmem:[#allocation14 + $0x174] sm:$0xff]
        %v5281 = vld [vmem:[#allocation14 + $0x17c] sm:$0xff]
        %v5282 = vld [vmem:[#allocation14 + $0x184] sm:$0xf]
        %v5283 = vld [vmem:[#allocation14 + $0x188] sm:$0xff]
        %v5284 = vld [vmem:[#allocation14 + $0x190] sm:$0xff]
        %v5285 = vld [vmem:[#allocation14 + $0x198] sm:$0xff]
        %v5286 = vld [vmem:[#allocation14 + $0x1a0] sm:$0xf]
        %v5287 = vld [vmem:[#allocation14 + $0x1a4] sm:$0xff]
        %v5288 = vld [vmem:[#allocation14 + $0x1ac] sm:$0xff]
        %v5289 = vld [vmem:[#allocation14 + $0x1b4] sm:$0xff]
        %v5290 = vld [vmem:[#allocation14 + $0x1bc] sm:$0xf]
        %v5291 = vld [vmem:[#allocation14 + $0x1c0] sm:$0xff]
        %v5292 = vld [vmem:[#allocation14 + $0x1c8] sm:$0xff]
        %v5293 = vld [vmem:[#allocation14 + $0x1d0] sm:$0xff]
        %v5294 = vld [vmem:[#allocation14 + $0x1d8] sm:$0xf]
        %v5295 = vld [vmem:[#allocation14 + $0x1dc] sm:$0xff]
        %v5296 = vld [vmem:[#allocation14 + $0x1e4] sm:$0xff]
        %v5297 = vld [vmem:[#allocation14 + $0x1ec] sm:$0xff]
        %v5298 = vld [vmem:[#allocation14 + $0x1f4] sm:$0xf]
        %v5299 = vld [vmem:[#allocation14 + $0x1f8] sm:$0xff]
        %v5300 = vld [vmem:[#allocation14 + $0x200] sm:$0xff]
        %v5301 = vld [vmem:[#allocation14 + $0x208] sm:$0xff]
        %v5302 = vld [vmem:[#allocation14 + $0x210] sm:$0xf]
        %v5303 = vld [vmem:[#allocation14 + $0x214] sm:$0xff]
        %v5304 = vld [vmem:[#allocation14 + $0x21c] sm:$0xff]
        %v5305 = vld [vmem:[#allocation14 + $0x224] sm:$0xff]
        %v5306 = vld [vmem:[#allocation14 + $0x22c] sm:$0xf]
        %v5307 = vld [vmem:[#allocation14 + $0x230] sm:$0xff]
        %v5308 = vld [vmem:[#allocation14 + $0x238] sm:$0xff]
        %v5309 = vld [vmem:[#allocation14 + $0x240] sm:$0xff]
        %v5310 = vld [vmem:[#allocation14 + $0x248] sm:$0xf]
        %v5311 = vld [vmem:[#allocation14 + $0x24c] sm:$0xff]
        %v5312 = vld [vmem:[#allocation14 + $0x254] sm:$0xff]
        %v5313 = vld [vmem:[#allocation14 + $0x25c] sm:$0xff]
        %v5314 = vld [vmem:[#allocation14 + $0x264] sm:$0xf]
        %v5315 = vld [vmem:[#allocation14 + $0x268] sm:$0xff]
        %v5316 = vld [vmem:[#allocation14 + $0x270] sm:$0xff]
        %v5317 = vld [vmem:[#allocation14 + $0x278] sm:$0xff]
        %v5318 = vld [vmem:[#allocation14 + $0x280] sm:$0xf]
        %v5319 = vld [vmem:[#allocation14 + $0x284] sm:$0xff]
        %v5320 = vld [vmem:[#allocation14 + $0x28c] sm:$0xff]
        %v5321 = vld [vmem:[#allocation14 + $0x294] sm:$0xff]
        %v5322 = vld [vmem:[#allocation14 + $0x29c] sm:$0xf]
        %v5323 = vld [vmem:[#allocation14 + $0x2a0] sm:$0xff]
        %v5324 = vld [vmem:[#allocation14 + $0x2a8] sm:$0xff]
        %v5325 = vld [vmem:[#allocation14 + $0x2b0] sm:$0xff]
        %v5326 = vld [vmem:[#allocation14 + $0x2b8] sm:$0xf]
        %v5327 = vld [vmem:[#allocation14 + $0x2bc] sm:$0xff]
        %v5328 = vld [vmem:[#allocation14 + $0x2c4] sm:$0xff]
        %v5329 = vld [vmem:[#allocation14 + $0x2cc] sm:$0xff]
        %v5330 = vld [vmem:[#allocation14 + $0x2d4] sm:$0xf]
        %v5331 = vld [vmem:[#allocation14 + $0x2d8] sm:$0xff]
        %v5332 = vld [vmem:[#allocation14 + $0x2e0] sm:$0xff]
        %v5333 = vld [vmem:[#allocation14 + $0x2e8] sm:$0xff]
        %v5334 = vld [vmem:[#allocation14 + $0x2f0] sm:$0xf]
        %v5335 = vld [vmem:[#allocation14 + $0x2f4] sm:$0xff]
        %v5336 = vld [vmem:[#allocation14 + $0x2fc] sm:$0xff]
        %v5337 = vld [vmem:[#allocation14 + $0x304] sm:$0xff]
        %v5338 = vld [vmem:[#allocation14 + $0x30c] sm:$0xf]
        %v5339 = vld [vmem:[#allocation14 + $0x310] sm:$0xff]
        %v5340 = vld [vmem:[#allocation14 + $0x318] sm:$0xff]
        %v5341 = vld [vmem:[#allocation14 + $0x320] sm:$0xff]
        %v5342 = vld [vmem:[#allocation14 + $0x328] sm:$0xf]
        %v5343 = vld [vmem:[#allocation14 + $0x32c] sm:$0xff]
        %v5344 = vld [vmem:[#allocation14 + $0x334] sm:$0xff]
        %v5345 = vld [vmem:[#allocation14 + $0x33c] sm:$0xff]
        %v5346 = vld [vmem:[#allocation14 + $0x344] sm:$0xf]
        %v5347 = vld [vmem:[#allocation14 + $0x348] sm:$0xff]
        %v5348 = vld [vmem:[#allocation14 + $0x350] sm:$0xff]
        %v5349 = vld [vmem:[#allocation14 + $0x358] sm:$0xff]
        %v5350 = vld [vmem:[#allocation14 + $0x360] sm:$0xf]
        %v5351 = vld [vmem:[#allocation14 + $0x364] sm:$0xff]
        %v5352 = vld [vmem:[#allocation14 + $0x36c] sm:$0xff]
        %v5353 = vld [vmem:[#allocation14 + $0x374] sm:$0xff]
        %v5354 = vld [vmem:[#allocation14 + $0x37c] sm:$0xf]
        %v5355 = vld [vmem:[#allocation14 + $0x380] sm:$0xff]
        %v5356 = vld [vmem:[#allocation14 + $0x388] sm:$0xff]
        %v5357 = vld [vmem:[#allocation14 + $0x390] sm:$0xff]
        %v5358 = vld [vmem:[#allocation14 + $0x398] sm:$0xf]
        %v5359 = vld [vmem:[#allocation14 + $0x39c] sm:$0xff]
        %v5360 = vld [vmem:[#allocation14 + $0x3a4] sm:$0xff]
        %v5361 = vld [vmem:[#allocation14 + $0x3ac] sm:$0xff]
        %v5362 = vld [vmem:[#allocation14 + $0x3b4] sm:$0xf]
        %v5363 = vld [vmem:[#allocation14 + $0x3b8] sm:$0xff]
        %v5364 = vld [vmem:[#allocation14 + $0x3c0] sm:$0xff]
        %v5365 = vld [vmem:[#allocation14 + $0x3c8] sm:$0xff]
        %v5366 = vld [vmem:[#allocation14 + $0x3d0] sm:$0xf]
        %v5367 = vld [vmem:[#allocation14 + $0x3d4] sm:$0xff]
        %v5368 = vld [vmem:[#allocation14 + $0x3dc] sm:$0xff]
        %v5369 = vld [vmem:[#allocation14 + $0x3e4] sm:$0xff]
        %v5370 = vld [vmem:[#allocation14 + $0x3ec] sm:$0xf]
        %v5371 = vld [vmem:[#allocation14 + $0x3f0] sm:$0xff]
        %v5372 = vld [vmem:[#allocation14 + $0x3f8] sm:$0xff]
        %v5373 = vld [vmem:[#allocation14 + $0x400] sm:$0xff]
        %v5374 = vld [vmem:[#allocation14 + $0x408] sm:$0xf]
        %v5375 = vld [vmem:[#allocation14 + $0x40c] sm:$0xff]
        %v5376 = vld [vmem:[#allocation14 + $0x414] sm:$0xff]
        %v5377 = vld [vmem:[#allocation14 + $0x41c] sm:$0xff]
        %v5378 = vld [vmem:[#allocation14 + $0x424] sm:$0xf]
        %v5379 = vld [vmem:[#allocation14 + $0x428] sm:$0xff]
        %v5380 = vld [vmem:[#allocation14 + $0x430] sm:$0xff]
        %v5381 = vld [vmem:[#allocation14 + $0x438] sm:$0xff]
        %v5382 = vld [vmem:[#allocation14 + $0x440] sm:$0xf]
        %v5383 = vld [vmem:[#allocation14 + $0x444] sm:$0xff]
        %v5384 = vld [vmem:[#allocation14 + $0x44c] sm:$0xff]
        %v5385 = vld [vmem:[#allocation14 + $0x454] sm:$0xff]
        %v5386 = vld [vmem:[#allocation14 + $0x45c] sm:$0xf]
        %v5387 = vld [vmem:[#allocation14 + $0x460] sm:$0xff]
        %v5388 = vld [vmem:[#allocation14 + $0x468] sm:$0xff]
        %v5389 = vld [vmem:[#allocation14 + $0x470] sm:$0xff]
        %v5390 = vld [vmem:[#allocation14 + $0x478] sm:$0xf]
        %v5391 = vld [vmem:[#allocation14 + $0x47c] sm:$0xff]
        %v5392 = vld [vmem:[#allocation14 + $0x484] sm:$0xff]
        %v5393 = vld [vmem:[#allocation14 + $0x48c] sm:$0xff]
        %v5394 = vld [vmem:[#allocation14 + $0x494] sm:$0xf]
        %v5395 = vld [vmem:[#allocation14 + $0x498] sm:$0xff]
        %v5396 = vld [vmem:[#allocation14 + $0x4a0] sm:$0xff]
        %v5397 = vld [vmem:[#allocation14 + $0x4a8] sm:$0xff]
        %v5398 = vld [vmem:[#allocation14 + $0x4b0] sm:$0xf]
        %v5399 = vld [vmem:[#allocation14 + $0x4b4] sm:$0xff]
        %v5400 = vld [vmem:[#allocation14 + $0x4bc] sm:$0xff]
        %v5401 = vld [vmem:[#allocation14 + $0x4c4] sm:$0xff]
        %v5402 = vld [vmem:[#allocation14 + $0x4cc] sm:$0xf]
        %v5403 = vld [vmem:[#allocation14 + $0x4d0] sm:$0xff]
        %v5404 = vld [vmem:[#allocation14 + $0x4d8] sm:$0xff]
        %v5405 = vld [vmem:[#allocation14 + $0x4e0] sm:$0xff]
        %v5406 = vld [vmem:[#allocation14 + $0x4e8] sm:$0xf]
        %v5407 = vld [vmem:[#allocation14 + $0x4ec] sm:$0xff]
        %v5408 = vld [vmem:[#allocation14 + $0x4f4] sm:$0xff]
        %v5409 = vld [vmem:[#allocation14 + $0x4fc] sm:$0xff]
        %v5410 = vld [vmem:[#allocation14 + $0x504] sm:$0xf]
        %v5411 = vld [vmem:[#allocation14 + $0x508] sm:$0xff]
        %v5412 = vld [vmem:[#allocation14 + $0x510] sm:$0xff]
        %v5413 = vld [vmem:[#allocation14 + $0x518] sm:$0xff]
        %v5414 = vld [vmem:[#allocation14 + $0x520] sm:$0xf]
        %v5415 = vld [vmem:[#allocation14 + $0x524] sm:$0xff]
        %v5416 = vld [vmem:[#allocation14 + $0x52c] sm:$0xff]
        %v5417 = vld [vmem:[#allocation14 + $0x534] sm:$0xff]
        %v5418 = vld [vmem:[#allocation14 + $0x53c] sm:$0xf]
        %v5419 = vld [vmem:[#allocation14 + $0x540] sm:$0xff]
        %v5420 = vld [vmem:[#allocation14 + $0x548] sm:$0xff]
        %v5421 = vld [vmem:[#allocation14 + $0x550] sm:$0xff]
        %v5422 = vld [vmem:[#allocation14 + $0x558] sm:$0xf]
        %v5423 = vld [vmem:[#allocation14 + $0x55c] sm:$0xff]
        %v5424 = vld [vmem:[#allocation14 + $0x564] sm:$0xff]
        %v5425 = vld [vmem:[#allocation14 + $0x56c] sm:$0xff]
        %v5426 = vld [vmem:[#allocation14 + $0x574] sm:$0xf]
        %v5427 = vld [vmem:[#allocation14 + $0x578] sm:$0xff]
        %v5428 = vld [vmem:[#allocation14 + $0x580] sm:$0xff]
        %v5429 = vld [vmem:[#allocation14 + $0x588] sm:$0xff]
        %v5430 = vld [vmem:[#allocation14 + $0x590] sm:$0xf]
        %v5431 = vld [vmem:[#allocation14 + $0x594] sm:$0xff]
        %v5432 = vld [vmem:[#allocation14 + $0x59c] sm:$0xff]
        %v5433 = vld [vmem:[#allocation14 + $0x5a4] sm:$0xff]
        %v5434 = vld [vmem:[#allocation14 + $0x5ac] sm:$0xf]
        %v5435 = vld [vmem:[#allocation14 + $0x5b0] sm:$0xff]
        %v5436 = vld [vmem:[#allocation14 + $0x5b8] sm:$0xff]
        %v5437 = vld [vmem:[#allocation14 + $0x5c0] sm:$0xff]
        %v5438 = vld [vmem:[#allocation14 + $0x5c8] sm:$0xf]
        %v5439 = vld [vmem:[#allocation14 + $0x5cc] sm:$0xff]
        %v5440 = vld [vmem:[#allocation14 + $0x5d4] sm:$0xff]
        %v5441 = vld [vmem:[#allocation14 + $0x5dc] sm:$0xff]
        %v5442 = vld [vmem:[#allocation14 + $0x5e4] sm:$0xf]
        %v5443 = vld [vmem:[#allocation14 + $0x5e8] sm:$0xff]
        %v5444 = vld [vmem:[#allocation14 + $0x5f0] sm:$0xff]
        %v5445 = vld [vmem:[#allocation14 + $0x5f8] sm:$0xff]
        %v5446 = vld [vmem:[#allocation14 + $0x600] sm:$0xf]
        %v5447 = vld [vmem:[#allocation14 + $0x604] sm:$0xff]
        %v5448 = vld [vmem:[#allocation14 + $0x60c] sm:$0xff]
        %v5449 = vld [vmem:[#allocation14 + $0x614] sm:$0xff]
        %v5450 = vld [vmem:[#allocation14 + $0x61c] sm:$0xf]
        %v5451 = vld [vmem:[#allocation14 + $0x620] sm:$0xff]
        %v5452 = vld [vmem:[#allocation14 + $0x628] sm:$0xff]
        %v5453 = vld [vmem:[#allocation14 + $0x630] sm:$0xff]
        %v5454 = vld [vmem:[#allocation14 + $0x638] sm:$0xf]
        %v5455 = vld [vmem:[#allocation14 + $0x63c] sm:$0xff]
        %v5456 = vld [vmem:[#allocation14 + $0x644] sm:$0xff]
        %v5457 = vld [vmem:[#allocation14 + $0x64c] sm:$0xff]
        %v5458 = vld [vmem:[#allocation14 + $0x654] sm:$0xf]
        %v5459 = vld [vmem:[#allocation14 + $0x658] sm:$0xff]
        %v5460 = vld [vmem:[#allocation14 + $0x660] sm:$0xff]
        %v5461 = vld [vmem:[#allocation14 + $0x668] sm:$0xff]
        %v5462 = vld [vmem:[#allocation14 + $0x670] sm:$0xf]
        %v5463 = vld [vmem:[#allocation14 + $0x674] sm:$0xff]
        %v5464 = vld [vmem:[#allocation14 + $0x67c] sm:$0xff]
        %v5465 = vld [vmem:[#allocation14 + $0x684] sm:$0xff]
        %v5466 = vld [vmem:[#allocation14 + $0x68c] sm:$0xf]
        %v5467 = vld [vmem:[#allocation14 + $0x690] sm:$0xff]
        %v5468 = vld [vmem:[#allocation14 + $0x698] sm:$0xff]
        %v5469 = vld [vmem:[#allocation14 + $0x6a0] sm:$0xff]
        %v5470 = vld [vmem:[#allocation14 + $0x6a8] sm:$0xf]
        %v5471 = vld [vmem:[#allocation14 + $0x6ac] sm:$0xff]
        %v5472 = vld [vmem:[#allocation14 + $0x6b4] sm:$0xff]
        %v5473 = vld [vmem:[#allocation14 + $0x6bc] sm:$0xff]
        %v5474 = vld [vmem:[#allocation14 + $0x6c4] sm:$0xf]
        %v5475 = vld [vmem:[#allocation14 + $0x6c8] sm:$0xff]
        %v5476 = vld [vmem:[#allocation14 + $0x6d0] sm:$0xff]
        %v5477 = vld [vmem:[#allocation14 + $0x6d8] sm:$0xff]
        %v5478 = vld [vmem:[#allocation14 + $0x6e0] sm:$0xf]
        %v5479 = vld [vmem:[#allocation14 + $0x6e4] sm:$0xff]
        %v5480 = vld [vmem:[#allocation14 + $0x6ec] sm:$0xff]
        %v5481 = vld [vmem:[#allocation14 + $0x6f4] sm:$0xff]
        %v5482 = vld [vmem:[#allocation14 + $0x6fc] sm:$0xf]
        %v5483 = vld [vmem:[%s12] sm:$0xff]
        %v5485 = vlaneseq
        %v5486 = vshrl.u32 %v5485, 7
        %v5487 = vsub.s32 0, %v5486
        %v5488 = vrot.slane %v5483, %v5487
        %v5489 = vlaneseq
        %v5490 = vshrl.u32 %v5489, 7
        %v5491 = vsub.s32 1, %v5490
        %v5492 = vrot.slane %v5483, %v5491
        %v5493 = vlaneseq
        %v5494 = vshrl.u32 %v5493, 7
        %v5495 = vsub.s32 2, %v5494
        %v5496 = vrot.slane %v5483, %v5495
        %v5497 = vlaneseq
        %v5498 = vshrl.u32 %v5497, 7
        %v5499 = vsub.s32 3, %v5498
        %v5500 = vrot.slane %v5483, %v5499
        %v5501 = vlaneseq
        %v5502 = vshrl.u32 %v5501, 7
        %v5503 = vsub.s32 4, %v5502
        %v5504 = vrot.slane %v5483, %v5503
        %v5505 = vlaneseq
        %v5506 = vshrl.u32 %v5505, 7
        %v5507 = vsub.s32 5, %v5506
        %v5508 = vrot.slane %v5483, %v5507
        %v5509 = vlaneseq
        %v5510 = vshrl.u32 %v5509, 7
        %v5511 = vsub.s32 6, %v5510
        %v5512 = vrot.slane %v5483, %v5511
        %v5776 = vunpack.c.l.b16 %v5227
        %v5777 = vunpack.c.h.b16 %v5227
        %v5778 = vunpack.c.l.b16 %v5228
        %v5779 = vunpack.c.h.b16 %v5228
        %v5780 = vunpack.c.l.b16 %v5229
        %v5781 = vunpack.c.h.b16 %v5229
        %v5782 = vunpack.c.l.b16 %v5230
        %v5783 = vunpack.c.l.b16 %v5231
        %v5784 = vunpack.c.h.b16 %v5231
        %v5785 = vunpack.c.l.b16 %v5232
        %v5786 = vunpack.c.h.b16 %v5232
        %v5787 = vunpack.c.l.b16 %v5233
        %v5788 = vunpack.c.h.b16 %v5233
        %v5789 = vunpack.c.l.b16 %v5234
        %v5790 = vunpack.c.l.b16 %v5235
        %v5791 = vunpack.c.h.b16 %v5235
        %v5792 = vunpack.c.l.b16 %v5236
        %v5793 = vunpack.c.h.b16 %v5236
        %v5794 = vunpack.c.l.b16 %v5237
        %v5795 = vunpack.c.h.b16 %v5237
        %v5796 = vunpack.c.l.b16 %v5238
        %v5797 = vunpack.c.l.b16 %v5239
        %v5798 = vunpack.c.h.b16 %v5239
        %v5799 = vunpack.c.l.b16 %v5240
        %v5800 = vunpack.c.h.b16 %v5240
        %v5801 = vunpack.c.l.b16 %v5241
        %v5802 = vunpack.c.h.b16 %v5241
        %v5803 = vunpack.c.l.b16 %v5242
        %v5804 = vunpack.c.l.b16 %v5243
        %v5805 = vunpack.c.h.b16 %v5243
        %v5806 = vunpack.c.l.b16 %v5244
        %v5807 = vunpack.c.h.b16 %v5244
        %v5808 = vunpack.c.l.b16 %v5245
        %v5809 = vunpack.c.h.b16 %v5245
        %v5810 = vunpack.c.l.b16 %v5246
        %v5811 = vunpack.c.l.b16 %v5247
        %v5812 = vunpack.c.h.b16 %v5247
        %v5813 = vunpack.c.l.b16 %v5248
        %v5814 = vunpack.c.h.b16 %v5248
        %v5815 = vunpack.c.l.b16 %v5249
        %v5816 = vunpack.c.h.b16 %v5249
        %v5817 = vunpack.c.l.b16 %v5250
        %v5818 = vunpack.c.l.b16 %v5251
        %v5819 = vunpack.c.h.b16 %v5251
        %v5820 = vunpack.c.l.b16 %v5252
        %v5821 = vunpack.c.h.b16 %v5252
        %v5822 = vunpack.c.l.b16 %v5253
        %v5823 = vunpack.c.h.b16 %v5253
        %v5824 = vunpack.c.l.b16 %v5254
        %v5825 = vunpack.c.l.b16 %v5255
        %v5826 = vunpack.c.h.b16 %v5255
        %v5827 = vunpack.c.l.b16 %v5256
        %v5828 = vunpack.c.h.b16 %v5256
        %v5829 = vunpack.c.l.b16 %v5257
        %v5830 = vunpack.c.h.b16 %v5257
        %v5831 = vunpack.c.l.b16 %v5258
        %v5832 = vunpack.c.l.b16 %v5259
        %v5833 = vunpack.c.h.b16 %v5259
        %v5834 = vunpack.c.l.b16 %v5260
        %v5835 = vunpack.c.h.b16 %v5260
        %v5836 = vunpack.c.l.b16 %v5261
        %v5837 = vunpack.c.h.b16 %v5261
        %v5838 = vunpack.c.l.b16 %v5262
        %v5839 = vunpack.c.l.b16 %v5263
        %v5840 = vunpack.c.h.b16 %v5263
        %v5841 = vunpack.c.l.b16 %v5264
        %v5842 = vunpack.c.h.b16 %v5264
        %v5843 = vunpack.c.l.b16 %v5265
        %v5844 = vunpack.c.h.b16 %v5265
        %v5845 = vunpack.c.l.b16 %v5266
        %v5846 = vunpack.c.l.b16 %v5267
        %v5847 = vunpack.c.h.b16 %v5267
        %v5848 = vunpack.c.l.b16 %v5268
        %v5849 = vunpack.c.h.b16 %v5268
        %v5850 = vunpack.c.l.b16 %v5269
        %v5851 = vunpack.c.h.b16 %v5269
        %v5852 = vunpack.c.l.b16 %v5270
        %v5853 = vunpack.c.l.b16 %v5271
        %v5854 = vunpack.c.h.b16 %v5271
        %v5855 = vunpack.c.l.b16 %v5272
        %v5856 = vunpack.c.h.b16 %v5272
        %v5857 = vunpack.c.l.b16 %v5273
        %v5858 = vunpack.c.h.b16 %v5273
        %v5859 = vunpack.c.l.b16 %v5274
        %v5860 = vunpack.c.l.b16 %v5275
        %v5861 = vunpack.c.h.b16 %v5275
        %v5862 = vunpack.c.l.b16 %v5276
        %v5863 = vunpack.c.h.b16 %v5276
        %v5864 = vunpack.c.l.b16 %v5277
        %v5865 = vunpack.c.h.b16 %v5277
        %v5866 = vunpack.c.l.b16 %v5278
        %v5867 = vunpack.c.l.b16 %v5279
        %v5868 = vunpack.c.h.b16 %v5279
        %v5869 = vunpack.c.l.b16 %v5280
        %v5870 = vunpack.c.h.b16 %v5280
        %v5871 = vunpack.c.l.b16 %v5281
        %v5872 = vunpack.c.h.b16 %v5281
        %v5873 = vunpack.c.l.b16 %v5282
        %v5874 = vunpack.c.l.b16 %v5283
        %v5875 = vunpack.c.h.b16 %v5283
        %v5876 = vunpack.c.l.b16 %v5284
        %v5877 = vunpack.c.h.b16 %v5284
        %v5878 = vunpack.c.l.b16 %v5285
        %v5879 = vunpack.c.h.b16 %v5285
        %v5880 = vunpack.c.l.b16 %v5286
        %v5881 = vunpack.c.l.b16 %v5287
        %v5882 = vunpack.c.h.b16 %v5287
        %v5883 = vunpack.c.l.b16 %v5288
        %v5884 = vunpack.c.h.b16 %v5288
        %v5885 = vunpack.c.l.b16 %v5289
        %v5886 = vunpack.c.h.b16 %v5289
        %v5887 = vunpack.c.l.b16 %v5290
        %v5888 = vunpack.c.l.b16 %v5291
        %v5889 = vunpack.c.h.b16 %v5291
        %v5890 = vunpack.c.l.b16 %v5292
        %v5891 = vunpack.c.h.b16 %v5292
        %v5892 = vunpack.c.l.b16 %v5293
        %v5893 = vunpack.c.h.b16 %v5293
        %v5894 = vunpack.c.l.b16 %v5294
        %v5895 = vunpack.c.l.b16 %v5295
        %v5896 = vunpack.c.h.b16 %v5295
        %v5897 = vunpack.c.l.b16 %v5296
        %v5898 = vunpack.c.h.b16 %v5296
        %v5899 = vunpack.c.l.b16 %v5297
        %v5900 = vunpack.c.h.b16 %v5297
        %v5901 = vunpack.c.l.b16 %v5298
        %v5902 = vunpack.c.l.b16 %v5299
        %v5903 = vunpack.c.h.b16 %v5299
        %v5904 = vunpack.c.l.b16 %v5300
        %v5905 = vunpack.c.h.b16 %v5300
        %v5906 = vunpack.c.l.b16 %v5301
        %v5907 = vunpack.c.h.b16 %v5301
        %v5908 = vunpack.c.l.b16 %v5302
        %v5909 = vunpack.c.l.b16 %v5303
        %v5910 = vunpack.c.h.b16 %v5303
        %v5911 = vunpack.c.l.b16 %v5304
        %v5912 = vunpack.c.h.b16 %v5304
        %v5913 = vunpack.c.l.b16 %v5305
        %v5914 = vunpack.c.h.b16 %v5305
        %v5915 = vunpack.c.l.b16 %v5306
        %v5916 = vunpack.c.l.b16 %v5307
        %v5917 = vunpack.c.h.b16 %v5307
        %v5918 = vunpack.c.l.b16 %v5308
        %v5919 = vunpack.c.h.b16 %v5308
        %v5920 = vunpack.c.l.b16 %v5309
        %v5921 = vunpack.c.h.b16 %v5309
        %v5922 = vunpack.c.l.b16 %v5310
        %v5923 = vunpack.c.l.b16 %v5311
        %v5924 = vunpack.c.h.b16 %v5311
        %v5925 = vunpack.c.l.b16 %v5312
        %v5926 = vunpack.c.h.b16 %v5312
        %v5927 = vunpack.c.l.b16 %v5313
        %v5928 = vunpack.c.h.b16 %v5313
        %v5929 = vunpack.c.l.b16 %v5314
        %v5930 = vunpack.c.l.b16 %v5315
        %v5931 = vunpack.c.h.b16 %v5315
        %v5932 = vunpack.c.l.b16 %v5316
        %v5933 = vunpack.c.h.b16 %v5316
        %v5934 = vunpack.c.l.b16 %v5317
        %v5935 = vunpack.c.h.b16 %v5317
        %v5936 = vunpack.c.l.b16 %v5318
        %v5937 = vunpack.c.l.b16 %v5319
        %v5938 = vunpack.c.h.b16 %v5319
        %v5939 = vunpack.c.l.b16 %v5320
        %v5940 = vunpack.c.h.b16 %v5320
        %v5941 = vunpack.c.l.b16 %v5321
        %v5942 = vunpack.c.h.b16 %v5321
        %v5943 = vunpack.c.l.b16 %v5322
        %v5944 = vunpack.c.l.b16 %v5323
        %v5945 = vunpack.c.h.b16 %v5323
        %v5946 = vunpack.c.l.b16 %v5324
        %v5947 = vunpack.c.h.b16 %v5324
        %v5948 = vunpack.c.l.b16 %v5325
        %v5949 = vunpack.c.h.b16 %v5325
        %v5950 = vunpack.c.l.b16 %v5326
        %v5951 = vunpack.c.l.b16 %v5327
        %v5952 = vunpack.c.h.b16 %v5327
        %v5953 = vunpack.c.l.b16 %v5328
        %v5954 = vunpack.c.h.b16 %v5328
        %v5955 = vunpack.c.l.b16 %v5329
        %v5956 = vunpack.c.h.b16 %v5329
        %v5957 = vunpack.c.l.b16 %v5330
        %v5958 = vunpack.c.l.b16 %v5331
        %v5959 = vunpack.c.h.b16 %v5331
        %v5960 = vunpack.c.l.b16 %v5332
        %v5961 = vunpack.c.h.b16 %v5332
        %v5962 = vunpack.c.l.b16 %v5333
        %v5963 = vunpack.c.h.b16 %v5333
        %v5964 = vunpack.c.l.b16 %v5334
        %v5965 = vunpack.c.l.b16 %v5335
        %v5966 = vunpack.c.h.b16 %v5335
        %v5967 = vunpack.c.l.b16 %v5336
        %v5968 = vunpack.c.h.b16 %v5336
        %v5969 = vunpack.c.l.b16 %v5337
        %v5970 = vunpack.c.h.b16 %v5337
        %v5971 = vunpack.c.l.b16 %v5338
        %v5972 = vunpack.c.l.b16 %v5339
        %v5973 = vunpack.c.h.b16 %v5339
        %v5974 = vunpack.c.l.b16 %v5340
        %v5975 = vunpack.c.h.b16 %v5340
        %v5976 = vunpack.c.l.b16 %v5341
        %v5977 = vunpack.c.h.b16 %v5341
        %v5978 = vunpack.c.l.b16 %v5342
        %v5979 = vunpack.c.l.b16 %v5343
        %v5980 = vunpack.c.h.b16 %v5343
        %v5981 = vunpack.c.l.b16 %v5344
        %v5982 = vunpack.c.h.b16 %v5344
        %v5983 = vunpack.c.l.b16 %v5345
        %v5984 = vunpack.c.h.b16 %v5345
        %v5985 = vunpack.c.l.b16 %v5346
        %v5986 = vunpack.c.l.b16 %v5347
        %v5987 = vunpack.c.h.b16 %v5347
        %v5988 = vunpack.c.l.b16 %v5348
        %v5989 = vunpack.c.h.b16 %v5348
        %v5990 = vunpack.c.l.b16 %v5349
        %v5991 = vunpack.c.h.b16 %v5349
        %v5992 = vunpack.c.l.b16 %v5350
        %v5993 = vunpack.c.l.b16 %v5351
        %v5994 = vunpack.c.h.b16 %v5351
        %v5995 = vunpack.c.l.b16 %v5352
        %v5996 = vunpack.c.h.b16 %v5352
        %v5997 = vunpack.c.l.b16 %v5353
        %v5998 = vunpack.c.h.b16 %v5353
        %v5999 = vunpack.c.l.b16 %v5354
        %v6000 = vunpack.c.l.b16 %v5355
        %v6001 = vunpack.c.h.b16 %v5355
        %v6002 = vunpack.c.l.b16 %v5356
        %v6003 = vunpack.c.h.b16 %v5356
        %v6004 = vunpack.c.l.b16 %v5357
        %v6005 = vunpack.c.h.b16 %v5357
        %v6006 = vunpack.c.l.b16 %v5358
        %v6007 = vunpack.c.l.b16 %v5359
        %v6008 = vunpack.c.h.b16 %v5359
        %v6009 = vunpack.c.l.b16 %v5360
        %v6010 = vunpack.c.h.b16 %v5360
        %v6011 = vunpack.c.l.b16 %v5361
        %v6012 = vunpack.c.h.b16 %v5361
        %v6013 = vunpack.c.l.b16 %v5362
        %v6014 = vunpack.c.l.b16 %v5363
        %v6015 = vunpack.c.h.b16 %v5363
        %v6016 = vunpack.c.l.b16 %v5364
        %v6017 = vunpack.c.h.b16 %v5364
        %v6018 = vunpack.c.l.b16 %v5365
        %v6019 = vunpack.c.h.b16 %v5365
        %v6020 = vunpack.c.l.b16 %v5366
        %v6021 = vunpack.c.l.b16 %v5367
        %v6022 = vunpack.c.h.b16 %v5367
        %v6023 = vunpack.c.l.b16 %v5368
        %v6024 = vunpack.c.h.b16 %v5368
        %v6025 = vunpack.c.l.b16 %v5369
        %v6026 = vunpack.c.h.b16 %v5369
        %v6027 = vunpack.c.l.b16 %v5370
        %v6028 = vunpack.c.l.b16 %v5371
        %v6029 = vunpack.c.h.b16 %v5371
        %v6030 = vunpack.c.l.b16 %v5372
        %v6031 = vunpack.c.h.b16 %v5372
        %v6032 = vunpack.c.l.b16 %v5373
        %v6033 = vunpack.c.h.b16 %v5373
        %v6034 = vunpack.c.l.b16 %v5374
        %v6035 = vunpack.c.l.b16 %v5375
        %v6036 = vunpack.c.h.b16 %v5375
        %v6037 = vunpack.c.l.b16 %v5376
        %v6038 = vunpack.c.h.b16 %v5376
        %v6039 = vunpack.c.l.b16 %v5377
        %v6040 = vunpack.c.h.b16 %v5377
        %v6041 = vunpack.c.l.b16 %v5378
        %v6042 = vunpack.c.l.b16 %v5379
        %v6043 = vunpack.c.h.b16 %v5379
        %v6044 = vunpack.c.l.b16 %v5380
        %v6045 = vunpack.c.h.b16 %v5380
        %v6046 = vunpack.c.l.b16 %v5381
        %v6047 = vunpack.c.h.b16 %v5381
        %v6048 = vunpack.c.l.b16 %v5382
        %v6049 = vunpack.c.l.b16 %v5383
        %v6050 = vunpack.c.h.b16 %v5383
        %v6051 = vunpack.c.l.b16 %v5384
        %v6052 = vunpack.c.h.b16 %v5384
        %v6053 = vunpack.c.l.b16 %v5385
        %v6054 = vunpack.c.h.b16 %v5385
        %v6055 = vunpack.c.l.b16 %v5386
        %v6056 = vunpack.c.l.b16 %v5387
        %v6057 = vunpack.c.h.b16 %v5387
        %v6058 = vunpack.c.l.b16 %v5388
        %v6059 = vunpack.c.h.b16 %v5388
        %v6060 = vunpack.c.l.b16 %v5389
        %v6061 = vunpack.c.h.b16 %v5389
        %v6062 = vunpack.c.l.b16 %v5390
        %v6063 = vunpack.c.l.b16 %v5391
        %v6064 = vunpack.c.h.b16 %v5391
        %v6065 = vunpack.c.l.b16 %v5392
        %v6066 = vunpack.c.h.b16 %v5392
        %v6067 = vunpack.c.l.b16 %v5393
        %v6068 = vunpack.c.h.b16 %v5393
        %v6069 = vunpack.c.l.b16 %v5394
        %v6070 = vunpack.c.l.b16 %v5395
        %v6071 = vunpack.c.h.b16 %v5395
        %v6072 = vunpack.c.l.b16 %v5396
        %v6073 = vunpack.c.h.b16 %v5396
        %v6074 = vunpack.c.l.b16 %v5397
        %v6075 = vunpack.c.h.b16 %v5397
        %v6076 = vunpack.c.l.b16 %v5398
        %v6077 = vunpack.c.l.b16 %v5399
        %v6078 = vunpack.c.h.b16 %v5399
        %v6079 = vunpack.c.l.b16 %v5400
        %v6080 = vunpack.c.h.b16 %v5400
        %v6081 = vunpack.c.l.b16 %v5401
        %v6082 = vunpack.c.h.b16 %v5401
        %v6083 = vunpack.c.l.b16 %v5402
        %v6084 = vunpack.c.l.b16 %v5403
        %v6085 = vunpack.c.h.b16 %v5403
        %v6086 = vunpack.c.l.b16 %v5404
        %v6087 = vunpack.c.h.b16 %v5404
        %v6088 = vunpack.c.l.b16 %v5405
        %v6089 = vunpack.c.h.b16 %v5405
        %v6090 = vunpack.c.l.b16 %v5406
        %v6091 = vunpack.c.l.b16 %v5407
        %v6092 = vunpack.c.h.b16 %v5407
        %v6093 = vunpack.c.l.b16 %v5408
        %v6094 = vunpack.c.h.b16 %v5408
        %v6095 = vunpack.c.l.b16 %v5409
        %v6096 = vunpack.c.h.b16 %v5409
        %v6097 = vunpack.c.l.b16 %v5410
        %v6098 = vunpack.c.l.b16 %v5411
        %v6099 = vunpack.c.h.b16 %v5411
        %v6100 = vunpack.c.l.b16 %v5412
        %v6101 = vunpack.c.h.b16 %v5412
        %v6102 = vunpack.c.l.b16 %v5413
        %v6103 = vunpack.c.h.b16 %v5413
        %v6104 = vunpack.c.l.b16 %v5414
        %v6105 = vunpack.c.l.b16 %v5415
        %v6106 = vunpack.c.h.b16 %v5415
        %v6107 = vunpack.c.l.b16 %v5416
        %v6108 = vunpack.c.h.b16 %v5416
        %v6109 = vunpack.c.l.b16 %v5417
        %v6110 = vunpack.c.h.b16 %v5417
        %v6111 = vunpack.c.l.b16 %v5418
        %v6112 = vunpack.c.l.b16 %v5419
        %v6113 = vunpack.c.h.b16 %v5419
        %v6114 = vunpack.c.l.b16 %v5420
        %v6115 = vunpack.c.h.b16 %v5420
        %v6116 = vunpack.c.l.b16 %v5421
        %v6117 = vunpack.c.h.b16 %v5421
        %v6118 = vunpack.c.l.b16 %v5422
        %v6119 = vunpack.c.l.b16 %v5423
        %v6120 = vunpack.c.h.b16 %v5423
        %v6121 = vunpack.c.l.b16 %v5424
        %v6122 = vunpack.c.h.b16 %v5424
        %v6123 = vunpack.c.l.b16 %v5425
        %v6124 = vunpack.c.h.b16 %v5425
        %v6125 = vunpack.c.l.b16 %v5426
        %v6126 = vunpack.c.l.b16 %v5427
        %v6127 = vunpack.c.h.b16 %v5427
        %v6128 = vunpack.c.l.b16 %v5428
        %v6129 = vunpack.c.h.b16 %v5428
        %v6130 = vunpack.c.l.b16 %v5429
        %v6131 = vunpack.c.h.b16 %v5429
        %v6132 = vunpack.c.l.b16 %v5430
        %v6133 = vunpack.c.l.b16 %v5431
        %v6134 = vunpack.c.h.b16 %v5431
        %v6135 = vunpack.c.l.b16 %v5432
        %v6136 = vunpack.c.h.b16 %v5432
        %v6137 = vunpack.c.l.b16 %v5433
        %v6138 = vunpack.c.h.b16 %v5433
        %v6139 = vunpack.c.l.b16 %v5434
        %v6140 = vunpack.c.l.b16 %v5435
        %v6141 = vunpack.c.h.b16 %v5435
        %v6142 = vunpack.c.l.b16 %v5436
        %v6143 = vunpack.c.h.b16 %v5436
        %v6144 = vunpack.c.l.b16 %v5437
        %v6145 = vunpack.c.h.b16 %v5437
        %v6146 = vunpack.c.l.b16 %v5438
        %v6147 = vunpack.c.l.b16 %v5439
        %v6148 = vunpack.c.h.b16 %v5439
        %v6149 = vunpack.c.l.b16 %v5440
        %v6150 = vunpack.c.h.b16 %v5440
        %v6151 = vunpack.c.l.b16 %v5441
        %v6152 = vunpack.c.h.b16 %v5441
        %v6153 = vunpack.c.l.b16 %v5442
        %v6154 = vunpack.c.l.b16 %v5443
        %v6155 = vunpack.c.h.b16 %v5443
        %v6156 = vunpack.c.l.b16 %v5444
        %v6157 = vunpack.c.h.b16 %v5444
        %v6158 = vunpack.c.l.b16 %v5445
        %v6159 = vunpack.c.h.b16 %v5445
        %v6160 = vunpack.c.l.b16 %v5446
        %v6161 = vunpack.c.l.b16 %v5447
        %v6162 = vunpack.c.h.b16 %v5447
        %v6163 = vunpack.c.l.b16 %v5448
        %v6164 = vunpack.c.h.b16 %v5448
        %v6165 = vunpack.c.l.b16 %v5449
        %v6166 = vunpack.c.h.b16 %v5449
        %v6167 = vunpack.c.l.b16 %v5450
        %v6168 = vunpack.c.l.b16 %v5451
        %v6169 = vunpack.c.h.b16 %v5451
        %v6170 = vunpack.c.l.b16 %v5452
        %v6171 = vunpack.c.h.b16 %v5452
        %v6172 = vunpack.c.l.b16 %v5453
        %v6173 = vunpack.c.h.b16 %v5453
        %v6174 = vunpack.c.l.b16 %v5454
        %v6175 = vunpack.c.l.b16 %v5455
        %v6176 = vunpack.c.h.b16 %v5455
        %v6177 = vunpack.c.l.b16 %v5456
        %v6178 = vunpack.c.h.b16 %v5456
        %v6179 = vunpack.c.l.b16 %v5457
        %v6180 = vunpack.c.h.b16 %v5457
        %v6181 = vunpack.c.l.b16 %v5458
        %v6182 = vunpack.c.l.b16 %v5459
        %v6183 = vunpack.c.h.b16 %v5459
        %v6184 = vunpack.c.l.b16 %v5460
        %v6185 = vunpack.c.h.b16 %v5460
        %v6186 = vunpack.c.l.b16 %v5461
        %v6187 = vunpack.c.h.b16 %v5461
        %v6188 = vunpack.c.l.b16 %v5462
        %v6189 = vunpack.c.l.b16 %v5463
        %v6190 = vunpack.c.h.b16 %v5463
        %v6191 = vunpack.c.l.b16 %v5464
        %v6192 = vunpack.c.h.b16 %v5464
        %v6193 = vunpack.c.l.b16 %v5465
        %v6194 = vunpack.c.h.b16 %v5465
        %v6195 = vunpack.c.l.b16 %v5466
        %v6196 = vunpack.c.l.b16 %v5467
        %v6197 = vunpack.c.h.b16 %v5467
        %v6198 = vunpack.c.l.b16 %v5468
        %v6199 = vunpack.c.h.b16 %v5468
        %v6200 = vunpack.c.l.b16 %v5469
        %v6201 = vunpack.c.h.b16 %v5469
        %v6202 = vunpack.c.l.b16 %v5470
        %v6203 = vunpack.c.l.b16 %v5471
        %v6204 = vunpack.c.h.b16 %v5471
        %v6205 = vunpack.c.l.b16 %v5472
        %v6206 = vunpack.c.h.b16 %v5472
        %v6207 = vunpack.c.l.b16 %v5473
        %v6208 = vunpack.c.h.b16 %v5473
        %v6209 = vunpack.c.l.b16 %v5474
        %v6210 = vunpack.c.l.b16 %v5475
        %v6211 = vunpack.c.h.b16 %v5475
        %v6212 = vunpack.c.l.b16 %v5476
        %v6213 = vunpack.c.h.b16 %v5476
        %v6214 = vunpack.c.l.b16 %v5477
        %v6215 = vunpack.c.h.b16 %v5477
        %v6216 = vunpack.c.l.b16 %v5478
        %v6217 = vunpack.c.l.b16 %v5479
        %v6218 = vunpack.c.h.b16 %v5479
        %v6219 = vunpack.c.l.b16 %v5480
        %v6220 = vunpack.c.h.b16 %v5480
        %v6221 = vunpack.c.l.b16 %v5481
        %v6222 = vunpack.c.h.b16 %v5481
        %v6223 = vunpack.c.l.b16 %v5482
        %v6224 = vpack.c.b16 %v5783, %v5776
        %v6225 = vpack.c.b16 %v5784, %v5777
        %v6226 = vpack.c.b16 %v5785, %v5778
        %v6227 = vpack.c.b16 %v5786, %v5779
        %v6228 = vpack.c.b16 %v5787, %v5780
        %v6229 = vpack.c.b16 %v5788, %v5781
        %v6230 = vpack.c.b16 %v5789, %v5782
        %v6231 = vpack.c.b16 %v5797, %v5790
        %v6232 = vpack.c.b16 %v5798, %v5791
        %v6233 = vpack.c.b16 %v5799, %v5792
        %v6234 = vpack.c.b16 %v5800, %v5793
        %v6235 = vpack.c.b16 %v5801, %v5794
        %v6236 = vpack.c.b16 %v5802, %v5795
        %v6237 = vpack.c.b16 %v5803, %v5796
        %v6238 = vpack.c.b16 %v5811, %v5804
        %v6239 = vpack.c.b16 %v5812, %v5805
        %v6240 = vpack.c.b16 %v5813, %v5806
        %v6241 = vpack.c.b16 %v5814, %v5807
        %v6242 = vpack.c.b16 %v5815, %v5808
        %v6243 = vpack.c.b16 %v5816, %v5809
        %v6244 = vpack.c.b16 %v5817, %v5810
        %v6245 = vpack.c.b16 %v5825, %v5818
        %v6246 = vpack.c.b16 %v5826, %v5819
        %v6247 = vpack.c.b16 %v5827, %v5820
        %v6248 = vpack.c.b16 %v5828, %v5821
        %v6249 = vpack.c.b16 %v5829, %v5822
        %v6250 = vpack.c.b16 %v5830, %v5823
        %v6251 = vpack.c.b16 %v5831, %v5824
        %v6252 = vpack.c.b16 %v5839, %v5832
        %v6253 = vpack.c.b16 %v5840, %v5833
        %v6254 = vpack.c.b16 %v5841, %v5834
        %v6255 = vpack.c.b16 %v5842, %v5835
        %v6256 = vpack.c.b16 %v5843, %v5836
        %v6257 = vpack.c.b16 %v5844, %v5837
        %v6258 = vpack.c.b16 %v5845, %v5838
        %v6259 = vpack.c.b16 %v5853, %v5846
        %v6260 = vpack.c.b16 %v5854, %v5847
        %v6261 = vpack.c.b16 %v5855, %v5848
        %v6262 = vpack.c.b16 %v5856, %v5849
        %v6263 = vpack.c.b16 %v5857, %v5850
        %v6264 = vpack.c.b16 %v5858, %v5851
        %v6265 = vpack.c.b16 %v5859, %v5852
        %v6266 = vpack.c.b16 %v5867, %v5860
        %v6267 = vpack.c.b16 %v5868, %v5861
        %v6268 = vpack.c.b16 %v5869, %v5862
        %v6269 = vpack.c.b16 %v5870, %v5863
        %v6270 = vpack.c.b16 %v5871, %v5864
        %v6271 = vpack.c.b16 %v5872, %v5865
        %v6272 = vpack.c.b16 %v5873, %v5866
        %v6273 = vpack.c.b16 %v5881, %v5874
        %v6274 = vpack.c.b16 %v5882, %v5875
        %v6275 = vpack.c.b16 %v5883, %v5876
        %v6276 = vpack.c.b16 %v5884, %v5877
        %v6277 = vpack.c.b16 %v5885, %v5878
        %v6278 = vpack.c.b16 %v5886, %v5879
        %v6279 = vpack.c.b16 %v5887, %v5880
        %v6280 = vpack.c.b16 %v5895, %v5888
        %v6281 = vpack.c.b16 %v5896, %v5889
        %v6282 = vpack.c.b16 %v5897, %v5890
        %v6283 = vpack.c.b16 %v5898, %v5891
        %v6284 = vpack.c.b16 %v5899, %v5892
        %v6285 = vpack.c.b16 %v5900, %v5893
        %v6286 = vpack.c.b16 %v5901, %v5894
        %v6287 = vpack.c.b16 %v5909, %v5902
        %v6288 = vpack.c.b16 %v5910, %v5903
        %v6289 = vpack.c.b16 %v5911, %v5904
        %v6290 = vpack.c.b16 %v5912, %v5905
        %v6291 = vpack.c.b16 %v5913, %v5906
        %v6292 = vpack.c.b16 %v5914, %v5907
        %v6293 = vpack.c.b16 %v5915, %v5908
        %v6294 = vpack.c.b16 %v5923, %v5916
        %v6295 = vpack.c.b16 %v5924, %v5917
        %v6296 = vpack.c.b16 %v5925, %v5918
        %v6297 = vpack.c.b16 %v5926, %v5919
        %v6298 = vpack.c.b16 %v5927, %v5920
        %v6299 = vpack.c.b16 %v5928, %v5921
        %v6300 = vpack.c.b16 %v5929, %v5922
        %v6301 = vpack.c.b16 %v5937, %v5930
        %v6302 = vpack.c.b16 %v5938, %v5931
        %v6303 = vpack.c.b16 %v5939, %v5932
        %v6304 = vpack.c.b16 %v5940, %v5933
        %v6305 = vpack.c.b16 %v5941, %v5934
        %v6306 = vpack.c.b16 %v5942, %v5935
        %v6307 = vpack.c.b16 %v5943, %v5936
        %v6308 = vpack.c.b16 %v5951, %v5944
        %v6309 = vpack.c.b16 %v5952, %v5945
        %v6310 = vpack.c.b16 %v5953, %v5946
        %v6311 = vpack.c.b16 %v5954, %v5947
        %v6312 = vpack.c.b16 %v5955, %v5948
        %v6313 = vpack.c.b16 %v5956, %v5949
        %v6314 = vpack.c.b16 %v5957, %v5950
        %v6315 = vpack.c.b16 %v5965, %v5958
        %v6316 = vpack.c.b16 %v5966, %v5959
        %v6317 = vpack.c.b16 %v5967, %v5960
        %v6318 = vpack.c.b16 %v5968, %v5961
        %v6319 = vpack.c.b16 %v5969, %v5962
        %v6320 = vpack.c.b16 %v5970, %v5963
        %v6321 = vpack.c.b16 %v5971, %v5964
        %v6322 = vpack.c.b16 %v5979, %v5972
        %v6323 = vpack.c.b16 %v5980, %v5973
        %v6324 = vpack.c.b16 %v5981, %v5974
        %v6325 = vpack.c.b16 %v5982, %v5975
        %v6326 = vpack.c.b16 %v5983, %v5976
        %v6327 = vpack.c.b16 %v5984, %v5977
        %v6328 = vpack.c.b16 %v5985, %v5978
        %v6329 = vpack.c.b16 %v5993, %v5986
        %v6330 = vpack.c.b16 %v5994, %v5987
        %v6331 = vpack.c.b16 %v5995, %v5988
        %v6332 = vpack.c.b16 %v5996, %v5989
        %v6333 = vpack.c.b16 %v5997, %v5990
        %v6334 = vpack.c.b16 %v5998, %v5991
        %v6335 = vpack.c.b16 %v5999, %v5992
        %v6336 = vpack.c.b16 %v6007, %v6000
        %v6337 = vpack.c.b16 %v6008, %v6001
        %v6338 = vpack.c.b16 %v6009, %v6002
        %v6339 = vpack.c.b16 %v6010, %v6003
        %v6340 = vpack.c.b16 %v6011, %v6004
        %v6341 = vpack.c.b16 %v6012, %v6005
        %v6342 = vpack.c.b16 %v6013, %v6006
        %v6343 = vpack.c.b16 %v6021, %v6014
        %v6344 = vpack.c.b16 %v6022, %v6015
        %v6345 = vpack.c.b16 %v6023, %v6016
        %v6346 = vpack.c.b16 %v6024, %v6017
        %v6347 = vpack.c.b16 %v6025, %v6018
        %v6348 = vpack.c.b16 %v6026, %v6019
        %v6349 = vpack.c.b16 %v6027, %v6020
        %v6350 = vpack.c.b16 %v6035, %v6028
        %v6351 = vpack.c.b16 %v6036, %v6029
        %v6352 = vpack.c.b16 %v6037, %v6030
        %v6353 = vpack.c.b16 %v6038, %v6031
        %v6354 = vpack.c.b16 %v6039, %v6032
        %v6355 = vpack.c.b16 %v6040, %v6033
        %v6356 = vpack.c.b16 %v6041, %v6034
        %v6357 = vpack.c.b16 %v6049, %v6042
        %v6358 = vpack.c.b16 %v6050, %v6043
        %v6359 = vpack.c.b16 %v6051, %v6044
        %v6360 = vpack.c.b16 %v6052, %v6045
        %v6361 = vpack.c.b16 %v6053, %v6046
        %v6362 = vpack.c.b16 %v6054, %v6047
        %v6363 = vpack.c.b16 %v6055, %v6048
        %v6364 = vpack.c.b16 %v6063, %v6056
        %v6365 = vpack.c.b16 %v6064, %v6057
        %v6366 = vpack.c.b16 %v6065, %v6058
        %v6367 = vpack.c.b16 %v6066, %v6059
        %v6368 = vpack.c.b16 %v6067, %v6060
        %v6369 = vpack.c.b16 %v6068, %v6061
        %v6370 = vpack.c.b16 %v6069, %v6062
        %v6371 = vpack.c.b16 %v6077, %v6070
        %v6372 = vpack.c.b16 %v6078, %v6071
        %v6373 = vpack.c.b16 %v6079, %v6072
        %v6374 = vpack.c.b16 %v6080, %v6073
        %v6375 = vpack.c.b16 %v6081, %v6074
        %v6376 = vpack.c.b16 %v6082, %v6075
        %v6377 = vpack.c.b16 %v6083, %v6076
        %v6378 = vpack.c.b16 %v6091, %v6084
        %v6379 = vpack.c.b16 %v6092, %v6085
        %v6380 = vpack.c.b16 %v6093, %v6086
        %v6381 = vpack.c.b16 %v6094, %v6087
        %v6382 = vpack.c.b16 %v6095, %v6088
        %v6383 = vpack.c.b16 %v6096, %v6089
        %v6384 = vpack.c.b16 %v6097, %v6090
        %v6385 = vpack.c.b16 %v6105, %v6098
        %v6386 = vpack.c.b16 %v6106, %v6099
        %v6387 = vpack.c.b16 %v6107, %v6100
        %v6388 = vpack.c.b16 %v6108, %v6101
        %v6389 = vpack.c.b16 %v6109, %v6102
        %v6390 = vpack.c.b16 %v6110, %v6103
        %v6391 = vpack.c.b16 %v6111, %v6104
        %v6392 = vpack.c.b16 %v6119, %v6112
        %v6393 = vpack.c.b16 %v6120, %v6113
        %v6394 = vpack.c.b16 %v6121, %v6114
        %v6395 = vpack.c.b16 %v6122, %v6115
        %v6396 = vpack.c.b16 %v6123, %v6116
        %v6397 = vpack.c.b16 %v6124, %v6117
        %v6398 = vpack.c.b16 %v6125, %v6118
        %v6399 = vpack.c.b16 %v6133, %v6126
        %v6400 = vpack.c.b16 %v6134, %v6127
        %v6401 = vpack.c.b16 %v6135, %v6128
        %v6402 = vpack.c.b16 %v6136, %v6129
        %v6403 = vpack.c.b16 %v6137, %v6130
        %v6404 = vpack.c.b16 %v6138, %v6131
        %v6405 = vpack.c.b16 %v6139, %v6132
        %v6406 = vpack.c.b16 %v6147, %v6140
        %v6407 = vpack.c.b16 %v6148, %v6141
        %v6408 = vpack.c.b16 %v6149, %v6142
        %v6409 = vpack.c.b16 %v6150, %v6143
        %v6410 = vpack.c.b16 %v6151, %v6144
        %v6411 = vpack.c.b16 %v6152, %v6145
        %v6412 = vpack.c.b16 %v6153, %v6146
        %v6413 = vpack.c.b16 %v6161, %v6154
        %v6414 = vpack.c.b16 %v6162, %v6155
        %v6415 = vpack.c.b16 %v6163, %v6156
        %v6416 = vpack.c.b16 %v6164, %v6157
        %v6417 = vpack.c.b16 %v6165, %v6158
        %v6418 = vpack.c.b16 %v6166, %v6159
        %v6419 = vpack.c.b16 %v6167, %v6160
        %v6420 = vpack.c.b16 %v6175, %v6168
        %v6421 = vpack.c.b16 %v6176, %v6169
        %v6422 = vpack.c.b16 %v6177, %v6170
        %v6423 = vpack.c.b16 %v6178, %v6171
        %v6424 = vpack.c.b16 %v6179, %v6172
        %v6425 = vpack.c.b16 %v6180, %v6173
        %v6426 = vpack.c.b16 %v6181, %v6174
        %v6427 = vpack.c.b16 %v6189, %v6182
        %v6428 = vpack.c.b16 %v6190, %v6183
        %v6429 = vpack.c.b16 %v6191, %v6184
        %v6430 = vpack.c.b16 %v6192, %v6185
        %v6431 = vpack.c.b16 %v6193, %v6186
        %v6432 = vpack.c.b16 %v6194, %v6187
        %v6433 = vpack.c.b16 %v6195, %v6188
        %v6434 = vpack.c.b16 %v6203, %v6196
        %v6435 = vpack.c.b16 %v6204, %v6197
        %v6436 = vpack.c.b16 %v6205, %v6198
        %v6437 = vpack.c.b16 %v6206, %v6199
        %v6438 = vpack.c.b16 %v6207, %v6200
        %v6439 = vpack.c.b16 %v6208, %v6201
        %v6440 = vpack.c.b16 %v6209, %v6202
        %v6441 = vpack.c.b16 %v6217, %v6210
        %v6442 = vpack.c.b16 %v6218, %v6211
        %v6443 = vpack.c.b16 %v6219, %v6212
        %v6444 = vpack.c.b16 %v6220, %v6213
        %v6445 = vpack.c.b16 %v6221, %v6214
        %v6446 = vpack.c.b16 %v6222, %v6215
        %v6447 = vpack.c.b16 %v6223, %v6216
        %6672 = vmatprep.subr.bf16.mxu0 %v6225
        %6673 = vmatpush1.bf16.msra.mxu0 %v6224
        %6674 = vmatprep.subr.bf16.mxu0 %v6232
        %6675 = vmatpush1.bf16.msra.mxu0 %v6231
        %6676 = vmatprep.subr.bf16.mxu0 %v6239
        %6677 = vmatpush1.bf16.msra.mxu0 %v6238
        %6678 = vmatprep.subr.bf16.mxu0 %v6246
        %6679 = vmatpush1.bf16.msra.mxu0 %v6245
        %6680 = vmatprep.subr.bf16.mxu0 %v6253
        %6681 = vmatpush1.bf16.msra.mxu0 %v6252
        %6682 = vmatprep.subr.bf16.mxu0 %v6260
        %6683 = vmatpush1.bf16.msra.mxu0 %v6259
        %6684 = vmatprep.subr.bf16.mxu0 %v6267
        %6685 = vmatpush1.bf16.msra.mxu0 %v6266
        %6686 = vmatprep.subr.bf16.mxu0 %v6274
        %6687 = vmatpush1.bf16.msra.mxu0 %v6273
        %6688 = vmatprep.subr.bf16.mxu0 %v6281
        %6689 = vmatpush1.bf16.msra.mxu0 %v6280
        %6690 = vmatprep.subr.bf16.mxu0 %v6288
        %6691 = vmatpush1.bf16.msra.mxu0 %v6287
        %6692 = vmatprep.subr.bf16.mxu0 %v6295
        %6693 = vmatpush1.bf16.msra.mxu0 %v6294
        %6694 = vmatprep.subr.bf16.mxu0 %v6302
        %6695 = vmatpush1.bf16.msra.mxu0 %v6301
        %6696 = vmatprep.subr.bf16.mxu0 %v6309
        %6697 = vmatpush1.bf16.msra.mxu0 %v6308
        %6698 = vmatprep.subr.bf16.mxu0 %v6316
        %6699 = vmatpush1.bf16.msra.mxu0 %v6315
        %6700 = vmatprep.subr.bf16.mxu0 %v6323
        %6701 = vmatpush1.bf16.msra.mxu0 %v6322
        %6702 = vmatprep.subr.bf16.mxu0 %v6330
        %6703 = vmatpush1.bf16.msra.mxu0 %v6329
        %6704 = vmatprep.mubr.bf16.mxu0 %v5196
        %6705 = vmatmul.mubr.bf16.gmra.mrb[0].mxu0 %v5195
        %v6706 = vpop.f32.mrb[0].mxu0
        %v6707 = vadd.f32 %v5488, %v6706
        %v6708 = vpop.f32.mrb[0].mxu0
        %v6709 = vadd.f32 %v5492, %v6708
        %v6710 = vpop.f32.mrb[0].mxu0
        %v6711 = vadd.f32 %v5488, %v6710
        %v6712 = vpop.f32.mrb[0].mxu0
        %v6713 = vadd.f32 %v5492, %v6712
        %6714 = vmatprep.mubr.bf16.mxu0 %v5200
        %6715 = vmatmul.mubr.bf16.gmra.mrb[0].mxu0 %v5199
        %v6716 = vpop.f32.mrb[0].mxu0
        %v6717 = vadd.f32 %v5488, %v6716
        %v6718 = vpop.f32.mrb[0].mxu0
        %v6719 = vadd.f32 %v5492, %v6718
        %v6720 = vpop.f32.mrb[0].mxu0
        %v6721 = vadd.f32 %v5488, %v6720
        %v6722 = vpop.f32.mrb[0].mxu0
        %v6723 = vadd.f32 %v5492, %v6722
        %6724 = vmatprep.mubr.bf16.mxu0 %v5204
        %6725 = vmatmul.mubr.bf16.gmra.mrb[0].mxu0 %v5203
        %v6726 = vpop.f32.mrb[0].mxu0
        %v6727 = vadd.f32 %v5488, %v6726
        %v6728 = vpop.f32.mrb[0].mxu0
        %v6729 = vadd.f32 %v5492, %v6728
        %v6730 = vpop.f32.mrb[0].mxu0
        %v6731 = vadd.f32 %v5488, %v6730
        %v6732 = vpop.f32.mrb[0].mxu0
        %v6733 = vadd.f32 %v5492, %v6732
        %6734 = vmatprep.mubr.bf16.mxu0 %v5208
        %6735 = vmatmul.mubr.bf16.gmra.mrb[0].mxu0 %v5207
        %v6736 = vpop.f32.mrb[0].mxu0
        %v6737 = vadd.f32 %v5488, %v6736
        %v6738 = vpop.f32.mrb[0].mxu0
        %v6739 = vadd.f32 %v5492, %v6738
        %v6740 = vpop.f32.mrb[0].mxu0
        %v6741 = vadd.f32 %v5488, %v6740
        %v6742 = vpop.f32.mrb[0].mxu0
        %v6743 = vadd.f32 %v5492, %v6742
        %6744 = vmatprep.mubr.bf16.mxu0 %v5212
        %6745 = vmatmul.mubr.bf16.gmra.mrb[0].mxu0 %v5211
        %v6746 = vpop.f32.mrb[0].mxu0
        %v6747 = vadd.f32 %v5488, %v6746
        %v6748 = vpop.f32.mrb[0].mxu0
        %v6749 = vadd.f32 %v5492, %v6748
        %v6750 = vpop.f32.mrb[0].mxu0
        %v6751 = vadd.f32 %v5488, %v6750
        %v6752 = vpop.f32.mrb[0].mxu0
        %v6753 = vadd.f32 %v5492, %v6752
        %6754 = vmatprep.mubr.bf16.mxu0 %v5216
        %6755 = vmatmul.mubr.bf16.gmra.mrb[0].mxu0 %v5215
        %v6756 = vpop.f32.mrb[0].mxu0
        %v6757 = vadd.f32 %v5488, %v6756
        %v6758 = vpop.f32.mrb[0].mxu0
        %v6759 = vadd.f32 %v5492, %v6758
        %v6760 = vpop.f32.mrb[0].mxu0
        %v6761 = vadd.f32 %v5488, %v6760
        %v6762 = vpop.f32.mrb[0].mxu0
        %v6763 = vadd.f32 %v5492, %v6762
        %6764 = vmatprep.mubr.bf16.mxu0 %v5220
        %6765 = vmatmul.mubr.bf16.gmra.mrb[0].mxu0 %v5219
        %v6766 = vpop.f32.mrb[0].mxu0
        %v6767 = vadd.f32 %v5488, %v6766
        %v6768 = vpop.f32.mrb[0].mxu0
        %v6769 = vadd.f32 %v5492, %v6768
        %v6770 = vpop.f32.mrb[0].mxu0
        %v6771 = vadd.f32 %v5488, %v6770
        %v6772 = vpop.f32.mrb[0].mxu0
        %v6773 = vadd.f32 %v5492, %v6772
        %6774 = vmatprep.mubr.bf16.mxu0 %v5224
        %6775 = vmatmul.mubr.bf16.gmra.mrb[0].mxu0 %v5223
        %v6776 = vpop.f32.mrb[0].mxu0
        %v6777 = vadd.f32 %v5488, %v6776
        %v6778 = vpop.f32.mrb[0].mxu0
        %v6779 = vadd.f32 %v5492, %v6778
        %v6780 = vpop.f32.mrb[0].mxu0
        %v6781 = vadd.f32 %v5488, %v6780
        %v6782 = vpop.f32.mrb[0].mxu0
        %v6783 = vadd.f32 %v5492, %v6782
        %6784 = vdwg.mxu0
        %6785 = vmatprep.subr.bf16.mxu0 %v6337
        %6786 = vmatpush1.bf16.msra.mxu0 %v6336
        %6787 = vmatprep.subr.bf16.mxu0 %v6344
        %6788 = vmatpush1.bf16.msra.mxu0 %v6343
        %6789 = vmatprep.subr.bf16.mxu0 %v6351
        %6790 = vmatpush1.bf16.msra.mxu0 %v6350
        %6791 = vmatprep.subr.bf16.mxu0 %v6358
        %6792 = vmatpush1.bf16.msra.mxu0 %v6357
        %6793 = vmatprep.subr.bf16.mxu0 %v6365
        %6794 = vmatpush1.bf16.msra.mxu0 %v6364
        %6795 = vmatprep.subr.bf16.mxu0 %v6372
        %6796 = vmatpush1.bf16.msra.mxu0 %v6371
        %6797 = vmatprep.subr.bf16.mxu0 %v6379
        %6798 = vmatpush1.bf16.msra.mxu0 %v6378
        %6799 = vmatprep.subr.bf16.mxu0 %v6386
        %6800 = vmatpush1.bf16.msra.mxu0 %v6385
        %6801 = vmatprep.subr.bf16.mxu0 %v6393
        %6802 = vmatpush1.bf16.msra.mxu0 %v6392
        %6803 = vmatprep.subr.bf16.mxu0 %v6400
        %6804 = vmatpush1.bf16.msra.mxu0 %v6399
        %6805 = vmatprep.subr.bf16.mxu0 %v6407
        %6806 = vmatpush1.bf16.msra.mxu0 %v6406
        %6807 = vmatprep.subr.bf16.mxu0 %v6414
        %6808 = vmatpush1.bf16.msra.mxu0 %v6413
        %6809 = vmatprep.subr.bf16.mxu0 %v6421
        %6810 = vmatpush1.bf16.msra.mxu0 %v6420
        %6811 = vmatprep.subr.bf16.mxu0 %v6428
        %6812 = vmatpush1.bf16.msra.mxu0 %v6427
        %6813 = vmatprep.subr.bf16.mxu0 %v6435
        %6814 = vmatpush1.bf16.msra.mxu0 %v6434
        %6815 = vmatprep.subr.bf16.mxu0 %v6442
        %6816 = vmatpush1.bf16.msra.mxu0 %v6441
        %6817 = vmatprep.mubr.bf16.mxu0 %v5198
        %6818 = vmatmul.mubr.bf16.gmra.mrb[0].mxu0 %v5197
        %v6819 = vpop.f32.mrb[0].mxu0
        %v6820 = vadd.f32 %v6707, %v6819
        %v6821 = vpop.f32.mrb[0].mxu0
        %v6822 = vadd.f32 %v6709, %v6821
        %v6823 = vpop.f32.mrb[0].mxu0
        %v6824 = vadd.f32 %v6711, %v6823
        %v6825 = vpop.f32.mrb[0].mxu0
        %v6826 = vadd.f32 %v6713, %v6825
        %6827 = vmatprep.mubr.bf16.mxu0 %v5202
        %6828 = vmatmul.mubr.bf16.gmra.mrb[0].mxu0 %v5201
        %v6829 = vpop.f32.mrb[0].mxu0
        %v6830 = vadd.f32 %v6717, %v6829
        %v6831 = vpop.f32.mrb[0].mxu0
        %v6832 = vadd.f32 %v6719, %v6831
        %v6833 = vpop.f32.mrb[0].mxu0
        %v6834 = vadd.f32 %v6721, %v6833
        %v6835 = vpop.f32.mrb[0].mxu0
        %v6836 = vadd.f32 %v6723, %v6835
        %6837 = vmatprep.mubr.bf16.mxu0 %v5206
        %6838 = vmatmul.mubr.bf16.gmra.mrb[0].mxu0 %v5205
        %v6839 = vpop.f32.mrb[0].mxu0
        %v6840 = vadd.f32 %v6727, %v6839
        %v6841 = vpop.f32.mrb[0].mxu0
        %v6842 = vadd.f32 %v6729, %v6841
        %v6843 = vpop.f32.mrb[0].mxu0
        %v6844 = vadd.f32 %v6731, %v6843
        %v6845 = vpop.f32.mrb[0].mxu0
        %v6846 = vadd.f32 %v6733, %v6845
        %6847 = vmatprep.mubr.bf16.mxu0 %v5210
        %6848 = vmatmul.mubr.bf16.gmra.mrb[0].mxu0 %v5209
        %v6849 = vpop.f32.mrb[0].mxu0
        %v6850 = vadd.f32 %v6737, %v6849
        %v6851 = vpop.f32.mrb[0].mxu0
        %v6852 = vadd.f32 %v6739, %v6851
        %v6853 = vpop.f32.mrb[0].mxu0
        %v6854 = vadd.f32 %v6741, %v6853
        %v6855 = vpop.f32.mrb[0].mxu0
        %v6856 = vadd.f32 %v6743, %v6855
        %6857 = vmatprep.mubr.bf16.mxu0 %v5214
        %6858 = vmatmul.mubr.bf16.gmra.mrb[0].mxu0 %v5213
        %v6859 = vpop.f32.mrb[0].mxu0
        %v6860 = vadd.f32 %v6747, %v6859
        %v6861 = vpop.f32.mrb[0].mxu0
        %v6862 = vadd.f32 %v6749, %v6861
        %v6863 = vpop.f32.mrb[0].mxu0
        %v6864 = vadd.f32 %v6751, %v6863
        %v6865 = vpop.f32.mrb[0].mxu0
        %v6866 = vadd.f32 %v6753, %v6865
        %6867 = vmatprep.mubr.bf16.mxu0 %v5218
        %6868 = vmatmul.mubr.bf16.gmra.mrb[0].mxu0 %v5217
        %v6869 = vpop.f32.mrb[0].mxu0
        %v6870 = vadd.f32 %v6757, %v6869
        %v6871 = vpop.f32.mrb[0].mxu0
        %v6872 = vadd.f32 %v6759, %v6871
        %v6873 = vpop.f32.mrb[0].mxu0
        %v6874 = vadd.f32 %v6761, %v6873
        %v6875 = vpop.f32.mrb[0].mxu0
        %v6876 = vadd.f32 %v6763, %v6875
        %6877 = vmatprep.mubr.bf16.mxu0 %v5222
        %6878 = vmatmul.mubr.bf16.gmra.mrb[0].mxu0 %v5221
        %v6879 = vpop.f32.mrb[0].mxu0
        %v6880 = vadd.f32 %v6767, %v6879
        %v6881 = vpop.f32.mrb[0].mxu0
        %v6882 = vadd.f32 %v6769, %v6881
        %v6883 = vpop.f32.mrb[0].mxu0
        %v6884 = vadd.f32 %v6771, %v6883
        %v6885 = vpop.f32.mrb[0].mxu0
        %v6886 = vadd.f32 %v6773, %v6885
        %6887 = vmatprep.mubr.bf16.mxu0 %v5226
        %6888 = vmatmul.mubr.bf16.gmra.mrb[0].mxu0 %v5225
        %v6889 = vpop.f32.mrb[0].mxu0
        %v6890 = vadd.f32 %v6777, %v6889
        %v6891 = vpop.f32.mrb[0].mxu0
        %v6892 = vadd.f32 %v6779, %v6891
        %v6893 = vpop.f32.mrb[0].mxu0
        %v6894 = vadd.f32 %v6781, %v6893
        %v6895 = vpop.f32.mrb[0].mxu0
        %v6896 = vadd.f32 %v6783, %v6895
        %6897 = vdwg.mxu0
        %6898 = vmatprep.subr.bf16.mxu0 %v6227
        %6899 = vmatpush1.bf16.msra.mxu0 %v6226
        %6900 = vmatprep.subr.bf16.mxu0 %v6234
        %6901 = vmatpush1.bf16.msra.mxu0 %v6233
        %6902 = vmatprep.subr.bf16.mxu0 %v6241
        %6903 = vmatpush1.bf16.msra.mxu0 %v6240
        %6904 = vmatprep.subr.bf16.mxu0 %v6248
        %6905 = vmatpush1.bf16.msra.mxu0 %v6247
        %6906 = vmatprep.subr.bf16.mxu0 %v6255
        %6907 = vmatpush1.bf16.msra.mxu0 %v6254
        %6908 = vmatprep.subr.bf16.mxu0 %v6262
        %6909 = vmatpush1.bf16.msra.mxu0 %v6261
        %6910 = vmatprep.subr.bf16.mxu0 %v6269
        %6911 = vmatpush1.bf16.msra.mxu0 %v6268
        %6912 = vmatprep.subr.bf16.mxu0 %v6276
        %6913 = vmatpush1.bf16.msra.mxu0 %v6275
        %6914 = vmatprep.subr.bf16.mxu0 %v6283
        %6915 = vmatpush1.bf16.msra.mxu0 %v6282
        %6916 = vmatprep.subr.bf16.mxu0 %v6290
        %6917 = vmatpush1.bf16.msra.mxu0 %v6289
        %6918 = vmatprep.subr.bf16.mxu0 %v6297
        %6919 = vmatpush1.bf16.msra.mxu0 %v6296
        %6920 = vmatprep.subr.bf16.mxu0 %v6304
        %6921 = vmatpush1.bf16.msra.mxu0 %v6303
        %6922 = vmatprep.subr.bf16.mxu0 %v6311
        %6923 = vmatpush1.bf16.msra.mxu0 %v6310
        %6924 = vmatprep.subr.bf16.mxu0 %v6318
        %6925 = vmatpush1.bf16.msra.mxu0 %v6317
        %6926 = vmatprep.subr.bf16.mxu0 %v6325
        %6927 = vmatpush1.bf16.msra.mxu0 %v6324
        %6928 = vmatprep.subr.bf16.mxu0 %v6332
        %6929 = vmatpush1.bf16.msra.mxu0 %v6331
        %6930 = vmatprep.mubr.bf16.mxu0 %v5196
        %6931 = vmatmul.mubr.bf16.gmra.mrb[0].mxu0 %v5195
        %v6932 = vpop.f32.mrb[0].mxu0
        %v6933 = vadd.f32 %v5496, %v6932
        %v6934 = vpop.f32.mrb[0].mxu0
        %v6935 = vadd.f32 %v5500, %v6934
        %v6936 = vpop.f32.mrb[0].mxu0
        %v6937 = vadd.f32 %v5496, %v6936
        %v6938 = vpop.f32.mrb[0].mxu0
        %v6939 = vadd.f32 %v5500, %v6938
        %6940 = vmatprep.mubr.bf16.mxu0 %v5200
        %6941 = vmatmul.mubr.bf16.gmra.mrb[0].mxu0 %v5199
        %v6942 = vpop.f32.mrb[0].mxu0
        %v6943 = vadd.f32 %v5496, %v6942
        %v6944 = vpop.f32.mrb[0].mxu0
        %v6945 = vadd.f32 %v5500, %v6944
        %v6946 = vpop.f32.mrb[0].mxu0
        %v6947 = vadd.f32 %v5496, %v6946
        %v6948 = vpop.f32.mrb[0].mxu0
        %v6949 = vadd.f32 %v5500, %v6948
        %6950 = vmatprep.mubr.bf16.mxu0 %v5204
        %6951 = vmatmul.mubr.bf16.gmra.mrb[0].mxu0 %v5203
        %v6952 = vpop.f32.mrb[0].mxu0
        %v6953 = vadd.f32 %v5496, %v6952
        %v6954 = vpop.f32.mrb[0].mxu0
        %v6955 = vadd.f32 %v5500, %v6954
        %v6956 = vpop.f32.mrb[0].mxu0
        %v6957 = vadd.f32 %v5496, %v6956
        %v6958 = vpop.f32.mrb[0].mxu0
        %v6959 = vadd.f32 %v5500, %v6958
        %6960 = vmatprep.mubr.bf16.mxu0 %v5208
        %6961 = vmatmul.mubr.bf16.gmra.mrb[0].mxu0 %v5207
        %v6962 = vpop.f32.mrb[0].mxu0
        %v6963 = vadd.f32 %v5496, %v6962
        %v6964 = vpop.f32.mrb[0].mxu0
        %v6965 = vadd.f32 %v5500, %v6964
        %v6966 = vpop.f32.mrb[0].mxu0
        %v6967 = vadd.f32 %v5496, %v6966
        %v6968 = vpop.f32.mrb[0].mxu0
        %v6969 = vadd.f32 %v5500, %v6968
        %6970 = vmatprep.mubr.bf16.mxu0 %v5212
        %6971 = vmatmul.mubr.bf16.gmra.mrb[0].mxu0 %v5211
        %v6972 = vpop.f32.mrb[0].mxu0
        %v6973 = vadd.f32 %v5496, %v6972
        %v6974 = vpop.f32.mrb[0].mxu0
        %v6975 = vadd.f32 %v5500, %v6974
        %v6976 = vpop.f32.mrb[0].mxu0
        %v6977 = vadd.f32 %v5496, %v6976
        %v6978 = vpop.f32.mrb[0].mxu0
        %v6979 = vadd.f32 %v5500, %v6978
        %6980 = vmatprep.mubr.bf16.mxu0 %v5216
        %6981 = vmatmul.mubr.bf16.gmra.mrb[0].mxu0 %v5215
        %v6982 = vpop.f32.mrb[0].mxu0
        %v6983 = vadd.f32 %v5496, %v6982
        %v6984 = vpop.f32.mrb[0].mxu0
        %v6985 = vadd.f32 %v5500, %v6984
        %v6986 = vpop.f32.mrb[0].mxu0
        %v6987 = vadd.f32 %v5496, %v6986
        %v6988 = vpop.f32.mrb[0].mxu0
        %v6989 = vadd.f32 %v5500, %v6988
        %6990 = vmatprep.mubr.bf16.mxu0 %v5220
        %6991 = vmatmul.mubr.bf16.gmra.mrb[0].mxu0 %v5219
        %v6992 = vpop.f32.mrb[0].mxu0
        %v6993 = vadd.f32 %v5496, %v6992
        %v6994 = vpop.f32.mrb[0].mxu0
        %v6995 = vadd.f32 %v5500, %v6994
        %v6996 = vpop.f32.mrb[0].mxu0
        %v6997 = vadd.f32 %v5496, %v6996
        %v6998 = vpop.f32.mrb[0].mxu0
        %v6999 = vadd.f32 %v5500, %v6998
        %7000 = vmatprep.mubr.bf16.mxu0 %v5224
        %7001 = vmatmul.mubr.bf16.gmra.mrb[0].mxu0 %v5223
        %v7002 = vpop.f32.mrb[0].mxu0
        %v7003 = vadd.f32 %v5496, %v7002
        %v7004 = vpop.f32.mrb[0].mxu0
        %v7005 = vadd.f32 %v5500, %v7004
        %v7006 = vpop.f32.mrb[0].mxu0
        %v7007 = vadd.f32 %v5496, %v7006
        %v7008 = vpop.f32.mrb[0].mxu0
        %v7009 = vadd.f32 %v5500, %v7008
        %7010 = vdwg.mxu0
        %7011 = vmatprep.subr.bf16.mxu0 %v6339
        %7012 = vmatpush1.bf16.msra.mxu0 %v6338
        %7013 = vmatprep.subr.bf16.mxu0 %v6346
        %7014 = vmatpush1.bf16.msra.mxu0 %v6345
        %7015 = vmatprep.subr.bf16.mxu0 %v6353
        %7016 = vmatpush1.bf16.msra.mxu0 %v6352
        %7017 = vmatprep.subr.bf16.mxu0 %v6360
        %7018 = vmatpush1.bf16.msra.mxu0 %v6359
        %7019 = vmatprep.subr.bf16.mxu0 %v6367
        %7020 = vmatpush1.bf16.msra.mxu0 %v6366
        %7021 = vmatprep.subr.bf16.mxu0 %v6374
        %7022 = vmatpush1.bf16.msra.mxu0 %v6373
        %7023 = vmatprep.subr.bf16.mxu0 %v6381
        %7024 = vmatpush1.bf16.msra.mxu0 %v6380
        %7025 = vmatprep.subr.bf16.mxu0 %v6388
        %7026 = vmatpush1.bf16.msra.mxu0 %v6387
        %7027 = vmatprep.subr.bf16.mxu0 %v6395
        %7028 = vmatpush1.bf16.msra.mxu0 %v6394
        %7029 = vmatprep.subr.bf16.mxu0 %v6402
        %7030 = vmatpush1.bf16.msra.mxu0 %v6401
        %7031 = vmatprep.subr.bf16.mxu0 %v6409
        %7032 = vmatpush1.bf16.msra.mxu0 %v6408
        %7033 = vmatprep.subr.bf16.mxu0 %v6416
        %7034 = vmatpush1.bf16.msra.mxu0 %v6415
        %7035 = vmatprep.subr.bf16.mxu0 %v6423
        %7036 = vmatpush1.bf16.msra.mxu0 %v6422
        %7037 = vmatprep.subr.bf16.mxu0 %v6430
        %7038 = vmatpush1.bf16.msra.mxu0 %v6429
        %7039 = vmatprep.subr.bf16.mxu0 %v6437
        %7040 = vmatpush1.bf16.msra.mxu0 %v6436
        %7041 = vmatprep.subr.bf16.mxu0 %v6444
        %7042 = vmatpush1.bf16.msra.mxu0 %v6443
        %7043 = vmatprep.mubr.bf16.mxu0 %v5198
        %7044 = vmatmul.mubr.bf16.gmra.mrb[0].mxu0 %v5197
        %v7045 = vpop.f32.mrb[0].mxu0
        %v7046 = vadd.f32 %v6933, %v7045
        %v7047 = vpop.f32.mrb[0].mxu0
        %v7048 = vadd.f32 %v6935, %v7047
        %v7049 = vpop.f32.mrb[0].mxu0
        %v7050 = vadd.f32 %v6937, %v7049
        %v7051 = vpop.f32.mrb[0].mxu0
        %v7052 = vadd.f32 %v6939, %v7051
        %7053 = vmatprep.mubr.bf16.mxu0 %v5202
        %7054 = vmatmul.mubr.bf16.gmra.mrb[0].mxu0 %v5201
        %v7055 = vpop.f32.mrb[0].mxu0
        %v7056 = vadd.f32 %v6943, %v7055
        %v7057 = vpop.f32.mrb[0].mxu0
        %v7058 = vadd.f32 %v6945, %v7057
        %v7059 = vpop.f32.mrb[0].mxu0
        %v7060 = vadd.f32 %v6947, %v7059
        %v7061 = vpop.f32.mrb[0].mxu0
        %v7062 = vadd.f32 %v6949, %v7061
        %7063 = vmatprep.mubr.bf16.mxu0 %v5206
        %7064 = vmatmul.mubr.bf16.gmra.mrb[0].mxu0 %v5205
        %v7065 = vpop.f32.mrb[0].mxu0
        %v7066 = vadd.f32 %v6953, %v7065
        %v7067 = vpop.f32.mrb[0].mxu0
        %v7068 = vadd.f32 %v6955, %v7067
        %v7069 = vpop.f32.mrb[0].mxu0
        %v7070 = vadd.f32 %v6957, %v7069
        %v7071 = vpop.f32.mrb[0].mxu0
        %v7072 = vadd.f32 %v6959, %v7071
        %7073 = vmatprep.mubr.bf16.mxu0 %v5210
        %7074 = vmatmul.mubr.bf16.gmra.mrb[0].mxu0 %v5209
        %v7075 = vpop.f32.mrb[0].mxu0
        %v7076 = vadd.f32 %v6963, %v7075
        %v7077 = vpop.f32.mrb[0].mxu0
        %v7078 = vadd.f32 %v6965, %v7077
        %v7079 = vpop.f32.mrb[0].mxu0
        %v7080 = vadd.f32 %v6967, %v7079
        %v7081 = vpop.f32.mrb[0].mxu0
        %v7082 = vadd.f32 %v6969, %v7081
        %7083 = vmatprep.mubr.bf16.mxu0 %v5214
        %7084 = vmatmul.mubr.bf16.gmra.mrb[0].mxu0 %v5213
        %v7085 = vpop.f32.mrb[0].mxu0
        %v7086 = vadd.f32 %v6973, %v7085
        %v7087 = vpop.f32.mrb[0].mxu0
        %v7088 = vadd.f32 %v6975, %v7087
        %v7089 = vpop.f32.mrb[0].mxu0
        %v7090 = vadd.f32 %v6977, %v7089
        %v7091 = vpop.f32.mrb[0].mxu0
        %v7092 = vadd.f32 %v6979, %v7091
        %7093 = vmatprep.mubr.bf16.mxu0 %v5218
        %7094 = vmatmul.mubr.bf16.gmra.mrb[0].mxu0 %v5217
        %v7095 = vpop.f32.mrb[0].mxu0
        %v7096 = vadd.f32 %v6983, %v7095
        %v7097 = vpop.f32.mrb[0].mxu0
        %v7098 = vadd.f32 %v6985, %v7097
        %v7099 = vpop.f32.mrb[0].mxu0
        %v7100 = vadd.f32 %v6987, %v7099
        %v7101 = vpop.f32.mrb[0].mxu0
        %v7102 = vadd.f32 %v6989, %v7101
        %7103 = vmatprep.mubr.bf16.mxu0 %v5222
        %7104 = vmatmul.mubr.bf16.gmra.mrb[0].mxu0 %v5221
        %v7105 = vpop.f32.mrb[0].mxu0
        %v7106 = vadd.f32 %v6993, %v7105
        %v7107 = vpop.f32.mrb[0].mxu0
        %v7108 = vadd.f32 %v6995, %v7107
        %v7109 = vpop.f32.mrb[0].mxu0
        %v7110 = vadd.f32 %v6997, %v7109
        %v7111 = vpop.f32.mrb[0].mxu0
        %v7112 = vadd.f32 %v6999, %v7111
        %7113 = vmatprep.mubr.bf16.mxu0 %v5226
        %7114 = vmatmul.mubr.bf16.gmra.mrb[0].mxu0 %v5225
        %v7115 = vpop.f32.mrb[0].mxu0
        %v7116 = vadd.f32 %v7003, %v7115
        %v7117 = vpop.f32.mrb[0].mxu0
        %v7118 = vadd.f32 %v7005, %v7117
        %v7119 = vpop.f32.mrb[0].mxu0
        %v7120 = vadd.f32 %v7007, %v7119
        %v7121 = vpop.f32.mrb[0].mxu0
        %v7122 = vadd.f32 %v7009, %v7121
        %7123 = vdwg.mxu0
        %7124 = vmatprep.subr.bf16.mxu0 %v6229
        %7125 = vmatpush1.bf16.msra.mxu0 %v6228
        %7126 = vmatprep.subr.bf16.mxu0 %v6236
        %7127 = vmatpush1.bf16.msra.mxu0 %v6235
        %7128 = vmatprep.subr.bf16.mxu0 %v6243
        %7129 = vmatpush1.bf16.msra.mxu0 %v6242
        %7130 = vmatprep.subr.bf16.mxu0 %v6250
        %7131 = vmatpush1.bf16.msra.mxu0 %v6249
        %7132 = vmatprep.subr.bf16.mxu0 %v6257
        %7133 = vmatpush1.bf16.msra.mxu0 %v6256
        %7134 = vmatprep.subr.bf16.mxu0 %v6264
        %7135 = vmatpush1.bf16.msra.mxu0 %v6263
        %7136 = vmatprep.subr.bf16.mxu0 %v6271
        %7137 = vmatpush1.bf16.msra.mxu0 %v6270
        %7138 = vmatprep.subr.bf16.mxu0 %v6278
        %7139 = vmatpush1.bf16.msra.mxu0 %v6277
        %7140 = vmatprep.subr.bf16.mxu0 %v6285
        %7141 = vmatpush1.bf16.msra.mxu0 %v6284
        %7142 = vmatprep.subr.bf16.mxu0 %v6292
        %7143 = vmatpush1.bf16.msra.mxu0 %v6291
        %7144 = vmatprep.subr.bf16.mxu0 %v6299
        %7145 = vmatpush1.bf16.msra.mxu0 %v6298
        %7146 = vmatprep.subr.bf16.mxu0 %v6306
        %7147 = vmatpush1.bf16.msra.mxu0 %v6305
        %7148 = vmatprep.subr.bf16.mxu0 %v6313
        %7149 = vmatpush1.bf16.msra.mxu0 %v6312
        %7150 = vmatprep.subr.bf16.mxu0 %v6320
        %7151 = vmatpush1.bf16.msra.mxu0 %v6319
        %7152 = vmatprep.subr.bf16.mxu0 %v6327
        %7153 = vmatpush1.bf16.msra.mxu0 %v6326
        %7154 = vmatprep.subr.bf16.mxu0 %v6334
        %7155 = vmatpush1.bf16.msra.mxu0 %v6333
        %7156 = vmatprep.mubr.bf16.mxu0 %v5196
        %7157 = vmatmul.mubr.bf16.gmra.mrb[0].mxu0 %v5195
        %v7158 = vpop.f32.mrb[0].mxu0
        %v7159 = vadd.f32 %v5504, %v7158
        %v7160 = vpop.f32.mrb[0].mxu0
        %v7161 = vadd.f32 %v5508, %v7160
        %v7162 = vpop.f32.mrb[0].mxu0
        %v7163 = vadd.f32 %v5504, %v7162
        %v7164 = vpop.f32.mrb[0].mxu0
        %v7165 = vadd.f32 %v5508, %v7164
        %7166 = vmatprep.mubr.bf16.mxu0 %v5200
        %7167 = vmatmul.mubr.bf16.gmra.mrb[0].mxu0 %v5199
        %v7168 = vpop.f32.mrb[0].mxu0
        %v7169 = vadd.f32 %v5504, %v7168
        %v7170 = vpop.f32.mrb[0].mxu0
        %v7171 = vadd.f32 %v5508, %v7170
        %v7172 = vpop.f32.mrb[0].mxu0
        %v7173 = vadd.f32 %v5504, %v7172
        %v7174 = vpop.f32.mrb[0].mxu0
        %v7175 = vadd.f32 %v5508, %v7174
        %7176 = vmatprep.mubr.bf16.mxu0 %v5204
        %7177 = vmatmul.mubr.bf16.gmra.mrb[0].mxu0 %v5203
        %v7178 = vpop.f32.mrb[0].mxu0
        %v7179 = vadd.f32 %v5504, %v7178
        %v7180 = vpop.f32.mrb[0].mxu0
        %v7181 = vadd.f32 %v5508, %v7180
        %v7182 = vpop.f32.mrb[0].mxu0
        %v7183 = vadd.f32 %v5504, %v7182
        %v7184 = vpop.f32.mrb[0].mxu0
        %v7185 = vadd.f32 %v5508, %v7184
        %7186 = vmatprep.mubr.bf16.mxu0 %v5208
        %7187 = vmatmul.mubr.bf16.gmra.mrb[0].mxu0 %v5207
        %v7188 = vpop.f32.mrb[0].mxu0
        %v7189 = vadd.f32 %v5504, %v7188
        %v7190 = vpop.f32.mrb[0].mxu0
        %v7191 = vadd.f32 %v5508, %v7190
        %v7192 = vpop.f32.mrb[0].mxu0
        %v7193 = vadd.f32 %v5504, %v7192
        %v7194 = vpop.f32.mrb[0].mxu0
        %v7195 = vadd.f32 %v5508, %v7194
        %7196 = vmatprep.mubr.bf16.mxu0 %v5212
        %7197 = vmatmul.mubr.bf16.gmra.mrb[0].mxu0 %v5211
        %v7198 = vpop.f32.mrb[0].mxu0
        %v7199 = vadd.f32 %v5504, %v7198
        %v7200 = vpop.f32.mrb[0].mxu0
        %v7201 = vadd.f32 %v5508, %v7200
        %v7202 = vpop.f32.mrb[0].mxu0
        %v7203 = vadd.f32 %v5504, %v7202
        %v7204 = vpop.f32.mrb[0].mxu0
        %v7205 = vadd.f32 %v5508, %v7204
        %7206 = vmatprep.mubr.bf16.mxu0 %v5216
        %7207 = vmatmul.mubr.bf16.gmra.mrb[0].mxu0 %v5215
        %v7208 = vpop.f32.mrb[0].mxu0
        %v7209 = vadd.f32 %v5504, %v7208
        %v7210 = vpop.f32.mrb[0].mxu0
        %v7211 = vadd.f32 %v5508, %v7210
        %v7212 = vpop.f32.mrb[0].mxu0
        %v7213 = vadd.f32 %v5504, %v7212
        %v7214 = vpop.f32.mrb[0].mxu0
        %v7215 = vadd.f32 %v5508, %v7214
        %7216 = vmatprep.mubr.bf16.mxu0 %v5220
        %7217 = vmatmul.mubr.bf16.gmra.mrb[0].mxu0 %v5219
        %v7218 = vpop.f32.mrb[0].mxu0
        %v7219 = vadd.f32 %v5504, %v7218
        %v7220 = vpop.f32.mrb[0].mxu0
        %v7221 = vadd.f32 %v5508, %v7220
        %v7222 = vpop.f32.mrb[0].mxu0
        %v7223 = vadd.f32 %v5504, %v7222
        %v7224 = vpop.f32.mrb[0].mxu0
        %v7225 = vadd.f32 %v5508, %v7224
        %7226 = vmatprep.mubr.bf16.mxu0 %v5224
        %7227 = vmatmul.mubr.bf16.gmra.mrb[0].mxu0 %v5223
        %v7228 = vpop.f32.mrb[0].mxu0
        %v7229 = vadd.f32 %v5504, %v7228
        %v7230 = vpop.f32.mrb[0].mxu0
        %v7231 = vadd.f32 %v5508, %v7230
        %v7232 = vpop.f32.mrb[0].mxu0
        %v7233 = vadd.f32 %v5504, %v7232
        %v7234 = vpop.f32.mrb[0].mxu0
        %v7235 = vadd.f32 %v5508, %v7234
        %7236 = vdwg.mxu0
        %7237 = vmatprep.subr.bf16.mxu0 %v6341
        %7238 = vmatpush1.bf16.msra.mxu0 %v6340
        %7239 = vmatprep.subr.bf16.mxu0 %v6348
        %7240 = vmatpush1.bf16.msra.mxu0 %v6347
        %7241 = vmatprep.subr.bf16.mxu0 %v6355
        %7242 = vmatpush1.bf16.msra.mxu0 %v6354
        %7243 = vmatprep.subr.bf16.mxu0 %v6362
        %7244 = vmatpush1.bf16.msra.mxu0 %v6361
        %7245 = vmatprep.subr.bf16.mxu0 %v6369
        %7246 = vmatpush1.bf16.msra.mxu0 %v6368
        %7247 = vmatprep.subr.bf16.mxu0 %v6376
        %7248 = vmatpush1.bf16.msra.mxu0 %v6375
        %7249 = vmatprep.subr.bf16.mxu0 %v6383
        %7250 = vmatpush1.bf16.msra.mxu0 %v6382
        %7251 = vmatprep.subr.bf16.mxu0 %v6390
        %7252 = vmatpush1.bf16.msra.mxu0 %v6389
        %7253 = vmatprep.subr.bf16.mxu0 %v6397
        %7254 = vmatpush1.bf16.msra.mxu0 %v6396
        %7255 = vmatprep.subr.bf16.mxu0 %v6404
        %7256 = vmatpush1.bf16.msra.mxu0 %v6403
        %7257 = vmatprep.subr.bf16.mxu0 %v6411
        %7258 = vmatpush1.bf16.msra.mxu0 %v6410
        %7259 = vmatprep.subr.bf16.mxu0 %v6418
        %7260 = vmatpush1.bf16.msra.mxu0 %v6417
        %7261 = vmatprep.subr.bf16.mxu0 %v6425
        %7262 = vmatpush1.bf16.msra.mxu0 %v6424
        %7263 = vmatprep.subr.bf16.mxu0 %v6432
        %7264 = vmatpush1.bf16.msra.mxu0 %v6431
        %7265 = vmatprep.subr.bf16.mxu0 %v6439
        %7266 = vmatpush1.bf16.msra.mxu0 %v6438
        %7267 = vmatprep.subr.bf16.mxu0 %v6446
        %7268 = vmatpush1.bf16.msra.mxu0 %v6445
        %7269 = vmatprep.mubr.bf16.mxu0 %v5198
        %7270 = vmatmul.mubr.bf16.gmra.mrb[0].mxu0 %v5197
        %v7271 = vpop.f32.mrb[0].mxu0
        %v7272 = vadd.f32 %v7159, %v7271
        %v7273 = vpop.f32.mrb[0].mxu0
        %v7274 = vadd.f32 %v7161, %v7273
        %v7275 = vpop.f32.mrb[0].mxu0
        %v7276 = vadd.f32 %v7163, %v7275
        %v7277 = vpop.f32.mrb[0].mxu0
        %v7278 = vadd.f32 %v7165, %v7277
        %7279 = vmatprep.mubr.bf16.mxu0 %v5202
        %7280 = vmatmul.mubr.bf16.gmra.mrb[0].mxu0 %v5201
        %v7281 = vpop.f32.mrb[0].mxu0
        %v7282 = vadd.f32 %v7169, %v7281
        %v7283 = vpop.f32.mrb[0].mxu0
        %v7284 = vadd.f32 %v7171, %v7283
        %v7285 = vpop.f32.mrb[0].mxu0
        %v7286 = vadd.f32 %v7173, %v7285
        %v7287 = vpop.f32.mrb[0].mxu0
        %v7288 = vadd.f32 %v7175, %v7287
        %7289 = vmatprep.mubr.bf16.mxu0 %v5206
        %7290 = vmatmul.mubr.bf16.gmra.mrb[0].mxu0 %v5205
        %v7291 = vpop.f32.mrb[0].mxu0
        %v7292 = vadd.f32 %v7179, %v7291
        %v7293 = vpop.f32.mrb[0].mxu0
        %v7294 = vadd.f32 %v7181, %v7293
        %v7295 = vpop.f32.mrb[0].mxu0
        %v7296 = vadd.f32 %v7183, %v7295
        %v7297 = vpop.f32.mrb[0].mxu0
        %v7298 = vadd.f32 %v7185, %v7297
        %7299 = vmatprep.mubr.bf16.mxu0 %v5210
        %7300 = vmatmul.mubr.bf16.gmra.mrb[0].mxu0 %v5209
        %v7301 = vpop.f32.mrb[0].mxu0
        %v7302 = vadd.f32 %v7189, %v7301
        %v7303 = vpop.f32.mrb[0].mxu0
        %v7304 = vadd.f32 %v7191, %v7303
        %v7305 = vpop.f32.mrb[0].mxu0
        %v7306 = vadd.f32 %v7193, %v7305
        %v7307 = vpop.f32.mrb[0].mxu0
        %v7308 = vadd.f32 %v7195, %v7307
        %7309 = vmatprep.mubr.bf16.mxu0 %v5214
        %7310 = vmatmul.mubr.bf16.gmra.mrb[0].mxu0 %v5213
        %v7311 = vpop.f32.mrb[0].mxu0
        %v7312 = vadd.f32 %v7199, %v7311
        %v7313 = vpop.f32.mrb[0].mxu0
        %v7314 = vadd.f32 %v7201, %v7313
        %v7315 = vpop.f32.mrb[0].mxu0
        %v7316 = vadd.f32 %v7203, %v7315
        %v7317 = vpop.f32.mrb[0].mxu0
        %v7318 = vadd.f32 %v7205, %v7317
        %7319 = vmatprep.mubr.bf16.mxu0 %v5218
        %7320 = vmatmul.mubr.bf16.gmra.mrb[0].mxu0 %v5217
        %v7321 = vpop.f32.mrb[0].mxu0
        %v7322 = vadd.f32 %v7209, %v7321
        %v7323 = vpop.f32.mrb[0].mxu0
        %v7324 = vadd.f32 %v7211, %v7323
        %v7325 = vpop.f32.mrb[0].mxu0
        %v7326 = vadd.f32 %v7213, %v7325
        %v7327 = vpop.f32.mrb[0].mxu0
        %v7328 = vadd.f32 %v7215, %v7327
        %7329 = vmatprep.mubr.bf16.mxu0 %v5222
        %7330 = vmatmul.mubr.bf16.gmra.mrb[0].mxu0 %v5221
        %v7331 = vpop.f32.mrb[0].mxu0
        %v7332 = vadd.f32 %v7219, %v7331
        %v7333 = vpop.f32.mrb[0].mxu0
        %v7334 = vadd.f32 %v7221, %v7333
        %v7335 = vpop.f32.mrb[0].mxu0
        %v7336 = vadd.f32 %v7223, %v7335
        %v7337 = vpop.f32.mrb[0].mxu0
        %v7338 = vadd.f32 %v7225, %v7337
        %7339 = vmatprep.mubr.bf16.mxu0 %v5226
        %7340 = vmatmul.mubr.bf16.gmra.mrb[0].mxu0 %v5225
        %v7341 = vpop.f32.mrb[0].mxu0
        %v7342 = vadd.f32 %v7229, %v7341
        %v7343 = vpop.f32.mrb[0].mxu0
        %v7344 = vadd.f32 %v7231, %v7343
        %v7345 = vpop.f32.mrb[0].mxu0
        %v7346 = vadd.f32 %v7233, %v7345
        %v7347 = vpop.f32.mrb[0].mxu0
        %v7348 = vadd.f32 %v7235, %v7347
        %7349 = vdwg.mxu0
        %7350 = vmatprep.subr.bf16.mxu0 0
        %7351 = vmatpush1.bf16.msra.mxu0 %v6230
        %7352 = vmatprep.subr.bf16.mxu0 0
        %7353 = vmatpush1.bf16.msra.mxu0 %v6237
        %7354 = vmatprep.subr.bf16.mxu0 0
        %7355 = vmatpush1.bf16.msra.mxu0 %v6244
        %7356 = vmatprep.subr.bf16.mxu0 0
        %7357 = vmatpush1.bf16.msra.mxu0 %v6251
        %7358 = vmatprep.subr.bf16.mxu0 0
        %7359 = vmatpush1.bf16.msra.mxu0 %v6258
        %7360 = vmatprep.subr.bf16.mxu0 0
        %7361 = vmatpush1.bf16.msra.mxu0 %v6265
        %7362 = vmatprep.subr.bf16.mxu0 0
        %7363 = vmatpush1.bf16.msra.mxu0 %v6272
        %7364 = vmatprep.subr.bf16.mxu0 0
        %7365 = vmatpush1.bf16.msra.mxu0 %v6279
        %7366 = vmatprep.subr.bf16.mxu0 0
        %7367 = vmatpush1.bf16.msra.mxu0 %v6286
        %7368 = vmatprep.subr.bf16.mxu0 0
        %7369 = vmatpush1.bf16.msra.mxu0 %v6293
        %7370 = vmatprep.subr.bf16.mxu0 0
        %7371 = vmatpush1.bf16.msra.mxu0 %v6300
        %7372 = vmatprep.subr.bf16.mxu0 0
        %7373 = vmatpush1.bf16.msra.mxu0 %v6307
        %7374 = vmatprep.subr.bf16.mxu0 0
        %7375 = vmatpush1.bf16.msra.mxu0 %v6314
        %7376 = vmatprep.subr.bf16.mxu0 0
        %7377 = vmatpush1.bf16.msra.mxu0 %v6321
        %7378 = vmatprep.subr.bf16.mxu0 0
        %7379 = vmatpush1.bf16.msra.mxu0 %v6328
        %7380 = vmatprep.subr.bf16.mxu0 0
        %7381 = vmatpush1.bf16.msra.mxu0 %v6335
        %7382 = vmatprep.mubr.bf16.mxu0 %v5196
        %7383 = vmatmul.mubr.bf16.gmra.mrb[0].mxu0 %v5195
        %v7384 = vpop.f32.mrb[0].mxu0
        %v7385 = vadd.f32 %v5512, %v7384
        %v7386 = vpop.f32.mrb[0].mxu0
        %v7387 = vpop.f32.mrb[0].mxu0
        %v7388 = vadd.f32 %v5512, %v7387
        %v7389 = vpop.f32.mrb[0].mxu0
        %7390 = vmatprep.mubr.bf16.mxu0 %v5200
        %7391 = vmatmul.mubr.bf16.gmra.mrb[0].mxu0 %v5199
        %v7392 = vpop.f32.mrb[0].mxu0
        %v7393 = vadd.f32 %v5512, %v7392
        %v7394 = vpop.f32.mrb[0].mxu0
        %v7395 = vpop.f32.mrb[0].mxu0
        %v7396 = vadd.f32 %v5512, %v7395
        %v7397 = vpop.f32.mrb[0].mxu0
        %7398 = vmatprep.mubr.bf16.mxu0 %v5204
        %7399 = vmatmul.mubr.bf16.gmra.mrb[0].mxu0 %v5203
        %v7400 = vpop.f32.mrb[0].mxu0
        %v7401 = vadd.f32 %v5512, %v7400
        %v7402 = vpop.f32.mrb[0].mxu0
        %v7403 = vpop.f32.mrb[0].mxu0
        %v7404 = vadd.f32 %v5512, %v7403
        %v7405 = vpop.f32.mrb[0].mxu0
        %7406 = vmatprep.mubr.bf16.mxu0 %v5208
        %7407 = vmatmul.mubr.bf16.gmra.mrb[0].mxu0 %v5207
        %v7408 = vpop.f32.mrb[0].mxu0
        %v7409 = vadd.f32 %v5512, %v7408
        %v7410 = vpop.f32.mrb[0].mxu0
        %v7411 = vpop.f32.mrb[0].mxu0
        %v7412 = vadd.f32 %v5512, %v7411
        %v7413 = vpop.f32.mrb[0].mxu0
        %7414 = vmatprep.mubr.bf16.mxu0 %v5212
        %7415 = vmatmul.mubr.bf16.gmra.mrb[0].mxu0 %v5211
        %v7416 = vpop.f32.mrb[0].mxu0
        %v7417 = vadd.f32 %v5512, %v7416
        %v7418 = vpop.f32.mrb[0].mxu0
        %v7419 = vpop.f32.mrb[0].mxu0
        %v7420 = vadd.f32 %v5512, %v7419
        %v7421 = vpop.f32.mrb[0].mxu0
        %7422 = vmatprep.mubr.bf16.mxu0 %v5216
        %7423 = vmatmul.mubr.bf16.gmra.mrb[0].mxu0 %v5215
        %v7424 = vpop.f32.mrb[0].mxu0
        %v7425 = vadd.f32 %v5512, %v7424
        %v7426 = vpop.f32.mrb[0].mxu0
        %v7427 = vpop.f32.mrb[0].mxu0
        %v7428 = vadd.f32 %v5512, %v7427
        %v7429 = vpop.f32.mrb[0].mxu0
        %7430 = vmatprep.mubr.bf16.mxu0 %v5220
        %7431 = vmatmul.mubr.bf16.gmra.mrb[0].mxu0 %v5219
        %v7432 = vpop.f32.mrb[0].mxu0
        %v7433 = vadd.f32 %v5512, %v7432
        %v7434 = vpop.f32.mrb[0].mxu0
        %v7435 = vpop.f32.mrb[0].mxu0
        %v7436 = vadd.f32 %v5512, %v7435
        %v7437 = vpop.f32.mrb[0].mxu0
        %7438 = vmatprep.mubr.bf16.mxu0 %v5224
        %7439 = vmatmul.mubr.bf16.gmra.mrb[0].mxu0 %v5223
        %v7440 = vpop.f32.mrb[0].mxu0
        %v7441 = vadd.f32 %v5512, %v7440
        %v7442 = vpop.f32.mrb[0].mxu0
        %v7443 = vpop.f32.mrb[0].mxu0
        %v7444 = vadd.f32 %v5512, %v7443
        %v7445 = vpop.f32.mrb[0].mxu0
        %7446 = vdwg.mxu0
        %7447 = vmatprep.subr.bf16.mxu0 0
        %7448 = vmatpush1.bf16.msra.mxu0 %v6342
        %7449 = vmatprep.subr.bf16.mxu0 0
        %7450 = vmatpush1.bf16.msra.mxu0 %v6349
        %7451 = vmatprep.subr.bf16.mxu0 0
        %7452 = vmatpush1.bf16.msra.mxu0 %v6356
        %7453 = vmatprep.subr.bf16.mxu0 0
        %7454 = vmatpush1.bf16.msra.mxu0 %v6363
        %7455 = vmatprep.subr.bf16.mxu0 0
        %7456 = vmatpush1.bf16.msra.mxu0 %v6370
        %7457 = vmatprep.subr.bf16.mxu0 0
        %7458 = vmatpush1.bf16.msra.mxu0 %v6377
        %7459 = vmatprep.subr.bf16.mxu0 0
        %7460 = vmatpush1.bf16.msra.mxu0 %v6384
        %7461 = vmatprep.subr.bf16.mxu0 0
        %7462 = vmatpush1.bf16.msra.mxu0 %v6391
        %7463 = vmatprep.subr.bf16.mxu0 0
        %7464 = vmatpush1.bf16.msra.mxu0 %v6398
        %7465 = vmatprep.subr.bf16.mxu0 0
        %7466 = vmatpush1.bf16.msra.mxu0 %v6405
        %7467 = vmatprep.subr.bf16.mxu0 0
        %7468 = vmatpush1.bf16.msra.mxu0 %v6412
        %7469 = vmatprep.subr.bf16.mxu0 0
        %7470 = vmatpush1.bf16.msra.mxu0 %v6419
        %7471 = vmatprep.subr.bf16.mxu0 0
        %7472 = vmatpush1.bf16.msra.mxu0 %v6426
        %7473 = vmatprep.subr.bf16.mxu0 0
        %7474 = vmatpush1.bf16.msra.mxu0 %v6433
        %7475 = vmatprep.subr.bf16.mxu0 0
        %7476 = vmatpush1.bf16.msra.mxu0 %v6440
        %7477 = vmatprep.subr.bf16.mxu0 0
        %7478 = vmatpush1.bf16.msra.mxu0 %v6447
        %7479 = vmatprep.mubr.bf16.mxu0 %v5198
        %7480 = vmatmul.mubr.bf16.gmra.mrb[0].mxu0 %v5197
        %v7481 = vpop.f32.mrb[0].mxu0
        %v7482 = vadd.f32 %v7385, %v7481
        %v7483 = vpop.f32.mrb[0].mxu0
        %v7484 = vpop.f32.mrb[0].mxu0
        %v7485 = vadd.f32 %v7388, %v7484
        %v7486 = vpop.f32.mrb[0].mxu0
        %7487 = vmatprep.mubr.bf16.mxu0 %v5202
        %7488 = vmatmul.mubr.bf16.gmra.mrb[0].mxu0 %v5201
        %v7489 = vpop.f32.mrb[0].mxu0
        %v7490 = vadd.f32 %v7393, %v7489
        %v7491 = vpop.f32.mrb[0].mxu0
        %v7492 = vpop.f32.mrb[0].mxu0
        %v7493 = vadd.f32 %v7396, %v7492
        %v7494 = vpop.f32.mrb[0].mxu0
        %7495 = vmatprep.mubr.bf16.mxu0 %v5206
        %7496 = vmatmul.mubr.bf16.gmra.mrb[0].mxu0 %v5205
        %v7497 = vpop.f32.mrb[0].mxu0
        %v7498 = vadd.f32 %v7401, %v7497
        %v7499 = vpop.f32.mrb[0].mxu0
        %v7500 = vpop.f32.mrb[0].mxu0
        %v7501 = vadd.f32 %v7404, %v7500
        %v7502 = vpop.f32.mrb[0].mxu0
        %7503 = vmatprep.mubr.bf16.mxu0 %v5210
        %7504 = vmatmul.mubr.bf16.gmra.mrb[0].mxu0 %v5209
        %v7505 = vpop.f32.mrb[0].mxu0
        %v7506 = vadd.f32 %v7409, %v7505
        %v7507 = vpop.f32.mrb[0].mxu0
        %v7508 = vpop.f32.mrb[0].mxu0
        %v7509 = vadd.f32 %v7412, %v7508
        %v7510 = vpop.f32.mrb[0].mxu0
        %7511 = vmatprep.mubr.bf16.mxu0 %v5214
        %7512 = vmatmul.mubr.bf16.gmra.mrb[0].mxu0 %v5213
        %v7513 = vpop.f32.mrb[0].mxu0
        %v7514 = vadd.f32 %v7417, %v7513
        %v7515 = vpop.f32.mrb[0].mxu0
        %v7516 = vpop.f32.mrb[0].mxu0
        %v7517 = vadd.f32 %v7420, %v7516
        %v7518 = vpop.f32.mrb[0].mxu0
        %7519 = vmatprep.mubr.bf16.mxu0 %v5218
        %7520 = vmatmul.mubr.bf16.gmra.mrb[0].mxu0 %v5217
        %v7521 = vpop.f32.mrb[0].mxu0
        %v7522 = vadd.f32 %v7425, %v7521
        %v7523 = vpop.f32.mrb[0].mxu0
        %v7524 = vpop.f32.mrb[0].mxu0
        %v7525 = vadd.f32 %v7428, %v7524
        %v7526 = vpop.f32.mrb[0].mxu0
        %7527 = vmatprep.mubr.bf16.mxu0 %v5222
        %7528 = vmatmul.mubr.bf16.gmra.mrb[0].mxu0 %v5221
        %v7529 = vpop.f32.mrb[0].mxu0
        %v7530 = vadd.f32 %v7433, %v7529
        %v7531 = vpop.f32.mrb[0].mxu0
        %v7532 = vpop.f32.mrb[0].mxu0
        %v7533 = vadd.f32 %v7436, %v7532
        %v7534 = vpop.f32.mrb[0].mxu0
        %7535 = vmatprep.mubr.bf16.mxu0 %v5226
        %7536 = vmatmul.mubr.bf16.gmra.mrb[0].mxu0 %v5225
        %v7537 = vpop.f32.mrb[0].mxu0
        %v7538 = vadd.f32 %v7441, %v7537
        %v7539 = vpop.f32.mrb[0].mxu0
        %v7540 = vpop.f32.mrb[0].mxu0
        %v7541 = vadd.f32 %v7444, %v7540
        %v7542 = vpop.f32.mrb[0].mxu0
        %7543 = vdwg.mxu0
        %7544 = vst [vmem:[%s590] sm:$0xff] %v4160
        %7545 = vst [vmem:[%s590 + $0x8] sm:$0xff] %v4163
        %7546 = vst [vmem:[%s590 + $0x10] sm:$0xff] %v4168
        %7547 = vst [vmem:[%s590 + $0x18] sm:$0xff] %v4171
        %7548 = vst [vmem:[%s590 + $0x20] sm:$0xff] %v4176
        %7549 = vst [vmem:[%s590 + $0x28] sm:$0xff] %v4179
        %7550 = vst [vmem:[%s590 + $0x30] sm:$0xff] %v4184
        %7551 = vst [vmem:[%s590 + $0x38] sm:$0xff] %v4187
        %7552 = vst [vmem:[%s590 + $0x40] sm:$0xff] %v4192
        %7553 = vst [vmem:[%s590 + $0x48] sm:$0xff] %v4195
        %7554 = vst [vmem:[%s590 + $0x50] sm:$0xff] %v4200
        %7555 = vst [vmem:[%s590 + $0x58] sm:$0xff] %v4203
        %7556 = vst [vmem:[%s590 + $0x60] sm:$0xff] %v4208
        %7557 = vst [vmem:[%s590 + $0x68] sm:$0xff] %v4211
        %7558 = vst [vmem:[%s590 + $0x70] sm:$0xff] %v4216
        %7559 = vst [vmem:[%s590 + $0x78] sm:$0xff] %v4219
        %7560 = vst [vmem:[%s597] sm:$0xff] %v6820
        %7561 = vst [vmem:[%s597 + $0x8] sm:$0xff] %v6822
        %7562 = vst [vmem:[%s597 + $0x10] sm:$0xff] %v7046
        %7563 = vst [vmem:[%s597 + $0x18] sm:$0xff] %v7048
        %7564 = vst [vmem:[%s597 + $0x20] sm:$0xff] %v7272
        %7565 = vst [vmem:[%s597 + $0x28] sm:$0xff] %v7274
        %7566 = vst [vmem:[%s597 + $0x30] sm:$0xff] %v7482
        %7567 = vst [vmem:[%s597 + $0x38] sm:$0xff] %v6824
        %7568 = vst [vmem:[%s597 + $0x40] sm:$0xff] %v6826
        %7569 = vst [vmem:[%s597 + $0x48] sm:$0xff] %v7050
        %7570 = vst [vmem:[%s597 + $0x50] sm:$0xff] %v7052
        %7571 = vst [vmem:[%s597 + $0x58] sm:$0xff] %v7276
        %7572 = vst [vmem:[%s597 + $0x60] sm:$0xff] %v7278
        %7573 = vst [vmem:[%s597 + $0x68] sm:$0xff] %v7485
        %7574 = vst [vmem:[%s597 + $0x70] sm:$0xff] %v6830
        %7575 = vst [vmem:[%s597 + $0x78] sm:$0xff] %v6832
        %7576 = vst [vmem:[%s597 + $0x80] sm:$0xff] %v7056
        %7577 = vst [vmem:[%s597 + $0x88] sm:$0xff] %v7058
        %7578 = vst [vmem:[%s597 + $0x90] sm:$0xff] %v7282
        %7579 = vst [vmem:[%s597 + $0x98] sm:$0xff] %v7284
        %7580 = vst [vmem:[%s597 + $0xa0] sm:$0xff] %v7490
        %7581 = vst [vmem:[%s597 + $0xa8] sm:$0xff] %v6834
        %7582 = vst [vmem:[%s597 + $0xb0] sm:$0xff] %v6836
        %7583 = vst [vmem:[%s597 + $0xb8] sm:$0xff] %v7060
        %7584 = vst [vmem:[%s597 + $0xc0] sm:$0xff] %v7062
        %7585 = vst [vmem:[%s597 + $0xc8] sm:$0xff] %v7286
        %7586 = vst [vmem:[%s597 + $0xd0] sm:$0xff] %v7288
        %7587 = vst [vmem:[%s597 + $0xd8] sm:$0xff] %v7493
        %7588 = vst [vmem:[%s597 + $0xe0] sm:$0xff] %v6840
        %7589 = vst [vmem:[%s597 + $0xe8] sm:$0xff] %v6842
        %7590 = vst [vmem:[%s597 + $0xf0] sm:$0xff] %v7066
        %7591 = vst [vmem:[%s597 + $0xf8] sm:$0xff] %v7068
        %7592 = vst [vmem:[%s597 + $0x100] sm:$0xff] %v7292
        %7593 = vst [vmem:[%s597 + $0x108] sm:$0xff] %v7294
        %7594 = vst [vmem:[%s597 + $0x110] sm:$0xff] %v7498
        %7595 = vst [vmem:[%s597 + $0x118] sm:$0xff] %v6844
        %7596 = vst [vmem:[%s597 + $0x120] sm:$0xff] %v6846
        %7597 = vst [vmem:[%s597 + $0x128] sm:$0xff] %v7070
        %7598 = vst [vmem:[%s597 + $0x130] sm:$0xff] %v7072
        %7599 = vst [vmem:[%s597 + $0x138] sm:$0xff] %v7296
        %7600 = vst [vmem:[%s597 + $0x140] sm:$0xff] %v7298
        %7601 = vst [vmem:[%s597 + $0x148] sm:$0xff] %v7501
        %7602 = vst [vmem:[%s597 + $0x150] sm:$0xff] %v6850
        %7603 = vst [vmem:[%s597 + $0x158] sm:$0xff] %v6852
        %7604 = vst [vmem:[%s597 + $0x160] sm:$0xff] %v7076
        %7605 = vst [vmem:[%s597 + $0x168] sm:$0xff] %v7078
        %7606 = vst [vmem:[%s597 + $0x170] sm:$0xff] %v7302
        %7607 = vst [vmem:[%s597 + $0x178] sm:$0xff] %v7304
        %7608 = vst [vmem:[%s597 + $0x180] sm:$0xff] %v7506
        %7609 = vst [vmem:[%s597 + $0x188] sm:$0xff] %v6854
        %7610 = vst [vmem:[%s597 + $0x190] sm:$0xff] %v6856
        %7611 = vst [vmem:[%s597 + $0x198] sm:$0xff] %v7080
        %7612 = vst [vmem:[%s597 + $0x1a0] sm:$0xff] %v7082
        %7613 = vst [vmem:[%s597 + $0x1a8] sm:$0xff] %v7306
        %7614 = vst [vmem:[%s597 + $0x1b0] sm:$0xff] %v7308
        %7615 = vst [vmem:[%s597 + $0x1b8] sm:$0xff] %v7509
        %7616 = vst [vmem:[%s597 + $0x1c0] sm:$0xff] %v6860
        %7617 = vst [vmem:[%s597 + $0x1c8] sm:$0xff] %v6862
        %7618 = vst [vmem:[%s597 + $0x1d0] sm:$0xff] %v7086
        %7619 = vst [vmem:[%s597 + $0x1d8] sm:$0xff] %v7088
        %7620 = vst [vmem:[%s597 + $0x1e0] sm:$0xff] %v7312
        %7621 = vst [vmem:[%s597 + $0x1e8] sm:$0xff] %v7314
        %7622 = vst [vmem:[%s597 + $0x1f0] sm:$0xff] %v7514
        %7623 = vst [vmem:[%s597 + $0x1f8] sm:$0xff] %v6864
        %7624 = vst [vmem:[%s597 + $0x200] sm:$0xff] %v6866
        %7625 = vst [vmem:[%s597 + $0x208] sm:$0xff] %v7090
        %7626 = vst [vmem:[%s597 + $0x210] sm:$0xff] %v7092
        %7627 = vst [vmem:[%s597 + $0x218] sm:$0xff] %v7316
        %7628 = vst [vmem:[%s597 + $0x220] sm:$0xff] %v7318
        %7629 = vst [vmem:[%s597 + $0x228] sm:$0xff] %v7517
        %7630 = vst [vmem:[%s597 + $0x230] sm:$0xff] %v6870
        %7631 = vst [vmem:[%s597 + $0x238] sm:$0xff] %v6872
        %7632 = vst [vmem:[%s597 + $0x240] sm:$0xff] %v7096
        %7633 = vst [vmem:[%s597 + $0x248] sm:$0xff] %v7098
        %7634 = vst [vmem:[%s597 + $0x250] sm:$0xff] %v7322
        %7635 = vst [vmem:[%s597 + $0x258] sm:$0xff] %v7324
        %7636 = vst [vmem:[%s597 + $0x260] sm:$0xff] %v7522
        %7637 = vst [vmem:[%s597 + $0x268] sm:$0xff] %v6874
        %7638 = vst [vmem:[%s597 + $0x270] sm:$0xff] %v6876
        %7639 = vst [vmem:[%s597 + $0x278] sm:$0xff] %v7100
        %7640 = vst [vmem:[%s597 + $0x280] sm:$0xff] %v7102
        %7641 = vst [vmem:[%s597 + $0x288] sm:$0xff] %v7326
        %7642 = vst [vmem:[%s597 + $0x290] sm:$0xff] %v7328
        %7643 = vst [vmem:[%s597 + $0x298] sm:$0xff] %v7525
        %7644 = vst [vmem:[%s597 + $0x2a0] sm:$0xff] %v6880
        %7645 = vst [vmem:[%s597 + $0x2a8] sm:$0xff] %v6882
        %7646 = vst [vmem:[%s597 + $0x2b0] sm:$0xff] %v7106
        %7647 = vst [vmem:[%s597 + $0x2b8] sm:$0xff] %v7108
        %7648 = vst [vmem:[%s597 + $0x2c0] sm:$0xff] %v7332
        %7649 = vst [vmem:[%s597 + $0x2c8] sm:$0xff] %v7334
        %7650 = vst [vmem:[%s597 + $0x2d0] sm:$0xff] %v7530
        %7651 = vst [vmem:[%s597 + $0x2d8] sm:$0xff] %v6884
        %7652 = vst [vmem:[%s597 + $0x2e0] sm:$0xff] %v6886
        %7653 = vst [vmem:[%s597 + $0x2e8] sm:$0xff] %v7110
        %7654 = vst [vmem:[%s597 + $0x2f0] sm:$0xff] %v7112
        %7655 = vst [vmem:[%s597 + $0x2f8] sm:$0xff] %v7336
        %7656 = vst [vmem:[%s597 + $0x300] sm:$0xff] %v7338
        %7657 = vst [vmem:[%s597 + $0x308] sm:$0xff] %v7533
        %7658 = vst [vmem:[%s597 + $0x310] sm:$0xff] %v6890
        %7659 = vst [vmem:[%s597 + $0x318] sm:$0xff] %v6892
        %7660 = vst [vmem:[%s597 + $0x320] sm:$0xff] %v7116
        %7661 = vst [vmem:[%s597 + $0x328] sm:$0xff] %v7118
        %7662 = vst [vmem:[%s597 + $0x330] sm:$0xff] %v7342
        %7663 = vst [vmem:[%s597 + $0x338] sm:$0xff] %v7344
        %7664 = vst [vmem:[%s597 + $0x340] sm:$0xff] %v7538
        %7665 = vst [vmem:[%s597 + $0x348] sm:$0xff] %v6894
        %7666 = vst [vmem:[%s597 + $0x350] sm:$0xff] %v6896
        %7667 = vst [vmem:[%s597 + $0x358] sm:$0xff] %v7120
        %7668 = vst [vmem:[%s597 + $0x360] sm:$0xff] %v7122
        %7669 = vst [vmem:[%s597 + $0x368] sm:$0xff] %v7346
        %7670 = vst [vmem:[%s597 + $0x370] sm:$0xff] %v7348
        %7671 = vst [vmem:[%s597 + $0x378] sm:$0xff] %v7541
        %s7672 = sand.u32 %s325, 1
        %s7673 = scalar_lea.sflag [#allocation4], %s7672
        %s7674 = sand.u32 %s325, 1
        %s7675 = smul.addr %s7674, 128
        %s7676 = scalar_lea.vmem [#allocation16], %s7675
        %s7677 = sand.u32 %s351, 1
        %s7678 = scalar_lea.sflag [#allocation18], %s7677
        %s7679 = sand.u32 %s351, 1
        %s7680 = smul.addr %s7679, 896
        %s7681 = scalar_lea.vmem [#allocation17], %s7680
        // Predicated region
        $region105: #{tpu_custom_call.1} parent=71 // pred_check
          %p7682 = pneg %p335
        $region106: #{tpu_custom_call.1} parent=71 // pred_check_branch
          %7684 = sbr.rel (%p7682) target = $region108
        $region107: #{tpu_custom_call.1} parent=71 // pred_region
          %s7685 = smul.u32 16, %s39
          %s7687 = ssub.s32 2048, 2048
          %7688 = vsyncadd %s7673, %s7687
          %s7689 = smul.addr %s7685, 128
          %s7690 = scalar_lea.hbm %s13, %s7689
          %s7691 = sshll.u32 %s7676, 4
          %s7692 = int_to_ptr.vmem [resolvable:$true] %s7691
          %7697 = dma.vmem_to_hbm [thread:$0]  %s7692, 2048, %s7690, %s7673, 128, 128, 8
        $region108: #{tpu_custom_call.1} parent=71 // pred_fallthru
          _
        // Predicated region
        $region109: #{tpu_custom_call.1} parent=71 // pred_check
          %p7698 = pneg %p361
        $region110: #{tpu_custom_call.1} parent=71 // pred_check_branch
          %7700 = sbr.rel (%p7698) target = $region112
        $region111: #{tpu_custom_call.1} parent=71 // pred_region
          %s7701 = smul.u32 16, %s39
          %s7703 = ssub.s32 14336, 14336
          %7704 = vsyncadd %s7678, %s7703
          %s7705 = smul.addr %s7701, 7
          %s7706 = smul.addr %s7705, 128
          %s7707 = scalar_lea.hbm %s14, %s7706
          %s7708 = sshll.u32 %s7681, 4
          %s7709 = int_to_ptr.vmem [resolvable:$true] %s7708
          %7714 = dma.vmem_to_hbm [thread:$0]  %s7709, 14336, %s7707, %s7678, 896, 896, 56
        $region112: #{tpu_custom_call.1} parent=71 // pred_fallthru
          _
      $region72: #{tpu_custom_call.1} parent=5 // pred_fallthru
        _
      %p7715 = scmp.le.s32.totalorder 2, %s34
      // Predicated region
      $region113: #{tpu_custom_call.1} parent=5 // pred_check
        %p7716 = pneg %p7715
      $region114: #{tpu_custom_call.1} parent=5 // pred_check_branch
        %7718 = sbr.rel (%p7716) target = $region116
      $region115: #{tpu_custom_call.1} parent=5 // pred_region
        %s7719 = ssub.s32 %s34, 2
        // Predicated region
        $region117: #{tpu_custom_call.1} parent=115 // pred_check
          %p7720 = pneg %p341
        $region118: #{tpu_custom_call.1} parent=115 // pred_check_branch
          %7722 = sbr.rel (%p7720) target = $region120
        $region119: #{tpu_custom_call.1} parent=115 // pred_region
          %s7723 = sand.u32 %s326, 1
          %s7724 = scalar_lea.sflag [#allocation4], %s7723
          %s7725 = sand.u32 %s326, 1
          %s7726 = smul.addr %s7725, 128
          %s7727 = scalar_lea.vmem [#allocation16], %s7726
          %7728 = dma.done %s7724, 2048
        $region120: #{tpu_custom_call.1} parent=115 // pred_fallthru
          _
        // Predicated region
        $region121: #{tpu_custom_call.1} parent=115 // pred_check
          %p7729 = pneg %p367
        $region122: #{tpu_custom_call.1} parent=115 // pred_check_branch
          %7731 = sbr.rel (%p7729) target = $region124
        $region123: #{tpu_custom_call.1} parent=115 // pred_region
          %s7732 = sand.u32 %s352, 1
          %s7733 = scalar_lea.sflag [#allocation18], %s7732
          %s7734 = sand.u32 %s352, 1
          %s7735 = smul.addr %s7734, 896
          %s7736 = scalar_lea.vmem [#allocation17], %s7735
          %7737 = dma.done %s7733, 14336
        $region124: #{tpu_custom_call.1} parent=115 // pred_fallthru
          _
      $region116: #{tpu_custom_call.1} parent=5 // pred_fallthru
        _
    $region6: #{tpu_custom_call.1} parent=1 // loop_footer
      %s38 = sadd.s32 1, %s34
    $region7: #{tpu_custom_call.1} parent=1 // loop_footer_branch
      %33 = sbr.rel target = $region3
    $region8: #{tpu_custom_call.1} parent=1 // loop_exit
      _
    %7738 = vsyncpa [#allocation3], 1
    %s7739 = scalar_lea.sflag [#allocation3], 1
    %7740 = vsyncpa %s7739, 1
    %7741 = vsyncpa [#allocation6], 1
    %7742 = vsyncpa [#allocation9], 1
    %7743 = vsyncpa [#allocation12], 1
    %7744 = vsyncpa [#allocation15], 1
    %7745 = vsyncpa [#allocation4], 1
    %s7746 = scalar_lea.sflag [#allocation4], 1
    %7747 = vsyncpa %s7746, 1
    %7748 = vsyncpa [#allocation18], 1
    %s7749 = scalar_lea.sflag [#allocation18], 1
    %7750 = vsyncpa %s7749, 1

</llo_original>
